<compile_context>
chip_gen: v7x
topology: tpu7x:2x2x1
jax: 0.10.0
libtpu: 0.0.40
codegen_flags: <defaults>
</compile_context>

<pallas_src>
import functools

import jax
import jax.numpy as jnp
from jax.experimental import pallas as pl
from jax.experimental.pallas import tpu as pltpu

EPS = 1e-5
LANE = 128


def _round_up(v, m):
    return (v + m - 1) // m * m


# ---------------------------------------------------------------------------
# Kernel 1: 3x3 conv (stride 1, pad 1) as a single K-packed im2col matmul,
# plus numerically-stable per-image BN partial statistics.
# Optionally fuses "x = relu(x * scale + shift)" (the previous BN + ReLU) onto
# its input so the intermediate activation never round-trips HBM twice.
# ---------------------------------------------------------------------------
def _conv3x3_stats_kernel(*refs, fuse_bn_relu, dot_dtype):
    if fuse_bn_relu:
        x_ref, scale_ref, shift_ref, w_ref, y_ref, st_ref, xact_ref, col_ref = refs
    else:
        x_ref, w_ref, y_ref, st_ref, col_ref = refs

    H, W, CP = y_ref.shape[1], y_ref.shape[2], y_ref.shape[3]

    if fuse_bn_relu:
        # Apply bn1 (pre-folded scale/shift) + relu once, then slice the result.
        xact_ref[...] = jnp.maximum(
            x_ref[0] * scale_ref[...] + shift_ref[...], 0.0)

        def tap_src(ha, hb, wa, wb):
            return xact_ref[ha:hb, wa:wb, :]
    else:
        def tap_src(ha, hb, wa, wb):
            return x_ref[0, ha:hb, wa:wb, :]

    # ---- Build the (H, W, 9*CP) im2col buffer (once per image) -------------
    # Tap t = dy*3+dx holds the input shifted by (sy, sx) = (dy-1, dx-1); the
    # <=1 invalid border row/col per tap is zeroed explicitly every step, so
    # the scratch never depends on a previous grid iteration (megacore-safe).
    taps = [(dy - 1, dx - 1) for dy in range(3) for dx in range(3)]
    for t, (sy, sx) in enumerate(taps):
        c0 = t * CP
        h0, h1 = max(0, -sy), H - max(0, sy)
        w0, w1 = max(0, -sx), W - max(0, sx)
        if sy == -1:
            col_ref[0:1, :, c0:c0 + CP] = jnp.zeros((1, W, CP), jnp.float32)
        elif sy == 1:
            col_ref[H - 1:H, :, c0:c0 + CP] = jnp.zeros((1, W, CP), jnp.float32)
        if sx == -1:
            col_ref[:, 0:1, c0:c0 + CP] = jnp.zeros((H, 1, CP), jnp.float32)
        elif sx == 1:
            col_ref[:, W - 1:W, c0:c0 + CP] = jnp.zeros((H, 1, CP), jnp.float32)
        col_ref[h0:h1, w0:w1, c0:c0 + CP] = tap_src(h0 + sy, h1 + sy,
                                                    w0 + sx, w1 + sx)

    # ---- One K = 9*CP matmul on the MXU (bf16 operands, f32 accumulate) ----
    lhs = col_ref[...].reshape(H * W, 9 * CP).astype(dot_dtype)
    acc = jnp.dot(lhs, w_ref[...], preferred_element_type=jnp.float32)
    y_ref[0] = acc.reshape(H, W, CP)

    # ---- Per-image partial BN statistics (f32) ------------------------------
    # row 0 = sum(y); row 1 = sum((y - mean_image)^2).  Global combine (exact
    # parallel-variance merge) + affine fold happen in the wrapper.
    n_rows = H * W
    row_sum = jnp.sum(acc, axis=0, keepdims=True)              # (1, CP)
    mean_i = row_sum * (1.0 / n_rows)
    dev = acc - mean_i
    row_m2 = jnp.sum(dev * dev, axis=0, keepdims=True)         # (1, CP)
    rows = jax.lax.broadcasted_iota(jnp.int32, (8, CP), 0)
    st_ref[0] = jnp.where(rows == 0, row_sum,
                          jnp.where(rows == 1, row_m2, 0.0))


# ---------------------------------------------------------------------------
# Kernel 2: bn2 (pre-folded scale/shift) + residual add + relu, tiled over M.
# ---------------------------------------------------------------------------
def _bn_add_relu_kernel(y_ref, idn_ref, scale_ref, shift_ref, o_ref):
    z = y_ref[...] * scale_ref[...] + shift_ref[...] + idn_ref[...]
    o_ref[...] = jnp.maximum(z, 0.0)


# ---------------------------------------------------------------------------
# pallas_call wrappers
# ---------------------------------------------------------------------------
def _conv3x3_stats(x, w_packed, scale=None, shift=None, *, dot_dtype):
    """x: (N,H,W,CP) f32;  w_packed: (9*CP, CP) in dot_dtype."""
    N, H, W, CP = x.shape
    fuse = scale is not None
    kernel = functools.partial(_conv3x3_stats_kernel, fuse_bn_relu=fuse,
                               dot_dtype=dot_dtype)

    in_specs = [pl.BlockSpec((1, H, W, CP), lambda n: (n, 0, 0, 0))]
    args = [x]
    if fuse:
        in_specs += [pl.BlockSpec((1, CP), lambda n: (0, 0)),
                     pl.BlockSpec((1, CP), lambda n: (0, 0))]
        args += [scale, shift]
    in_specs.append(pl.BlockSpec((9 * CP, CP), lambda n: (0, 0)))
    args.append(w_packed)

    out_shape = (jax.ShapeDtypeStruct((N, H, W, CP), jnp.float32),
                 jax.ShapeDtypeStruct((N, 8, CP), jnp.float32))
    out_specs = (pl.BlockSpec((1, H, W, CP), lambda n: (n, 0, 0, 0)),
                 pl.BlockSpec((1, 8, CP), lambda n: (n, 0, 0)))

    scratch = []
    if fuse:
        scratch.append(pltpu.VMEM((H, W, CP), jnp.float32))      # activated input
    scratch.append(pltpu.VMEM((H, W, 9 * CP), jnp.float32))      # im2col buffer

    flops = 2 * N * H * W * 9 * CP * CP
    bytes_accessed = (4 * (x.size + N * H * W * CP + N * 8 * CP)
                      + w_packed.dtype.itemsize * w_packed.size
                      + (8 * CP if fuse else 0))

    return pl.pallas_call(
        kernel,
        grid=(N,),
        in_specs=in_specs,
        out_specs=out_specs,
        out_shape=out_shape,
        scratch_shapes=scratch,
        compiler_params=pltpu.CompilerParams(
            dimension_semantics=("parallel",)),
        cost_estimate=pl.CostEstimate(flops=flops, transcendentals=0,
                                      bytes_accessed=bytes_accessed),
    )(*args)


def _bn_add_relu(y, idn, scale, shift):
    """Pure HBM-bandwidth-bound pass: big row tiles, cdiv grid, partial tail."""
    M, CP = y.shape
    tm = M if (M % 8 != 0) else min(M, 4096)
    return pl.pallas_call(
        _bn_add_relu_kernel,
        grid=(pl.cdiv(M, tm),),
        in_specs=[pl.BlockSpec((tm, CP), lambda i: (i, 0)),
                  pl.BlockSpec((tm, CP), lambda i: (i, 0)),
                  pl.BlockSpec((1, CP), lambda i: (0, 0)),
                  pl.BlockSpec((1, CP), lambda i: (0, 0))],
        out_specs=pl.BlockSpec((tm, CP), lambda i: (i, 0)),
        out_shape=jax.ShapeDtypeStruct((M, CP), jnp.float32),
        compiler_params=pltpu.CompilerParams(
            dimension_semantics=("parallel",)),
    )(y, idn, scale, shift)


# ---------------------------------------------------------------------------
# Forward pass
# ---------------------------------------------------------------------------
@functools.partial(jax.jit, static_argnames="compute_dtype")
def residual_block_forward(x_nchw, w1, g1, b1, w2, g2, b2,
                           compute_dtype="bfloat16"):
    """x: NCHW f32; w1/w2: (3,3,Cin,Cout) HWIO; g*/b*: (1, Cout).

    compute_dtype selects the MXU operand dtype ("bfloat16" default for
    throughput, "float32" for strict numerical parity with the reference).
    """
    dot_dtype = jnp.bfloat16 if compute_dtype == "bfloat16" else jnp.float32
    N, C, H, W = x_nchw.shape
    CP = _round_up(C, LANE)          # lane-dense channel padding
    HW = H * W
    M = N * HW

    # TODO(synk): in a full model keep activations NHWC with CP-padded channels
    # end-to-end; these boundary transposes/pads are extra HBM round trips.
    x = jnp.transpose(x_nchw, (0, 2, 3, 1)).astype(jnp.float32)     # -> NHWC
    xp = jnp.pad(x, ((0, 0), (0, 0), (0, 0), (0, CP - C)))          # (N,H,W,CP)

    def pack_w(w):
        # (3,3,C,C) HWIO -> zero-pad channels -> (9*CP, CP) with K ordered
        # (dy, dx, cin), matching the im2col column layout; cast to dot dtype.
        wp = jnp.pad(w.astype(jnp.float32),
                     ((0, 0), (0, 0), (0, CP - C), (0, CP - C)))
        return wp.reshape(9 * CP, CP).astype(dot_dtype)

    def bn_affine(st, g, b):
        # Exact parallel-variance combine of per-image (sum, M2) partials
        # (numerically stable; no E[y^2]-E[y]^2 cancellation).
        sums = st[:, 0, :]                                   # (N, CP)
        m2s = st[:, 1, :]                                    # (N, CP)
        mean_i = sums / HW
        mean = jnp.sum(sums, axis=0) / M
        var = (jnp.sum(m2s, axis=0)
               + HW * jnp.sum((mean_i - mean) ** 2, axis=0)) / M
        istd = jax.lax.rsqrt(var + EPS)
        gp = jnp.pad(g.reshape(-1).astype(jnp.float32), (0, CP - C))
        bp = jnp.pad(b.reshape(-1).astype(jnp.float32), (0, CP - C))
        scale = gp * istd
        shift = bp - mean * scale
        return scale.reshape(1, CP), shift.reshape(1, CP)

    w1p = pack_w(w1)
    w2p = pack_w(w2)

    # conv01 + batch statistics
    y1, st1 = _conv3x3_stats(xp, w1p, dot_dtype=dot_dtype)
    scale1, shift1 = bn_affine(st1, g1, b1)

    # bn1 + relu fused into conv2's input load; conv2 + batch statistics
    y2, st2 = _conv3x3_stats(y1, w2p, scale1, shift1, dot_dtype=dot_dtype)
    scale2, shift2 = bn_affine(st2, g2, b2)

    # bn2 + residual add + relu (identity = channel-padded x), tiled over rows
    out = _bn_add_relu(y2.reshape(M, CP), xp.reshape(M, CP), scale2, shift2)

    out = out.reshape(N, H, W, CP)[..., :C]                 # drop padded channels
    return jnp.transpose(out, (0, 3, 1, 2))                 # -> NCHW


# ---------------------------------------------------------------------------
# Pure-JAX reference (correctness sanity check)
# ---------------------------------------------------------------------------
def _reference(x_nchw, w1, g1, b1, w2, g2, b2):
    def conv(x, w):  # w: (3,3,Cin,Cout) == HWIO
        return jax.lax.conv_general_dilated(
            x, w, (1, 1), "SAME", dimension_numbers=("NCHW", "HWIO", "NCHW"))

    def bn(y, g, b):
        mean = y.mean(axis=(0, 2, 3), keepdims=True)
        var = y.var(axis=(0, 2, 3), keepdims=True)
        return ((y - mean) * jax.lax.rsqrt(var + EPS)
                * g.reshape(1, -1, 1, 1) + b.reshape(1, -1, 1, 1))

    h = jax.nn.relu(bn(conv(x_nchw, w1), g1, b1))
    o = bn(conv(h, w2), g2, b2)
    return jax.nn.relu(o + x_nchw)


# ---------------------------------------------------------------------------
if __name__ == "__main__":
    key = jax.random.PRNGKey(0)
    k_x, k_w1, k_w2 = jax.random.split(key, 3)

    N, C, H, W = 2, 4, 16, 16            # inplanes == planes (residual add), stride=1
    x = jax.random.normal(k_x, (N, C, H, W), dtype=jnp.float32)

    # Deterministic parameter init (Conv2d weights ~ small normal; BN gamma=1, beta=0).
    wscale = (2.0 / (9 * C)) ** 0.5
    w1 = jax.random.normal(k_w1, (3, 3, C, C), dtype=jnp.float32) * wscale
    w2 = jax.random.normal(k_w2, (3, 3, C, C), dtype=jnp.float32) * wscale
    g1 = jnp.ones((1, C), jnp.float32)
    b1 = jnp.zeros((1, C), jnp.float32)
    g2 = jnp.ones((1, C), jnp.float32)
    b2 = jnp.zeros((1, C), jnp.float32)

    ref = _reference(x, w1, g1, b1, w2, g2, b2)

    # f32 MXU-operand path: strict check vs the f32 reference.
    out_f32 = jax.block_until_ready(
        residual_block_forward(x, w1, g1, b1, w2, g2, b2,
                               compute_dtype="float32"))
    assert out_f32.shape == (N, C, H, W)
    assert jnp.allclose(out_f32, ref, atol=1e-4, rtol=1e-4), "f32 path mismatch"

    # bf16 MXU-operand path (production default): deliberately relaxed tolerance.
    out_bf16 = jax.block_until_ready(
        residual_block_forward(x, w1, g1, b1, w2, g2, b2,
                               compute_dtype="bfloat16"))
    assert out_bf16.shape == (N, C, H, W)
    assert jnp.allclose(out_bf16, ref, atol=5e-2, rtol=5e-2), "bf16 path mismatch"

    print("KERNEL_OK")
</pallas_src>

<mosaic_0001>
module attributes {stable_mosaic.version = 11 : i64} {
  func.func @_conv3x3_stats_kernel(%arg0: i32, %arg1: memref<1x16x16x128xf32, #tpu.memory_space<vmem>>, %arg2: memref<1152x128xf32, #tpu.memory_space<vmem>>, %arg3: memref<1x16x16x128xf32, #tpu.memory_space<vmem>>, %arg4: memref<1x8x128xf32, #tpu.memory_space<vmem>>, %arg5: memref<16x16x1152xf32, #tpu.memory_space<vmem>>) attributes {dimension_semantics = [#tpu.dimension_semantics<parallel>], iteration_bounds = array<i64: 2>, scalar_prefetch = 0 : i64, scratch_operands = 1 : i64, tpu.core_type = #tpu.core_type<tc>, window_params = [{transform_indices = @transform_0, window_bounds = array<i64: 1, 16, 16, 128>}, {pipeline_mode = #tpu.pipeline_mode<synchronous>, transform_indices = @transform_1, window_bounds = array<i64: 1152, 128>}, {transform_indices = @transform_2, window_bounds = array<i64: 1, 16, 16, 128>}, {transform_indices = @transform_3, window_bounds = array<i64: 1, 8, 128>}]} {
    %cst = arith.constant 0.000000e+00 : f32
    %0 = vector.broadcast %cst : f32 to vector<1x16x128xf32>
    %c0 = arith.constant 0 : index
    %c0_0 = arith.constant 0 : index
    %c0_1 = arith.constant 0 : index
    %1 = vector.load %arg5[%c0, %c0_0, %c0_1] : memref<16x16x1152xf32, #tpu.memory_space<vmem>>, vector<1x16x128xf32>
    tpu.vector_store %arg5[%c0, %c0_0, %c0_1], %0 {strides = array<i32>} : memref<16x16x1152xf32, #tpu.memory_space<vmem>>, vector<1x16x128xf32>,
    %cst_2 = arith.constant 0.000000e+00 : f32
    %2 = vector.broadcast %cst_2 : f32 to vector<16x1x128xf32>
    %c0_3 = arith.constant 0 : index
    %c0_4 = arith.constant 0 : index
    %c0_5 = arith.constant 0 : index
    %3 = vector.load %arg5[%c0_3, %c0_4, %c0_5] : memref<16x16x1152xf32, #tpu.memory_space<vmem>>, vector<16x1x128xf32>
    tpu.vector_store %arg5[%c0_3, %c0_4, %c0_5], %2 {strides = array<i32>} : memref<16x16x1152xf32, #tpu.memory_space<vmem>>, vector<16x1x128xf32>,
    %c0_6 = arith.constant 0 : index
    %c0_7 = arith.constant 0 : index
    %c0_8 = arith.constant 0 : index
    %c0_9 = arith.constant 0 : index
    %4 = vector.load %arg1[%c0_6, %c0_7, %c0_8, %c0_9] : memref<1x16x16x128xf32, #tpu.memory_space<vmem>>, vector<1x15x15x128xf32>
    %5 = vector.shape_cast %4 : vector<1x15x15x128xf32> to vector<15x15x128xf32>
    %c1 = arith.constant 1 : index
    %c1_10 = arith.constant 1 : index
    %c0_11 = arith.constant 0 : index
    %6 = vector.load %arg5[%c1, %c1_10, %c0_11] : memref<16x16x1152xf32, #tpu.memory_space<vmem>>, vector<15x15x128xf32>
    tpu.vector_store %arg5[%c1, %c1_10, %c0_11], %5 {strides = array<i32>} : memref<16x16x1152xf32, #tpu.memory_space<vmem>>, vector<15x15x128xf32>,
    %cst_12 = arith.constant 0.000000e+00 : f32
    %7 = vector.broadcast %cst_12 : f32 to vector<1x16x128xf32>
    %c0_13 = arith.constant 0 : index
    %c0_14 = arith.constant 0 : index
    %c128 = arith.constant 128 : index
    %8 = vector.load %arg5[%c0_13, %c0_14, %c128] : memref<16x16x1152xf32, #tpu.memory_space<vmem>>, vector<1x16x128xf32>
    tpu.vector_store %arg5[%c0_13, %c0_14, %c128], %7 {strides = array<i32>} : memref<16x16x1152xf32, #tpu.memory_space<vmem>>, vector<1x16x128xf32>,
    %c0_15 = arith.constant 0 : index
    %c0_16 = arith.constant 0 : index
    %c0_17 = arith.constant 0 : index
    %c0_18 = arith.constant 0 : index
    %9 = vector.load %arg1[%c0_15, %c0_16, %c0_17, %c0_18] : memref<1x16x16x128xf32, #tpu.memory_space<vmem>>, vector<1x15x16x128xf32>
    %10 = vector.shape_cast %9 : vector<1x15x16x128xf32> to vector<15x16x128xf32>
    %c1_19 = arith.constant 1 : index
    %c0_20 = arith.constant 0 : index
    %c128_21 = arith.constant 128 : index
    %11 = vector.load %arg5[%c1_19, %c0_20, %c128_21] : memref<16x16x1152xf32, #tpu.memory_space<vmem>>, vector<15x16x128xf32>
    tpu.vector_store %arg5[%c1_19, %c0_20, %c128_21], %10 {strides = array<i32>} : memref<16x16x1152xf32, #tpu.memory_space<vmem>>, vector<15x16x128xf32>,
    %cst_22 = arith.constant 0.000000e+00 : f32
    %12 = vector.broadcast %cst_22 : f32 to vector<1x16x128xf32>
    %c0_23 = arith.constant 0 : index
    %c0_24 = arith.constant 0 : index
    %c256 = arith.constant 256 : index
    %13 = vector.load %arg5[%c0_23, %c0_24, %c256] : memref<16x16x1152xf32, #tpu.memory_space<vmem>>, vector<1x16x128xf32>
    tpu.vector_store %arg5[%c0_23, %c0_24, %c256], %12 {strides = array<i32>} : memref<16x16x1152xf32, #tpu.memory_space<vmem>>, vector<1x16x128xf32>,
    %cst_25 = arith.constant 0.000000e+00 : f32
    %14 = vector.broadcast %cst_25 : f32 to vector<16x1x128xf32>
    %c0_26 = arith.constant 0 : index
    %c15 = arith.constant 15 : index
    %c256_27 = arith.constant 256 : index
    %15 = vector.load %arg5[%c0_26, %c15, %c256_27] : memref<16x16x1152xf32, #tpu.memory_space<vmem>>, vector<16x1x128xf32>
    tpu.vector_store %arg5[%c0_26, %c15, %c256_27], %14 {strides = array<i32>} : memref<16x16x1152xf32, #tpu.memory_space<vmem>>, vector<16x1x128xf32>,
    %c0_28 = arith.constant 0 : index
    %c0_29 = arith.constant 0 : index
    %c1_30 = arith.constant 1 : index
    %c0_31 = arith.constant 0 : index
    %16 = vector.load %arg1[%c0_28, %c0_29, %c1_30, %c0_31] : memref<1x16x16x128xf32, #tpu.memory_space<vmem>>, vector<1x15x15x128xf32>
    %17 = vector.shape_cast %16 : vector<1x15x15x128xf32> to vector<15x15x128xf32>
    %c1_32 = arith.constant 1 : index
    %c0_33 = arith.constant 0 : index
    %c256_34 = arith.constant 256 : index
    %18 = vector.load %arg5[%c1_32, %c0_33, %c256_34] : memref<16x16x1152xf32, #tpu.memory_space<vmem>>, vector<15x15x128xf32>
    tpu.vector_store %arg5[%c1_32, %c0_33, %c256_34], %17 {strides = array<i32>} : memref<16x16x1152xf32, #tpu.memory_space<vmem>>, vector<15x15x128xf32>,
    %cst_35 = arith.constant 0.000000e+00 : f32
    %19 = vector.broadcast %cst_35 : f32 to vector<16x1x128xf32>
    %c0_36 = arith.constant 0 : index
    %c0_37 = arith.constant 0 : index
    %c384 = arith.constant 384 : index
    %20 = vector.load %arg5[%c0_36, %c0_37, %c384] : memref<16x16x1152xf32, #tpu.memory_space<vmem>>, vector<16x1x128xf32>
    tpu.vector_store %arg5[%c0_36, %c0_37, %c384], %19 {strides = array<i32>} : memref<16x16x1152xf32, #tpu.memory_space<vmem>>, vector<16x1x128xf32>,
    %c0_38 = arith.constant 0 : index
    %c0_39 = arith.constant 0 : index
    %c0_40 = arith.constant 0 : index
    %c0_41 = arith.constant 0 : index
    %21 = vector.load %arg1[%c0_38, %c0_39, %c0_40, %c0_41] : memref<1x16x16x128xf32, #tpu.memory_space<vmem>>, vector<1x16x15x128xf32>
    %22 = vector.shape_cast %21 : vector<1x16x15x128xf32> to vector<16x15x128xf32>
    %c0_42 = arith.constant 0 : index
    %c1_43 = arith.constant 1 : index
    %c384_44 = arith.constant 384 : index
    %23 = vector.load %arg5[%c0_42, %c1_43, %c384_44] : memref<16x16x1152xf32, #tpu.memory_space<vmem>>, vector<16x15x128xf32>
    tpu.vector_store %arg5[%c0_42, %c1_43, %c384_44], %22 {strides = array<i32>} : memref<16x16x1152xf32, #tpu.memory_space<vmem>>, vector<16x15x128xf32>,
    %c0_45 = arith.constant 0 : index
    %c0_46 = arith.constant 0 : index
    %c0_47 = arith.constant 0 : index
    %c0_48 = arith.constant 0 : index
    %24 = vector.load %arg1[%c0_45, %c0_46, %c0_47, %c0_48] : memref<1x16x16x128xf32, #tpu.memory_space<vmem>>, vector<1x16x16x128xf32>
    %25 = vector.shape_cast %24 : vector<1x16x16x128xf32> to vector<16x16x128xf32>
    %c0_49 = arith.constant 0 : index
    %c0_50 = arith.constant 0 : index
    %c512 = arith.constant 512 : index
    %26 = vector.load %arg5[%c0_49, %c0_50, %c512] : memref<16x16x1152xf32, #tpu.memory_space<vmem>>, vector<16x16x128xf32>
    tpu.vector_store %arg5[%c0_49, %c0_50, %c512], %25 {strides = array<i32>} : memref<16x16x1152xf32, #tpu.memory_space<vmem>>, vector<16x16x128xf32>,
    %cst_51 = arith.constant 0.000000e+00 : f32
    %27 = vector.broadcast %cst_51 : f32 to vector<16x1x128xf32>
    %c0_52 = arith.constant 0 : index
    %c15_53 = arith.constant 15 : index
    %c640 = arith.constant 640 : index
    %28 = vector.load %arg5[%c0_52, %c15_53, %c640] : memref<16x16x1152xf32, #tpu.memory_space<vmem>>, vector<16x1x128xf32>
    tpu.vector_store %arg5[%c0_52, %c15_53, %c640], %27 {strides = array<i32>} : memref<16x16x1152xf32, #tpu.memory_space<vmem>>, vector<16x1x128xf32>,
    %c0_54 = arith.constant 0 : index
    %c0_55 = arith.constant 0 : index
    %c1_56 = arith.constant 1 : index
    %c0_57 = arith.constant 0 : index
    %29 = vector.load %arg1[%c0_54, %c0_55, %c1_56, %c0_57] : memref<1x16x16x128xf32, #tpu.memory_space<vmem>>, vector<1x16x15x128xf32>
    %30 = vector.shape_cast %29 : vector<1x16x15x128xf32> to vector<16x15x128xf32>
    %c0_58 = arith.constant 0 : index
    %c0_59 = arith.constant 0 : index
    %c640_60 = arith.constant 640 : index
    %31 = vector.load %arg5[%c0_58, %c0_59, %c640_60] : memref<16x16x1152xf32, #tpu.memory_space<vmem>>, vector<16x15x128xf32>
    tpu.vector_store %arg5[%c0_58, %c0_59, %c640_60], %30 {strides = array<i32>} : memref<16x16x1152xf32, #tpu.memory_space<vmem>>, vector<16x15x128xf32>,
    %cst_61 = arith.constant 0.000000e+00 : f32
    %32 = vector.broadcast %cst_61 : f32 to vector<1x16x128xf32>
    %c15_62 = arith.constant 15 : index
    %c0_63 = arith.constant 0 : index
    %c768 = arith.constant 768 : index
    %33 = vector.load %arg5[%c15_62, %c0_63, %c768] : memref<16x16x1152xf32, #tpu.memory_space<vmem>>, vector<1x16x128xf32>
    tpu.vector_store %arg5[%c15_62, %c0_63, %c768], %32 {strides = array<i32>} : memref<16x16x1152xf32, #tpu.memory_space<vmem>>, vector<1x16x128xf32>,
    %cst_64 = arith.constant 0.000000e+00 : f32
    %34 = vector.broadcast %cst_64 : f32 to vector<16x1x128xf32>
    %c0_65 = arith.constant 0 : index
    %c0_66 = arith.constant 0 : index
    %c768_67 = arith.constant 768 : index
    %35 = vector.load %arg5[%c0_65, %c0_66, %c768_67] : memref<16x16x1152xf32, #tpu.memory_space<vmem>>, vector<16x1x128xf32>
    tpu.vector_store %arg5[%c0_65, %c0_66, %c768_67], %34 {strides = array<i32>} : memref<16x16x1152xf32, #tpu.memory_space<vmem>>, vector<16x1x128xf32>,
    %c0_68 = arith.constant 0 : index
    %c1_69 = arith.constant 1 : index
    %c0_70 = arith.constant 0 : index
    %c0_71 = arith.constant 0 : index
    %36 = vector.load %arg1[%c0_68, %c1_69, %c0_70, %c0_71] : memref<1x16x16x128xf32, #tpu.memory_space<vmem>>, vector<1x15x15x128xf32>
    %37 = vector.shape_cast %36 : vector<1x15x15x128xf32> to vector<15x15x128xf32>
    %c0_72 = arith.constant 0 : index
    %c1_73 = arith.constant 1 : index
    %c768_74 = arith.constant 768 : index
    %38 = vector.load %arg5[%c0_72, %c1_73, %c768_74] : memref<16x16x1152xf32, #tpu.memory_space<vmem>>, vector<15x15x128xf32>
    tpu.vector_store %arg5[%c0_72, %c1_73, %c768_74], %37 {strides = array<i32>} : memref<16x16x1152xf32, #tpu.memory_space<vmem>>, vector<15x15x128xf32>,
    %cst_75 = arith.constant 0.000000e+00 : f32
    %39 = vector.broadcast %cst_75 : f32 to vector<1x16x128xf32>
    %c15_76 = arith.constant 15 : index
    %c0_77 = arith.constant 0 : index
    %c896 = arith.constant 896 : index
    %40 = vector.load %arg5[%c15_76, %c0_77, %c896] : memref<16x16x1152xf32, #tpu.memory_space<vmem>>, vector<1x16x128xf32>
    tpu.vector_store %arg5[%c15_76, %c0_77, %c896], %39 {strides = array<i32>} : memref<16x16x1152xf32, #tpu.memory_space<vmem>>, vector<1x16x128xf32>,
    %c0_78 = arith.constant 0 : index
    %c1_79 = arith.constant 1 : index
    %c0_80 = arith.constant 0 : index
    %c0_81 = arith.constant 0 : index
    %41 = vector.load %arg1[%c0_78, %c1_79, %c0_80, %c0_81] : memref<1x16x16x128xf32, #tpu.memory_space<vmem>>, vector<1x15x16x128xf32>
    %42 = vector.shape_cast %41 : vector<1x15x16x128xf32> to vector<15x16x128xf32>
    %c0_82 = arith.constant 0 : index
    %c0_83 = arith.constant 0 : index
    %c896_84 = arith.constant 896 : index
    %43 = vector.load %arg5[%c0_82, %c0_83, %c896_84] : memref<16x16x1152xf32, #tpu.memory_space<vmem>>, vector<15x16x128xf32>
    tpu.vector_store %arg5[%c0_82, %c0_83, %c896_84], %42 {strides = array<i32>} : memref<16x16x1152xf32, #tpu.memory_space<vmem>>, vector<15x16x128xf32>,
    %cst_85 = arith.constant 0.000000e+00 : f32
    %44 = vector.broadcast %cst_85 : f32 to vector<1x16x128xf32>
    %c15_86 = arith.constant 15 : index
    %c0_87 = arith.constant 0 : index
    %c1024 = arith.constant 1024 : index
    %45 = vector.load %arg5[%c15_86, %c0_87, %c1024] : memref<16x16x1152xf32, #tpu.memory_space<vmem>>, vector<1x16x128xf32>
    tpu.vector_store %arg5[%c15_86, %c0_87, %c1024], %44 {strides = array<i32>} : memref<16x16x1152xf32, #tpu.memory_space<vmem>>, vector<1x16x128xf32>,
    %cst_88 = arith.constant 0.000000e+00 : f32
    %46 = vector.broadcast %cst_88 : f32 to vector<16x1x128xf32>
    %c0_89 = arith.constant 0 : index
    %c15_90 = arith.constant 15 : index
    %c1024_91 = arith.constant 1024 : index
    %47 = vector.load %arg5[%c0_89, %c15_90, %c1024_91] : memref<16x16x1152xf32, #tpu.memory_space<vmem>>, vector<16x1x128xf32>
    tpu.vector_store %arg5[%c0_89, %c15_90, %c1024_91], %46 {strides = array<i32>} : memref<16x16x1152xf32, #tpu.memory_space<vmem>>, vector<16x1x128xf32>,
    %c0_92 = arith.constant 0 : index
    %c1_93 = arith.constant 1 : index
    %c1_94 = arith.constant 1 : index
    %c0_95 = arith.constant 0 : index
    %48 = vector.load %arg1[%c0_92, %c1_93, %c1_94, %c0_95] : memref<1x16x16x128xf32, #tpu.memory_space<vmem>>, vector<1x15x15x128xf32>
    %49 = vector.shape_cast %48 : vector<1x15x15x128xf32> to vector<15x15x128xf32>
    %c0_96 = arith.constant 0 : index
    %c0_97 = arith.constant 0 : index
    %c1024_98 = arith.constant 1024 : index
    %50 = vector.load %arg5[%c0_96, %c0_97, %c1024_98] : memref<16x16x1152xf32, #tpu.memory_space<vmem>>, vector<15x15x128xf32>
    tpu.vector_store %arg5[%c0_96, %c0_97, %c1024_98], %49 {strides = array<i32>} : memref<16x16x1152xf32, #tpu.memory_space<vmem>>, vector<15x15x128xf32>,
    %c0_99 = arith.constant 0 : index
    %c0_100 = arith.constant 0 : index
    %c0_101 = arith.constant 0 : index
    %51 = vector.load %arg5[%c0_99, %c0_100, %c0_101] : memref<16x16x1152xf32, #tpu.memory_space<vmem>>, vector<16x16x1152xf32>
    %52 = vector.shape_cast %51 : vector<16x16x1152xf32> to vector<256x1152xf32>
    %c0_102 = arith.constant 0 : index
    %c0_103 = arith.constant 0 : index
    %53 = vector.load %arg2[%c0_102, %c0_103] : memref<1152x128xf32, #tpu.memory_space<vmem>>, vector<1152x128xf32>
    %cst_104 = arith.constant dense<0.000000e+00> : vector<256x128xf32>
    %54 = tpu.matmul %52, %53, %cst_104 {dimension_numbers = #tpu.dot_dimension_numbers<[1], [0], [0], [1], [0, 0, 1, 1], [], []>} : vector<256x1152xf32>, vector<1152x128xf32>, vector<256x128xf32> -> vector<256x128xf32>
    %55 = vector.shape_cast %54 : vector<256x128xf32> to vector<16x16x128xf32>
    %c0_105 = arith.constant 0 : index
    %c0_106 = arith.constant 0 : index
    %c0_107 = arith.constant 0 : index
    %c0_108 = arith.constant 0 : index
    %56 = vector.load %arg3[%c0_105, %c0_106, %c0_107, %c0_108] : memref<1x16x16x128xf32, #tpu.memory_space<vmem>>, vector<1x16x16x128xf32>
    %57 = vector.shape_cast %56 : vector<1x16x16x128xf32> to vector<16x16x128xf32>
    %58 = vector.shape_cast %55 : vector<16x16x128xf32> to vector<1x16x16x128xf32>
    tpu.vector_store %arg3[%c0_105, %c0_106, %c0_107, %c0_108], %58 {strides = array<i32>} : memref<1x16x16x128xf32, #tpu.memory_space<vmem>>, vector<1x16x16x128xf32>,
    %cst_109 = arith.constant dense<0.000000e+00> : vector<128xf32>
    %59 = vector.multi_reduction <add>, %54, %cst_109 [0] : vector<256x128xf32> to vector<128xf32>
    %60 = vector.shape_cast %59 : vector<128xf32> to vector<1x128xf32>
    %cst_110 = arith.constant 3.906250e-03 : f32
    %61 = vector.broadcast %cst_110 : f32 to vector<1x128xf32>
    %62 = arith.mulf %60, %61 : vector<1x128xf32>
    %63 = vector.broadcast %62 : vector<1x128xf32> to vector<256x128xf32>
    %64 = arith.subf %54, %63 : vector<256x128xf32>
    %65 = arith.mulf %64, %64 : vector<256x128xf32>
    %cst_111 = arith.constant dense<0.000000e+00> : vector<128xf32>
    %66 = vector.multi_reduction <add>, %65, %cst_111 [0] : vector<256x128xf32> to vector<128xf32>
    %67 = vector.shape_cast %66 : vector<128xf32> to vector<1x128xf32>
    %68 = tpu.iota {dimensions = array<i32: 0>} : vector<8x128xi32>
    %c0_i32 = arith.constant 0 : i32
    %69 = vector.broadcast %c0_i32 : i32 to vector<8x128xi32>
    %70 = arith.cmpi eq, %68, %69 : vector<8x128xi32>
    %c1_i32 = arith.constant 1 : i32
    %71 = vector.broadcast %c1_i32 : i32 to vector<8x128xi32>
    %72 = arith.cmpi eq, %68, %71 : vector<8x128xi32>
    %cst_112 = arith.constant 0.000000e+00 : f32
    %73 = vector.shape_cast %67 : vector<1x128xf32> to vector<1x128xf32>
    %74 = vector.broadcast %73 : vector<1x128xf32> to vector<8x128xf32>
    %75 = vector.broadcast %cst_112 : f32 to vector<8x128xf32>
    %76 = arith.select %72, %74, %75 : vector<8x128xi1>, vector<8x128xf32>
    %77 = vector.shape_cast %60 : vector<1x128xf32> to vector<1x128xf32>
    %78 = vector.broadcast %77 : vector<1x128xf32> to vector<8x128xf32>
    %79 = arith.select %70, %78, %76 : vector<8x128xi1>, vector<8x128xf32>
    %c0_113 = arith.constant 0 : index
    %c0_114 = arith.constant 0 : index
    %c0_115 = arith.constant 0 : index
    %80 = vector.load %arg4[%c0_113, %c0_114, %c0_115] : memref<1x8x128xf32, #tpu.memory_space<vmem>>, vector<1x8x128xf32>
    %81 = vector.shape_cast %80 : vector<1x8x128xf32> to vector<8x128xf32>
    %82 = vector.shape_cast %79 : vector<8x128xf32> to vector<1x8x128xf32>
    tpu.vector_store %arg4[%c0_113, %c0_114, %c0_115], %82 {strides = array<i32>} : memref<1x8x128xf32, #tpu.memory_space<vmem>>, vector<1x8x128xf32>,
    return
  }
  func.func @transform_0(%arg0: i32) -> (i32, i32, i32, i32) {
    %c0_i32 = arith.constant 0 : i32
    %c0_i32_0 = arith.constant 0 : i32
    %c0_i32_1 = arith.constant 0 : i32
    %c0_i32_2 = arith.constant 0 : i32
    return %arg0, %c0_i32, %c0_i32_0, %c0_i32_1 : i32, i32, i32, i32
  }
  func.func @transform_1(%arg0: i32) -> (i32, i32) {
    %c0_i32 = arith.constant 0 : i32
    %c0_i32_0 = arith.constant 0 : i32
    %c0_i32_1 = arith.constant 0 : i32
    return %c0_i32, %c0_i32_0 : i32, i32
  }
  func.func @transform_2(%arg0: i32) -> (i32, i32, i32, i32) {
    %c0_i32 = arith.constant 0 : i32
    %c0_i32_0 = arith.constant 0 : i32
    %c0_i32_1 = arith.constant 0 : i32
    %c0_i32_2 = arith.constant 0 : i32
    return %arg0, %c0_i32, %c0_i32_0, %c0_i32_1 : i32, i32, i32, i32
  }
  func.func @transform_3(%arg0: i32) -> (i32, i32, i32) {
    %c0_i32 = arith.constant 0 : i32
    %c0_i32_0 = arith.constant 0 : i32
    %c0_i32_1 = arith.constant 0 : i32
    return %arg0, %c0_i32, %c0_i32_0 : i32, i32, i32
  }
}

module attributes {stable_mosaic.version = 11 : i64} {
  func.func @_bn_add_relu_kernel(%arg0: i32, %arg1: memref<512x128xf32, #tpu.memory_space<vmem>>, %arg2: memref<512x128xf32, #tpu.memory_space<vmem>>, %arg3: memref<1x128xf32, #tpu.memory_space<vmem>>, %arg4: memref<1x128xf32, #tpu.memory_space<vmem>>, %arg5: memref<512x128xf32, #tpu.memory_space<vmem>>) attributes {dimension_semantics = [#tpu.dimension_semantics<parallel>], iteration_bounds = array<i64: 1>, scalar_prefetch = 0 : i64, scratch_operands = 0 : i64, tpu.core_type = #tpu.core_type<tc>, window_params = [{transform_indices = @transform_0, window_bounds = array<i64: 512, 128>}, {transform_indices = @transform_1, window_bounds = array<i64: 512, 128>}, {pipeline_mode = #tpu.pipeline_mode<synchronous>, transform_indices = @transform_2, window_bounds = array<i64: 1, 128>}, {pipeline_mode = #tpu.pipeline_mode<synchronous>, transform_indices = @transform_3, window_bounds = array<i64: 1, 128>}, {transform_indices = @transform_4, window_bounds = array<i64: 512, 128>}]} {
    %c0 = arith.constant 0 : index
    %c0_0 = arith.constant 0 : index
    %0 = vector.load %arg1[%c0, %c0_0] : memref<512x128xf32, #tpu.memory_space<vmem>>, vector<512x128xf32>
    %c0_1 = arith.constant 0 : index
    %c0_2 = arith.constant 0 : index
    %1 = vector.load %arg3[%c0_1, %c0_2] : memref<1x128xf32, #tpu.memory_space<vmem>>, vector<1x128xf32>
    %2 = vector.broadcast %1 : vector<1x128xf32> to vector<512x128xf32>
    %3 = arith.mulf %0, %2 : vector<512x128xf32>
    %c0_3 = arith.constant 0 : index
    %c0_4 = arith.constant 0 : index
    %4 = vector.load %arg4[%c0_3, %c0_4] : memref<1x128xf32, #tpu.memory_space<vmem>>, vector<1x128xf32>
    %5 = vector.broadcast %4 : vector<1x128xf32> to vector<512x128xf32>
    %6 = arith.addf %3, %5 : vector<512x128xf32>
    %c0_5 = arith.constant 0 : index
    %c0_6 = arith.constant 0 : index
    %7 = vector.load %arg2[%c0_5, %c0_6] : memref<512x128xf32, #tpu.memory_space<vmem>>, vector<512x128xf32>
    %8 = arith.addf %6, %7 : vector<512x128xf32>
    %cst = arith.constant 0.000000e+00 : f32
    %9 = vector.broadcast %cst : f32 to vector<512x128xf32>
    %10 = arith.maximumf %8, %9 : vector<512x128xf32>
    %c0_7 = arith.constant 0 : index
    %c0_8 = arith.constant 0 : index
    %11 = vector.load %arg5[%c0_7, %c0_8] : memref<512x128xf32, #tpu.memory_space<vmem>>, vector<512x128xf32>
    tpu.vector_store %arg5[%c0_7, %c0_8], %10 {strides = array<i32>} : memref<512x128xf32, #tpu.memory_space<vmem>>, vector<512x128xf32>,
    return
  }
  func.func @transform_0(%arg0: i32) -> (i32, i32) {
    %c0_i32 = arith.constant 0 : i32
    %c0_i32_0 = arith.constant 0 : i32
    return %arg0, %c0_i32 : i32, i32
  }
  func.func @transform_1(%arg0: i32) -> (i32, i32) {
    %c0_i32 = arith.constant 0 : i32
    %c0_i32_0 = arith.constant 0 : i32
    return %arg0, %c0_i32 : i32, i32
  }
  func.func @transform_2(%arg0: i32) -> (i32, i32) {
    %c0_i32 = arith.constant 0 : i32
    %c0_i32_0 = arith.constant 0 : i32
    %c0_i32_1 = arith.constant 0 : i32
    return %c0_i32, %c0_i32_0 : i32, i32
  }
  func.func @transform_3(%arg0: i32) -> (i32, i32) {
    %c0_i32 = arith.constant 0 : i32
    %c0_i32_0 = arith.constant 0 : i32
    %c0_i32_1 = arith.constant 0 : i32
    return %c0_i32, %c0_i32_0 : i32, i32
  }
  func.func @transform_4(%arg0: i32) -> (i32, i32) {
    %c0_i32 = arith.constant 0 : i32
    %c0_i32_0 = arith.constant 0 : i32
    return %arg0, %c0_i32 : i32, i32
  }
}

module attributes {stable_mosaic.version = 11 : i64} {
  func.func @_conv3x3_stats_kernel(%arg0: i32, %arg1: memref<1x16x16x128xf32, #tpu.memory_space<vmem>>, %arg2: memref<1x128xf32, #tpu.memory_space<vmem>>, %arg3: memref<1x128xf32, #tpu.memory_space<vmem>>, %arg4: memref<1152x128xf32, #tpu.memory_space<vmem>>, %arg5: memref<1x16x16x128xf32, #tpu.memory_space<vmem>>, %arg6: memref<1x8x128xf32, #tpu.memory_space<vmem>>, %arg7: memref<16x16x128xf32, #tpu.memory_space<vmem>>, %arg8: memref<16x16x1152xf32, #tpu.memory_space<vmem>>) attributes {dimension_semantics = [#tpu.dimension_semantics<parallel>], iteration_bounds = array<i64: 2>, scalar_prefetch = 0 : i64, scratch_operands = 2 : i64, tpu.core_type = #tpu.core_type<tc>, window_params = [{transform_indices = @transform_0, window_bounds = array<i64: 1, 16, 16, 128>}, {pipeline_mode = #tpu.pipeline_mode<synchronous>, transform_indices = @transform_1, window_bounds = array<i64: 1, 128>}, {pipeline_mode = #tpu.pipeline_mode<synchronous>, transform_indices = @transform_2, window_bounds = array<i64: 1, 128>}, {pipeline_mode = #tpu.pipeline_mode<synchronous>, transform_indices = @transform_3, window_bounds = array<i64: 1152, 128>}, {transform_indices = @transform_4, window_bounds = array<i64: 1, 16, 16, 128>}, {transform_indices = @transform_5, window_bounds = array<i64: 1, 8, 128>}]} {
    %c0 = arith.constant 0 : index
    %c0_0 = arith.constant 0 : index
    %c0_1 = arith.constant 0 : index
    %c0_2 = arith.constant 0 : index
    %0 = vector.load %arg1[%c0, %c0_0, %c0_1, %c0_2] : memref<1x16x16x128xf32, #tpu.memory_space<vmem>>, vector<1x16x16x128xf32>
    %1 = vector.shape_cast %0 : vector<1x16x16x128xf32> to vector<16x16x128xf32>
    %c0_3 = arith.constant 0 : index
    %c0_4 = arith.constant 0 : index
    %2 = vector.load %arg2[%c0_3, %c0_4] : memref<1x128xf32, #tpu.memory_space<vmem>>, vector<1x128xf32>
    %3 = vector.shape_cast %2 : vector<1x128xf32> to vector<1x1x128xf32>
    %4 = vector.broadcast %3 : vector<1x1x128xf32> to vector<16x16x128xf32>
    %5 = arith.mulf %1, %4 : vector<16x16x128xf32>
    %c0_5 = arith.constant 0 : index
    %c0_6 = arith.constant 0 : index
    %6 = vector.load %arg3[%c0_5, %c0_6] : memref<1x128xf32, #tpu.memory_space<vmem>>, vector<1x128xf32>
    %7 = vector.shape_cast %6 : vector<1x128xf32> to vector<1x1x128xf32>
    %8 = vector.broadcast %7 : vector<1x1x128xf32> to vector<16x16x128xf32>
    %9 = arith.addf %5, %8 : vector<16x16x128xf32>
    %cst = arith.constant 0.000000e+00 : f32
    %10 = vector.broadcast %cst : f32 to vector<16x16x128xf32>
    %11 = arith.maximumf %9, %10 : vector<16x16x128xf32>
    %c0_7 = arith.constant 0 : index
    %c0_8 = arith.constant 0 : index
    %c0_9 = arith.constant 0 : index
    %12 = vector.load %arg7[%c0_7, %c0_8, %c0_9] : memref<16x16x128xf32, #tpu.memory_space<vmem>>, vector<16x16x128xf32>
    tpu.vector_store %arg7[%c0_7, %c0_8, %c0_9], %11 {strides = array<i32>} : memref<16x16x128xf32, #tpu.memory_space<vmem>>, vector<16x16x128xf32>,
    %cst_10 = arith.constant 0.000000e+00 : f32
    %13 = vector.broadcast %cst_10 : f32 to vector<1x16x128xf32>
    %c0_11 = arith.constant 0 : index
    %c0_12 = arith.constant 0 : index
    %c0_13 = arith.constant 0 : index
    %14 = vector.load %arg8[%c0_11, %c0_12, %c0_13] : memref<16x16x1152xf32, #tpu.memory_space<vmem>>, vector<1x16x128xf32>
    tpu.vector_store %arg8[%c0_11, %c0_12, %c0_13], %13 {strides = array<i32>} : memref<16x16x1152xf32, #tpu.memory_space<vmem>>, vector<1x16x128xf32>,
    %cst_14 = arith.constant 0.000000e+00 : f32
    %15 = vector.broadcast %cst_14 : f32 to vector<16x1x128xf32>
    %c0_15 = arith.constant 0 : index
    %c0_16 = arith.constant 0 : index
    %c0_17 = arith.constant 0 : index
    %16 = vector.load %arg8[%c0_15, %c0_16, %c0_17] : memref<16x16x1152xf32, #tpu.memory_space<vmem>>, vector<16x1x128xf32>
    tpu.vector_store %arg8[%c0_15, %c0_16, %c0_17], %15 {strides = array<i32>} : memref<16x16x1152xf32, #tpu.memory_space<vmem>>, vector<16x1x128xf32>,
    %c0_18 = arith.constant 0 : index
    %c0_19 = arith.constant 0 : index
    %c0_20 = arith.constant 0 : index
    %17 = vector.load %arg7[%c0_18, %c0_19, %c0_20] : memref<16x16x128xf32, #tpu.memory_space<vmem>>, vector<15x15x128xf32>
    %c1 = arith.constant 1 : index
    %c1_21 = arith.constant 1 : index
    %c0_22 = arith.constant 0 : index
    %18 = vector.load %arg8[%c1, %c1_21, %c0_22] : memref<16x16x1152xf32, #tpu.memory_space<vmem>>, vector<15x15x128xf32>
    tpu.vector_store %arg8[%c1, %c1_21, %c0_22], %17 {strides = array<i32>} : memref<16x16x1152xf32, #tpu.memory_space<vmem>>, vector<15x15x128xf32>,
    %cst_23 = arith.constant 0.000000e+00 : f32
    %19 = vector.broadcast %cst_23 : f32 to vector<1x16x128xf32>
    %c0_24 = arith.constant 0 : index
    %c0_25 = arith.constant 0 : index
    %c128 = arith.constant 128 : index
    %20 = vector.load %arg8[%c0_24, %c0_25, %c128] : memref<16x16x1152xf32, #tpu.memory_space<vmem>>, vector<1x16x128xf32>
    tpu.vector_store %arg8[%c0_24, %c0_25, %c128], %19 {strides = array<i32>} : memref<16x16x1152xf32, #tpu.memory_space<vmem>>, vector<1x16x128xf32>,
    %c0_26 = arith.constant 0 : index
    %c0_27 = arith.constant 0 : index
    %c0_28 = arith.constant 0 : index
    %21 = vector.load %arg7[%c0_26, %c0_27, %c0_28] : memref<16x16x128xf32, #tpu.memory_space<vmem>>, vector<15x16x128xf32>
    %c1_29 = arith.constant 1 : index
    %c0_30 = arith.constant 0 : index
    %c128_31 = arith.constant 128 : index
    %22 = vector.load %arg8[%c1_29, %c0_30, %c128_31] : memref<16x16x1152xf32, #tpu.memory_space<vmem>>, vector<15x16x128xf32>
    tpu.vector_store %arg8[%c1_29, %c0_30, %c128_31], %21 {strides = array<i32>} : memref<16x16x1152xf32, #tpu.memory_space<vmem>>, vector<15x16x128xf32>,
    %cst_32 = arith.constant 0.000000e+00 : f32
    %23 = vector.broadcast %cst_32 : f32 to vector<1x16x128xf32>
    %c0_33 = arith.constant 0 : index
    %c0_34 = arith.constant 0 : index
    %c256 = arith.constant 256 : index
    %24 = vector.load %arg8[%c0_33, %c0_34, %c256] : memref<16x16x1152xf32, #tpu.memory_space<vmem>>, vector<1x16x128xf32>
    tpu.vector_store %arg8[%c0_33, %c0_34, %c256], %23 {strides = array<i32>} : memref<16x16x1152xf32, #tpu.memory_space<vmem>>, vector<1x16x128xf32>,
    %cst_35 = arith.constant 0.000000e+00 : f32
    %25 = vector.broadcast %cst_35 : f32 to vector<16x1x128xf32>
    %c0_36 = arith.constant 0 : index
    %c15 = arith.constant 15 : index
    %c256_37 = arith.constant 256 : index
    %26 = vector.load %arg8[%c0_36, %c15, %c256_37] : memref<16x16x1152xf32, #tpu.memory_space<vmem>>, vector<16x1x128xf32>
    tpu.vector_store %arg8[%c0_36, %c15, %c256_37], %25 {strides = array<i32>} : memref<16x16x1152xf32, #tpu.memory_space<vmem>>, vector<16x1x128xf32>,
    %c0_38 = arith.constant 0 : index
    %c1_39 = arith.constant 1 : index
    %c0_40 = arith.constant 0 : index
    %27 = vector.load %arg7[%c0_38, %c1_39, %c0_40] : memref<16x16x128xf32, #tpu.memory_space<vmem>>, vector<15x15x128xf32>
    %c1_41 = arith.constant 1 : index
    %c0_42 = arith.constant 0 : index
    %c256_43 = arith.constant 256 : index
    %28 = vector.load %arg8[%c1_41, %c0_42, %c256_43] : memref<16x16x1152xf32, #tpu.memory_space<vmem>>, vector<15x15x128xf32>
    tpu.vector_store %arg8[%c1_41, %c0_42, %c256_43], %27 {strides = array<i32>} : memref<16x16x1152xf32, #tpu.memory_space<vmem>>, vector<15x15x128xf32>,
    %cst_44 = arith.constant 0.000000e+00 : f32
    %29 = vector.broadcast %cst_44 : f32 to vector<16x1x128xf32>
    %c0_45 = arith.constant 0 : index
    %c0_46 = arith.constant 0 : index
    %c384 = arith.constant 384 : index
    %30 = vector.load %arg8[%c0_45, %c0_46, %c384] : memref<16x16x1152xf32, #tpu.memory_space<vmem>>, vector<16x1x128xf32>
    tpu.vector_store %arg8[%c0_45, %c0_46, %c384], %29 {strides = array<i32>} : memref<16x16x1152xf32, #tpu.memory_space<vmem>>, vector<16x1x128xf32>,
    %c0_47 = arith.constant 0 : index
    %c0_48 = arith.constant 0 : index
    %c0_49 = arith.constant 0 : index
    %31 = vector.load %arg7[%c0_47, %c0_48, %c0_49] : memref<16x16x128xf32, #tpu.memory_space<vmem>>, vector<16x15x128xf32>
    %c0_50 = arith.constant 0 : index
    %c1_51 = arith.constant 1 : index
    %c384_52 = arith.constant 384 : index
    %32 = vector.load %arg8[%c0_50, %c1_51, %c384_52] : memref<16x16x1152xf32, #tpu.memory_space<vmem>>, vector<16x15x128xf32>
    tpu.vector_store %arg8[%c0_50, %c1_51, %c384_52], %31 {strides = array<i32>} : memref<16x16x1152xf32, #tpu.memory_space<vmem>>, vector<16x15x128xf32>,
    %c0_53 = arith.constant 0 : index
    %c0_54 = arith.constant 0 : index
    %c0_55 = arith.constant 0 : index
    %33 = vector.load %arg7[%c0_53, %c0_54, %c0_55] : memref<16x16x128xf32, #tpu.memory_space<vmem>>, vector<16x16x128xf32>
    %c0_56 = arith.constant 0 : index
    %c0_57 = arith.constant 0 : index
    %c512 = arith.constant 512 : index
    %34 = vector.load %arg8[%c0_56, %c0_57, %c512] : memref<16x16x1152xf32, #tpu.memory_space<vmem>>, vector<16x16x128xf32>
    tpu.vector_store %arg8[%c0_56, %c0_57, %c512], %33 {strides = array<i32>} : memref<16x16x1152xf32, #tpu.memory_space<vmem>>, vector<16x16x128xf32>,
    %cst_58 = arith.constant 0.000000e+00 : f32
    %35 = vector.broadcast %cst_58 : f32 to vector<16x1x128xf32>
    %c0_59 = arith.constant 0 : index
    %c15_60 = arith.constant 15 : index
    %c640 = arith.constant 640 : index
    %36 = vector.load %arg8[%c0_59, %c15_60, %c640] : memref<16x16x1152xf32, #tpu.memory_space<vmem>>, vector<16x1x128xf32>
    tpu.vector_store %arg8[%c0_59, %c15_60, %c640], %35 {strides = array<i32>} : memref<16x16x1152xf32, #tpu.memory_space<vmem>>, vector<16x1x128xf32>,
    %c0_61 = arith.constant 0 : index
    %c1_62 = arith.constant 1 : index
    %c0_63 = arith.constant 0 : index
    %37 = vector.load %arg7[%c0_61, %c1_62, %c0_63] : memref<16x16x128xf32, #tpu.memory_space<vmem>>, vector<16x15x128xf32>
    %c0_64 = arith.constant 0 : index
    %c0_65 = arith.constant 0 : index
    %c640_66 = arith.constant 640 : index
    %38 = vector.load %arg8[%c0_64, %c0_65, %c640_66] : memref<16x16x1152xf32, #tpu.memory_space<vmem>>, vector<16x15x128xf32>
    tpu.vector_store %arg8[%c0_64, %c0_65, %c640_66], %37 {strides = array<i32>} : memref<16x16x1152xf32, #tpu.memory_space<vmem>>, vector<16x15x128xf32>,
    %cst_67 = arith.constant 0.000000e+00 : f32
    %39 = vector.broadcast %cst_67 : f32 to vector<1x16x128xf32>
    %c15_68 = arith.constant 15 : index
    %c0_69 = arith.constant 0 : index
    %c768 = arith.constant 768 : index
    %40 = vector.load %arg8[%c15_68, %c0_69, %c768] : memref<16x16x1152xf32, #tpu.memory_space<vmem>>, vector<1x16x128xf32>
    tpu.vector_store %arg8[%c15_68, %c0_69, %c768], %39 {strides = array<i32>} : memref<16x16x1152xf32, #tpu.memory_space<vmem>>, vector<1x16x128xf32>,
    %cst_70 = arith.constant 0.000000e+00 : f32
    %41 = vector.broadcast %cst_70 : f32 to vector<16x1x128xf32>
    %c0_71 = arith.constant 0 : index
    %c0_72 = arith.constant 0 : index
    %c768_73 = arith.constant 768 : index
    %42 = vector.load %arg8[%c0_71, %c0_72, %c768_73] : memref<16x16x1152xf32, #tpu.memory_space<vmem>>, vector<16x1x128xf32>
    tpu.vector_store %arg8[%c0_71, %c0_72, %c768_73], %41 {strides = array<i32>} : memref<16x16x1152xf32, #tpu.memory_space<vmem>>, vector<16x1x128xf32>,
    %c1_74 = arith.constant 1 : index
    %c0_75 = arith.constant 0 : index
    %c0_76 = arith.constant 0 : index
    %43 = vector.load %arg7[%c1_74, %c0_75, %c0_76] : memref<16x16x128xf32, #tpu.memory_space<vmem>>, vector<15x15x128xf32>
    %c0_77 = arith.constant 0 : index
    %c1_78 = arith.constant 1 : index
    %c768_79 = arith.constant 768 : index
    %44 = vector.load %arg8[%c0_77, %c1_78, %c768_79] : memref<16x16x1152xf32, #tpu.memory_space<vmem>>, vector<15x15x128xf32>
    tpu.vector_store %arg8[%c0_77, %c1_78, %c768_79], %43 {strides = array<i32>} : memref<16x16x1152xf32, #tpu.memory_space<vmem>>, vector<15x15x128xf32>,
    %cst_80 = arith.constant 0.000000e+00 : f32
    %45 = vector.broadcast %cst_80 : f32 to vector<1x16x128xf32>
    %c15_81 = arith.constant 15 : index
    %c0_82 = arith.constant 0 : index
    %c896 = arith.constant 896 : index
    %46 = vector.load %arg8[%c15_81, %c0_82, %c896] : memref<16x16x1152xf32, #tpu.memory_space<vmem>>, vector<1x16x128xf32>
    tpu.vector_store %arg8[%c15_81, %c0_82, %c896], %45 {strides = array<i32>} : memref<16x16x1152xf32, #tpu.memory_space<vmem>>, vector<1x16x128xf32>,
    %c1_83 = arith.constant 1 : index
    %c0_84 = arith.constant 0 : index
    %c0_85 = arith.constant 0 : index
    %47 = vector.load %arg7[%c1_83, %c0_84, %c0_85] : memref<16x16x128xf32, #tpu.memory_space<vmem>>, vector<15x16x128xf32>
    %c0_86 = arith.constant 0 : index
    %c0_87 = arith.constant 0 : index
    %c896_88 = arith.constant 896 : index
    %48 = vector.load %arg8[%c0_86, %c0_87, %c896_88] : memref<16x16x1152xf32, #tpu.memory_space<vmem>>, vector<15x16x128xf32>
    tpu.vector_store %arg8[%c0_86, %c0_87, %c896_88], %47 {strides = array<i32>} : memref<16x16x1152xf32, #tpu.memory_space<vmem>>, vector<15x16x128xf32>,
    %cst_89 = arith.constant 0.000000e+00 : f32
    %49 = vector.broadcast %cst_89 : f32 to vector<1x16x128xf32>
    %c15_90 = arith.constant 15 : index
    %c0_91 = arith.constant 0 : index
    %c1024 = arith.constant 1024 : index
    %50 = vector.load %arg8[%c15_90, %c0_91, %c1024] : memref<16x16x1152xf32, #tpu.memory_space<vmem>>, vector<1x16x128xf32>
    tpu.vector_store %arg8[%c15_90, %c0_91, %c1024], %49 {strides = array<i32>} : memref<16x16x1152xf32, #tpu.memory_space<vmem>>, vector<1x16x128xf32>,
    %cst_92 = arith.constant 0.000000e+00 : f32
    %51 = vector.broadcast %cst_92 : f32 to vector<16x1x128xf32>
    %c0_93 = arith.constant 0 : index
    %c15_94 = arith.constant 15 : index
    %c1024_95 = arith.constant 1024 : index
    %52 = vector.load %arg8[%c0_93, %c15_94, %c1024_95] : memref<16x16x1152xf32, #tpu.memory_space<vmem>>, vector<16x1x128xf32>
    tpu.vector_store %arg8[%c0_93, %c15_94, %c1024_95], %51 {strides = array<i32>} : memref<16x16x1152xf32, #tpu.memory_space<vmem>>, vector<16x1x128xf32>,
    %c1_96 = arith.constant 1 : index
    %c1_97 = arith.constant 1 : index
    %c0_98 = arith.constant 0 : index
    %53 = vector.load %arg7[%c1_96, %c1_97, %c0_98] : memref<16x16x128xf32, #tpu.memory_space<vmem>>, vector<15x15x128xf32>
    %c0_99 = arith.constant 0 : index
    %c0_100 = arith.constant 0 : index
    %c1024_101 = arith.constant 1024 : index
    %54 = vector.load %arg8[%c0_99, %c0_100, %c1024_101] : memref<16x16x1152xf32, #tpu.memory_space<vmem>>, vector<15x15x128xf32>
    tpu.vector_store %arg8[%c0_99, %c0_100, %c1024_101], %53 {strides = array<i32>} : memref<16x16x1152xf32, #tpu.memory_space<vmem>>, vector<15x15x128xf32>,
    %c0_102 = arith.constant 0 : index
    %c0_103 = arith.constant 0 : index
    %c0_104 = arith.constant 0 : index
    %55 = vector.load %arg8[%c0_102, %c0_103, %c0_104] : memref<16x16x1152xf32, #tpu.memory_space<vmem>>, vector<16x16x1152xf32>
    %56 = vector.shape_cast %55 : vector<16x16x1152xf32> to vector<256x1152xf32>
    %c0_105 = arith.constant 0 : index
    %c0_106 = arith.constant 0 : index
    %57 = vector.load %arg4[%c0_105, %c0_106] : memref<1152x128xf32, #tpu.memory_space<vmem>>, vector<1152x128xf32>
    %cst_107 = arith.constant dense<0.000000e+00> : vector<256x128xf32>
    %58 = tpu.matmul %56, %57, %cst_107 {dimension_numbers = #tpu.dot_dimension_numbers<[1], [0], [0], [1], [0, 0, 1, 1], [], []>} : vector<256x1152xf32>, vector<1152x128xf32>, vector<256x128xf32> -> vector<256x128xf32>
    %59 = vector.shape_cast %58 : vector<256x128xf32> to vector<16x16x128xf32>
    %c0_108 = arith.constant 0 : index
    %c0_109 = arith.constant 0 : index
    %c0_110 = arith.constant 0 : index
    %c0_111 = arith.constant 0 : index
    %60 = vector.load %arg5[%c0_108, %c0_109, %c0_110, %c0_111] : memref<1x16x16x128xf32, #tpu.memory_space<vmem>>, vector<1x16x16x128xf32>
    %61 = vector.shape_cast %60 : vector<1x16x16x128xf32> to vector<16x16x128xf32>
    %62 = vector.shape_cast %59 : vector<16x16x128xf32> to vector<1x16x16x128xf32>
    tpu.vector_store %arg5[%c0_108, %c0_109, %c0_110, %c0_111], %62 {strides = array<i32>} : memref<1x16x16x128xf32, #tpu.memory_space<vmem>>, vector<1x16x16x128xf32>,
    %cst_112 = arith.constant dense<0.000000e+00> : vector<128xf32>
    %63 = vector.multi_reduction <add>, %58, %cst_112 [0] : vector<256x128xf32> to vector<128xf32>
    %64 = vector.shape_cast %63 : vector<128xf32> to vector<1x128xf32>
    %cst_113 = arith.constant 3.906250e-03 : f32
    %65 = vector.broadcast %cst_113 : f32 to vector<1x128xf32>
    %66 = arith.mulf %64, %65 : vector<1x128xf32>
    %67 = vector.broadcast %66 : vector<1x128xf32> to vector<256x128xf32>
    %68 = arith.subf %58, %67 : vector<256x128xf32>
    %69 = arith.mulf %68, %68 : vector<256x128xf32>
    %cst_114 = arith.constant dense<0.000000e+00> : vector<128xf32>
    %70 = vector.multi_reduction <add>, %69, %cst_114 [0] : vector<256x128xf32> to vector<128xf32>
    %71 = vector.shape_cast %70 : vector<128xf32> to vector<1x128xf32>
    %72 = tpu.iota {dimensions = array<i32: 0>} : vector<8x128xi32>
    %c0_i32 = arith.constant 0 : i32
    %73 = vector.broadcast %c0_i32 : i32 to vector<8x128xi32>
    %74 = arith.cmpi eq, %72, %73 : vector<8x128xi32>
    %c1_i32 = arith.constant 1 : i32
    %75 = vector.broadcast %c1_i32 : i32 to vector<8x128xi32>
    %76 = arith.cmpi eq, %72, %75 : vector<8x128xi32>
    %cst_115 = arith.constant 0.000000e+00 : f32
    %77 = vector.shape_cast %71 : vector<1x128xf32> to vector<1x128xf32>
    %78 = vector.broadcast %77 : vector<1x128xf32> to vector<8x128xf32>
    %79 = vector.broadcast %cst_115 : f32 to vector<8x128xf32>
    %80 = arith.select %76, %78, %79 : vector<8x128xi1>, vector<8x128xf32>
    %81 = vector.shape_cast %64 : vector<1x128xf32> to vector<1x128xf32>
    %82 = vector.broadcast %81 : vector<1x128xf32> to vector<8x128xf32>
    %83 = arith.select %74, %82, %80 : vector<8x128xi1>, vector<8x128xf32>
    %c0_116 = arith.constant 0 : index
    %c0_117 = arith.constant 0 : index
    %c0_118 = arith.constant 0 : index
    %84 = vector.load %arg6[%c0_116, %c0_117, %c0_118] : memref<1x8x128xf32, #tpu.memory_space<vmem>>, vector<1x8x128xf32>
    %85 = vector.shape_cast %84 : vector<1x8x128xf32> to vector<8x128xf32>
    %86 = vector.shape_cast %83 : vector<8x128xf32> to vector<1x8x128xf32>
    tpu.vector_store %arg6[%c0_116, %c0_117, %c0_118], %86 {strides = array<i32>} : memref<1x8x128xf32, #tpu.memory_space<vmem>>, vector<1x8x128xf32>,
    return
  }
  func.func @transform_0(%arg0: i32) -> (i32, i32, i32, i32) {
    %c0_i32 = arith.constant 0 : i32
    %c0_i32_0 = arith.constant 0 : i32
    %c0_i32_1 = arith.constant 0 : i32
    %c0_i32_2 = arith.constant 0 : i32
    return %arg0, %c0_i32, %c0_i32_0, %c0_i32_1 : i32, i32, i32, i32
  }
  func.func @transform_1(%arg0: i32) -> (i32, i32) {
    %c0_i32 = arith.constant 0 : i32
    %c0_i32_0 = arith.constant 0 : i32
    %c0_i32_1 = arith.constant 0 : i32
    return %c0_i32, %c0_i32_0 : i32, i32
  }
  func.func @transform_2(%arg0: i32) -> (i32, i32) {
    %c0_i32 = arith.constant 0 : i32
    %c0_i32_0 = arith.constant 0 : i32
    %c0_i32_1 = arith.constant 0 : i32
    return %c0_i32, %c0_i32_0 : i32, i32
  }
  func.func @transform_3(%arg0: i32) -> (i32, i32) {
    %c0_i32 = arith.constant 0 : i32
    %c0_i32_0 = arith.constant 0 : i32
    %c0_i32_1 = arith.constant 0 : i32
    return %c0_i32, %c0_i32_0 : i32, i32
  }
  func.func @transform_4(%arg0: i32) -> (i32, i32, i32, i32) {
    %c0_i32 = arith.constant 0 : i32
    %c0_i32_0 = arith.constant 0 : i32
    %c0_i32_1 = arith.constant 0 : i32
    %c0_i32_2 = arith.constant 0 : i32
    return %arg0, %c0_i32, %c0_i32_0, %c0_i32_1 : i32, i32, i32, i32
  }
  func.func @transform_5(%arg0: i32) -> (i32, i32, i32) {
    %c0_i32 = arith.constant 0 : i32
    %c0_i32_0 = arith.constant 0 : i32
    %c0_i32_1 = arith.constant 0 : i32
    return %arg0, %c0_i32, %c0_i32_0 : i32, i32, i32
  }
}

</mosaic_0001>

<llo_original>
// kernel: residual_block_forward.5
$region0: #{residual_block_forward.5}
  #allocation0 [shape = 'u32[]', space=smem, size = 0x4, offset = 0x4, fixed_abs, tag = 'smem constant byte address 0x4 - core index']
  #allocation1 [shape = 'u32[144,128]{1,0:T(1,128)}', space=vmem, size = 0x12000, scoped, tag = 'internal scratch']
  %s0 = inlined_call_operand.vmem [shape: f32[512,128], index: 0, kind: input, shape index: {}]
  %s1 = inlined_call_operand.vmem [shape: f32[512,128], index: 1, kind: input, shape index: {}]
  %s2 = inlined_call_operand.vmem [shape: f32[1,128], index: 2, kind: input, shape index: {}]
  %s3 = inlined_call_operand.vmem [shape: f32[1,128], index: 3, kind: input, shape index: {}]
  %s4 = inlined_call_operand.vmem [shape: f32[512,128], index: 4, kind: output, shape index: {}]
  %s5 = sld [smem:[#allocation0]]
  $region26: #{residual_block_forward.5} parent=0
    _
  %s7 = ssub.s32 1, %s5
  %s8 = scalar_select 0, %s7, %s5
  // Predicated region
  $region2: #{residual_block_forward.5} parent=0 // pred_check
    _
  $region3: #{residual_block_forward.5} parent=0 // pred_check_branch
    %10 = sbr.rel (0) target = $region5
  $region4: #{residual_block_forward.5} parent=0 // pred_region
    _
  $region5: #{residual_block_forward.5} parent=0 // pred_fallthru
    _
  // Predicated region
  $region6: #{residual_block_forward.5} parent=0 // pred_check
    _
  $region7: #{residual_block_forward.5} parent=0 // pred_check_branch
    %12 = sbr.rel (0) target = $region9
  $region8: #{residual_block_forward.5} parent=0 // pred_region
    _
  $region9: #{residual_block_forward.5} parent=0 // pred_fallthru
    _
  // Predicated region
  $region10: #{residual_block_forward.5} parent=0 // pred_check
    _
  $region11: #{residual_block_forward.5} parent=0 // pred_check_branch
    %14 = sbr.rel (0) target = $region13
  $region12: #{residual_block_forward.5} parent=0 // pred_region
    _
  $region13: #{residual_block_forward.5} parent=0 // pred_fallthru
    _
  // Predicated region
  $region14: #{residual_block_forward.5} parent=0 // pred_check
    _
  $region15: #{residual_block_forward.5} parent=0 // pred_check_branch
    %16 = sbr.rel (0) target = $region17
  $region16: #{residual_block_forward.5} parent=0 // pred_region
    _
  $region17: #{residual_block_forward.5} parent=0 // pred_fallthru
    _
  %v17 = vld [vmem:[%s0] sm:$0xff]
  %v18 = vld [vmem:[%s0 + $0x8] sm:$0xff]
  %v19 = vld [vmem:[%s0 + $0x10] sm:$0xff]
  %v20 = vld [vmem:[%s0 + $0x18] sm:$0xff]
  %v21 = vld [vmem:[%s0 + $0x20] sm:$0xff]
  %v22 = vld [vmem:[%s0 + $0x28] sm:$0xff]
  %v23 = vld [vmem:[%s0 + $0x30] sm:$0xff]
  %v24 = vld [vmem:[%s0 + $0x38] sm:$0xff]
  %v25 = vld [vmem:[%s0 + $0x40] sm:$0xff]
  %v26 = vld [vmem:[%s0 + $0x48] sm:$0xff]
  %v27 = vld [vmem:[%s0 + $0x50] sm:$0xff]
  %v28 = vld [vmem:[%s0 + $0x58] sm:$0xff]
  %v29 = vld [vmem:[%s0 + $0x60] sm:$0xff]
  %v30 = vld [vmem:[%s0 + $0x68] sm:$0xff]
  %v31 = vld [vmem:[%s0 + $0x70] sm:$0xff]
  %v32 = vld [vmem:[%s0 + $0x78] sm:$0xff]
  %v33 = vld [vmem:[%s0 + $0x80] sm:$0xff]
  %v34 = vld [vmem:[%s0 + $0x88] sm:$0xff]
  %v35 = vld [vmem:[%s0 + $0x90] sm:$0xff]
  %v36 = vld [vmem:[%s0 + $0x98] sm:$0xff]
  %v37 = vld [vmem:[%s0 + $0xa0] sm:$0xff]
  %v38 = vld [vmem:[%s0 + $0xa8] sm:$0xff]
  %v39 = vld [vmem:[%s0 + $0xb0] sm:$0xff]
  %v40 = vld [vmem:[%s0 + $0xb8] sm:$0xff]
  %v41 = vld [vmem:[%s0 + $0xc0] sm:$0xff]
  %v42 = vld [vmem:[%s0 + $0xc8] sm:$0xff]
  %v43 = vld [vmem:[%s0 + $0xd0] sm:$0xff]
  %v44 = vld [vmem:[%s0 + $0xd8] sm:$0xff]
  %v45 = vld [vmem:[%s0 + $0xe0] sm:$0xff]
  %v46 = vld [vmem:[%s0 + $0xe8] sm:$0xff]
  %v47 = vld [vmem:[%s0 + $0xf0] sm:$0xff]
  %v48 = vld [vmem:[%s0 + $0xf8] sm:$0xff]
  %v49 = vld [vmem:[%s0 + $0x100] sm:$0xff]
  %v50 = vld [vmem:[%s0 + $0x108] sm:$0xff]
  %v51 = vld [vmem:[%s0 + $0x110] sm:$0xff]
  %v52 = vld [vmem:[%s0 + $0x118] sm:$0xff]
  %v53 = vld [vmem:[%s0 + $0x120] sm:$0xff]
  %v54 = vld [vmem:[%s0 + $0x128] sm:$0xff]
  %v55 = vld [vmem:[%s0 + $0x130] sm:$0xff]
  %v56 = vld [vmem:[%s0 + $0x138] sm:$0xff]
  %v57 = vld [vmem:[%s0 + $0x140] sm:$0xff]
  %v58 = vld [vmem:[%s0 + $0x148] sm:$0xff]
  %v59 = vld [vmem:[%s0 + $0x150] sm:$0xff]
  %v60 = vld [vmem:[%s0 + $0x158] sm:$0xff]
  %v61 = vld [vmem:[%s0 + $0x160] sm:$0xff]
  %v62 = vld [vmem:[%s0 + $0x168] sm:$0xff]
  %v63 = vld [vmem:[%s0 + $0x170] sm:$0xff]
  %v64 = vld [vmem:[%s0 + $0x178] sm:$0xff]
  %v65 = vld [vmem:[%s0 + $0x180] sm:$0xff]
  %v66 = vld [vmem:[%s0 + $0x188] sm:$0xff]
  %v67 = vld [vmem:[%s0 + $0x190] sm:$0xff]
  %v68 = vld [vmem:[%s0 + $0x198] sm:$0xff]
  %v69 = vld [vmem:[%s0 + $0x1a0] sm:$0xff]
  %v70 = vld [vmem:[%s0 + $0x1a8] sm:$0xff]
  %v71 = vld [vmem:[%s0 + $0x1b0] sm:$0xff]
  %v72 = vld [vmem:[%s0 + $0x1b8] sm:$0xff]
  %v73 = vld [vmem:[%s0 + $0x1c0] sm:$0xff]
  %v74 = vld [vmem:[%s0 + $0x1c8] sm:$0xff]
  %v75 = vld [vmem:[%s0 + $0x1d0] sm:$0xff]
  %v76 = vld [vmem:[%s0 + $0x1d8] sm:$0xff]
  %v77 = vld [vmem:[%s0 + $0x1e0] sm:$0xff]
  %v78 = vld [vmem:[%s0 + $0x1e8] sm:$0xff]
  %v79 = vld [vmem:[%s0 + $0x1f0] sm:$0xff]
  %v80 = vld [vmem:[%s0 + $0x1f8] sm:$0xff]
  %v81 = vld [vmem:[%s2] sm:$0x1]
  %v83 = vlaneseq
  %v84 = vshrl.u32 %v83, 7
  %v85 = vsub.s32 0, %v84
  %v86 = vrot.slane %v81, %v85
  %v88 = vmul.f32 %v17, %v86
  %v89 = vmul.f32 %v18, %v86
  %v90 = vmul.f32 %v19, %v86
  %v91 = vmul.f32 %v20, %v86
  %v92 = vmul.f32 %v21, %v86
  %v93 = vmul.f32 %v22, %v86
  %v94 = vmul.f32 %v23, %v86
  %v95 = vmul.f32 %v24, %v86
  %v96 = vmul.f32 %v25, %v86
  %v97 = vmul.f32 %v26, %v86
  %v98 = vmul.f32 %v27, %v86
  %v99 = vmul.f32 %v28, %v86
  %v100 = vmul.f32 %v29, %v86
  %v101 = vmul.f32 %v30, %v86
  %v102 = vmul.f32 %v31, %v86
  %v103 = vmul.f32 %v32, %v86
  %v104 = vmul.f32 %v33, %v86
  %v105 = vmul.f32 %v34, %v86
  %v106 = vmul.f32 %v35, %v86
  %v107 = vmul.f32 %v36, %v86
  %v108 = vmul.f32 %v37, %v86
  %v109 = vmul.f32 %v38, %v86
  %v110 = vmul.f32 %v39, %v86
  %v111 = vmul.f32 %v40, %v86
  %v112 = vmul.f32 %v41, %v86
  %v113 = vmul.f32 %v42, %v86
  %v114 = vmul.f32 %v43, %v86
  %v115 = vmul.f32 %v44, %v86
  %v116 = vmul.f32 %v45, %v86
  %v117 = vmul.f32 %v46, %v86
  %v118 = vmul.f32 %v47, %v86
  %v119 = vmul.f32 %v48, %v86
  %v120 = vmul.f32 %v49, %v86
  %v121 = vmul.f32 %v50, %v86
  %v122 = vmul.f32 %v51, %v86
  %v123 = vmul.f32 %v52, %v86
  %v124 = vmul.f32 %v53, %v86
  %v125 = vmul.f32 %v54, %v86
  %v126 = vmul.f32 %v55, %v86
  %v127 = vmul.f32 %v56, %v86
  %v128 = vmul.f32 %v57, %v86
  %v129 = vmul.f32 %v58, %v86
  %v130 = vmul.f32 %v59, %v86
  %v131 = vmul.f32 %v60, %v86
  %v132 = vmul.f32 %v61, %v86
  %v133 = vmul.f32 %v62, %v86
  %v134 = vmul.f32 %v63, %v86
  %v135 = vmul.f32 %v64, %v86
  %v136 = vmul.f32 %v65, %v86
  %v137 = vmul.f32 %v66, %v86
  %v138 = vmul.f32 %v67, %v86
  %v139 = vmul.f32 %v68, %v86
  %v140 = vmul.f32 %v69, %v86
  %v141 = vmul.f32 %v70, %v86
  %v142 = vmul.f32 %v71, %v86
  %v143 = vmul.f32 %v72, %v86
  %v144 = vmul.f32 %v73, %v86
  %v145 = vmul.f32 %v74, %v86
  %v146 = vmul.f32 %v75, %v86
  %v147 = vmul.f32 %v76, %v86
  %v148 = vmul.f32 %v77, %v86
  %v149 = vmul.f32 %v78, %v86
  %v150 = vmul.f32 %v79, %v86
  %v151 = vmul.f32 %v80, %v86
  %v152 = vld [vmem:[%s3] sm:$0x1]
  %v154 = vlaneseq
  %v155 = vshrl.u32 %v154, 7
  %v156 = vsub.s32 0, %v155
  %v157 = vrot.slane %v152, %v156
  %v159 = vadd.f32 %v88, %v157
  %v160 = vadd.f32 %v89, %v157
  %v161 = vadd.f32 %v90, %v157
  %v162 = vadd.f32 %v91, %v157
  %v163 = vadd.f32 %v92, %v157
  %v164 = vadd.f32 %v93, %v157
  %v165 = vadd.f32 %v94, %v157
  %v166 = vadd.f32 %v95, %v157
  %v167 = vadd.f32 %v96, %v157
  %v168 = vadd.f32 %v97, %v157
  %v169 = vadd.f32 %v98, %v157
  %v170 = vadd.f32 %v99, %v157
  %v171 = vadd.f32 %v100, %v157
  %v172 = vadd.f32 %v101, %v157
  %v173 = vadd.f32 %v102, %v157
  %v174 = vadd.f32 %v103, %v157
  %v175 = vadd.f32 %v104, %v157
  %v176 = vadd.f32 %v105, %v157
  %v177 = vadd.f32 %v106, %v157
  %v178 = vadd.f32 %v107, %v157
  %v179 = vadd.f32 %v108, %v157
  %v180 = vadd.f32 %v109, %v157
  %v181 = vadd.f32 %v110, %v157
  %v182 = vadd.f32 %v111, %v157
  %v183 = vadd.f32 %v112, %v157
  %v184 = vadd.f32 %v113, %v157
  %v185 = vadd.f32 %v114, %v157
  %v186 = vadd.f32 %v115, %v157
  %v187 = vadd.f32 %v116, %v157
  %v188 = vadd.f32 %v117, %v157
  %v189 = vadd.f32 %v118, %v157
  %v190 = vadd.f32 %v119, %v157
  %v191 = vadd.f32 %v120, %v157
  %v192 = vadd.f32 %v121, %v157
  %v193 = vadd.f32 %v122, %v157
  %v194 = vadd.f32 %v123, %v157
  %v195 = vadd.f32 %v124, %v157
  %v196 = vadd.f32 %v125, %v157
  %v197 = vadd.f32 %v126, %v157
  %v198 = vadd.f32 %v127, %v157
  %v199 = vadd.f32 %v128, %v157
  %v200 = vadd.f32 %v129, %v157
  %v201 = vadd.f32 %v130, %v157
  %v202 = vadd.f32 %v131, %v157
  %v203 = vadd.f32 %v132, %v157
  %v204 = vadd.f32 %v133, %v157
  %v205 = vadd.f32 %v134, %v157
  %v206 = vadd.f32 %v135, %v157
  %v207 = vadd.f32 %v136, %v157
  %v208 = vadd.f32 %v137, %v157
  %v209 = vadd.f32 %v138, %v157
  %v210 = vadd.f32 %v139, %v157
  %v211 = vadd.f32 %v140, %v157
  %v212 = vadd.f32 %v141, %v157
  %v213 = vadd.f32 %v142, %v157
  %v214 = vadd.f32 %v143, %v157
  %v215 = vadd.f32 %v144, %v157
  %v216 = vadd.f32 %v145, %v157
  %v217 = vadd.f32 %v146, %v157
  %v218 = vadd.f32 %v147, %v157
  %v219 = vadd.f32 %v148, %v157
  %v220 = vadd.f32 %v149, %v157
  %v221 = vadd.f32 %v150, %v157
  %v222 = vadd.f32 %v151, %v157
  %v223 = vld [vmem:[%s1] sm:$0xff]
  %v224 = vld [vmem:[%s1 + $0x8] sm:$0xff]
  %v225 = vld [vmem:[%s1 + $0x10] sm:$0xff]
  %v226 = vld [vmem:[%s1 + $0x18] sm:$0xff]
  %v227 = vld [vmem:[%s1 + $0x20] sm:$0xff]
  %v228 = vld [vmem:[%s1 + $0x28] sm:$0xff]
  %v229 = vld [vmem:[%s1 + $0x30] sm:$0xff]
  %v230 = vld [vmem:[%s1 + $0x38] sm:$0xff]
  %v231 = vld [vmem:[%s1 + $0x40] sm:$0xff]
  %v232 = vld [vmem:[%s1 + $0x48] sm:$0xff]
  %v233 = vld [vmem:[%s1 + $0x50] sm:$0xff]
  %v234 = vld [vmem:[%s1 + $0x58] sm:$0xff]
  %v235 = vld [vmem:[%s1 + $0x60] sm:$0xff]
  %v236 = vld [vmem:[%s1 + $0x68] sm:$0xff]
  %v237 = vld [vmem:[%s1 + $0x70] sm:$0xff]
  %v238 = vld [vmem:[%s1 + $0x78] sm:$0xff]
  %v239 = vld [vmem:[%s1 + $0x80] sm:$0xff]
  %v240 = vld [vmem:[%s1 + $0x88] sm:$0xff]
  %v241 = vld [vmem:[%s1 + $0x90] sm:$0xff]
  %v242 = vld [vmem:[%s1 + $0x98] sm:$0xff]
  %v243 = vld [vmem:[%s1 + $0xa0] sm:$0xff]
  %v244 = vld [vmem:[%s1 + $0xa8] sm:$0xff]
  %v245 = vld [vmem:[%s1 + $0xb0] sm:$0xff]
  %v246 = vld [vmem:[%s1 + $0xb8] sm:$0xff]
  %v247 = vld [vmem:[%s1 + $0xc0] sm:$0xff]
  %v248 = vld [vmem:[%s1 + $0xc8] sm:$0xff]
  %v249 = vld [vmem:[%s1 + $0xd0] sm:$0xff]
  %v250 = vld [vmem:[%s1 + $0xd8] sm:$0xff]
  %v251 = vld [vmem:[%s1 + $0xe0] sm:$0xff]
  %v252 = vld [vmem:[%s1 + $0xe8] sm:$0xff]
  %v253 = vld [vmem:[%s1 + $0xf0] sm:$0xff]
  %v254 = vld [vmem:[%s1 + $0xf8] sm:$0xff]
  %v255 = vld [vmem:[%s1 + $0x100] sm:$0xff]
  %v256 = vld [vmem:[%s1 + $0x108] sm:$0xff]
  %v257 = vld [vmem:[%s1 + $0x110] sm:$0xff]
  %v258 = vld [vmem:[%s1 + $0x118] sm:$0xff]
  %v259 = vld [vmem:[%s1 + $0x120] sm:$0xff]
  %v260 = vld [vmem:[%s1 + $0x128] sm:$0xff]
  %v261 = vld [vmem:[%s1 + $0x130] sm:$0xff]
  %v262 = vld [vmem:[%s1 + $0x138] sm:$0xff]
  %v263 = vld [vmem:[%s1 + $0x140] sm:$0xff]
  %v264 = vld [vmem:[%s1 + $0x148] sm:$0xff]
  %v265 = vld [vmem:[%s1 + $0x150] sm:$0xff]
  %v266 = vld [vmem:[%s1 + $0x158] sm:$0xff]
  %v267 = vld [vmem:[%s1 + $0x160] sm:$0xff]
  %v268 = vld [vmem:[%s1 + $0x168] sm:$0xff]
  %v269 = vld [vmem:[%s1 + $0x170] sm:$0xff]
  %v270 = vld [vmem:[%s1 + $0x178] sm:$0xff]
  %v271 = vld [vmem:[%s1 + $0x180] sm:$0xff]
  %v272 = vld [vmem:[%s1 + $0x188] sm:$0xff]
  %v273 = vld [vmem:[%s1 + $0x190] sm:$0xff]
  %v274 = vld [vmem:[%s1 + $0x198] sm:$0xff]
  %v275 = vld [vmem:[%s1 + $0x1a0] sm:$0xff]
  %v276 = vld [vmem:[%s1 + $0x1a8] sm:$0xff]
  %v277 = vld [vmem:[%s1 + $0x1b0] sm:$0xff]
  %v278 = vld [vmem:[%s1 + $0x1b8] sm:$0xff]
  %v279 = vld [vmem:[%s1 + $0x1c0] sm:$0xff]
  %v280 = vld [vmem:[%s1 + $0x1c8] sm:$0xff]
  %v281 = vld [vmem:[%s1 + $0x1d0] sm:$0xff]
  %v282 = vld [vmem:[%s1 + $0x1d8] sm:$0xff]
  %v283 = vld [vmem:[%s1 + $0x1e0] sm:$0xff]
  %v284 = vld [vmem:[%s1 + $0x1e8] sm:$0xff]
  %v285 = vld [vmem:[%s1 + $0x1f0] sm:$0xff]
  %v286 = vld [vmem:[%s1 + $0x1f8] sm:$0xff]
  %v287 = vadd.f32 %v159, %v223
  %v288 = vadd.f32 %v160, %v224
  %v289 = vadd.f32 %v161, %v225
  %v290 = vadd.f32 %v162, %v226
  %v291 = vadd.f32 %v163, %v227
  %v292 = vadd.f32 %v164, %v228
  %v293 = vadd.f32 %v165, %v229
  %v294 = vadd.f32 %v166, %v230
  %v295 = vadd.f32 %v167, %v231
  %v296 = vadd.f32 %v168, %v232
  %v297 = vadd.f32 %v169, %v233
  %v298 = vadd.f32 %v170, %v234
  %v299 = vadd.f32 %v171, %v235
  %v300 = vadd.f32 %v172, %v236
  %v301 = vadd.f32 %v173, %v237
  %v302 = vadd.f32 %v174, %v238
  %v303 = vadd.f32 %v175, %v239
  %v304 = vadd.f32 %v176, %v240
  %v305 = vadd.f32 %v177, %v241
  %v306 = vadd.f32 %v178, %v242
  %v307 = vadd.f32 %v179, %v243
  %v308 = vadd.f32 %v180, %v244
  %v309 = vadd.f32 %v181, %v245
  %v310 = vadd.f32 %v182, %v246
  %v311 = vadd.f32 %v183, %v247
  %v312 = vadd.f32 %v184, %v248
  %v313 = vadd.f32 %v185, %v249
  %v314 = vadd.f32 %v186, %v250
  %v315 = vadd.f32 %v187, %v251
  %v316 = vadd.f32 %v188, %v252
  %v317 = vadd.f32 %v189, %v253
  %v318 = vadd.f32 %v190, %v254
  %v319 = vadd.f32 %v191, %v255
  %v320 = vadd.f32 %v192, %v256
  %v321 = vadd.f32 %v193, %v257
  %v322 = vadd.f32 %v194, %v258
  %v323 = vadd.f32 %v195, %v259
  %v324 = vadd.f32 %v196, %v260
  %v325 = vadd.f32 %v197, %v261
  %v326 = vadd.f32 %v198, %v262
  %v327 = vadd.f32 %v199, %v263
  %v328 = vadd.f32 %v200, %v264
  %v329 = vadd.f32 %v201, %v265
  %v330 = vadd.f32 %v202, %v266
  %v331 = vadd.f32 %v203, %v267
  %v332 = vadd.f32 %v204, %v268
  %v333 = vadd.f32 %v205, %v269
  %v334 = vadd.f32 %v206, %v270
  %v335 = vadd.f32 %v207, %v271
  %v336 = vadd.f32 %v208, %v272
  %v337 = vadd.f32 %v209, %v273
  %v338 = vadd.f32 %v210, %v274
  %v339 = vadd.f32 %v211, %v275
  %v340 = vadd.f32 %v212, %v276
  %v341 = vadd.f32 %v213, %v277
  %v342 = vadd.f32 %v214, %v278
  %v343 = vadd.f32 %v215, %v279
  %v344 = vadd.f32 %v216, %v280
  %v345 = vadd.f32 %v217, %v281
  %v346 = vadd.f32 %v218, %v282
  %v347 = vadd.f32 %v219, %v283
  %v348 = vadd.f32 %v220, %v284
  %v349 = vadd.f32 %v221, %v285
  %v350 = vadd.f32 %v222, %v286
  %v351 = vmax.f32 %v287, 0.0
  %v352 = vmax.f32 %v288, 0.0
  %v353 = vmax.f32 %v289, 0.0
  %v354 = vmax.f32 %v290, 0.0
  %v355 = vmax.f32 %v291, 0.0
  %v356 = vmax.f32 %v292, 0.0
  %v357 = vmax.f32 %v293, 0.0
  %v358 = vmax.f32 %v294, 0.0
  %v359 = vmax.f32 %v295, 0.0
  %v360 = vmax.f32 %v296, 0.0
  %v361 = vmax.f32 %v297, 0.0
  %v362 = vmax.f32 %v298, 0.0
  %v363 = vmax.f32 %v299, 0.0
  %v364 = vmax.f32 %v300, 0.0
  %v365 = vmax.f32 %v301, 0.0
  %v366 = vmax.f32 %v302, 0.0
  %v367 = vmax.f32 %v303, 0.0
  %v368 = vmax.f32 %v304, 0.0
  %v369 = vmax.f32 %v305, 0.0
  %v370 = vmax.f32 %v306, 0.0
  %v371 = vmax.f32 %v307, 0.0
  %v372 = vmax.f32 %v308, 0.0
  %v373 = vmax.f32 %v309, 0.0
  %v374 = vmax.f32 %v310, 0.0
  %v375 = vmax.f32 %v311, 0.0
  %v376 = vmax.f32 %v312, 0.0
  %v377 = vmax.f32 %v313, 0.0
  %v378 = vmax.f32 %v314, 0.0
  %v379 = vmax.f32 %v315, 0.0
  %v380 = vmax.f32 %v316, 0.0
  %v381 = vmax.f32 %v317, 0.0
  %v382 = vmax.f32 %v318, 0.0
  %v383 = vmax.f32 %v319, 0.0
  %v384 = vmax.f32 %v320, 0.0
  %v385 = vmax.f32 %v321, 0.0
  %v386 = vmax.f32 %v322, 0.0
  %v387 = vmax.f32 %v323, 0.0
  %v388 = vmax.f32 %v324, 0.0
  %v389 = vmax.f32 %v325, 0.0
  %v390 = vmax.f32 %v326, 0.0
  %v391 = vmax.f32 %v327, 0.0
  %v392 = vmax.f32 %v328, 0.0
  %v393 = vmax.f32 %v329, 0.0
  %v394 = vmax.f32 %v330, 0.0
  %v395 = vmax.f32 %v331, 0.0
  %v396 = vmax.f32 %v332, 0.0
  %v397 = vmax.f32 %v333, 0.0
  %v398 = vmax.f32 %v334, 0.0
  %v399 = vmax.f32 %v335, 0.0
  %v400 = vmax.f32 %v336, 0.0
  %v401 = vmax.f32 %v337, 0.0
  %v402 = vmax.f32 %v338, 0.0
  %v403 = vmax.f32 %v339, 0.0
  %v404 = vmax.f32 %v340, 0.0
  %v405 = vmax.f32 %v341, 0.0
  %v406 = vmax.f32 %v342, 0.0
  %v407 = vmax.f32 %v343, 0.0
  %v408 = vmax.f32 %v344, 0.0
  %v409 = vmax.f32 %v345, 0.0
  %v410 = vmax.f32 %v346, 0.0
  %v411 = vmax.f32 %v347, 0.0
  %v412 = vmax.f32 %v348, 0.0
  %v413 = vmax.f32 %v349, 0.0
  %v414 = vmax.f32 %v350, 0.0
  %415 = vst [vmem:[%s4] sm:$0xff] %v351
  %416 = vst [vmem:[%s4 + $0x8] sm:$0xff] %v352
  %417 = vst [vmem:[%s4 + $0x10] sm:$0xff] %v353
  %418 = vst [vmem:[%s4 + $0x18] sm:$0xff] %v354
  %419 = vst [vmem:[%s4 + $0x20] sm:$0xff] %v355
  %420 = vst [vmem:[%s4 + $0x28] sm:$0xff] %v356
  %421 = vst [vmem:[%s4 + $0x30] sm:$0xff] %v357
  %422 = vst [vmem:[%s4 + $0x38] sm:$0xff] %v358
  %423 = vst [vmem:[%s4 + $0x40] sm:$0xff] %v359
  %424 = vst [vmem:[%s4 + $0x48] sm:$0xff] %v360
  %425 = vst [vmem:[%s4 + $0x50] sm:$0xff] %v361
  %426 = vst [vmem:[%s4 + $0x58] sm:$0xff] %v362
  %427 = vst [vmem:[%s4 + $0x60] sm:$0xff] %v363
  %428 = vst [vmem:[%s4 + $0x68] sm:$0xff] %v364
  %429 = vst [vmem:[%s4 + $0x70] sm:$0xff] %v365
  %430 = vst [vmem:[%s4 + $0x78] sm:$0xff] %v366
  %431 = vst [vmem:[%s4 + $0x80] sm:$0xff] %v367
  %432 = vst [vmem:[%s4 + $0x88] sm:$0xff] %v368
  %433 = vst [vmem:[%s4 + $0x90] sm:$0xff] %v369
  %434 = vst [vmem:[%s4 + $0x98] sm:$0xff] %v370
  %435 = vst [vmem:[%s4 + $0xa0] sm:$0xff] %v371
  %436 = vst [vmem:[%s4 + $0xa8] sm:$0xff] %v372
  %437 = vst [vmem:[%s4 + $0xb0] sm:$0xff] %v373
  %438 = vst [vmem:[%s4 + $0xb8] sm:$0xff] %v374
  %439 = vst [vmem:[%s4 + $0xc0] sm:$0xff] %v375
  %440 = vst [vmem:[%s4 + $0xc8] sm:$0xff] %v376
  %441 = vst [vmem:[%s4 + $0xd0] sm:$0xff] %v377
  %442 = vst [vmem:[%s4 + $0xd8] sm:$0xff] %v378
  %443 = vst [vmem:[%s4 + $0xe0] sm:$0xff] %v379
  %444 = vst [vmem:[%s4 + $0xe8] sm:$0xff] %v380
  %445 = vst [vmem:[%s4 + $0xf0] sm:$0xff] %v381
  %446 = vst [vmem:[%s4 + $0xf8] sm:$0xff] %v382
  %447 = vst [vmem:[%s4 + $0x100] sm:$0xff] %v383
  %448 = vst [vmem:[%s4 + $0x108] sm:$0xff] %v384
  %449 = vst [vmem:[%s4 + $0x110] sm:$0xff] %v385
  %450 = vst [vmem:[%s4 + $0x118] sm:$0xff] %v386
  %451 = vst [vmem:[%s4 + $0x120] sm:$0xff] %v387
  %452 = vst [vmem:[%s4 + $0x128] sm:$0xff] %v388
  %453 = vst [vmem:[%s4 + $0x130] sm:$0xff] %v389
  %454 = vst [vmem:[%s4 + $0x138] sm:$0xff] %v390
  %455 = vst [vmem:[%s4 + $0x140] sm:$0xff] %v391
  %456 = vst [vmem:[%s4 + $0x148] sm:$0xff] %v392
  %457 = vst [vmem:[%s4 + $0x150] sm:$0xff] %v393
  %458 = vst [vmem:[%s4 + $0x158] sm:$0xff] %v394
  %459 = vst [vmem:[%s4 + $0x160] sm:$0xff] %v395
  %460 = vst [vmem:[%s4 + $0x168] sm:$0xff] %v396
  %461 = vst [vmem:[%s4 + $0x170] sm:$0xff] %v397
  %462 = vst [vmem:[%s4 + $0x178] sm:$0xff] %v398
  %463 = vst [vmem:[%s4 + $0x180] sm:$0xff] %v399
  %464 = vst [vmem:[%s4 + $0x188] sm:$0xff] %v400
  %465 = vst [vmem:[%s4 + $0x190] sm:$0xff] %v401
  %466 = vst [vmem:[%s4 + $0x198] sm:$0xff] %v402
  %467 = vst [vmem:[%s4 + $0x1a0] sm:$0xff] %v403
  %468 = vst [vmem:[%s4 + $0x1a8] sm:$0xff] %v404
  %469 = vst [vmem:[%s4 + $0x1b0] sm:$0xff] %v405
  %470 = vst [vmem:[%s4 + $0x1b8] sm:$0xff] %v406
  %471 = vst [vmem:[%s4 + $0x1c0] sm:$0xff] %v407
  %472 = vst [vmem:[%s4 + $0x1c8] sm:$0xff] %v408
  %473 = vst [vmem:[%s4 + $0x1d0] sm:$0xff] %v409
  %474 = vst [vmem:[%s4 + $0x1d8] sm:$0xff] %v410
  %475 = vst [vmem:[%s4 + $0x1e0] sm:$0xff] %v411
  %476 = vst [vmem:[%s4 + $0x1e8] sm:$0xff] %v412
  %477 = vst [vmem:[%s4 + $0x1f0] sm:$0xff] %v413
  %478 = vst [vmem:[%s4 + $0x1f8] sm:$0xff] %v414
  // Predicated region
  $region18: #{residual_block_forward.5} parent=0 // pred_check
    _
  $region19: #{residual_block_forward.5} parent=0 // pred_check_branch
    %480 = sbr.rel (0) target = $region21
  $region20: #{residual_block_forward.5} parent=0 // pred_region
    _
  $region21: #{residual_block_forward.5} parent=0 // pred_fallthru
    _
  // Predicated region
  $region22: #{residual_block_forward.5} parent=0 // pred_check
    _
  $region23: #{residual_block_forward.5} parent=0 // pred_check_branch
    %482 = sbr.rel (0) target = $region25
  $region24: #{residual_block_forward.5} parent=0 // pred_region
    _
  $region25: #{residual_block_forward.5} parent=0 // pred_fallthru
    _

// kernel: residual_block_forward.3
$region0: #{residual_block_forward.3}
  #allocation0 [shape = 'u32[]', space=smem, size = 0x4, offset = 0x4, fixed_abs, tag = 'smem constant byte address 0x4 - core index']
  #allocation1 [shape = 'u32[144,128]{1,0:T(1,128)}', space=vmem, size = 0x12000, scoped, tag = 'internal scratch']
  #allocation2 [shape = 'f32[16,16,1152]{2,1,0:T(8,128)}', space=vmem, size = 0x120000, scoped, tag = 'scratch operand']
  %s0 = inlined_call_operand.vmem [shape: f32[2,16,16,128], index: 0, kind: input, shape index: {}]
  %s1 = inlined_call_operand.vmem [shape: f32[1152,128], index: 1, kind: input, shape index: {}]
  %s2 = inlined_call_operand.vmem [shape: f32[2,16,16,128], index: 2, kind: output, shape index: {0}]
  %s3 = inlined_call_operand.vmem [shape: f32[2,8,128], index: 3, kind: output, shape index: {1}]
  %4 = xla_tuple %s2, %s3
  %s5 = sld [smem:[#allocation0]]
  $region49: #{residual_block_forward.3} parent=0
    _
  %s7 = ssub.s32 1, %s5
  %s8 = scalar_select 0, %s7, %s5
  loop: start=0, step=1, limit=4
  $region2: #{residual_block_forward.3} parent=0 // loop_pre_header
    _
  $region3: #{residual_block_forward.3} parent=0 // loop_header
    %s10 = sphi 0, %s14
    %p11 = scmp.ge.s32.totalorder %s10, 4
    %s20 = sphi 0, %s22
    %s23 = sphi 0, %s20
    %s24 = sphi 0, %s23
    %s40 = sphi 0, %s24
    %s44 = sphi 0, %s44
    %s46 = sphi 0, %s44
    %s47 = sphi 0, %s46
    %s61 = sphi 0, %s47
    %s67 = sphi 0, %s69
    %s70 = sphi 0, %s67
    %s71 = sphi 0, %s70
    %s87 = sphi 0, %s71
    %s93 = sphi 0, %s95
    %s96 = sphi 0, %s93
    %s97 = sphi 0, %s96
    %s113 = sphi 0, %s97
  $region4: #{residual_block_forward.3} parent=0 // loop_header_branch
    %13 = sbr.rel (%p11) target = $region8
  $region5: #{residual_block_forward.3} parent=0 // loop_body
    %s15 = ssub.s32 %s10, 1
    %s16 = ssub.s32 %s10, 2
    %s17 = sadd.s32 %s10, 1
    %s18 = ssub.s32 %s10, %s17
    %p19 = scmp.eq.s32.totalorder %s18, 0
    %s21 = sadd.s32 %s20, 1
    %s22 = scalar_select %p19, %s20, %s21
    %p25 = pneg %p19
    %p26 = scmp.eq.s32.totalorder %s10, 1
    %p27 = por %p25, %p26
    %p28 = scmp.ne.s32.totalorder %s20, %s23
    %p29 = scmp.eq.s32.totalorder %s10, 0
    %p30 = por %p28, %p29
    %p31 = scmp.ne.s32.totalorder %s20, %s23
    %p32 = scmp.eq.s32.totalorder %s15, 1
    %p33 = por %p31, %p32
    %p34 = scmp.ne.s32.totalorder %s23, %s24
    %p35 = scmp.eq.s32.totalorder %s15, 0
    %p36 = por %p34, %p35
    %p37 = scmp.ne.s32.totalorder %s23, %s24
    %p38 = scmp.eq.s32.totalorder %s16, 1
    %p39 = por %p37, %p38
    %p41 = scmp.ne.s32.totalorder %s24, %s40
    %p42 = scmp.eq.s32.totalorder %s16, 0
    %p43 = por %p41, %p42
    %s45 = sadd.s32 %s44, 1
    %p48 = scmp.eq.s32.totalorder %s10, 1
    %p49 = scmp.ne.s32.totalorder %s44, %s46
    %p50 = scmp.eq.s32.totalorder %s10, 0
    %p51 = por %p49, %p50
    %p52 = scmp.ne.s32.totalorder %s44, %s46
    %p53 = scmp.eq.s32.totalorder %s15, 1
    %p54 = por %p52, %p53
    %p55 = scmp.ne.s32.totalorder %s46, %s47
    %p56 = scmp.eq.s32.totalorder %s15, 0
    %p57 = por %p55, %p56
    %p58 = scmp.ne.s32.totalorder %s46, %s47
    %p59 = scmp.eq.s32.totalorder %s16, 1
    %p60 = por %p58, %p59
    %p62 = scmp.ne.s32.totalorder %s47, %s61
    %p63 = scmp.eq.s32.totalorder %s16, 0
    %p64 = por %p62, %p63
    %s65 = ssub.s32 %s10, %s17
    %p66 = scmp.eq.s32.totalorder %s65, 0
    %s68 = sadd.s32 %s67, 1
    %s69 = scalar_select %p66, %s67, %s68
    %p72 = pneg %p66
    %p73 = scmp.eq.s32.totalorder %s10, 1
    %p74 = por %p72, %p73
    %p75 = scmp.ne.s32.totalorder %s67, %s70
    %p76 = scmp.eq.s32.totalorder %s10, 0
    %p77 = por %p75, %p76
    %p78 = scmp.ne.s32.totalorder %s67, %s70
    %p79 = scmp.eq.s32.totalorder %s15, 1
    %p80 = por %p78, %p79
    %p81 = scmp.ne.s32.totalorder %s70, %s71
    %p82 = scmp.eq.s32.totalorder %s15, 0
    %p83 = por %p81, %p82
    %p84 = scmp.ne.s32.totalorder %s70, %s71
    %p85 = scmp.eq.s32.totalorder %s16, 1
    %p86 = por %p84, %p85
    %p88 = scmp.ne.s32.totalorder %s71, %s87
    %p89 = scmp.eq.s32.totalorder %s16, 0
    %p90 = por %p88, %p89
    %s91 = ssub.s32 %s10, %s17
    %p92 = scmp.eq.s32.totalorder %s91, 0
    %s94 = sadd.s32 %s93, 1
    %s95 = scalar_select %p92, %s93, %s94
    %p98 = pneg %p92
    %p99 = scmp.eq.s32.totalorder %s10, 1
    %p100 = por %p98, %p99
    %p101 = scmp.ne.s32.totalorder %s93, %s96
    %p102 = scmp.eq.s32.totalorder %s10, 0
    %p103 = por %p101, %p102
    %p104 = scmp.ne.s32.totalorder %s93, %s96
    %p105 = scmp.eq.s32.totalorder %s15, 1
    %p106 = por %p104, %p105
    %p107 = scmp.ne.s32.totalorder %s96, %s97
    %p108 = scmp.eq.s32.totalorder %s15, 0
    %p109 = por %p107, %p108
    %p110 = scmp.ne.s32.totalorder %s96, %s97
    %p111 = scmp.eq.s32.totalorder %s16, 1
    %p112 = por %p110, %p111
    %p114 = scmp.ne.s32.totalorder %s97, %s113
    %p115 = scmp.eq.s32.totalorder %s16, 0
    %p116 = por %p114, %p115
    %p117 = scmp.le.s32.totalorder 1, %s10
    %p118 = scmp.lt.s32.totalorder %s10, 3
    %p119 = pnand %p117, %p118
    %p120 = pneg %p119
    // Predicated region
    $region9: #{residual_block_forward.3} parent=5 // pred_check
      _
    $region10: #{residual_block_forward.3} parent=5 // pred_check_branch
      %122 = sbr.rel (%p119) target = $region12
    $region11: #{residual_block_forward.3} parent=5 // pred_region
      %s123 = ssub.s32 %s10, 1
      // Predicated region
      $region13: #{residual_block_forward.3} parent=11 // pred_check
        %p124 = pneg %p57
      $region14: #{residual_block_forward.3} parent=11 // pred_check_branch
        %126 = sbr.rel (%p124) target = $region16
      $region15: #{residual_block_forward.3} parent=11 // pred_region
        _
      $region16: #{residual_block_forward.3} parent=11 // pred_fallthru
        _
    $region12: #{residual_block_forward.3} parent=5 // pred_fallthru
      _
    %p127 = scmp.lt.s32.totalorder %s10, 2
    // Predicated region
    $region17: #{residual_block_forward.3} parent=5 // pred_check
      %p128 = pneg %p127
    $region18: #{residual_block_forward.3} parent=5 // pred_check_branch
      %130 = sbr.rel (%p128) target = $region20
    $region19: #{residual_block_forward.3} parent=5 // pred_region
      // Predicated region
      $region21: #{residual_block_forward.3} parent=19 // pred_check
        %p131 = pneg %p30
      $region22: #{residual_block_forward.3} parent=19 // pred_check_branch
        %133 = sbr.rel (%p131) target = $region24
      $region23: #{residual_block_forward.3} parent=19 // pred_region
        %p134 = scmp.lt.s32.totalorder %s10, 1
        %s135 = scalar_select %p134, %s10, 1
        %s136 = smul.addr %s135, 32
        %s137 = smul.addr %s136, 8
        %s138 = scalar_lea.vmem %s0, %s137
      $region24: #{residual_block_forward.3} parent=19 // pred_fallthru
        _
    $region20: #{residual_block_forward.3} parent=5 // pred_fallthru
      _
    %p139 = scmp.le.s32.totalorder 1, %s10
    %p140 = scmp.lt.s32.totalorder %s10, 3
    %p141 = pnand %p139, %p140
    %p142 = pneg %p141
    // Predicated region
    $region25: #{residual_block_forward.3} parent=5 // pred_check
      _
    $region26: #{residual_block_forward.3} parent=5 // pred_check_branch
      %144 = sbr.rel (%p141) target = $region28
    $region27: #{residual_block_forward.3} parent=5 // pred_region
      %s145 = ssub.s32 %s10, 1
      %p146 = scmp.lt.s32.totalorder %s15, 1
      %s147 = scalar_select %p146, %s15, 1
      %s148 = smul.addr %s147, 32
      %s149 = smul.addr %s148, 8
      %s150 = scalar_lea.vmem %s0, %s149
      %p151 = pneg %p36
      %p152 = pneg %p33
      %p153 = pneg %p57
      %p154 = pneg %p54
      %p155 = pneg %p83
      %p156 = pneg %p80
      %p157 = scmp.lt.s32.totalorder %s15, 1
      %s158 = scalar_select %p157, %s15, 1
      %s159 = smul.addr %s158, 32
      %s160 = smul.addr %s159, 8
      %s161 = scalar_lea.vmem %s2, %s160
      %p162 = pneg %p109
      %p163 = pneg %p106
      %p164 = scmp.lt.s32.totalorder %s15, 1
      %s165 = scalar_select %p164, %s15, 1
      %s166 = smul.addr %s165, 8
      %s167 = scalar_lea.vmem %s3, %s166
      %p168 = scmp.lt.s32.totalorder %s15, 1
      %s169 = scalar_select %p168, %s15, 1
      %s170 = smul.addr %s169, 32
      %s171 = smul.addr %s170, 8
      %s172 = scalar_lea.vmem %s0, %s171
      %p173 = scmp.lt.s32.totalorder %s15, 1
      %s174 = scalar_select %p173, %s15, 1
      %s175 = smul.addr %s174, 32
      %s176 = smul.addr %s175, 8
      %s177 = scalar_lea.vmem %s2, %s176
      %p178 = scmp.lt.s32.totalorder %s15, 1
      %s179 = scalar_select %p178, %s15, 1
      %s180 = smul.addr %s179, 8
      %s181 = scalar_lea.vmem %s3, %s180
      %182 = vst [vmem:[#allocation2] sm:$0xff] 0.0
      %183 = vst [vmem:[#allocation2 + $0x48] sm:$0xff] 0.0
      %184 = vst [vmem:[#allocation2] sm:$0x1] 0.0
      %185 = vst [vmem:[#allocation2 + $0x90] sm:$0x1] 0.0
      %186 = vst [vmem:[#allocation2 + $0x120] sm:$0x1] 0.0
      %187 = vst [vmem:[#allocation2 + $0x1b0] sm:$0x1] 0.0
      %188 = vst [vmem:[#allocation2 + $0x240] sm:$0x1] 0.0
      %189 = vst [vmem:[#allocation2 + $0x2d0] sm:$0x1] 0.0
      %190 = vst [vmem:[#allocation2 + $0x360] sm:$0x1] 0.0
      %191 = vst [vmem:[#allocation2 + $0x3f0] sm:$0x1] 0.0
      %192 = vst [vmem:[#allocation2 + $0x480] sm:$0x1] 0.0
      %193 = vst [vmem:[#allocation2 + $0x510] sm:$0x1] 0.0
      %194 = vst [vmem:[#allocation2 + $0x5a0] sm:$0x1] 0.0
      %195 = vst [vmem:[#allocation2 + $0x630] sm:$0x1] 0.0
      %196 = vst [vmem:[#allocation2 + $0x6c0] sm:$0x1] 0.0
      %197 = vst [vmem:[#allocation2 + $0x750] sm:$0x1] 0.0
      %198 = vst [vmem:[#allocation2 + $0x7e0] sm:$0x1] 0.0
      %199 = vst [vmem:[#allocation2 + $0x870] sm:$0x1] 0.0
      %v200 = vld [vmem:[%s172] sm:$0xff]
      %v201 = vld [vmem:[%s172 + $0x8] sm:$0x7f]
      %v202 = vld [vmem:[%s172 + $0x10] sm:$0xff]
      %v203 = vld [vmem:[%s172 + $0x18] sm:$0x7f]
      %v204 = vld [vmem:[%s172 + $0x20] sm:$0xff]
      %v205 = vld [vmem:[%s172 + $0x28] sm:$0x7f]
      %v206 = vld [vmem:[%s172 + $0x30] sm:$0xff]
      %v207 = vld [vmem:[%s172 + $0x38] sm:$0x7f]
      %v208 = vld [vmem:[%s172 + $0x40] sm:$0xff]
      %v209 = vld [vmem:[%s172 + $0x48] sm:$0x7f]
      %v210 = vld [vmem:[%s172 + $0x50] sm:$0xff]
      %v211 = vld [vmem:[%s172 + $0x58] sm:$0x7f]
      %v212 = vld [vmem:[%s172 + $0x60] sm:$0xff]
      %v213 = vld [vmem:[%s172 + $0x68] sm:$0x7f]
      %v214 = vld [vmem:[%s172 + $0x70] sm:$0xff]
      %v215 = vld [vmem:[%s172 + $0x78] sm:$0x7f]
      %v216 = vld [vmem:[%s172 + $0x80] sm:$0xff]
      %v217 = vld [vmem:[%s172 + $0x88] sm:$0x7f]
      %v218 = vld [vmem:[%s172 + $0x90] sm:$0xff]
      %v219 = vld [vmem:[%s172 + $0x98] sm:$0x7f]
      %v220 = vld [vmem:[%s172 + $0xa0] sm:$0xff]
      %v221 = vld [vmem:[%s172 + $0xa8] sm:$0x7f]
      %v222 = vld [vmem:[%s172 + $0xb0] sm:$0xff]
      %v223 = vld [vmem:[%s172 + $0xb8] sm:$0x7f]
      %v224 = vld [vmem:[%s172 + $0xc0] sm:$0xff]
      %v225 = vld [vmem:[%s172 + $0xc8] sm:$0x7f]
      %v226 = vld [vmem:[%s172 + $0xd0] sm:$0xff]
      %v227 = vld [vmem:[%s172 + $0xd8] sm:$0x7f]
      %v228 = vld [vmem:[%s172 + $0xe0] sm:$0xff]
      %v229 = vld [vmem:[%s172 + $0xe8] sm:$0x7f]
      %vm260 = vcmask 1040384
      %v261 = vrot.slane %v200, 7
      %v262 = vrot.slane %v201, 7
      %v263 = vsel %vm260, %v261, %v262
      %v264 = vrot.slane %v202, 7
      %v265 = vrot.slane %v203, 7
      %v266 = vsel %vm260, %v264, %v265
      %v267 = vrot.slane %v204, 7
      %v268 = vrot.slane %v205, 7
      %v269 = vsel %vm260, %v267, %v268
      %v270 = vrot.slane %v206, 7
      %v271 = vrot.slane %v207, 7
      %v272 = vsel %vm260, %v270, %v271
      %v273 = vrot.slane %v208, 7
      %v274 = vrot.slane %v209, 7
      %v275 = vsel %vm260, %v273, %v274
      %v276 = vrot.slane %v210, 7
      %v277 = vrot.slane %v211, 7
      %v278 = vsel %vm260, %v276, %v277
      %v279 = vrot.slane %v212, 7
      %v280 = vrot.slane %v213, 7
      %v281 = vsel %vm260, %v279, %v280
      %v282 = vrot.slane %v214, 7
      %v283 = vrot.slane %v215, 7
      %v284 = vsel %vm260, %v282, %v283
      %v285 = vrot.slane %v216, 7
      %v286 = vrot.slane %v217, 7
      %v287 = vsel %vm260, %v285, %v286
      %v288 = vrot.slane %v218, 7
      %v289 = vrot.slane %v219, 7
      %v290 = vsel %vm260, %v288, %v289
      %v291 = vrot.slane %v220, 7
      %v292 = vrot.slane %v221, 7
      %v293 = vsel %vm260, %v291, %v292
      %v294 = vrot.slane %v222, 7
      %v295 = vrot.slane %v223, 7
      %v296 = vsel %vm260, %v294, %v295
      %v297 = vrot.slane %v224, 7
      %v298 = vrot.slane %v225, 7
      %v299 = vsel %vm260, %v297, %v298
      %v300 = vrot.slane %v226, 7
      %v301 = vrot.slane %v227, 7
      %v302 = vsel %vm260, %v300, %v301
      %v303 = vrot.slane %v228, 7
      %v304 = vrot.slane %v229, 7
      %v305 = vsel %vm260, %v303, %v304
      %s336 = scalar_lea.vmem [#allocation2], 144
      %337 = vst [vmem:[%s336] sm:$0xfe] %v261
      %338 = vst [vmem:[%s336 + $0x48] sm:$0xff] %v263
      %339 = vst [vmem:[%s336 + $0x90] sm:$0xfe] %v264
      %340 = vst [vmem:[%s336 + $0xd8] sm:$0xff] %v266
      %341 = vst [vmem:[%s336 + $0x120] sm:$0xfe] %v267
      %342 = vst [vmem:[%s336 + $0x168] sm:$0xff] %v269
      %343 = vst [vmem:[%s336 + $0x1b0] sm:$0xfe] %v270
      %344 = vst [vmem:[%s336 + $0x1f8] sm:$0xff] %v272
      %345 = vst [vmem:[%s336 + $0x240] sm:$0xfe] %v273
      %346 = vst [vmem:[%s336 + $0x288] sm:$0xff] %v275
      %347 = vst [vmem:[%s336 + $0x2d0] sm:$0xfe] %v276
      %348 = vst [vmem:[%s336 + $0x318] sm:$0xff] %v278
      %349 = vst [vmem:[%s336 + $0x360] sm:$0xfe] %v279
      %350 = vst [vmem:[%s336 + $0x3a8] sm:$0xff] %v281
      %351 = vst [vmem:[%s336 + $0x3f0] sm:$0xfe] %v282
      %352 = vst [vmem:[%s336 + $0x438] sm:$0xff] %v284
      %353 = vst [vmem:[%s336 + $0x480] sm:$0xfe] %v285
      %354 = vst [vmem:[%s336 + $0x4c8] sm:$0xff] %v287
      %355 = vst [vmem:[%s336 + $0x510] sm:$0xfe] %v288
      %356 = vst [vmem:[%s336 + $0x558] sm:$0xff] %v290
      %357 = vst [vmem:[%s336 + $0x5a0] sm:$0xfe] %v291
      %358 = vst [vmem:[%s336 + $0x5e8] sm:$0xff] %v293
      %359 = vst [vmem:[%s336 + $0x630] sm:$0xfe] %v294
      %360 = vst [vmem:[%s336 + $0x678] sm:$0xff] %v296
      %361 = vst [vmem:[%s336 + $0x6c0] sm:$0xfe] %v297
      %362 = vst [vmem:[%s336 + $0x708] sm:$0xff] %v299
      %363 = vst [vmem:[%s336 + $0x750] sm:$0xfe] %v300
      %364 = vst [vmem:[%s336 + $0x798] sm:$0xff] %v302
      %365 = vst [vmem:[%s336 + $0x7e0] sm:$0xfe] %v303
      %366 = vst [vmem:[%s336 + $0x828] sm:$0xff] %v305
      %367 = vst [vmem:[#allocation2 + $0x8] sm:$0xff] 0.0
      %368 = vst [vmem:[#allocation2 + $0x50] sm:$0xff] 0.0
      %v369 = vld [vmem:[%s172] sm:$0xff]
      %v370 = vld [vmem:[%s172 + $0x8] sm:$0xff]
      %v371 = vld [vmem:[%s172 + $0x10] sm:$0xff]
      %v372 = vld [vmem:[%s172 + $0x18] sm:$0xff]
      %v373 = vld [vmem:[%s172 + $0x20] sm:$0xff]
      %v374 = vld [vmem:[%s172 + $0x28] sm:$0xff]
      %v375 = vld [vmem:[%s172 + $0x30] sm:$0xff]
      %v376 = vld [vmem:[%s172 + $0x38] sm:$0xff]
      %v377 = vld [vmem:[%s172 + $0x40] sm:$0xff]
      %v378 = vld [vmem:[%s172 + $0x48] sm:$0xff]
      %v379 = vld [vmem:[%s172 + $0x50] sm:$0xff]
      %v380 = vld [vmem:[%s172 + $0x58] sm:$0xff]
      %v381 = vld [vmem:[%s172 + $0x60] sm:$0xff]
      %v382 = vld [vmem:[%s172 + $0x68] sm:$0xff]
      %v383 = vld [vmem:[%s172 + $0x70] sm:$0xff]
      %v384 = vld [vmem:[%s172 + $0x78] sm:$0xff]
      %v385 = vld [vmem:[%s172 + $0x80] sm:$0xff]
      %v386 = vld [vmem:[%s172 + $0x88] sm:$0xff]
      %v387 = vld [vmem:[%s172 + $0x90] sm:$0xff]
      %v388 = vld [vmem:[%s172 + $0x98] sm:$0xff]
      %v389 = vld [vmem:[%s172 + $0xa0] sm:$0xff]
      %v390 = vld [vmem:[%s172 + $0xa8] sm:$0xff]
      %v391 = vld [vmem:[%s172 + $0xb0] sm:$0xff]
      %v392 = vld [vmem:[%s172 + $0xb8] sm:$0xff]
      %v393 = vld [vmem:[%s172 + $0xc0] sm:$0xff]
      %v394 = vld [vmem:[%s172 + $0xc8] sm:$0xff]
      %v395 = vld [vmem:[%s172 + $0xd0] sm:$0xff]
      %v396 = vld [vmem:[%s172 + $0xd8] sm:$0xff]
      %v397 = vld [vmem:[%s172 + $0xe0] sm:$0xff]
      %v398 = vld [vmem:[%s172 + $0xe8] sm:$0xff]
      %399 = vst [vmem:[%s336 + $0x8] sm:$0xff] %v369
      %400 = vst [vmem:[%s336 + $0x50] sm:$0xff] %v370
      %401 = vst [vmem:[%s336 + $0x98] sm:$0xff] %v371
      %402 = vst [vmem:[%s336 + $0xe0] sm:$0xff] %v372
      %403 = vst [vmem:[%s336 + $0x128] sm:$0xff] %v373
      %404 = vst [vmem:[%s336 + $0x170] sm:$0xff] %v374
      %405 = vst [vmem:[%s336 + $0x1b8] sm:$0xff] %v375
      %406 = vst [vmem:[%s336 + $0x200] sm:$0xff] %v376
      %407 = vst [vmem:[%s336 + $0x248] sm:$0xff] %v377
      %408 = vst [vmem:[%s336 + $0x290] sm:$0xff] %v378
      %409 = vst [vmem:[%s336 + $0x2d8] sm:$0xff] %v379
      %410 = vst [vmem:[%s336 + $0x320] sm:$0xff] %v380
      %411 = vst [vmem:[%s336 + $0x368] sm:$0xff] %v381
      %412 = vst [vmem:[%s336 + $0x3b0] sm:$0xff] %v382
      %413 = vst [vmem:[%s336 + $0x3f8] sm:$0xff] %v383
      %414 = vst [vmem:[%s336 + $0x440] sm:$0xff] %v384
      %415 = vst [vmem:[%s336 + $0x488] sm:$0xff] %v385
      %416 = vst [vmem:[%s336 + $0x4d0] sm:$0xff] %v386
      %417 = vst [vmem:[%s336 + $0x518] sm:$0xff] %v387
      %418 = vst [vmem:[%s336 + $0x560] sm:$0xff] %v388
      %419 = vst [vmem:[%s336 + $0x5a8] sm:$0xff] %v389
      %420 = vst [vmem:[%s336 + $0x5f0] sm:$0xff] %v390
      %421 = vst [vmem:[%s336 + $0x638] sm:$0xff] %v391
      %422 = vst [vmem:[%s336 + $0x680] sm:$0xff] %v392
      %423 = vst [vmem:[%s336 + $0x6c8] sm:$0xff] %v393
      %424 = vst [vmem:[%s336 + $0x710] sm:$0xff] %v394
      %425 = vst [vmem:[%s336 + $0x758] sm:$0xff] %v395
      %426 = vst [vmem:[%s336 + $0x7a0] sm:$0xff] %v396
      %427 = vst [vmem:[%s336 + $0x7e8] sm:$0xff] %v397
      %428 = vst [vmem:[%s336 + $0x830] sm:$0xff] %v398
      %429 = vst [vmem:[#allocation2 + $0x10] sm:$0xff] 0.0
      %430 = vst [vmem:[#allocation2 + $0x58] sm:$0xff] 0.0
      %431 = vst [vmem:[#allocation2 + $0x5f] sm:$0x1] 0.0
      %432 = vst [vmem:[#allocation2 + $0xef] sm:$0x1] 0.0
      %433 = vst [vmem:[#allocation2 + $0x17f] sm:$0x1] 0.0
      %434 = vst [vmem:[#allocation2 + $0x20f] sm:$0x1] 0.0
      %435 = vst [vmem:[#allocation2 + $0x29f] sm:$0x1] 0.0
      %436 = vst [vmem:[#allocation2 + $0x32f] sm:$0x1] 0.0
      %437 = vst [vmem:[#allocation2 + $0x3bf] sm:$0x1] 0.0
      %438 = vst [vmem:[#allocation2 + $0x44f] sm:$0x1] 0.0
      %439 = vst [vmem:[#allocation2 + $0x4df] sm:$0x1] 0.0
      %440 = vst [vmem:[#allocation2 + $0x56f] sm:$0x1] 0.0
      %441 = vst [vmem:[#allocation2 + $0x5ff] sm:$0x1] 0.0
      %442 = vst [vmem:[#allocation2 + $0x68f] sm:$0x1] 0.0
      %443 = vst [vmem:[#allocation2 + $0x71f] sm:$0x1] 0.0
      %444 = vst [vmem:[#allocation2 + $0x7af] sm:$0x1] 0.0
      %445 = vst [vmem:[#allocation2 + $0x83f] sm:$0x1] 0.0
      %446 = vst [vmem:[#allocation2 + $0x8cf] sm:$0x1] 0.0
      %v447 = vld [vmem:[%s172 + $0x1] sm:$0xff]
      %v448 = vld [vmem:[%s172 + $0x9] sm:$0x7f]
      %v449 = vld [vmem:[%s172 + $0x11] sm:$0xff]
      %v450 = vld [vmem:[%s172 + $0x19] sm:$0x7f]
      %v451 = vld [vmem:[%s172 + $0x21] sm:$0xff]
      %v452 = vld [vmem:[%s172 + $0x29] sm:$0x7f]
      %v453 = vld [vmem:[%s172 + $0x31] sm:$0xff]
      %v454 = vld [vmem:[%s172 + $0x39] sm:$0x7f]
      %v455 = vld [vmem:[%s172 + $0x41] sm:$0xff]
      %v456 = vld [vmem:[%s172 + $0x49] sm:$0x7f]
      %v457 = vld [vmem:[%s172 + $0x51] sm:$0xff]
      %v458 = vld [vmem:[%s172 + $0x59] sm:$0x7f]
      %v459 = vld [vmem:[%s172 + $0x61] sm:$0xff]
      %v460 = vld [vmem:[%s172 + $0x69] sm:$0x7f]
      %v461 = vld [vmem:[%s172 + $0x71] sm:$0xff]
      %v462 = vld [vmem:[%s172 + $0x79] sm:$0x7f]
      %v463 = vld [vmem:[%s172 + $0x81] sm:$0xff]
      %v464 = vld [vmem:[%s172 + $0x89] sm:$0x7f]
      %v465 = vld [vmem:[%s172 + $0x91] sm:$0xff]
      %v466 = vld [vmem:[%s172 + $0x99] sm:$0x7f]
      %v467 = vld [vmem:[%s172 + $0xa1] sm:$0xff]
      %v468 = vld [vmem:[%s172 + $0xa9] sm:$0x7f]
      %v469 = vld [vmem:[%s172 + $0xb1] sm:$0xff]
      %v470 = vld [vmem:[%s172 + $0xb9] sm:$0x7f]
      %v471 = vld [vmem:[%s172 + $0xc1] sm:$0xff]
      %v472 = vld [vmem:[%s172 + $0xc9] sm:$0x7f]
      %v473 = vld [vmem:[%s172 + $0xd1] sm:$0xff]
      %v474 = vld [vmem:[%s172 + $0xd9] sm:$0x7f]
      %v475 = vld [vmem:[%s172 + $0xe1] sm:$0xff]
      %v476 = vld [vmem:[%s172 + $0xe9] sm:$0x7f]
      %477 = vst [vmem:[%s336 + $0x10] sm:$0xff] %v447
      %478 = vst [vmem:[%s336 + $0x58] sm:$0x7f] %v448
      %479 = vst [vmem:[%s336 + $0xa0] sm:$0xff] %v449
      %480 = vst [vmem:[%s336 + $0xe8] sm:$0x7f] %v450
      %481 = vst [vmem:[%s336 + $0x130] sm:$0xff] %v451
      %482 = vst [vmem:[%s336 + $0x178] sm:$0x7f] %v452
      %483 = vst [vmem:[%s336 + $0x1c0] sm:$0xff] %v453
      %484 = vst [vmem:[%s336 + $0x208] sm:$0x7f] %v454
      %485 = vst [vmem:[%s336 + $0x250] sm:$0xff] %v455
      %486 = vst [vmem:[%s336 + $0x298] sm:$0x7f] %v456
      %487 = vst [vmem:[%s336 + $0x2e0] sm:$0xff] %v457
      %488 = vst [vmem:[%s336 + $0x328] sm:$0x7f] %v458
      %489 = vst [vmem:[%s336 + $0x370] sm:$0xff] %v459
      %490 = vst [vmem:[%s336 + $0x3b8] sm:$0x7f] %v460
      %491 = vst [vmem:[%s336 + $0x400] sm:$0xff] %v461
      %492 = vst [vmem:[%s336 + $0x448] sm:$0x7f] %v462
      %493 = vst [vmem:[%s336 + $0x490] sm:$0xff] %v463
      %494 = vst [vmem:[%s336 + $0x4d8] sm:$0x7f] %v464
      %495 = vst [vmem:[%s336 + $0x520] sm:$0xff] %v465
      %496 = vst [vmem:[%s336 + $0x568] sm:$0x7f] %v466
      %497 = vst [vmem:[%s336 + $0x5b0] sm:$0xff] %v467
      %498 = vst [vmem:[%s336 + $0x5f8] sm:$0x7f] %v468
      %499 = vst [vmem:[%s336 + $0x640] sm:$0xff] %v469
      %500 = vst [vmem:[%s336 + $0x688] sm:$0x7f] %v470
      %501 = vst [vmem:[%s336 + $0x6d0] sm:$0xff] %v471
      %502 = vst [vmem:[%s336 + $0x718] sm:$0x7f] %v472
      %503 = vst [vmem:[%s336 + $0x760] sm:$0xff] %v473
      %504 = vst [vmem:[%s336 + $0x7a8] sm:$0x7f] %v474
      %505 = vst [vmem:[%s336 + $0x7f0] sm:$0xff] %v475
      %506 = vst [vmem:[%s336 + $0x838] sm:$0x7f] %v476
      %507 = vst [vmem:[#allocation2 + $0x18] sm:$0x1] 0.0
      %508 = vst [vmem:[#allocation2 + $0xa8] sm:$0x1] 0.0
      %509 = vst [vmem:[#allocation2 + $0x138] sm:$0x1] 0.0
      %510 = vst [vmem:[#allocation2 + $0x1c8] sm:$0x1] 0.0
      %511 = vst [vmem:[#allocation2 + $0x258] sm:$0x1] 0.0
      %512 = vst [vmem:[#allocation2 + $0x2e8] sm:$0x1] 0.0
      %513 = vst [vmem:[#allocation2 + $0x378] sm:$0x1] 0.0
      %514 = vst [vmem:[#allocation2 + $0x408] sm:$0x1] 0.0
      %515 = vst [vmem:[#allocation2 + $0x498] sm:$0x1] 0.0
      %516 = vst [vmem:[#allocation2 + $0x528] sm:$0x1] 0.0
      %517 = vst [vmem:[#allocation2 + $0x5b8] sm:$0x1] 0.0
      %518 = vst [vmem:[#allocation2 + $0x648] sm:$0x1] 0.0
      %519 = vst [vmem:[#allocation2 + $0x6d8] sm:$0x1] 0.0
      %520 = vst [vmem:[#allocation2 + $0x768] sm:$0x1] 0.0
      %521 = vst [vmem:[#allocation2 + $0x7f8] sm:$0x1] 0.0
      %522 = vst [vmem:[#allocation2 + $0x888] sm:$0x1] 0.0
      %v523 = vld [vmem:[%s172] sm:$0xff]
      %v524 = vld [vmem:[%s172 + $0x8] sm:$0x7f]
      %v525 = vld [vmem:[%s172 + $0x10] sm:$0xff]
      %v526 = vld [vmem:[%s172 + $0x18] sm:$0x7f]
      %v527 = vld [vmem:[%s172 + $0x20] sm:$0xff]
      %v528 = vld [vmem:[%s172 + $0x28] sm:$0x7f]
      %v529 = vld [vmem:[%s172 + $0x30] sm:$0xff]
      %v530 = vld [vmem:[%s172 + $0x38] sm:$0x7f]
      %v531 = vld [vmem:[%s172 + $0x40] sm:$0xff]
      %v532 = vld [vmem:[%s172 + $0x48] sm:$0x7f]
      %v533 = vld [vmem:[%s172 + $0x50] sm:$0xff]
      %v534 = vld [vmem:[%s172 + $0x58] sm:$0x7f]
      %v535 = vld [vmem:[%s172 + $0x60] sm:$0xff]
      %v536 = vld [vmem:[%s172 + $0x68] sm:$0x7f]
      %v537 = vld [vmem:[%s172 + $0x70] sm:$0xff]
      %v538 = vld [vmem:[%s172 + $0x78] sm:$0x7f]
      %v539 = vld [vmem:[%s172 + $0x80] sm:$0xff]
      %v540 = vld [vmem:[%s172 + $0x88] sm:$0x7f]
      %v541 = vld [vmem:[%s172 + $0x90] sm:$0xff]
      %v542 = vld [vmem:[%s172 + $0x98] sm:$0x7f]
      %v543 = vld [vmem:[%s172 + $0xa0] sm:$0xff]
      %v544 = vld [vmem:[%s172 + $0xa8] sm:$0x7f]
      %v545 = vld [vmem:[%s172 + $0xb0] sm:$0xff]
      %v546 = vld [vmem:[%s172 + $0xb8] sm:$0x7f]
      %v547 = vld [vmem:[%s172 + $0xc0] sm:$0xff]
      %v548 = vld [vmem:[%s172 + $0xc8] sm:$0x7f]
      %v549 = vld [vmem:[%s172 + $0xd0] sm:$0xff]
      %v550 = vld [vmem:[%s172 + $0xd8] sm:$0x7f]
      %v551 = vld [vmem:[%s172 + $0xe0] sm:$0xff]
      %v552 = vld [vmem:[%s172 + $0xe8] sm:$0x7f]
      %v553 = vld [vmem:[%s172 + $0xf0] sm:$0xff]
      %v554 = vld [vmem:[%s172 + $0xf8] sm:$0x7f]
      %v587 = vrot.slane %v523, 7
      %v588 = vrot.slane %v524, 7
      %v589 = vsel %vm260, %v587, %v588
      %v590 = vrot.slane %v525, 7
      %v591 = vrot.slane %v526, 7
      %v592 = vsel %vm260, %v590, %v591
      %v593 = vrot.slane %v527, 7
      %v594 = vrot.slane %v528, 7
      %v595 = vsel %vm260, %v593, %v594
      %v596 = vrot.slane %v529, 7
      %v597 = vrot.slane %v530, 7
      %v598 = vsel %vm260, %v596, %v597
      %v599 = vrot.slane %v531, 7
      %v600 = vrot.slane %v532, 7
      %v601 = vsel %vm260, %v599, %v600
      %v602 = vrot.slane %v533, 7
      %v603 = vrot.slane %v534, 7
      %v604 = vsel %vm260, %v602, %v603
      %v605 = vrot.slane %v535, 7
      %v606 = vrot.slane %v536, 7
      %v607 = vsel %vm260, %v605, %v606
      %v608 = vrot.slane %v537, 7
      %v609 = vrot.slane %v538, 7
      %v610 = vsel %vm260, %v608, %v609
      %v611 = vrot.slane %v539, 7
      %v612 = vrot.slane %v540, 7
      %v613 = vsel %vm260, %v611, %v612
      %v614 = vrot.slane %v541, 7
      %v615 = vrot.slane %v542, 7
      %v616 = vsel %vm260, %v614, %v615
      %v617 = vrot.slane %v543, 7
      %v618 = vrot.slane %v544, 7
      %v619 = vsel %vm260, %v617, %v618
      %v620 = vrot.slane %v545, 7
      %v621 = vrot.slane %v546, 7
      %v622 = vsel %vm260, %v620, %v621
      %v623 = vrot.slane %v547, 7
      %v624 = vrot.slane %v548, 7
      %v625 = vsel %vm260, %v623, %v624
      %v626 = vrot.slane %v549, 7
      %v627 = vrot.slane %v550, 7
      %v628 = vsel %vm260, %v626, %v627
      %v629 = vrot.slane %v551, 7
      %v630 = vrot.slane %v552, 7
      %v631 = vsel %vm260, %v629, %v630
      %v632 = vrot.slane %v553, 7
      %v633 = vrot.slane %v554, 7
      %v634 = vsel %vm260, %v632, %v633
      %667 = vst [vmem:[#allocation2 + $0x18] sm:$0xfe] %v587
      %668 = vst [vmem:[#allocation2 + $0x60] sm:$0xff] %v589
      %669 = vst [vmem:[#allocation2 + $0xa8] sm:$0xfe] %v590
      %670 = vst [vmem:[#allocation2 + $0xf0] sm:$0xff] %v592
      %671 = vst [vmem:[#allocation2 + $0x138] sm:$0xfe] %v593
      %672 = vst [vmem:[#allocation2 + $0x180] sm:$0xff] %v595
      %673 = vst [vmem:[#allocation2 + $0x1c8] sm:$0xfe] %v596
      %674 = vst [vmem:[#allocation2 + $0x210] sm:$0xff] %v598
      %675 = vst [vmem:[#allocation2 + $0x258] sm:$0xfe] %v599
      %676 = vst [vmem:[#allocation2 + $0x2a0] sm:$0xff] %v601
      %677 = vst [vmem:[#allocation2 + $0x2e8] sm:$0xfe] %v602
      %678 = vst [vmem:[#allocation2 + $0x330] sm:$0xff] %v604
      %679 = vst [vmem:[#allocation2 + $0x378] sm:$0xfe] %v605
      %680 = vst [vmem:[#allocation2 + $0x3c0] sm:$0xff] %v607
      %681 = vst [vmem:[#allocation2 + $0x408] sm:$0xfe] %v608
      %682 = vst [vmem:[#allocation2 + $0x450] sm:$0xff] %v610
      %683 = vst [vmem:[#allocation2 + $0x498] sm:$0xfe] %v611
      %684 = vst [vmem:[#allocation2 + $0x4e0] sm:$0xff] %v613
      %685 = vst [vmem:[#allocation2 + $0x528] sm:$0xfe] %v614
      %686 = vst [vmem:[#allocation2 + $0x570] sm:$0xff] %v616
      %687 = vst [vmem:[#allocation2 + $0x5b8] sm:$0xfe] %v617
      %688 = vst [vmem:[#allocation2 + $0x600] sm:$0xff] %v619
      %689 = vst [vmem:[#allocation2 + $0x648] sm:$0xfe] %v620
      %690 = vst [vmem:[#allocation2 + $0x690] sm:$0xff] %v622
      %691 = vst [vmem:[#allocation2 + $0x6d8] sm:$0xfe] %v623
      %692 = vst [vmem:[#allocation2 + $0x720] sm:$0xff] %v625
      %693 = vst [vmem:[#allocation2 + $0x768] sm:$0xfe] %v626
      %694 = vst [vmem:[#allocation2 + $0x7b0] sm:$0xff] %v628
      %695 = vst [vmem:[#allocation2 + $0x7f8] sm:$0xfe] %v629
      %696 = vst [vmem:[#allocation2 + $0x840] sm:$0xff] %v631
      %697 = vst [vmem:[#allocation2 + $0x888] sm:$0xfe] %v632
      %698 = vst [vmem:[#allocation2 + $0x8d0] sm:$0xff] %v634
      %v699 = vld [vmem:[%s172] sm:$0xff]
      %v700 = vld [vmem:[%s172 + $0x8] sm:$0xff]
      %v701 = vld [vmem:[%s172 + $0x10] sm:$0xff]
      %v702 = vld [vmem:[%s172 + $0x18] sm:$0xff]
      %v703 = vld [vmem:[%s172 + $0x20] sm:$0xff]
      %v704 = vld [vmem:[%s172 + $0x28] sm:$0xff]
      %v705 = vld [vmem:[%s172 + $0x30] sm:$0xff]
      %v706 = vld [vmem:[%s172 + $0x38] sm:$0xff]
      %v707 = vld [vmem:[%s172 + $0x40] sm:$0xff]
      %v708 = vld [vmem:[%s172 + $0x48] sm:$0xff]
      %v709 = vld [vmem:[%s172 + $0x50] sm:$0xff]
      %v710 = vld [vmem:[%s172 + $0x58] sm:$0xff]
      %v711 = vld [vmem:[%s172 + $0x60] sm:$0xff]
      %v712 = vld [vmem:[%s172 + $0x68] sm:$0xff]
      %v713 = vld [vmem:[%s172 + $0x70] sm:$0xff]
      %v714 = vld [vmem:[%s172 + $0x78] sm:$0xff]
      %v715 = vld [vmem:[%s172 + $0x80] sm:$0xff]
      %v716 = vld [vmem:[%s172 + $0x88] sm:$0xff]
      %v717 = vld [vmem:[%s172 + $0x90] sm:$0xff]
      %v718 = vld [vmem:[%s172 + $0x98] sm:$0xff]
      %v719 = vld [vmem:[%s172 + $0xa0] sm:$0xff]
      %v720 = vld [vmem:[%s172 + $0xa8] sm:$0xff]
      %v721 = vld [vmem:[%s172 + $0xb0] sm:$0xff]
      %v722 = vld [vmem:[%s172 + $0xb8] sm:$0xff]
      %v723 = vld [vmem:[%s172 + $0xc0] sm:$0xff]
      %v724 = vld [vmem:[%s172 + $0xc8] sm:$0xff]
      %v725 = vld [vmem:[%s172 + $0xd0] sm:$0xff]
      %v726 = vld [vmem:[%s172 + $0xd8] sm:$0xff]
      %v727 = vld [vmem:[%s172 + $0xe0] sm:$0xff]
      %v728 = vld [vmem:[%s172 + $0xe8] sm:$0xff]
      %v729 = vld [vmem:[%s172 + $0xf0] sm:$0xff]
      %v730 = vld [vmem:[%s172 + $0xf8] sm:$0xff]
      %731 = vst [vmem:[#allocation2 + $0x20] sm:$0xff] %v699
      %732 = vst [vmem:[#allocation2 + $0x68] sm:$0xff] %v700
      %733 = vst [vmem:[#allocation2 + $0xb0] sm:$0xff] %v701
      %734 = vst [vmem:[#allocation2 + $0xf8] sm:$0xff] %v702
      %735 = vst [vmem:[#allocation2 + $0x140] sm:$0xff] %v703
      %736 = vst [vmem:[#allocation2 + $0x188] sm:$0xff] %v704
      %737 = vst [vmem:[#allocation2 + $0x1d0] sm:$0xff] %v705
      %738 = vst [vmem:[#allocation2 + $0x218] sm:$0xff] %v706
      %739 = vst [vmem:[#allocation2 + $0x260] sm:$0xff] %v707
      %740 = vst [vmem:[#allocation2 + $0x2a8] sm:$0xff] %v708
      %741 = vst [vmem:[#allocation2 + $0x2f0] sm:$0xff] %v709
      %742 = vst [vmem:[#allocation2 + $0x338] sm:$0xff] %v710
      %743 = vst [vmem:[#allocation2 + $0x380] sm:$0xff] %v711
      %744 = vst [vmem:[#allocation2 + $0x3c8] sm:$0xff] %v712
      %745 = vst [vmem:[#allocation2 + $0x410] sm:$0xff] %v713
      %746 = vst [vmem:[#allocation2 + $0x458] sm:$0xff] %v714
      %747 = vst [vmem:[#allocation2 + $0x4a0] sm:$0xff] %v715
      %748 = vst [vmem:[#allocation2 + $0x4e8] sm:$0xff] %v716
      %749 = vst [vmem:[#allocation2 + $0x530] sm:$0xff] %v717
      %750 = vst [vmem:[#allocation2 + $0x578] sm:$0xff] %v718
      %751 = vst [vmem:[#allocation2 + $0x5c0] sm:$0xff] %v719
      %752 = vst [vmem:[#allocation2 + $0x608] sm:$0xff] %v720
      %753 = vst [vmem:[#allocation2 + $0x650] sm:$0xff] %v721
      %754 = vst [vmem:[#allocation2 + $0x698] sm:$0xff] %v722
      %755 = vst [vmem:[#allocation2 + $0x6e0] sm:$0xff] %v723
      %756 = vst [vmem:[#allocation2 + $0x728] sm:$0xff] %v724
      %757 = vst [vmem:[#allocation2 + $0x770] sm:$0xff] %v725
      %758 = vst [vmem:[#allocation2 + $0x7b8] sm:$0xff] %v726
      %759 = vst [vmem:[#allocation2 + $0x800] sm:$0xff] %v727
      %760 = vst [vmem:[#allocation2 + $0x848] sm:$0xff] %v728
      %761 = vst [vmem:[#allocation2 + $0x890] sm:$0xff] %v729
      %762 = vst [vmem:[#allocation2 + $0x8d8] sm:$0xff] %v730
      %763 = vst [vmem:[#allocation2 + $0x77] sm:$0x1] 0.0
      %764 = vst [vmem:[#allocation2 + $0x107] sm:$0x1] 0.0
      %765 = vst [vmem:[#allocation2 + $0x197] sm:$0x1] 0.0
      %766 = vst [vmem:[#allocation2 + $0x227] sm:$0x1] 0.0
      %767 = vst [vmem:[#allocation2 + $0x2b7] sm:$0x1] 0.0
      %768 = vst [vmem:[#allocation2 + $0x347] sm:$0x1] 0.0
      %769 = vst [vmem:[#allocation2 + $0x3d7] sm:$0x1] 0.0
      %770 = vst [vmem:[#allocation2 + $0x467] sm:$0x1] 0.0
      %771 = vst [vmem:[#allocation2 + $0x4f7] sm:$0x1] 0.0
      %772 = vst [vmem:[#allocation2 + $0x587] sm:$0x1] 0.0
      %773 = vst [vmem:[#allocation2 + $0x617] sm:$0x1] 0.0
      %774 = vst [vmem:[#allocation2 + $0x6a7] sm:$0x1] 0.0
      %775 = vst [vmem:[#allocation2 + $0x737] sm:$0x1] 0.0
      %776 = vst [vmem:[#allocation2 + $0x7c7] sm:$0x1] 0.0
      %777 = vst [vmem:[#allocation2 + $0x857] sm:$0x1] 0.0
      %778 = vst [vmem:[#allocation2 + $0x8e7] sm:$0x1] 0.0
      %v779 = vld [vmem:[%s172 + $0x1] sm:$0xff]
      %v780 = vld [vmem:[%s172 + $0x9] sm:$0x7f]
      %v781 = vld [vmem:[%s172 + $0x11] sm:$0xff]
      %v782 = vld [vmem:[%s172 + $0x19] sm:$0x7f]
      %v783 = vld [vmem:[%s172 + $0x21] sm:$0xff]
      %v784 = vld [vmem:[%s172 + $0x29] sm:$0x7f]
      %v785 = vld [vmem:[%s172 + $0x31] sm:$0xff]
      %v786 = vld [vmem:[%s172 + $0x39] sm:$0x7f]
      %v787 = vld [vmem:[%s172 + $0x41] sm:$0xff]
      %v788 = vld [vmem:[%s172 + $0x49] sm:$0x7f]
      %v789 = vld [vmem:[%s172 + $0x51] sm:$0xff]
      %v790 = vld [vmem:[%s172 + $0x59] sm:$0x7f]
      %v791 = vld [vmem:[%s172 + $0x61] sm:$0xff]
      %v792 = vld [vmem:[%s172 + $0x69] sm:$0x7f]
      %v793 = vld [vmem:[%s172 + $0x71] sm:$0xff]
      %v794 = vld [vmem:[%s172 + $0x79] sm:$0x7f]
      %v795 = vld [vmem:[%s172 + $0x81] sm:$0xff]
      %v796 = vld [vmem:[%s172 + $0x89] sm:$0x7f]
      %v797 = vld [vmem:[%s172 + $0x91] sm:$0xff]
      %v798 = vld [vmem:[%s172 + $0x99] sm:$0x7f]
      %v799 = vld [vmem:[%s172 + $0xa1] sm:$0xff]
      %v800 = vld [vmem:[%s172 + $0xa9] sm:$0x7f]
      %v801 = vld [vmem:[%s172 + $0xb1] sm:$0xff]
      %v802 = vld [vmem:[%s172 + $0xb9] sm:$0x7f]
      %v803 = vld [vmem:[%s172 + $0xc1] sm:$0xff]
      %v804 = vld [vmem:[%s172 + $0xc9] sm:$0x7f]
      %v805 = vld [vmem:[%s172 + $0xd1] sm:$0xff]
      %v806 = vld [vmem:[%s172 + $0xd9] sm:$0x7f]
      %v807 = vld [vmem:[%s172 + $0xe1] sm:$0xff]
      %v808 = vld [vmem:[%s172 + $0xe9] sm:$0x7f]
      %v809 = vld [vmem:[%s172 + $0xf1] sm:$0xff]
      %v810 = vld [vmem:[%s172 + $0xf9] sm:$0x7f]
      %811 = vst [vmem:[#allocation2 + $0x28] sm:$0xff] %v779
      %812 = vst [vmem:[#allocation2 + $0x70] sm:$0x7f] %v780
      %813 = vst [vmem:[#allocation2 + $0xb8] sm:$0xff] %v781
      %814 = vst [vmem:[#allocation2 + $0x100] sm:$0x7f] %v782
      %815 = vst [vmem:[#allocation2 + $0x148] sm:$0xff] %v783
      %816 = vst [vmem:[#allocation2 + $0x190] sm:$0x7f] %v784
      %817 = vst [vmem:[#allocation2 + $0x1d8] sm:$0xff] %v785
      %818 = vst [vmem:[#allocation2 + $0x220] sm:$0x7f] %v786
      %819 = vst [vmem:[#allocation2 + $0x268] sm:$0xff] %v787
      %820 = vst [vmem:[#allocation2 + $0x2b0] sm:$0x7f] %v788
      %821 = vst [vmem:[#allocation2 + $0x2f8] sm:$0xff] %v789
      %822 = vst [vmem:[#allocation2 + $0x340] sm:$0x7f] %v790
      %823 = vst [vmem:[#allocation2 + $0x388] sm:$0xff] %v791
      %824 = vst [vmem:[#allocation2 + $0x3d0] sm:$0x7f] %v792
      %825 = vst [vmem:[#allocation2 + $0x418] sm:$0xff] %v793
      %826 = vst [vmem:[#allocation2 + $0x460] sm:$0x7f] %v794
      %827 = vst [vmem:[#allocation2 + $0x4a8] sm:$0xff] %v795
      %828 = vst [vmem:[#allocation2 + $0x4f0] sm:$0x7f] %v796
      %829 = vst [vmem:[#allocation2 + $0x538] sm:$0xff] %v797
      %830 = vst [vmem:[#allocation2 + $0x580] sm:$0x7f] %v798
      %831 = vst [vmem:[#allocation2 + $0x5c8] sm:$0xff] %v799
      %832 = vst [vmem:[#allocation2 + $0x610] sm:$0x7f] %v800
      %833 = vst [vmem:[#allocation2 + $0x658] sm:$0xff] %v801
      %834 = vst [vmem:[#allocation2 + $0x6a0] sm:$0x7f] %v802
      %835 = vst [vmem:[#allocation2 + $0x6e8] sm:$0xff] %v803
      %836 = vst [vmem:[#allocation2 + $0x730] sm:$0x7f] %v804
      %837 = vst [vmem:[#allocation2 + $0x778] sm:$0xff] %v805
      %838 = vst [vmem:[#allocation2 + $0x7c0] sm:$0x7f] %v806
      %839 = vst [vmem:[#allocation2 + $0x808] sm:$0xff] %v807
      %840 = vst [vmem:[#allocation2 + $0x850] sm:$0x7f] %v808
      %841 = vst [vmem:[#allocation2 + $0x898] sm:$0xff] %v809
      %842 = vst [vmem:[#allocation2 + $0x8e0] sm:$0x7f] %v810
      %s843 = scalar_lea.vmem [#allocation2], 2160
      %844 = vst [vmem:[%s843 + $0x30] sm:$0xff] 0.0
      %845 = vst [vmem:[%s843 + $0x78] sm:$0xff] 0.0
      %846 = vst [vmem:[#allocation2 + $0x30] sm:$0x1] 0.0
      %847 = vst [vmem:[#allocation2 + $0xc0] sm:$0x1] 0.0
      %848 = vst [vmem:[#allocation2 + $0x150] sm:$0x1] 0.0
      %849 = vst [vmem:[#allocation2 + $0x1e0] sm:$0x1] 0.0
      %850 = vst [vmem:[#allocation2 + $0x270] sm:$0x1] 0.0
      %851 = vst [vmem:[#allocation2 + $0x300] sm:$0x1] 0.0
      %852 = vst [vmem:[#allocation2 + $0x390] sm:$0x1] 0.0
      %853 = vst [vmem:[#allocation2 + $0x420] sm:$0x1] 0.0
      %854 = vst [vmem:[#allocation2 + $0x4b0] sm:$0x1] 0.0
      %855 = vst [vmem:[#allocation2 + $0x540] sm:$0x1] 0.0
      %856 = vst [vmem:[#allocation2 + $0x5d0] sm:$0x1] 0.0
      %857 = vst [vmem:[#allocation2 + $0x660] sm:$0x1] 0.0
      %858 = vst [vmem:[#allocation2 + $0x6f0] sm:$0x1] 0.0
      %859 = vst [vmem:[#allocation2 + $0x780] sm:$0x1] 0.0
      %860 = vst [vmem:[#allocation2 + $0x810] sm:$0x1] 0.0
      %861 = vst [vmem:[#allocation2 + $0x8a0] sm:$0x1] 0.0
      %s862 = scalar_lea.vmem %s172, 16
      %v863 = vld [vmem:[%s862] sm:$0xff]
      %v864 = vld [vmem:[%s862 + $0x8] sm:$0x7f]
      %v865 = vld [vmem:[%s862 + $0x10] sm:$0xff]
      %v866 = vld [vmem:[%s862 + $0x18] sm:$0x7f]
      %v867 = vld [vmem:[%s862 + $0x20] sm:$0xff]
      %v868 = vld [vmem:[%s862 + $0x28] sm:$0x7f]
      %v869 = vld [vmem:[%s862 + $0x30] sm:$0xff]
      %v870 = vld [vmem:[%s862 + $0x38] sm:$0x7f]
      %v871 = vld [vmem:[%s862 + $0x40] sm:$0xff]
      %v872 = vld [vmem:[%s862 + $0x48] sm:$0x7f]
      %v873 = vld [vmem:[%s862 + $0x50] sm:$0xff]
      %v874 = vld [vmem:[%s862 + $0x58] sm:$0x7f]
      %v875 = vld [vmem:[%s862 + $0x60] sm:$0xff]
      %v876 = vld [vmem:[%s862 + $0x68] sm:$0x7f]
      %v877 = vld [vmem:[%s862 + $0x70] sm:$0xff]
      %v878 = vld [vmem:[%s862 + $0x78] sm:$0x7f]
      %v879 = vld [vmem:[%s862 + $0x80] sm:$0xff]
      %v880 = vld [vmem:[%s862 + $0x88] sm:$0x7f]
      %v881 = vld [vmem:[%s862 + $0x90] sm:$0xff]
      %v882 = vld [vmem:[%s862 + $0x98] sm:$0x7f]
      %v883 = vld [vmem:[%s862 + $0xa0] sm:$0xff]
      %v884 = vld [vmem:[%s862 + $0xa8] sm:$0x7f]
      %v885 = vld [vmem:[%s862 + $0xb0] sm:$0xff]
      %v886 = vld [vmem:[%s862 + $0xb8] sm:$0x7f]
      %v887 = vld [vmem:[%s862 + $0xc0] sm:$0xff]
      %v888 = vld [vmem:[%s862 + $0xc8] sm:$0x7f]
      %v889 = vld [vmem:[%s862 + $0xd0] sm:$0xff]
      %v890 = vld [vmem:[%s862 + $0xd8] sm:$0x7f]
      %v891 = vld [vmem:[%s862 + $0xe0] sm:$0xff]
      %v892 = vld [vmem:[%s862 + $0xe8] sm:$0x7f]
      %v923 = vrot.slane %v863, 7
      %v924 = vrot.slane %v864, 7
      %v925 = vsel %vm260, %v923, %v924
      %v926 = vrot.slane %v865, 7
      %v927 = vrot.slane %v866, 7
      %v928 = vsel %vm260, %v926, %v927
      %v929 = vrot.slane %v867, 7
      %v930 = vrot.slane %v868, 7
      %v931 = vsel %vm260, %v929, %v930
      %v932 = vrot.slane %v869, 7
      %v933 = vrot.slane %v870, 7
      %v934 = vsel %vm260, %v932, %v933
      %v935 = vrot.slane %v871, 7
      %v936 = vrot.slane %v872, 7
      %v937 = vsel %vm260, %v935, %v936
      %v938 = vrot.slane %v873, 7
      %v939 = vrot.slane %v874, 7
      %v940 = vsel %vm260, %v938, %v939
      %v941 = vrot.slane %v875, 7
      %v942 = vrot.slane %v876, 7
      %v943 = vsel %vm260, %v941, %v942
      %v944 = vrot.slane %v877, 7
      %v945 = vrot.slane %v878, 7
      %v946 = vsel %vm260, %v944, %v945
      %v947 = vrot.slane %v879, 7
      %v948 = vrot.slane %v880, 7
      %v949 = vsel %vm260, %v947, %v948
      %v950 = vrot.slane %v881, 7
      %v951 = vrot.slane %v882, 7
      %v952 = vsel %vm260, %v950, %v951
      %v953 = vrot.slane %v883, 7
      %v954 = vrot.slane %v884, 7
      %v955 = vsel %vm260, %v953, %v954
      %v956 = vrot.slane %v885, 7
      %v957 = vrot.slane %v886, 7
      %v958 = vsel %vm260, %v956, %v957
      %v959 = vrot.slane %v887, 7
      %v960 = vrot.slane %v888, 7
      %v961 = vsel %vm260, %v959, %v960
      %v962 = vrot.slane %v889, 7
      %v963 = vrot.slane %v890, 7
      %v964 = vsel %vm260, %v962, %v963
      %v965 = vrot.slane %v891, 7
      %v966 = vrot.slane %v892, 7
      %v967 = vsel %vm260, %v965, %v966
      %998 = vst [vmem:[#allocation2 + $0x30] sm:$0xfe] %v923
      %999 = vst [vmem:[#allocation2 + $0x78] sm:$0xff] %v925
      %1000 = vst [vmem:[#allocation2 + $0xc0] sm:$0xfe] %v926
      %1001 = vst [vmem:[#allocation2 + $0x108] sm:$0xff] %v928
      %1002 = vst [vmem:[#allocation2 + $0x150] sm:$0xfe] %v929
      %1003 = vst [vmem:[#allocation2 + $0x198] sm:$0xff] %v931
      %1004 = vst [vmem:[#allocation2 + $0x1e0] sm:$0xfe] %v932
      %1005 = vst [vmem:[#allocation2 + $0x228] sm:$0xff] %v934
      %1006 = vst [vmem:[#allocation2 + $0x270] sm:$0xfe] %v935
      %1007 = vst [vmem:[#allocation2 + $0x2b8] sm:$0xff] %v937
      %1008 = vst [vmem:[#allocation2 + $0x300] sm:$0xfe] %v938
      %1009 = vst [vmem:[#allocation2 + $0x348] sm:$0xff] %v940
      %1010 = vst [vmem:[#allocation2 + $0x390] sm:$0xfe] %v941
      %1011 = vst [vmem:[#allocation2 + $0x3d8] sm:$0xff] %v943
      %1012 = vst [vmem:[#allocation2 + $0x420] sm:$0xfe] %v944
      %1013 = vst [vmem:[#allocation2 + $0x468] sm:$0xff] %v946
      %1014 = vst [vmem:[#allocation2 + $0x4b0] sm:$0xfe] %v947
      %1015 = vst [vmem:[#allocation2 + $0x4f8] sm:$0xff] %v949
      %1016 = vst [vmem:[#allocation2 + $0x540] sm:$0xfe] %v950
      %1017 = vst [vmem:[#allocation2 + $0x588] sm:$0xff] %v952
      %1018 = vst [vmem:[#allocation2 + $0x5d0] sm:$0xfe] %v953
      %1019 = vst [vmem:[#allocation2 + $0x618] sm:$0xff] %v955
      %1020 = vst [vmem:[#allocation2 + $0x660] sm:$0xfe] %v956
      %1021 = vst [vmem:[#allocation2 + $0x6a8] sm:$0xff] %v958
      %1022 = vst [vmem:[#allocation2 + $0x6f0] sm:$0xfe] %v959
      %1023 = vst [vmem:[#allocation2 + $0x738] sm:$0xff] %v961
      %1024 = vst [vmem:[#allocation2 + $0x780] sm:$0xfe] %v962
      %1025 = vst [vmem:[#allocation2 + $0x7c8] sm:$0xff] %v964
      %1026 = vst [vmem:[#allocation2 + $0x810] sm:$0xfe] %v965
      %1027 = vst [vmem:[#allocation2 + $0x858] sm:$0xff] %v967
      %1028 = vst [vmem:[%s843 + $0x38] sm:$0xff] 0.0
      %1029 = vst [vmem:[%s843 + $0x80] sm:$0xff] 0.0
      %v1030 = vld [vmem:[%s862] sm:$0xff]
      %v1031 = vld [vmem:[%s862 + $0x8] sm:$0xff]
      %v1032 = vld [vmem:[%s862 + $0x10] sm:$0xff]
      %v1033 = vld [vmem:[%s862 + $0x18] sm:$0xff]
      %v1034 = vld [vmem:[%s862 + $0x20] sm:$0xff]
      %v1035 = vld [vmem:[%s862 + $0x28] sm:$0xff]
      %v1036 = vld [vmem:[%s862 + $0x30] sm:$0xff]
      %v1037 = vld [vmem:[%s862 + $0x38] sm:$0xff]
      %v1038 = vld [vmem:[%s862 + $0x40] sm:$0xff]
      %v1039 = vld [vmem:[%s862 + $0x48] sm:$0xff]
      %v1040 = vld [vmem:[%s862 + $0x50] sm:$0xff]
      %v1041 = vld [vmem:[%s862 + $0x58] sm:$0xff]
      %v1042 = vld [vmem:[%s862 + $0x60] sm:$0xff]
      %v1043 = vld [vmem:[%s862 + $0x68] sm:$0xff]
      %v1044 = vld [vmem:[%s862 + $0x70] sm:$0xff]
      %v1045 = vld [vmem:[%s862 + $0x78] sm:$0xff]
      %v1046 = vld [vmem:[%s862 + $0x80] sm:$0xff]
      %v1047 = vld [vmem:[%s862 + $0x88] sm:$0xff]
      %v1048 = vld [vmem:[%s862 + $0x90] sm:$0xff]
      %v1049 = vld [vmem:[%s862 + $0x98] sm:$0xff]
      %v1050 = vld [vmem:[%s862 + $0xa0] sm:$0xff]
      %v1051 = vld [vmem:[%s862 + $0xa8] sm:$0xff]
      %v1052 = vld [vmem:[%s862 + $0xb0] sm:$0xff]
      %v1053 = vld [vmem:[%s862 + $0xb8] sm:$0xff]
      %v1054 = vld [vmem:[%s862 + $0xc0] sm:$0xff]
      %v1055 = vld [vmem:[%s862 + $0xc8] sm:$0xff]
      %v1056 = vld [vmem:[%s862 + $0xd0] sm:$0xff]
      %v1057 = vld [vmem:[%s862 + $0xd8] sm:$0xff]
      %v1058 = vld [vmem:[%s862 + $0xe0] sm:$0xff]
      %v1059 = vld [vmem:[%s862 + $0xe8] sm:$0xff]
      %1060 = vst [vmem:[#allocation2 + $0x38] sm:$0xff] %v1030
      %1061 = vst [vmem:[#allocation2 + $0x80] sm:$0xff] %v1031
      %1062 = vst [vmem:[#allocation2 + $0xc8] sm:$0xff] %v1032
      %1063 = vst [vmem:[#allocation2 + $0x110] sm:$0xff] %v1033
      %1064 = vst [vmem:[#allocation2 + $0x158] sm:$0xff] %v1034
      %1065 = vst [vmem:[#allocation2 + $0x1a0] sm:$0xff] %v1035
      %1066 = vst [vmem:[#allocation2 + $0x1e8] sm:$0xff] %v1036
      %1067 = vst [vmem:[#allocation2 + $0x230] sm:$0xff] %v1037
      %1068 = vst [vmem:[#allocation2 + $0x278] sm:$0xff] %v1038
      %1069 = vst [vmem:[#allocation2 + $0x2c0] sm:$0xff] %v1039
      %1070 = vst [vmem:[#allocation2 + $0x308] sm:$0xff] %v1040
      %1071 = vst [vmem:[#allocation2 + $0x350] sm:$0xff] %v1041
      %1072 = vst [vmem:[#allocation2 + $0x398] sm:$0xff] %v1042
      %1073 = vst [vmem:[#allocation2 + $0x3e0] sm:$0xff] %v1043
      %1074 = vst [vmem:[#allocation2 + $0x428] sm:$0xff] %v1044
      %1075 = vst [vmem:[#allocation2 + $0x470] sm:$0xff] %v1045
      %1076 = vst [vmem:[#allocation2 + $0x4b8] sm:$0xff] %v1046
      %1077 = vst [vmem:[#allocation2 + $0x500] sm:$0xff] %v1047
      %1078 = vst [vmem:[#allocation2 + $0x548] sm:$0xff] %v1048
      %1079 = vst [vmem:[#allocation2 + $0x590] sm:$0xff] %v1049
      %1080 = vst [vmem:[#allocation2 + $0x5d8] sm:$0xff] %v1050
      %1081 = vst [vmem:[#allocation2 + $0x620] sm:$0xff] %v1051
      %1082 = vst [vmem:[#allocation2 + $0x668] sm:$0xff] %v1052
      %1083 = vst [vmem:[#allocation2 + $0x6b0] sm:$0xff] %v1053
      %1084 = vst [vmem:[#allocation2 + $0x6f8] sm:$0xff] %v1054
      %1085 = vst [vmem:[#allocation2 + $0x740] sm:$0xff] %v1055
      %1086 = vst [vmem:[#allocation2 + $0x788] sm:$0xff] %v1056
      %1087 = vst [vmem:[#allocation2 + $0x7d0] sm:$0xff] %v1057
      %1088 = vst [vmem:[#allocation2 + $0x818] sm:$0xff] %v1058
      %1089 = vst [vmem:[#allocation2 + $0x860] sm:$0xff] %v1059
      %1090 = vst [vmem:[%s843 + $0x40] sm:$0xff] 0.0
      %1091 = vst [vmem:[%s843 + $0x88] sm:$0xff] 0.0
      %1092 = vst [vmem:[#allocation2 + $0x8f] sm:$0x1] 0.0
      %1093 = vst [vmem:[#allocation2 + $0x11f] sm:$0x1] 0.0
      %1094 = vst [vmem:[#allocation2 + $0x1af] sm:$0x1] 0.0
      %1095 = vst [vmem:[#allocation2 + $0x23f] sm:$0x1] 0.0
      %1096 = vst [vmem:[#allocation2 + $0x2cf] sm:$0x1] 0.0
      %1097 = vst [vmem:[#allocation2 + $0x35f] sm:$0x1] 0.0
      %1098 = vst [vmem:[#allocation2 + $0x3ef] sm:$0x1] 0.0
      %1099 = vst [vmem:[#allocation2 + $0x47f] sm:$0x1] 0.0
      %1100 = vst [vmem:[#allocation2 + $0x50f] sm:$0x1] 0.0
      %1101 = vst [vmem:[#allocation2 + $0x59f] sm:$0x1] 0.0
      %1102 = vst [vmem:[#allocation2 + $0x62f] sm:$0x1] 0.0
      %1103 = vst [vmem:[#allocation2 + $0x6bf] sm:$0x1] 0.0
      %1104 = vst [vmem:[#allocation2 + $0x74f] sm:$0x1] 0.0
      %1105 = vst [vmem:[#allocation2 + $0x7df] sm:$0x1] 0.0
      %1106 = vst [vmem:[#allocation2 + $0x86f] sm:$0x1] 0.0
      %1107 = vst [vmem:[#allocation2 + $0x8ff] sm:$0x1] 0.0
      %v1108 = vld [vmem:[%s862 + $0x1] sm:$0xff]
      %v1109 = vld [vmem:[%s862 + $0x9] sm:$0x7f]
      %v1110 = vld [vmem:[%s862 + $0x11] sm:$0xff]
      %v1111 = vld [vmem:[%s862 + $0x19] sm:$0x7f]
      %v1112 = vld [vmem:[%s862 + $0x21] sm:$0xff]
      %v1113 = vld [vmem:[%s862 + $0x29] sm:$0x7f]
      %v1114 = vld [vmem:[%s862 + $0x31] sm:$0xff]
      %v1115 = vld [vmem:[%s862 + $0x39] sm:$0x7f]
      %v1116 = vld [vmem:[%s862 + $0x41] sm:$0xff]
      %v1117 = vld [vmem:[%s862 + $0x49] sm:$0x7f]
      %v1118 = vld [vmem:[%s862 + $0x51] sm:$0xff]
      %v1119 = vld [vmem:[%s862 + $0x59] sm:$0x7f]
      %v1120 = vld [vmem:[%s862 + $0x61] sm:$0xff]
      %v1121 = vld [vmem:[%s862 + $0x69] sm:$0x7f]
      %v1122 = vld [vmem:[%s862 + $0x71] sm:$0xff]
      %v1123 = vld [vmem:[%s862 + $0x79] sm:$0x7f]
      %v1124 = vld [vmem:[%s862 + $0x81] sm:$0xff]
      %v1125 = vld [vmem:[%s862 + $0x89] sm:$0x7f]
      %v1126 = vld [vmem:[%s862 + $0x91] sm:$0xff]
      %v1127 = vld [vmem:[%s862 + $0x99] sm:$0x7f]
      %v1128 = vld [vmem:[%s862 + $0xa1] sm:$0xff]
      %v1129 = vld [vmem:[%s862 + $0xa9] sm:$0x7f]
      %v1130 = vld [vmem:[%s862 + $0xb1] sm:$0xff]
      %v1131 = vld [vmem:[%s862 + $0xb9] sm:$0x7f]
      %v1132 = vld [vmem:[%s862 + $0xc1] sm:$0xff]
      %v1133 = vld [vmem:[%s862 + $0xc9] sm:$0x7f]
      %v1134 = vld [vmem:[%s862 + $0xd1] sm:$0xff]
      %v1135 = vld [vmem:[%s862 + $0xd9] sm:$0x7f]
      %v1136 = vld [vmem:[%s862 + $0xe1] sm:$0xff]
      %v1137 = vld [vmem:[%s862 + $0xe9] sm:$0x7f]
      %1138 = vst [vmem:[#allocation2 + $0x40] sm:$0xff] %v1108
      %1139 = vst [vmem:[#allocation2 + $0x88] sm:$0x7f] %v1109
      %1140 = vst [vmem:[#allocation2 + $0xd0] sm:$0xff] %v1110
      %1141 = vst [vmem:[#allocation2 + $0x118] sm:$0x7f] %v1111
      %1142 = vst [vmem:[#allocation2 + $0x160] sm:$0xff] %v1112
      %1143 = vst [vmem:[#allocation2 + $0x1a8] sm:$0x7f] %v1113
      %1144 = vst [vmem:[#allocation2 + $0x1f0] sm:$0xff] %v1114
      %1145 = vst [vmem:[#allocation2 + $0x238] sm:$0x7f] %v1115
      %1146 = vst [vmem:[#allocation2 + $0x280] sm:$0xff] %v1116
      %1147 = vst [vmem:[#allocation2 + $0x2c8] sm:$0x7f] %v1117
      %1148 = vst [vmem:[#allocation2 + $0x310] sm:$0xff] %v1118
      %1149 = vst [vmem:[#allocation2 + $0x358] sm:$0x7f] %v1119
      %1150 = vst [vmem:[#allocation2 + $0x3a0] sm:$0xff] %v1120
      %1151 = vst [vmem:[#allocation2 + $0x3e8] sm:$0x7f] %v1121
      %1152 = vst [vmem:[#allocation2 + $0x430] sm:$0xff] %v1122
      %1153 = vst [vmem:[#allocation2 + $0x478] sm:$0x7f] %v1123
      %1154 = vst [vmem:[#allocation2 + $0x4c0] sm:$0xff] %v1124
      %1155 = vst [vmem:[#allocation2 + $0x508] sm:$0x7f] %v1125
      %1156 = vst [vmem:[#allocation2 + $0x550] sm:$0xff] %v1126
      %1157 = vst [vmem:[#allocation2 + $0x598] sm:$0x7f] %v1127
      %1158 = vst [vmem:[#allocation2 + $0x5e0] sm:$0xff] %v1128
      %1159 = vst [vmem:[#allocation2 + $0x628] sm:$0x7f] %v1129
      %1160 = vst [vmem:[#allocation2 + $0x670] sm:$0xff] %v1130
      %1161 = vst [vmem:[#allocation2 + $0x6b8] sm:$0x7f] %v1131
      %1162 = vst [vmem:[#allocation2 + $0x700] sm:$0xff] %v1132
      %1163 = vst [vmem:[#allocation2 + $0x748] sm:$0x7f] %v1133
      %1164 = vst [vmem:[#allocation2 + $0x790] sm:$0xff] %v1134
      %1165 = vst [vmem:[#allocation2 + $0x7d8] sm:$0x7f] %v1135
      %1166 = vst [vmem:[#allocation2 + $0x820] sm:$0xff] %v1136
      %1167 = vst [vmem:[#allocation2 + $0x868] sm:$0x7f] %v1137
      %v1168 = vld [vmem:[#allocation2] sm:$0xff]
      %v1169 = vld [vmem:[#allocation2 + $0x8] sm:$0xff]
      %v1170 = vld [vmem:[#allocation2 + $0x10] sm:$0xff]
      %v1171 = vld [vmem:[#allocation2 + $0x18] sm:$0xff]
      %v1172 = vld [vmem:[#allocation2 + $0x20] sm:$0xff]
      %v1173 = vld [vmem:[#allocation2 + $0x28] sm:$0xff]
      %v1174 = vld [vmem:[#allocation2 + $0x30] sm:$0xff]
      %v1175 = vld [vmem:[#allocation2 + $0x38] sm:$0xff]
      %v1176 = vld [vmem:[#allocation2 + $0x40] sm:$0xff]
      %v1177 = vld [vmem:[#allocation2 + $0x48] sm:$0xff]
      %v1178 = vld [vmem:[#allocation2 + $0x50] sm:$0xff]
      %v1179 = vld [vmem:[#allocation2 + $0x58] sm:$0xff]
      %v1180 = vld [vmem:[#allocation2 + $0x60] sm:$0xff]
      %v1181 = vld [vmem:[#allocation2 + $0x68] sm:$0xff]
      %v1182 = vld [vmem:[#allocation2 + $0x70] sm:$0xff]
      %v1183 = vld [vmem:[#allocation2 + $0x78] sm:$0xff]
      %v1184 = vld [vmem:[#allocation2 + $0x80] sm:$0xff]
      %v1185 = vld [vmem:[#allocation2 + $0x88] sm:$0xff]
      %v1186 = vld [vmem:[#allocation2 + $0x90] sm:$0xff]
      %v1187 = vld [vmem:[#allocation2 + $0x98] sm:$0xff]
      %v1188 = vld [vmem:[#allocation2 + $0xa0] sm:$0xff]
      %v1189 = vld [vmem:[#allocation2 + $0xa8] sm:$0xff]
      %v1190 = vld [vmem:[#allocation2 + $0xb0] sm:$0xff]
      %v1191 = vld [vmem:[#allocation2 + $0xb8] sm:$0xff]
      %v1192 = vld [vmem:[#allocation2 + $0xc0] sm:$0xff]
      %v1193 = vld [vmem:[#allocation2 + $0xc8] sm:$0xff]
      %v1194 = vld [vmem:[#allocation2 + $0xd0] sm:$0xff]
      %v1195 = vld [vmem:[#allocation2 + $0xd8] sm:$0xff]
      %v1196 = vld [vmem:[#allocation2 + $0xe0] sm:$0xff]
      %v1197 = vld [vmem:[#allocation2 + $0xe8] sm:$0xff]
      %v1198 = vld [vmem:[#allocation2 + $0xf0] sm:$0xff]
      %v1199 = vld [vmem:[#allocation2 + $0xf8] sm:$0xff]
      %v1200 = vld [vmem:[#allocation2 + $0x100] sm:$0xff]
      %v1201 = vld [vmem:[#allocation2 + $0x108] sm:$0xff]
      %v1202 = vld [vmem:[#allocation2 + $0x110] sm:$0xff]
      %v1203 = vld [vmem:[#allocation2 + $0x118] sm:$0xff]
      %v1204 = vld [vmem:[#allocation2 + $0x120] sm:$0xff]
      %v1205 = vld [vmem:[#allocation2 + $0x128] sm:$0xff]
      %v1206 = vld [vmem:[#allocation2 + $0x130] sm:$0xff]
      %v1207 = vld [vmem:[#allocation2 + $0x138] sm:$0xff]
      %v1208 = vld [vmem:[#allocation2 + $0x140] sm:$0xff]
      %v1209 = vld [vmem:[#allocation2 + $0x148] sm:$0xff]
      %v1210 = vld [vmem:[#allocation2 + $0x150] sm:$0xff]
      %v1211 = vld [vmem:[#allocation2 + $0x158] sm:$0xff]
      %v1212 = vld [vmem:[#allocation2 + $0x160] sm:$0xff]
      %v1213 = vld [vmem:[#allocation2 + $0x168] sm:$0xff]
      %v1214 = vld [vmem:[#allocation2 + $0x170] sm:$0xff]
      %v1215 = vld [vmem:[#allocation2 + $0x178] sm:$0xff]
      %v1216 = vld [vmem:[#allocation2 + $0x180] sm:$0xff]
      %v1217 = vld [vmem:[#allocation2 + $0x188] sm:$0xff]
      %v1218 = vld [vmem:[#allocation2 + $0x190] sm:$0xff]
      %v1219 = vld [vmem:[#allocation2 + $0x198] sm:$0xff]
      %v1220 = vld [vmem:[#allocation2 + $0x1a0] sm:$0xff]
      %v1221 = vld [vmem:[#allocation2 + $0x1a8] sm:$0xff]
      %v1222 = vld [vmem:[#allocation2 + $0x1b0] sm:$0xff]
      %v1223 = vld [vmem:[#allocation2 + $0x1b8] sm:$0xff]
      %v1224 = vld [vmem:[#allocation2 + $0x1c0] sm:$0xff]
      %v1225 = vld [vmem:[#allocation2 + $0x1c8] sm:$0xff]
      %v1226 = vld [vmem:[#allocation2 + $0x1d0] sm:$0xff]
      %v1227 = vld [vmem:[#allocation2 + $0x1d8] sm:$0xff]
      %v1228 = vld [vmem:[#allocation2 + $0x1e0] sm:$0xff]
      %v1229 = vld [vmem:[#allocation2 + $0x1e8] sm:$0xff]
      %v1230 = vld [vmem:[#allocation2 + $0x1f0] sm:$0xff]
      %v1231 = vld [vmem:[#allocation2 + $0x1f8] sm:$0xff]
      %v1232 = vld [vmem:[#allocation2 + $0x200] sm:$0xff]
      %v1233 = vld [vmem:[#allocation2 + $0x208] sm:$0xff]
      %v1234 = vld [vmem:[#allocation2 + $0x210] sm:$0xff]
      %v1235 = vld [vmem:[#allocation2 + $0x218] sm:$0xff]
      %v1236 = vld [vmem:[#allocation2 + $0x220] sm:$0xff]
      %v1237 = vld [vmem:[#allocation2 + $0x228] sm:$0xff]
      %v1238 = vld [vmem:[#allocation2 + $0x230] sm:$0xff]
      %v1239 = vld [vmem:[#allocation2 + $0x238] sm:$0xff]
      %v1240 = vld [vmem:[#allocation2 + $0x240] sm:$0xff]
      %v1241 = vld [vmem:[#allocation2 + $0x248] sm:$0xff]
      %v1242 = vld [vmem:[#allocation2 + $0x250] sm:$0xff]
      %v1243 = vld [vmem:[#allocation2 + $0x258] sm:$0xff]
      %v1244 = vld [vmem:[#allocation2 + $0x260] sm:$0xff]
      %v1245 = vld [vmem:[#allocation2 + $0x268] sm:$0xff]
      %v1246 = vld [vmem:[#allocation2 + $0x270] sm:$0xff]
      %v1247 = vld [vmem:[#allocation2 + $0x278] sm:$0xff]
      %v1248 = vld [vmem:[#allocation2 + $0x280] sm:$0xff]
      %v1249 = vld [vmem:[#allocation2 + $0x288] sm:$0xff]
      %v1250 = vld [vmem:[#allocation2 + $0x290] sm:$0xff]
      %v1251 = vld [vmem:[#allocation2 + $0x298] sm:$0xff]
      %v1252 = vld [vmem:[#allocation2 + $0x2a0] sm:$0xff]
      %v1253 = vld [vmem:[#allocation2 + $0x2a8] sm:$0xff]
      %v1254 = vld [vmem:[#allocation2 + $0x2b0] sm:$0xff]
      %v1255 = vld [vmem:[#allocation2 + $0x2b8] sm:$0xff]
      %v1256 = vld [vmem:[#allocation2 + $0x2c0] sm:$0xff]
      %v1257 = vld [vmem:[#allocation2 + $0x2c8] sm:$0xff]
      %v1258 = vld [vmem:[#allocation2 + $0x2d0] sm:$0xff]
      %v1259 = vld [vmem:[#allocation2 + $0x2d8] sm:$0xff]
      %v1260 = vld [vmem:[#allocation2 + $0x2e0] sm:$0xff]
      %v1261 = vld [vmem:[#allocation2 + $0x2e8] sm:$0xff]
      %v1262 = vld [vmem:[#allocation2 + $0x2f0] sm:$0xff]
      %v1263 = vld [vmem:[#allocation2 + $0x2f8] sm:$0xff]
      %v1264 = vld [vmem:[#allocation2 + $0x300] sm:$0xff]
      %v1265 = vld [vmem:[#allocation2 + $0x308] sm:$0xff]
      %v1266 = vld [vmem:[#allocation2 + $0x310] sm:$0xff]
      %v1267 = vld [vmem:[#allocation2 + $0x318] sm:$0xff]
      %v1268 = vld [vmem:[#allocation2 + $0x320] sm:$0xff]
      %v1269 = vld [vmem:[#allocation2 + $0x328] sm:$0xff]
      %v1270 = vld [vmem:[#allocation2 + $0x330] sm:$0xff]
      %v1271 = vld [vmem:[#allocation2 + $0x338] sm:$0xff]
      %v1272 = vld [vmem:[#allocation2 + $0x340] sm:$0xff]
      %v1273 = vld [vmem:[#allocation2 + $0x348] sm:$0xff]
      %v1274 = vld [vmem:[#allocation2 + $0x350] sm:$0xff]
      %v1275 = vld [vmem:[#allocation2 + $0x358] sm:$0xff]
      %v1276 = vld [vmem:[#allocation2 + $0x360] sm:$0xff]
      %v1277 = vld [vmem:[#allocation2 + $0x368] sm:$0xff]
      %v1278 = vld [vmem:[#allocation2 + $0x370] sm:$0xff]
      %v1279 = vld [vmem:[#allocation2 + $0x378] sm:$0xff]
      %v1280 = vld [vmem:[#allocation2 + $0x380] sm:$0xff]
      %v1281 = vld [vmem:[#allocation2 + $0x388] sm:$0xff]
      %v1282 = vld [vmem:[#allocation2 + $0x390] sm:$0xff]
      %v1283 = vld [vmem:[#allocation2 + $0x398] sm:$0xff]
      %v1284 = vld [vmem:[#allocation2 + $0x3a0] sm:$0xff]
      %v1285 = vld [vmem:[#allocation2 + $0x3a8] sm:$0xff]
      %v1286 = vld [vmem:[#allocation2 + $0x3b0] sm:$0xff]
      %v1287 = vld [vmem:[#allocation2 + $0x3b8] sm:$0xff]
      %v1288 = vld [vmem:[#allocation2 + $0x3c0] sm:$0xff]
      %v1289 = vld [vmem:[#allocation2 + $0x3c8] sm:$0xff]
      %v1290 = vld [vmem:[#allocation2 + $0x3d0] sm:$0xff]
      %v1291 = vld [vmem:[#allocation2 + $0x3d8] sm:$0xff]
      %v1292 = vld [vmem:[#allocation2 + $0x3e0] sm:$0xff]
      %v1293 = vld [vmem:[#allocation2 + $0x3e8] sm:$0xff]
      %v1294 = vld [vmem:[#allocation2 + $0x3f0] sm:$0xff]
      %v1295 = vld [vmem:[#allocation2 + $0x3f8] sm:$0xff]
      %v1296 = vld [vmem:[#allocation2 + $0x400] sm:$0xff]
      %v1297 = vld [vmem:[#allocation2 + $0x408] sm:$0xff]
      %v1298 = vld [vmem:[#allocation2 + $0x410] sm:$0xff]
      %v1299 = vld [vmem:[#allocation2 + $0x418] sm:$0xff]
      %v1300 = vld [vmem:[#allocation2 + $0x420] sm:$0xff]
      %v1301 = vld [vmem:[#allocation2 + $0x428] sm:$0xff]
      %v1302 = vld [vmem:[#allocation2 + $0x430] sm:$0xff]
      %v1303 = vld [vmem:[#allocation2 + $0x438] sm:$0xff]
      %v1304 = vld [vmem:[#allocation2 + $0x440] sm:$0xff]
      %v1305 = vld [vmem:[#allocation2 + $0x448] sm:$0xff]
      %v1306 = vld [vmem:[#allocation2 + $0x450] sm:$0xff]
      %v1307 = vld [vmem:[#allocation2 + $0x458] sm:$0xff]
      %v1308 = vld [vmem:[#allocation2 + $0x460] sm:$0xff]
      %v1309 = vld [vmem:[#allocation2 + $0x468] sm:$0xff]
      %v1310 = vld [vmem:[#allocation2 + $0x470] sm:$0xff]
      %v1311 = vld [vmem:[#allocation2 + $0x478] sm:$0xff]
      %v1312 = vld [vmem:[#allocation2 + $0x480] sm:$0xff]
      %v1313 = vld [vmem:[#allocation2 + $0x488] sm:$0xff]
      %v1314 = vld [vmem:[#allocation2 + $0x490] sm:$0xff]
      %v1315 = vld [vmem:[#allocation2 + $0x498] sm:$0xff]
      %v1316 = vld [vmem:[#allocation2 + $0x4a0] sm:$0xff]
      %v1317 = vld [vmem:[#allocation2 + $0x4a8] sm:$0xff]
      %v1318 = vld [vmem:[#allocation2 + $0x4b0] sm:$0xff]
      %v1319 = vld [vmem:[#allocation2 + $0x4b8] sm:$0xff]
      %v1320 = vld [vmem:[#allocation2 + $0x4c0] sm:$0xff]
      %v1321 = vld [vmem:[#allocation2 + $0x4c8] sm:$0xff]
      %v1322 = vld [vmem:[#allocation2 + $0x4d0] sm:$0xff]
      %v1323 = vld [vmem:[#allocation2 + $0x4d8] sm:$0xff]
      %v1324 = vld [vmem:[#allocation2 + $0x4e0] sm:$0xff]
      %v1325 = vld [vmem:[#allocation2 + $0x4e8] sm:$0xff]
      %v1326 = vld [vmem:[#allocation2 + $0x4f0] sm:$0xff]
      %v1327 = vld [vmem:[#allocation2 + $0x4f8] sm:$0xff]
      %v1328 = vld [vmem:[#allocation2 + $0x500] sm:$0xff]
      %v1329 = vld [vmem:[#allocation2 + $0x508] sm:$0xff]
      %v1330 = vld [vmem:[#allocation2 + $0x510] sm:$0xff]
      %v1331 = vld [vmem:[#allocation2 + $0x518] sm:$0xff]
      %v1332 = vld [vmem:[#allocation2 + $0x520] sm:$0xff]
      %v1333 = vld [vmem:[#allocation2 + $0x528] sm:$0xff]
      %v1334 = vld [vmem:[#allocation2 + $0x530] sm:$0xff]
      %v1335 = vld [vmem:[#allocation2 + $0x538] sm:$0xff]
      %v1336 = vld [vmem:[#allocation2 + $0x540] sm:$0xff]
      %v1337 = vld [vmem:[#allocation2 + $0x548] sm:$0xff]
      %v1338 = vld [vmem:[#allocation2 + $0x550] sm:$0xff]
      %v1339 = vld [vmem:[#allocation2 + $0x558] sm:$0xff]
      %v1340 = vld [vmem:[#allocation2 + $0x560] sm:$0xff]
      %v1341 = vld [vmem:[#allocation2 + $0x568] sm:$0xff]
      %v1342 = vld [vmem:[#allocation2 + $0x570] sm:$0xff]
      %v1343 = vld [vmem:[#allocation2 + $0x578] sm:$0xff]
      %v1344 = vld [vmem:[#allocation2 + $0x580] sm:$0xff]
      %v1345 = vld [vmem:[#allocation2 + $0x588] sm:$0xff]
      %v1346 = vld [vmem:[#allocation2 + $0x590] sm:$0xff]
      %v1347 = vld [vmem:[#allocation2 + $0x598] sm:$0xff]
      %v1348 = vld [vmem:[#allocation2 + $0x5a0] sm:$0xff]
      %v1349 = vld [vmem:[#allocation2 + $0x5a8] sm:$0xff]
      %v1350 = vld [vmem:[#allocation2 + $0x5b0] sm:$0xff]
      %v1351 = vld [vmem:[#allocation2 + $0x5b8] sm:$0xff]
      %v1352 = vld [vmem:[#allocation2 + $0x5c0] sm:$0xff]
      %v1353 = vld [vmem:[#allocation2 + $0x5c8] sm:$0xff]
      %v1354 = vld [vmem:[#allocation2 + $0x5d0] sm:$0xff]
      %v1355 = vld [vmem:[#allocation2 + $0x5d8] sm:$0xff]
      %v1356 = vld [vmem:[#allocation2 + $0x5e0] sm:$0xff]
      %v1357 = vld [vmem:[#allocation2 + $0x5e8] sm:$0xff]
      %v1358 = vld [vmem:[#allocation2 + $0x5f0] sm:$0xff]
      %v1359 = vld [vmem:[#allocation2 + $0x5f8] sm:$0xff]
      %v1360 = vld [vmem:[#allocation2 + $0x600] sm:$0xff]
      %v1361 = vld [vmem:[#allocation2 + $0x608] sm:$0xff]
      %v1362 = vld [vmem:[#allocation2 + $0x610] sm:$0xff]
      %v1363 = vld [vmem:[#allocation2 + $0x618] sm:$0xff]
      %v1364 = vld [vmem:[#allocation2 + $0x620] sm:$0xff]
      %v1365 = vld [vmem:[#allocation2 + $0x628] sm:$0xff]
      %v1366 = vld [vmem:[#allocation2 + $0x630] sm:$0xff]
      %v1367 = vld [vmem:[#allocation2 + $0x638] sm:$0xff]
      %v1368 = vld [vmem:[#allocation2 + $0x640] sm:$0xff]
      %v1369 = vld [vmem:[#allocation2 + $0x648] sm:$0xff]
      %v1370 = vld [vmem:[#allocation2 + $0x650] sm:$0xff]
      %v1371 = vld [vmem:[#allocation2 + $0x658] sm:$0xff]
      %v1372 = vld [vmem:[#allocation2 + $0x660] sm:$0xff]
      %v1373 = vld [vmem:[#allocation2 + $0x668] sm:$0xff]
      %v1374 = vld [vmem:[#allocation2 + $0x670] sm:$0xff]
      %v1375 = vld [vmem:[#allocation2 + $0x678] sm:$0xff]
      %v1376 = vld [vmem:[#allocation2 + $0x680] sm:$0xff]
      %v1377 = vld [vmem:[#allocation2 + $0x688] sm:$0xff]
      %v1378 = vld [vmem:[#allocation2 + $0x690] sm:$0xff]
      %v1379 = vld [vmem:[#allocation2 + $0x698] sm:$0xff]
      %v1380 = vld [vmem:[#allocation2 + $0x6a0] sm:$0xff]
      %v1381 = vld [vmem:[#allocation2 + $0x6a8] sm:$0xff]
      %v1382 = vld [vmem:[#allocation2 + $0x6b0] sm:$0xff]
      %v1383 = vld [vmem:[#allocation2 + $0x6b8] sm:$0xff]
      %v1384 = vld [vmem:[#allocation2 + $0x6c0] sm:$0xff]
      %v1385 = vld [vmem:[#allocation2 + $0x6c8] sm:$0xff]
      %v1386 = vld [vmem:[#allocation2 + $0x6d0] sm:$0xff]
      %v1387 = vld [vmem:[#allocation2 + $0x6d8] sm:$0xff]
      %v1388 = vld [vmem:[#allocation2 + $0x6e0] sm:$0xff]
      %v1389 = vld [vmem:[#allocation2 + $0x6e8] sm:$0xff]
      %v1390 = vld [vmem:[#allocation2 + $0x6f0] sm:$0xff]
      %v1391 = vld [vmem:[#allocation2 + $0x6f8] sm:$0xff]
      %v1392 = vld [vmem:[#allocation2 + $0x700] sm:$0xff]
      %v1393 = vld [vmem:[#allocation2 + $0x708] sm:$0xff]
      %v1394 = vld [vmem:[#allocation2 + $0x710] sm:$0xff]
      %v1395 = vld [vmem:[#allocation2 + $0x718] sm:$0xff]
      %v1396 = vld [vmem:[#allocation2 + $0x720] sm:$0xff]
      %v1397 = vld [vmem:[#allocation2 + $0x728] sm:$0xff]
      %v1398 = vld [vmem:[#allocation2 + $0x730] sm:$0xff]
      %v1399 = vld [vmem:[#allocation2 + $0x738] sm:$0xff]
      %v1400 = vld [vmem:[#allocation2 + $0x740] sm:$0xff]
      %v1401 = vld [vmem:[#allocation2 + $0x748] sm:$0xff]
      %v1402 = vld [vmem:[#allocation2 + $0x750] sm:$0xff]
      %v1403 = vld [vmem:[#allocation2 + $0x758] sm:$0xff]
      %v1404 = vld [vmem:[#allocation2 + $0x760] sm:$0xff]
      %v1405 = vld [vmem:[#allocation2 + $0x768] sm:$0xff]
      %v1406 = vld [vmem:[#allocation2 + $0x770] sm:$0xff]
      %v1407 = vld [vmem:[#allocation2 + $0x778] sm:$0xff]
      %v1408 = vld [vmem:[#allocation2 + $0x780] sm:$0xff]
      %v1409 = vld [vmem:[#allocation2 + $0x788] sm:$0xff]
      %v1410 = vld [vmem:[#allocation2 + $0x790] sm:$0xff]
      %v1411 = vld [vmem:[#allocation2 + $0x798] sm:$0xff]
      %v1412 = vld [vmem:[#allocation2 + $0x7a0] sm:$0xff]
      %v1413 = vld [vmem:[#allocation2 + $0x7a8] sm:$0xff]
      %v1414 = vld [vmem:[#allocation2 + $0x7b0] sm:$0xff]
      %v1415 = vld [vmem:[#allocation2 + $0x7b8] sm:$0xff]
      %v1416 = vld [vmem:[#allocation2 + $0x7c0] sm:$0xff]
      %v1417 = vld [vmem:[#allocation2 + $0x7c8] sm:$0xff]
      %v1418 = vld [vmem:[#allocation2 + $0x7d0] sm:$0xff]
      %v1419 = vld [vmem:[#allocation2 + $0x7d8] sm:$0xff]
      %v1420 = vld [vmem:[#allocation2 + $0x7e0] sm:$0xff]
      %v1421 = vld [vmem:[#allocation2 + $0x7e8] sm:$0xff]
      %v1422 = vld [vmem:[#allocation2 + $0x7f0] sm:$0xff]
      %v1423 = vld [vmem:[#allocation2 + $0x7f8] sm:$0xff]
      %v1424 = vld [vmem:[#allocation2 + $0x800] sm:$0xff]
      %v1425 = vld [vmem:[#allocation2 + $0x808] sm:$0xff]
      %v1426 = vld [vmem:[#allocation2 + $0x810] sm:$0xff]
      %v1427 = vld [vmem:[#allocation2 + $0x818] sm:$0xff]
      %v1428 = vld [vmem:[#allocation2 + $0x820] sm:$0xff]
      %v1429 = vld [vmem:[#allocation2 + $0x828] sm:$0xff]
      %v1430 = vld [vmem:[#allocation2 + $0x830] sm:$0xff]
      %v1431 = vld [vmem:[#allocation2 + $0x838] sm:$0xff]
      %v1432 = vld [vmem:[#allocation2 + $0x840] sm:$0xff]
      %v1433 = vld [vmem:[#allocation2 + $0x848] sm:$0xff]
      %v1434 = vld [vmem:[#allocation2 + $0x850] sm:$0xff]
      %v1435 = vld [vmem:[#allocation2 + $0x858] sm:$0xff]
      %v1436 = vld [vmem:[#allocation2 + $0x860] sm:$0xff]
      %v1437 = vld [vmem:[#allocation2 + $0x868] sm:$0xff]
      %v1438 = vld [vmem:[#allocation2 + $0x870] sm:$0xff]
      %v1439 = vld [vmem:[#allocation2 + $0x878] sm:$0xff]
      %v1440 = vld [vmem:[#allocation2 + $0x880] sm:$0xff]
      %v1441 = vld [vmem:[#allocation2 + $0x888] sm:$0xff]
      %v1442 = vld [vmem:[#allocation2 + $0x890] sm:$0xff]
      %v1443 = vld [vmem:[#allocation2 + $0x898] sm:$0xff]
      %v1444 = vld [vmem:[#allocation2 + $0x8a0] sm:$0xff]
      %v1445 = vld [vmem:[#allocation2 + $0x8a8] sm:$0xff]
      %v1446 = vld [vmem:[#allocation2 + $0x8b0] sm:$0xff]
      %v1447 = vld [vmem:[#allocation2 + $0x8b8] sm:$0xff]
      %v1448 = vld [vmem:[#allocation2 + $0x8c0] sm:$0xff]
      %v1449 = vld [vmem:[#allocation2 + $0x8c8] sm:$0xff]
      %v1450 = vld [vmem:[#allocation2 + $0x8d0] sm:$0xff]
      %v1451 = vld [vmem:[#allocation2 + $0x8d8] sm:$0xff]
      %v1452 = vld [vmem:[#allocation2 + $0x8e0] sm:$0xff]
      %v1453 = vld [vmem:[#allocation2 + $0x8e8] sm:$0xff]
      %v1454 = vld [vmem:[#allocation2 + $0x8f0] sm:$0xff]
      %v1455 = vld [vmem:[#allocation2 + $0x8f8] sm:$0xff]
      %v1456 = vld [vmem:[%s1] sm:$0xff]
      %v1457 = vld [vmem:[%s1 + $0x8] sm:$0xff]
      %v1458 = vld [vmem:[%s1 + $0x10] sm:$0xff]
      %v1459 = vld [vmem:[%s1 + $0x18] sm:$0xff]
      %v1460 = vld [vmem:[%s1 + $0x20] sm:$0xff]
      %v1461 = vld [vmem:[%s1 + $0x28] sm:$0xff]
      %v1462 = vld [vmem:[%s1 + $0x30] sm:$0xff]
      %v1463 = vld [vmem:[%s1 + $0x38] sm:$0xff]
      %v1464 = vld [vmem:[%s1 + $0x40] sm:$0xff]
      %v1465 = vld [vmem:[%s1 + $0x48] sm:$0xff]
      %v1466 = vld [vmem:[%s1 + $0x50] sm:$0xff]
      %v1467 = vld [vmem:[%s1 + $0x58] sm:$0xff]
      %v1468 = vld [vmem:[%s1 + $0x60] sm:$0xff]
      %v1469 = vld [vmem:[%s1 + $0x68] sm:$0xff]
      %v1470 = vld [vmem:[%s1 + $0x70] sm:$0xff]
      %v1471 = vld [vmem:[%s1 + $0x78] sm:$0xff]
      %v1472 = vld [vmem:[%s1 + $0x80] sm:$0xff]
      %v1473 = vld [vmem:[%s1 + $0x88] sm:$0xff]
      %v1474 = vld [vmem:[%s1 + $0x90] sm:$0xff]
      %v1475 = vld [vmem:[%s1 + $0x98] sm:$0xff]
      %v1476 = vld [vmem:[%s1 + $0xa0] sm:$0xff]
      %v1477 = vld [vmem:[%s1 + $0xa8] sm:$0xff]
      %v1478 = vld [vmem:[%s1 + $0xb0] sm:$0xff]
      %v1479 = vld [vmem:[%s1 + $0xb8] sm:$0xff]
      %v1480 = vld [vmem:[%s1 + $0xc0] sm:$0xff]
      %v1481 = vld [vmem:[%s1 + $0xc8] sm:$0xff]
      %v1482 = vld [vmem:[%s1 + $0xd0] sm:$0xff]
      %v1483 = vld [vmem:[%s1 + $0xd8] sm:$0xff]
      %v1484 = vld [vmem:[%s1 + $0xe0] sm:$0xff]
      %v1485 = vld [vmem:[%s1 + $0xe8] sm:$0xff]
      %v1486 = vld [vmem:[%s1 + $0xf0] sm:$0xff]
      %v1487 = vld [vmem:[%s1 + $0xf8] sm:$0xff]
      %v1488 = vld [vmem:[%s1 + $0x100] sm:$0xff]
      %v1489 = vld [vmem:[%s1 + $0x108] sm:$0xff]
      %v1490 = vld [vmem:[%s1 + $0x110] sm:$0xff]
      %v1491 = vld [vmem:[%s1 + $0x118] sm:$0xff]
      %v1492 = vld [vmem:[%s1 + $0x120] sm:$0xff]
      %v1493 = vld [vmem:[%s1 + $0x128] sm:$0xff]
      %v1494 = vld [vmem:[%s1 + $0x130] sm:$0xff]
      %v1495 = vld [vmem:[%s1 + $0x138] sm:$0xff]
      %v1496 = vld [vmem:[%s1 + $0x140] sm:$0xff]
      %v1497 = vld [vmem:[%s1 + $0x148] sm:$0xff]
      %v1498 = vld [vmem:[%s1 + $0x150] sm:$0xff]
      %v1499 = vld [vmem:[%s1 + $0x158] sm:$0xff]
      %v1500 = vld [vmem:[%s1 + $0x160] sm:$0xff]
      %v1501 = vld [vmem:[%s1 + $0x168] sm:$0xff]
      %v1502 = vld [vmem:[%s1 + $0x170] sm:$0xff]
      %v1503 = vld [vmem:[%s1 + $0x178] sm:$0xff]
      %v1504 = vld [vmem:[%s1 + $0x180] sm:$0xff]
      %v1505 = vld [vmem:[%s1 + $0x188] sm:$0xff]
      %v1506 = vld [vmem:[%s1 + $0x190] sm:$0xff]
      %v1507 = vld [vmem:[%s1 + $0x198] sm:$0xff]
      %v1508 = vld [vmem:[%s1 + $0x1a0] sm:$0xff]
      %v1509 = vld [vmem:[%s1 + $0x1a8] sm:$0xff]
      %v1510 = vld [vmem:[%s1 + $0x1b0] sm:$0xff]
      %v1511 = vld [vmem:[%s1 + $0x1b8] sm:$0xff]
      %v1512 = vld [vmem:[%s1 + $0x1c0] sm:$0xff]
      %v1513 = vld [vmem:[%s1 + $0x1c8] sm:$0xff]
      %v1514 = vld [vmem:[%s1 + $0x1d0] sm:$0xff]
      %v1515 = vld [vmem:[%s1 + $0x1d8] sm:$0xff]
      %v1516 = vld [vmem:[%s1 + $0x1e0] sm:$0xff]
      %v1517 = vld [vmem:[%s1 + $0x1e8] sm:$0xff]
      %v1518 = vld [vmem:[%s1 + $0x1f0] sm:$0xff]
      %v1519 = vld [vmem:[%s1 + $0x1f8] sm:$0xff]
      %v1520 = vld [vmem:[%s1 + $0x200] sm:$0xff]
      %v1521 = vld [vmem:[%s1 + $0x208] sm:$0xff]
      %v1522 = vld [vmem:[%s1 + $0x210] sm:$0xff]
      %v1523 = vld [vmem:[%s1 + $0x218] sm:$0xff]
      %v1524 = vld [vmem:[%s1 + $0x220] sm:$0xff]
      %v1525 = vld [vmem:[%s1 + $0x228] sm:$0xff]
      %v1526 = vld [vmem:[%s1 + $0x230] sm:$0xff]
      %v1527 = vld [vmem:[%s1 + $0x238] sm:$0xff]
      %v1528 = vld [vmem:[%s1 + $0x240] sm:$0xff]
      %v1529 = vld [vmem:[%s1 + $0x248] sm:$0xff]
      %v1530 = vld [vmem:[%s1 + $0x250] sm:$0xff]
      %v1531 = vld [vmem:[%s1 + $0x258] sm:$0xff]
      %v1532 = vld [vmem:[%s1 + $0x260] sm:$0xff]
      %v1533 = vld [vmem:[%s1 + $0x268] sm:$0xff]
      %v1534 = vld [vmem:[%s1 + $0x270] sm:$0xff]
      %v1535 = vld [vmem:[%s1 + $0x278] sm:$0xff]
      %v1536 = vld [vmem:[%s1 + $0x280] sm:$0xff]
      %v1537 = vld [vmem:[%s1 + $0x288] sm:$0xff]
      %v1538 = vld [vmem:[%s1 + $0x290] sm:$0xff]
      %v1539 = vld [vmem:[%s1 + $0x298] sm:$0xff]
      %v1540 = vld [vmem:[%s1 + $0x2a0] sm:$0xff]
      %v1541 = vld [vmem:[%s1 + $0x2a8] sm:$0xff]
      %v1542 = vld [vmem:[%s1 + $0x2b0] sm:$0xff]
      %v1543 = vld [vmem:[%s1 + $0x2b8] sm:$0xff]
      %v1544 = vld [vmem:[%s1 + $0x2c0] sm:$0xff]
      %v1545 = vld [vmem:[%s1 + $0x2c8] sm:$0xff]
      %v1546 = vld [vmem:[%s1 + $0x2d0] sm:$0xff]
      %v1547 = vld [vmem:[%s1 + $0x2d8] sm:$0xff]
      %v1548 = vld [vmem:[%s1 + $0x2e0] sm:$0xff]
      %v1549 = vld [vmem:[%s1 + $0x2e8] sm:$0xff]
      %v1550 = vld [vmem:[%s1 + $0x2f0] sm:$0xff]
      %v1551 = vld [vmem:[%s1 + $0x2f8] sm:$0xff]
      %v1552 = vld [vmem:[%s1 + $0x300] sm:$0xff]
      %v1553 = vld [vmem:[%s1 + $0x308] sm:$0xff]
      %v1554 = vld [vmem:[%s1 + $0x310] sm:$0xff]
      %v1555 = vld [vmem:[%s1 + $0x318] sm:$0xff]
      %v1556 = vld [vmem:[%s1 + $0x320] sm:$0xff]
      %v1557 = vld [vmem:[%s1 + $0x328] sm:$0xff]
      %v1558 = vld [vmem:[%s1 + $0x330] sm:$0xff]
      %v1559 = vld [vmem:[%s1 + $0x338] sm:$0xff]
      %v1560 = vld [vmem:[%s1 + $0x340] sm:$0xff]
      %v1561 = vld [vmem:[%s1 + $0x348] sm:$0xff]
      %v1562 = vld [vmem:[%s1 + $0x350] sm:$0xff]
      %v1563 = vld [vmem:[%s1 + $0x358] sm:$0xff]
      %v1564 = vld [vmem:[%s1 + $0x360] sm:$0xff]
      %v1565 = vld [vmem:[%s1 + $0x368] sm:$0xff]
      %v1566 = vld [vmem:[%s1 + $0x370] sm:$0xff]
      %v1567 = vld [vmem:[%s1 + $0x378] sm:$0xff]
      %v1568 = vld [vmem:[%s1 + $0x380] sm:$0xff]
      %v1569 = vld [vmem:[%s1 + $0x388] sm:$0xff]
      %v1570 = vld [vmem:[%s1 + $0x390] sm:$0xff]
      %v1571 = vld [vmem:[%s1 + $0x398] sm:$0xff]
      %v1572 = vld [vmem:[%s1 + $0x3a0] sm:$0xff]
      %v1573 = vld [vmem:[%s1 + $0x3a8] sm:$0xff]
      %v1574 = vld [vmem:[%s1 + $0x3b0] sm:$0xff]
      %v1575 = vld [vmem:[%s1 + $0x3b8] sm:$0xff]
      %v1576 = vld [vmem:[%s1 + $0x3c0] sm:$0xff]
      %v1577 = vld [vmem:[%s1 + $0x3c8] sm:$0xff]
      %v1578 = vld [vmem:[%s1 + $0x3d0] sm:$0xff]
      %v1579 = vld [vmem:[%s1 + $0x3d8] sm:$0xff]
      %v1580 = vld [vmem:[%s1 + $0x3e0] sm:$0xff]
      %v1581 = vld [vmem:[%s1 + $0x3e8] sm:$0xff]
      %v1582 = vld [vmem:[%s1 + $0x3f0] sm:$0xff]
      %v1583 = vld [vmem:[%s1 + $0x3f8] sm:$0xff]
      %v1584 = vld [vmem:[%s1 + $0x400] sm:$0xff]
      %v1585 = vld [vmem:[%s1 + $0x408] sm:$0xff]
      %v1586 = vld [vmem:[%s1 + $0x410] sm:$0xff]
      %v1587 = vld [vmem:[%s1 + $0x418] sm:$0xff]
      %v1588 = vld [vmem:[%s1 + $0x420] sm:$0xff]
      %v1589 = vld [vmem:[%s1 + $0x428] sm:$0xff]
      %v1590 = vld [vmem:[%s1 + $0x430] sm:$0xff]
      %v1591 = vld [vmem:[%s1 + $0x438] sm:$0xff]
      %v1592 = vld [vmem:[%s1 + $0x440] sm:$0xff]
      %v1593 = vld [vmem:[%s1 + $0x448] sm:$0xff]
      %v1594 = vld [vmem:[%s1 + $0x450] sm:$0xff]
      %v1595 = vld [vmem:[%s1 + $0x458] sm:$0xff]
      %v1596 = vld [vmem:[%s1 + $0x460] sm:$0xff]
      %v1597 = vld [vmem:[%s1 + $0x468] sm:$0xff]
      %v1598 = vld [vmem:[%s1 + $0x470] sm:$0xff]
      %v1599 = vld [vmem:[%s1 + $0x478] sm:$0xff]
      %1600 = vmatprep.subr.mxu0 0.0
      %1601 = vmatpush1.msra.mxu0 %v1456
      %1602 = vmatprep.subr.mxu0 0.0
      %1603 = vmatpush1.msra.mxu0 %v1457
      %1604 = vmatprep.subr.mxu0 0.0
      %1605 = vmatpush1.msra.mxu0 %v1458
      %1606 = vmatprep.subr.mxu0 0.0
      %1607 = vmatpush1.msra.mxu0 %v1459
      %1608 = vmatprep.subr.mxu0 0.0
      %1609 = vmatpush1.msra.mxu0 %v1460
      %1610 = vmatprep.subr.mxu0 0.0
      %1611 = vmatpush1.msra.mxu0 %v1461
      %1612 = vmatprep.subr.mxu0 0.0
      %1613 = vmatpush1.msra.mxu0 %v1462
      %1614 = vmatprep.subr.mxu0 0.0
      %1615 = vmatpush1.msra.mxu0 %v1463
      %1616 = vmatprep.subr.mxu0 0.0
      %1617 = vmatpush1.msra.mxu0 %v1464
      %1618 = vmatprep.subr.mxu0 0.0
      %1619 = vmatpush1.msra.mxu0 %v1465
      %1620 = vmatprep.subr.mxu0 0.0
      %1621 = vmatpush1.msra.mxu0 %v1466
      %1622 = vmatprep.subr.mxu0 0.0
      %1623 = vmatpush1.msra.mxu0 %v1467
      %1624 = vmatprep.subr.mxu0 0.0
      %1625 = vmatpush1.msra.mxu0 %v1468
      %1626 = vmatprep.subr.mxu0 0.0
      %1627 = vmatpush1.msra.mxu0 %v1469
      %1628 = vmatprep.subr.mxu0 0.0
      %1629 = vmatpush1.msra.mxu0 %v1470
      %1630 = vmatprep.subr.mxu0 0.0
      %1631 = vmatpush1.msra.mxu0 %v1471
      %1632 = vmatprep.subr.mxu0 0.0
      %1633 = vmatpush1.msra.mxu0 %v1472
      %1634 = vmatprep.subr.mxu0 0.0
      %1635 = vmatpush1.msra.mxu0 %v1473
      %1636 = vmatprep.subr.mxu0 0.0
      %1637 = vmatpush1.msra.mxu0 %v1474
      %1638 = vmatprep.subr.mxu0 0.0
      %1639 = vmatpush1.msra.mxu0 %v1475
      %1640 = vmatprep.subr.mxu0 0.0
      %1641 = vmatpush1.msra.mxu0 %v1476
      %1642 = vmatprep.subr.mxu0 0.0
      %1643 = vmatpush1.msra.mxu0 %v1477
      %1644 = vmatprep.subr.mxu0 0.0
      %1645 = vmatpush1.msra.mxu0 %v1478
      %1646 = vmatprep.subr.mxu0 0.0
      %1647 = vmatpush1.msra.mxu0 %v1479
      %1648 = vmatprep.subr.mxu0 0.0
      %1649 = vmatpush1.msra.mxu0 %v1480
      %1650 = vmatprep.subr.mxu0 0.0
      %1651 = vmatpush1.msra.mxu0 %v1481
      %1652 = vmatprep.subr.mxu0 0.0
      %1653 = vmatpush1.msra.mxu0 %v1482
      %1654 = vmatprep.subr.mxu0 0.0
      %1655 = vmatpush1.msra.mxu0 %v1483
      %1656 = vmatprep.subr.mxu0 0.0
      %1657 = vmatpush1.msra.mxu0 %v1484
      %1658 = vmatprep.subr.mxu0 0.0
      %1659 = vmatpush1.msra.mxu0 %v1485
      %1660 = vmatprep.subr.mxu0 0.0
      %1661 = vmatpush1.msra.mxu0 %v1486
      %1662 = vmatprep.subr.mxu0 0.0
      %1663 = vmatpush1.msra.mxu0 %v1487
      %1664 = vmatprep.mubr.f32.mxu0 %v1169
      %1665 = vmatmul.mubr.f32.gmra.mrb[0].mxu0 %v1168
      %v1666 = vpop.f32.mrb[0].mxu0
      %v1667 = vadd.f32 0.0, %v1666
      %v1668 = vpop.f32.mrb[0].mxu0
      %1669 = vmatprep.mubr.f32.mxu0 %v1178
      %1670 = vmatmul.mubr.f32.gmra.mrb[0].mxu0 %v1177
      %v1671 = vpop.f32.mrb[0].mxu0
      %v1672 = vadd.f32 0.0, %v1671
      %v1673 = vpop.f32.mrb[0].mxu0
      %1674 = vmatprep.mubr.f32.mxu0 %v1187
      %1675 = vmatmul.mubr.f32.gmra.mrb[0].mxu0 %v1186
      %v1676 = vpop.f32.mrb[0].mxu0
      %v1677 = vadd.f32 0.0, %v1676
      %v1678 = vpop.f32.mrb[0].mxu0
      %1679 = vmatprep.mubr.f32.mxu0 %v1196
      %1680 = vmatmul.mubr.f32.gmra.mrb[0].mxu0 %v1195
      %v1681 = vpop.f32.mrb[0].mxu0
      %v1682 = vadd.f32 0.0, %v1681
      %v1683 = vpop.f32.mrb[0].mxu0
      %1684 = vmatprep.mubr.f32.mxu0 %v1205
      %1685 = vmatmul.mubr.f32.gmra.mrb[0].mxu0 %v1204
      %v1686 = vpop.f32.mrb[0].mxu0
      %v1687 = vadd.f32 0.0, %v1686
      %v1688 = vpop.f32.mrb[0].mxu0
      %1689 = vmatprep.mubr.f32.mxu0 %v1214
      %1690 = vmatmul.mubr.f32.gmra.mrb[0].mxu0 %v1213
      %v1691 = vpop.f32.mrb[0].mxu0
      %v1692 = vadd.f32 0.0, %v1691
      %v1693 = vpop.f32.mrb[0].mxu0
      %1694 = vmatprep.mubr.f32.mxu0 %v1223
      %1695 = vmatmul.mubr.f32.gmra.mrb[0].mxu0 %v1222
      %v1696 = vpop.f32.mrb[0].mxu0
      %v1697 = vadd.f32 0.0, %v1696
      %v1698 = vpop.f32.mrb[0].mxu0
      %1699 = vmatprep.mubr.f32.mxu0 %v1232
      %1700 = vmatmul.mubr.f32.gmra.mrb[0].mxu0 %v1231
      %v1701 = vpop.f32.mrb[0].mxu0
      %v1702 = vadd.f32 0.0, %v1701
      %v1703 = vpop.f32.mrb[0].mxu0
      %1704 = vmatprep.mubr.f32.mxu0 %v1241
      %1705 = vmatmul.mubr.f32.gmra.mrb[0].mxu0 %v1240
      %v1706 = vpop.f32.mrb[0].mxu0
      %v1707 = vadd.f32 0.0, %v1706
      %v1708 = vpop.f32.mrb[0].mxu0
      %1709 = vmatprep.mubr.f32.mxu0 %v1250
      %1710 = vmatmul.mubr.f32.gmra.mrb[0].mxu0 %v1249
      %v1711 = vpop.f32.mrb[0].mxu0
      %v1712 = vadd.f32 0.0, %v1711
      %v1713 = vpop.f32.mrb[0].mxu0
      %1714 = vmatprep.mubr.f32.mxu0 %v1259
      %1715 = vmatmul.mubr.f32.gmra.mrb[0].mxu0 %v1258
      %v1716 = vpop.f32.mrb[0].mxu0
      %v1717 = vadd.f32 0.0, %v1716
      %v1718 = vpop.f32.mrb[0].mxu0
      %1719 = vmatprep.mubr.f32.mxu0 %v1268
      %1720 = vmatmul.mubr.f32.gmra.mrb[0].mxu0 %v1267
      %v1721 = vpop.f32.mrb[0].mxu0
      %v1722 = vadd.f32 0.0, %v1721
      %v1723 = vpop.f32.mrb[0].mxu0
      %1724 = vmatprep.mubr.f32.mxu0 %v1277
      %1725 = vmatmul.mubr.f32.gmra.mrb[0].mxu0 %v1276
      %v1726 = vpop.f32.mrb[0].mxu0
      %v1727 = vadd.f32 0.0, %v1726
      %v1728 = vpop.f32.mrb[0].mxu0
      %1729 = vmatprep.mubr.f32.mxu0 %v1286
      %1730 = vmatmul.mubr.f32.gmra.mrb[0].mxu0 %v1285
      %v1731 = vpop.f32.mrb[0].mxu0
      %v1732 = vadd.f32 0.0, %v1731
      %v1733 = vpop.f32.mrb[0].mxu0
      %1734 = vmatprep.mubr.f32.mxu0 %v1295
      %1735 = vmatmul.mubr.f32.gmra.mrb[0].mxu0 %v1294
      %v1736 = vpop.f32.mrb[0].mxu0
      %v1737 = vadd.f32 0.0, %v1736
      %v1738 = vpop.f32.mrb[0].mxu0
      %1739 = vmatprep.mubr.f32.mxu0 %v1304
      %1740 = vmatmul.mubr.f32.gmra.mrb[0].mxu0 %v1303
      %v1741 = vpop.f32.mrb[0].mxu0
      %v1742 = vadd.f32 0.0, %v1741
      %v1743 = vpop.f32.mrb[0].mxu0
      %1744 = vmatprep.mubr.f32.mxu0 %v1313
      %1745 = vmatmul.mubr.f32.gmra.mrb[0].mxu0 %v1312
      %v1746 = vpop.f32.mrb[0].mxu0
      %v1747 = vadd.f32 0.0, %v1746
      %v1748 = vpop.f32.mrb[0].mxu0
      %1749 = vmatprep.mubr.f32.mxu0 %v1322
      %1750 = vmatmul.mubr.f32.gmra.mrb[0].mxu0 %v1321
      %v1751 = vpop.f32.mrb[0].mxu0
      %v1752 = vadd.f32 0.0, %v1751
      %v1753 = vpop.f32.mrb[0].mxu0
      %1754 = vmatprep.mubr.f32.mxu0 %v1331
      %1755 = vmatmul.mubr.f32.gmra.mrb[0].mxu0 %v1330
      %v1756 = vpop.f32.mrb[0].mxu0
      %v1757 = vadd.f32 0.0, %v1756
      %v1758 = vpop.f32.mrb[0].mxu0
      %1759 = vmatprep.mubr.f32.mxu0 %v1340
      %1760 = vmatmul.mubr.f32.gmra.mrb[0].mxu0 %v1339
      %v1761 = vpop.f32.mrb[0].mxu0
      %v1762 = vadd.f32 0.0, %v1761
      %v1763 = vpop.f32.mrb[0].mxu0
      %1764 = vmatprep.mubr.f32.mxu0 %v1349
      %1765 = vmatmul.mubr.f32.gmra.mrb[0].mxu0 %v1348
      %v1766 = vpop.f32.mrb[0].mxu0
      %v1767 = vadd.f32 0.0, %v1766
      %v1768 = vpop.f32.mrb[0].mxu0
      %1769 = vmatprep.mubr.f32.mxu0 %v1358
      %1770 = vmatmul.mubr.f32.gmra.mrb[0].mxu0 %v1357
      %v1771 = vpop.f32.mrb[0].mxu0
      %v1772 = vadd.f32 0.0, %v1771
      %v1773 = vpop.f32.mrb[0].mxu0
      %1774 = vmatprep.mubr.f32.mxu0 %v1367
      %1775 = vmatmul.mubr.f32.gmra.mrb[0].mxu0 %v1366
      %v1776 = vpop.f32.mrb[0].mxu0
      %v1777 = vadd.f32 0.0, %v1776
      %v1778 = vpop.f32.mrb[0].mxu0
      %1779 = vmatprep.mubr.f32.mxu0 %v1376
      %1780 = vmatmul.mubr.f32.gmra.mrb[0].mxu0 %v1375
      %v1781 = vpop.f32.mrb[0].mxu0
      %v1782 = vadd.f32 0.0, %v1781
      %v1783 = vpop.f32.mrb[0].mxu0
      %1784 = vmatprep.mubr.f32.mxu0 %v1385
      %1785 = vmatmul.mubr.f32.gmra.mrb[0].mxu0 %v1384
      %v1786 = vpop.f32.mrb[0].mxu0
      %v1787 = vadd.f32 0.0, %v1786
      %v1788 = vpop.f32.mrb[0].mxu0
      %1789 = vmatprep.mubr.f32.mxu0 %v1394
      %1790 = vmatmul.mubr.f32.gmra.mrb[0].mxu0 %v1393
      %v1791 = vpop.f32.mrb[0].mxu0
      %v1792 = vadd.f32 0.0, %v1791
      %v1793 = vpop.f32.mrb[0].mxu0
      %1794 = vmatprep.mubr.f32.mxu0 %v1403
      %1795 = vmatmul.mubr.f32.gmra.mrb[0].mxu0 %v1402
      %v1796 = vpop.f32.mrb[0].mxu0
      %v1797 = vadd.f32 0.0, %v1796
      %v1798 = vpop.f32.mrb[0].mxu0
      %1799 = vmatprep.mubr.f32.mxu0 %v1412
      %1800 = vmatmul.mubr.f32.gmra.mrb[0].mxu0 %v1411
      %v1801 = vpop.f32.mrb[0].mxu0
      %v1802 = vadd.f32 0.0, %v1801
      %v1803 = vpop.f32.mrb[0].mxu0
      %1804 = vmatprep.mubr.f32.mxu0 %v1421
      %1805 = vmatmul.mubr.f32.gmra.mrb[0].mxu0 %v1420
      %v1806 = vpop.f32.mrb[0].mxu0
      %v1807 = vadd.f32 0.0, %v1806
      %v1808 = vpop.f32.mrb[0].mxu0
      %1809 = vmatprep.mubr.f32.mxu0 %v1430
      %1810 = vmatmul.mubr.f32.gmra.mrb[0].mxu0 %v1429
      %v1811 = vpop.f32.mrb[0].mxu0
      %v1812 = vadd.f32 0.0, %v1811
      %v1813 = vpop.f32.mrb[0].mxu0
      %1814 = vmatprep.mubr.f32.mxu0 %v1439
      %1815 = vmatmul.mubr.f32.gmra.mrb[0].mxu0 %v1438
      %v1816 = vpop.f32.mrb[0].mxu0
      %v1817 = vadd.f32 0.0, %v1816
      %v1818 = vpop.f32.mrb[0].mxu0
      %1819 = vmatprep.mubr.f32.mxu0 %v1448
      %1820 = vmatmul.mubr.f32.gmra.mrb[0].mxu0 %v1447
      %v1821 = vpop.f32.mrb[0].mxu0
      %v1822 = vadd.f32 0.0, %v1821
      %v1823 = vpop.f32.mrb[0].mxu0
      %1824 = vdwg.mxu0
      %1825 = vmatprep.subr.mxu0 0.0
      %1826 = vmatpush1.msra.mxu0 %v1488
      %1827 = vmatprep.subr.mxu0 0.0
      %1828 = vmatpush1.msra.mxu0 %v1489
      %1829 = vmatprep.subr.mxu0 0.0
      %1830 = vmatpush1.msra.mxu0 %v1490
      %1831 = vmatprep.subr.mxu0 0.0
      %1832 = vmatpush1.msra.mxu0 %v1491
      %1833 = vmatprep.subr.mxu0 0.0
      %1834 = vmatpush1.msra.mxu0 %v1492
      %1835 = vmatprep.subr.mxu0 0.0
      %1836 = vmatpush1.msra.mxu0 %v1493
      %1837 = vmatprep.subr.mxu0 0.0
      %1838 = vmatpush1.msra.mxu0 %v1494
      %1839 = vmatprep.subr.mxu0 0.0
      %1840 = vmatpush1.msra.mxu0 %v1495
      %1841 = vmatprep.subr.mxu0 0.0
      %1842 = vmatpush1.msra.mxu0 %v1496
      %1843 = vmatprep.subr.mxu0 0.0
      %1844 = vmatpush1.msra.mxu0 %v1497
      %1845 = vmatprep.subr.mxu0 0.0
      %1846 = vmatpush1.msra.mxu0 %v1498
      %1847 = vmatprep.subr.mxu0 0.0
      %1848 = vmatpush1.msra.mxu0 %v1499
      %1849 = vmatprep.subr.mxu0 0.0
      %1850 = vmatpush1.msra.mxu0 %v1500
      %1851 = vmatprep.subr.mxu0 0.0
      %1852 = vmatpush1.msra.mxu0 %v1501
      %1853 = vmatprep.subr.mxu0 0.0
      %1854 = vmatpush1.msra.mxu0 %v1502
      %1855 = vmatprep.subr.mxu0 0.0
      %1856 = vmatpush1.msra.mxu0 %v1503
      %1857 = vmatprep.subr.mxu0 0.0
      %1858 = vmatpush1.msra.mxu0 %v1504
      %1859 = vmatprep.subr.mxu0 0.0
      %1860 = vmatpush1.msra.mxu0 %v1505
      %1861 = vmatprep.subr.mxu0 0.0
      %1862 = vmatpush1.msra.mxu0 %v1506
      %1863 = vmatprep.subr.mxu0 0.0
      %1864 = vmatpush1.msra.mxu0 %v1507
      %1865 = vmatprep.subr.mxu0 0.0
      %1866 = vmatpush1.msra.mxu0 %v1508
      %1867 = vmatprep.subr.mxu0 0.0
      %1868 = vmatpush1.msra.mxu0 %v1509
      %1869 = vmatprep.subr.mxu0 0.0
      %1870 = vmatpush1.msra.mxu0 %v1510
      %1871 = vmatprep.subr.mxu0 0.0
      %1872 = vmatpush1.msra.mxu0 %v1511
      %1873 = vmatprep.subr.mxu0 0.0
      %1874 = vmatpush1.msra.mxu0 %v1512
      %1875 = vmatprep.subr.mxu0 0.0
      %1876 = vmatpush1.msra.mxu0 %v1513
      %1877 = vmatprep.subr.mxu0 0.0
      %1878 = vmatpush1.msra.mxu0 %v1514
      %1879 = vmatprep.subr.mxu0 0.0
      %1880 = vmatpush1.msra.mxu0 %v1515
      %1881 = vmatprep.subr.mxu0 0.0
      %1882 = vmatpush1.msra.mxu0 %v1516
      %1883 = vmatprep.subr.mxu0 0.0
      %1884 = vmatpush1.msra.mxu0 %v1517
      %1885 = vmatprep.subr.mxu0 0.0
      %1886 = vmatpush1.msra.mxu0 %v1518
      %1887 = vmatprep.subr.mxu0 0.0
      %1888 = vmatpush1.msra.mxu0 %v1519
      %1889 = vmatprep.mubr.f32.mxu0 %v1171
      %1890 = vmatmul.mubr.f32.gmra.mrb[0].mxu0 %v1170
      %v1891 = vpop.f32.mrb[0].mxu0
      %v1892 = vadd.f32 %v1667, %v1891
      %v1893 = vpop.f32.mrb[0].mxu0
      %1894 = vmatprep.mubr.f32.mxu0 %v1180
      %1895 = vmatmul.mubr.f32.gmra.mrb[0].mxu0 %v1179
      %v1896 = vpop.f32.mrb[0].mxu0
      %v1897 = vadd.f32 %v1672, %v1896
      %v1898 = vpop.f32.mrb[0].mxu0
      %1899 = vmatprep.mubr.f32.mxu0 %v1189
      %1900 = vmatmul.mubr.f32.gmra.mrb[0].mxu0 %v1188
      %v1901 = vpop.f32.mrb[0].mxu0
      %v1902 = vadd.f32 %v1677, %v1901
      %v1903 = vpop.f32.mrb[0].mxu0
      %1904 = vmatprep.mubr.f32.mxu0 %v1198
      %1905 = vmatmul.mubr.f32.gmra.mrb[0].mxu0 %v1197
      %v1906 = vpop.f32.mrb[0].mxu0
      %v1907 = vadd.f32 %v1682, %v1906
      %v1908 = vpop.f32.mrb[0].mxu0
      %1909 = vmatprep.mubr.f32.mxu0 %v1207
      %1910 = vmatmul.mubr.f32.gmra.mrb[0].mxu0 %v1206
      %v1911 = vpop.f32.mrb[0].mxu0
      %v1912 = vadd.f32 %v1687, %v1911
      %v1913 = vpop.f32.mrb[0].mxu0
      %1914 = vmatprep.mubr.f32.mxu0 %v1216
      %1915 = vmatmul.mubr.f32.gmra.mrb[0].mxu0 %v1215
      %v1916 = vpop.f32.mrb[0].mxu0
      %v1917 = vadd.f32 %v1692, %v1916
      %v1918 = vpop.f32.mrb[0].mxu0
      %1919 = vmatprep.mubr.f32.mxu0 %v1225
      %1920 = vmatmul.mubr.f32.gmra.mrb[0].mxu0 %v1224
      %v1921 = vpop.f32.mrb[0].mxu0
      %v1922 = vadd.f32 %v1697, %v1921
      %v1923 = vpop.f32.mrb[0].mxu0
      %1924 = vmatprep.mubr.f32.mxu0 %v1234
      %1925 = vmatmul.mubr.f32.gmra.mrb[0].mxu0 %v1233
      %v1926 = vpop.f32.mrb[0].mxu0
      %v1927 = vadd.f32 %v1702, %v1926
      %v1928 = vpop.f32.mrb[0].mxu0
      %1929 = vmatprep.mubr.f32.mxu0 %v1243
      %1930 = vmatmul.mubr.f32.gmra.mrb[0].mxu0 %v1242
      %v1931 = vpop.f32.mrb[0].mxu0
      %v1932 = vadd.f32 %v1707, %v1931
      %v1933 = vpop.f32.mrb[0].mxu0
      %1934 = vmatprep.mubr.f32.mxu0 %v1252
      %1935 = vmatmul.mubr.f32.gmra.mrb[0].mxu0 %v1251
      %v1936 = vpop.f32.mrb[0].mxu0
      %v1937 = vadd.f32 %v1712, %v1936
      %v1938 = vpop.f32.mrb[0].mxu0
      %1939 = vmatprep.mubr.f32.mxu0 %v1261
      %1940 = vmatmul.mubr.f32.gmra.mrb[0].mxu0 %v1260
      %v1941 = vpop.f32.mrb[0].mxu0
      %v1942 = vadd.f32 %v1717, %v1941
      %v1943 = vpop.f32.mrb[0].mxu0
      %1944 = vmatprep.mubr.f32.mxu0 %v1270
      %1945 = vmatmul.mubr.f32.gmra.mrb[0].mxu0 %v1269
      %v1946 = vpop.f32.mrb[0].mxu0
      %v1947 = vadd.f32 %v1722, %v1946
      %v1948 = vpop.f32.mrb[0].mxu0
      %1949 = vmatprep.mubr.f32.mxu0 %v1279
      %1950 = vmatmul.mubr.f32.gmra.mrb[0].mxu0 %v1278
      %v1951 = vpop.f32.mrb[0].mxu0
      %v1952 = vadd.f32 %v1727, %v1951
      %v1953 = vpop.f32.mrb[0].mxu0
      %1954 = vmatprep.mubr.f32.mxu0 %v1288
      %1955 = vmatmul.mubr.f32.gmra.mrb[0].mxu0 %v1287
      %v1956 = vpop.f32.mrb[0].mxu0
      %v1957 = vadd.f32 %v1732, %v1956
      %v1958 = vpop.f32.mrb[0].mxu0
      %1959 = vmatprep.mubr.f32.mxu0 %v1297
      %1960 = vmatmul.mubr.f32.gmra.mrb[0].mxu0 %v1296
      %v1961 = vpop.f32.mrb[0].mxu0
      %v1962 = vadd.f32 %v1737, %v1961
      %v1963 = vpop.f32.mrb[0].mxu0
      %1964 = vmatprep.mubr.f32.mxu0 %v1306
      %1965 = vmatmul.mubr.f32.gmra.mrb[0].mxu0 %v1305
      %v1966 = vpop.f32.mrb[0].mxu0
      %v1967 = vadd.f32 %v1742, %v1966
      %v1968 = vpop.f32.mrb[0].mxu0
      %1969 = vmatprep.mubr.f32.mxu0 %v1315
      %1970 = vmatmul.mubr.f32.gmra.mrb[0].mxu0 %v1314
      %v1971 = vpop.f32.mrb[0].mxu0
      %v1972 = vadd.f32 %v1747, %v1971
      %v1973 = vpop.f32.mrb[0].mxu0
      %1974 = vmatprep.mubr.f32.mxu0 %v1324
      %1975 = vmatmul.mubr.f32.gmra.mrb[0].mxu0 %v1323
      %v1976 = vpop.f32.mrb[0].mxu0
      %v1977 = vadd.f32 %v1752, %v1976
      %v1978 = vpop.f32.mrb[0].mxu0
      %1979 = vmatprep.mubr.f32.mxu0 %v1333
      %1980 = vmatmul.mubr.f32.gmra.mrb[0].mxu0 %v1332
      %v1981 = vpop.f32.mrb[0].mxu0
      %v1982 = vadd.f32 %v1757, %v1981
      %v1983 = vpop.f32.mrb[0].mxu0
      %1984 = vmatprep.mubr.f32.mxu0 %v1342
      %1985 = vmatmul.mubr.f32.gmra.mrb[0].mxu0 %v1341
      %v1986 = vpop.f32.mrb[0].mxu0
      %v1987 = vadd.f32 %v1762, %v1986
      %v1988 = vpop.f32.mrb[0].mxu0
      %1989 = vmatprep.mubr.f32.mxu0 %v1351
      %1990 = vmatmul.mubr.f32.gmra.mrb[0].mxu0 %v1350
      %v1991 = vpop.f32.mrb[0].mxu0
      %v1992 = vadd.f32 %v1767, %v1991
      %v1993 = vpop.f32.mrb[0].mxu0
      %1994 = vmatprep.mubr.f32.mxu0 %v1360
      %1995 = vmatmul.mubr.f32.gmra.mrb[0].mxu0 %v1359
      %v1996 = vpop.f32.mrb[0].mxu0
      %v1997 = vadd.f32 %v1772, %v1996
      %v1998 = vpop.f32.mrb[0].mxu0
      %1999 = vmatprep.mubr.f32.mxu0 %v1369
      %2000 = vmatmul.mubr.f32.gmra.mrb[0].mxu0 %v1368
      %v2001 = vpop.f32.mrb[0].mxu0
      %v2002 = vadd.f32 %v1777, %v2001
      %v2003 = vpop.f32.mrb[0].mxu0
      %2004 = vmatprep.mubr.f32.mxu0 %v1378
      %2005 = vmatmul.mubr.f32.gmra.mrb[0].mxu0 %v1377
      %v2006 = vpop.f32.mrb[0].mxu0
      %v2007 = vadd.f32 %v1782, %v2006
      %v2008 = vpop.f32.mrb[0].mxu0
      %2009 = vmatprep.mubr.f32.mxu0 %v1387
      %2010 = vmatmul.mubr.f32.gmra.mrb[0].mxu0 %v1386
      %v2011 = vpop.f32.mrb[0].mxu0
      %v2012 = vadd.f32 %v1787, %v2011
      %v2013 = vpop.f32.mrb[0].mxu0
      %2014 = vmatprep.mubr.f32.mxu0 %v1396
      %2015 = vmatmul.mubr.f32.gmra.mrb[0].mxu0 %v1395
      %v2016 = vpop.f32.mrb[0].mxu0
      %v2017 = vadd.f32 %v1792, %v2016
      %v2018 = vpop.f32.mrb[0].mxu0
      %2019 = vmatprep.mubr.f32.mxu0 %v1405
      %2020 = vmatmul.mubr.f32.gmra.mrb[0].mxu0 %v1404
      %v2021 = vpop.f32.mrb[0].mxu0
      %v2022 = vadd.f32 %v1797, %v2021
      %v2023 = vpop.f32.mrb[0].mxu0
      %2024 = vmatprep.mubr.f32.mxu0 %v1414
      %2025 = vmatmul.mubr.f32.gmra.mrb[0].mxu0 %v1413
      %v2026 = vpop.f32.mrb[0].mxu0
      %v2027 = vadd.f32 %v1802, %v2026
      %v2028 = vpop.f32.mrb[0].mxu0
      %2029 = vmatprep.mubr.f32.mxu0 %v1423
      %2030 = vmatmul.mubr.f32.gmra.mrb[0].mxu0 %v1422
      %v2031 = vpop.f32.mrb[0].mxu0
      %v2032 = vadd.f32 %v1807, %v2031
      %v2033 = vpop.f32.mrb[0].mxu0
      %2034 = vmatprep.mubr.f32.mxu0 %v1432
      %2035 = vmatmul.mubr.f32.gmra.mrb[0].mxu0 %v1431
      %v2036 = vpop.f32.mrb[0].mxu0
      %v2037 = vadd.f32 %v1812, %v2036
      %v2038 = vpop.f32.mrb[0].mxu0
      %2039 = vmatprep.mubr.f32.mxu0 %v1441
      %2040 = vmatmul.mubr.f32.gmra.mrb[0].mxu0 %v1440
      %v2041 = vpop.f32.mrb[0].mxu0
      %v2042 = vadd.f32 %v1817, %v2041
      %v2043 = vpop.f32.mrb[0].mxu0
      %2044 = vmatprep.mubr.f32.mxu0 %v1450
      %2045 = vmatmul.mubr.f32.gmra.mrb[0].mxu0 %v1449
      %v2046 = vpop.f32.mrb[0].mxu0
      %v2047 = vadd.f32 %v1822, %v2046
      %v2048 = vpop.f32.mrb[0].mxu0
      %2049 = vdwg.mxu0
      %2050 = vmatprep.subr.mxu0 0.0
      %2051 = vmatpush1.msra.mxu0 %v1520
      %2052 = vmatprep.subr.mxu0 0.0
      %2053 = vmatpush1.msra.mxu0 %v1521
      %2054 = vmatprep.subr.mxu0 0.0
      %2055 = vmatpush1.msra.mxu0 %v1522
      %2056 = vmatprep.subr.mxu0 0.0
      %2057 = vmatpush1.msra.mxu0 %v1523
      %2058 = vmatprep.subr.mxu0 0.0
      %2059 = vmatpush1.msra.mxu0 %v1524
      %2060 = vmatprep.subr.mxu0 0.0
      %2061 = vmatpush1.msra.mxu0 %v1525
      %2062 = vmatprep.subr.mxu0 0.0
      %2063 = vmatpush1.msra.mxu0 %v1526
      %2064 = vmatprep.subr.mxu0 0.0
      %2065 = vmatpush1.msra.mxu0 %v1527
      %2066 = vmatprep.subr.mxu0 0.0
      %2067 = vmatpush1.msra.mxu0 %v1528
      %2068 = vmatprep.subr.mxu0 0.0
      %2069 = vmatpush1.msra.mxu0 %v1529
      %2070 = vmatprep.subr.mxu0 0.0
      %2071 = vmatpush1.msra.mxu0 %v1530
      %2072 = vmatprep.subr.mxu0 0.0
      %2073 = vmatpush1.msra.mxu0 %v1531
      %2074 = vmatprep.subr.mxu0 0.0
      %2075 = vmatpush1.msra.mxu0 %v1532
      %2076 = vmatprep.subr.mxu0 0.0
      %2077 = vmatpush1.msra.mxu0 %v1533
      %2078 = vmatprep.subr.mxu0 0.0
      %2079 = vmatpush1.msra.mxu0 %v1534
      %2080 = vmatprep.subr.mxu0 0.0
      %2081 = vmatpush1.msra.mxu0 %v1535
      %2082 = vmatprep.subr.mxu0 0.0
      %2083 = vmatpush1.msra.mxu0 %v1536
      %2084 = vmatprep.subr.mxu0 0.0
      %2085 = vmatpush1.msra.mxu0 %v1537
      %2086 = vmatprep.subr.mxu0 0.0
      %2087 = vmatpush1.msra.mxu0 %v1538
      %2088 = vmatprep.subr.mxu0 0.0
      %2089 = vmatpush1.msra.mxu0 %v1539
      %2090 = vmatprep.subr.mxu0 0.0
      %2091 = vmatpush1.msra.mxu0 %v1540
      %2092 = vmatprep.subr.mxu0 0.0
      %2093 = vmatpush1.msra.mxu0 %v1541
      %2094 = vmatprep.subr.mxu0 0.0
      %2095 = vmatpush1.msra.mxu0 %v1542
      %2096 = vmatprep.subr.mxu0 0.0
      %2097 = vmatpush1.msra.mxu0 %v1543
      %2098 = vmatprep.subr.mxu0 0.0
      %2099 = vmatpush1.msra.mxu0 %v1544
      %2100 = vmatprep.subr.mxu0 0.0
      %2101 = vmatpush1.msra.mxu0 %v1545
      %2102 = vmatprep.subr.mxu0 0.0
      %2103 = vmatpush1.msra.mxu0 %v1546
      %2104 = vmatprep.subr.mxu0 0.0
      %2105 = vmatpush1.msra.mxu0 %v1547
      %2106 = vmatprep.subr.mxu0 0.0
      %2107 = vmatpush1.msra.mxu0 %v1548
      %2108 = vmatprep.subr.mxu0 0.0
      %2109 = vmatpush1.msra.mxu0 %v1549
      %2110 = vmatprep.subr.mxu0 0.0
      %2111 = vmatpush1.msra.mxu0 %v1550
      %2112 = vmatprep.subr.mxu0 0.0
      %2113 = vmatpush1.msra.mxu0 %v1551
      %2114 = vmatprep.mubr.f32.mxu0 %v1173
      %2115 = vmatmul.mubr.f32.gmra.mrb[0].mxu0 %v1172
      %v2116 = vpop.f32.mrb[0].mxu0
      %v2117 = vadd.f32 %v1892, %v2116
      %v2118 = vpop.f32.mrb[0].mxu0
      %2119 = vmatprep.mubr.f32.mxu0 %v1182
      %2120 = vmatmul.mubr.f32.gmra.mrb[0].mxu0 %v1181
      %v2121 = vpop.f32.mrb[0].mxu0
      %v2122 = vadd.f32 %v1897, %v2121
      %v2123 = vpop.f32.mrb[0].mxu0
      %2124 = vmatprep.mubr.f32.mxu0 %v1191
      %2125 = vmatmul.mubr.f32.gmra.mrb[0].mxu0 %v1190
      %v2126 = vpop.f32.mrb[0].mxu0
      %v2127 = vadd.f32 %v1902, %v2126
      %v2128 = vpop.f32.mrb[0].mxu0
      %2129 = vmatprep.mubr.f32.mxu0 %v1200
      %2130 = vmatmul.mubr.f32.gmra.mrb[0].mxu0 %v1199
      %v2131 = vpop.f32.mrb[0].mxu0
      %v2132 = vadd.f32 %v1907, %v2131
      %v2133 = vpop.f32.mrb[0].mxu0
      %2134 = vmatprep.mubr.f32.mxu0 %v1209
      %2135 = vmatmul.mubr.f32.gmra.mrb[0].mxu0 %v1208
      %v2136 = vpop.f32.mrb[0].mxu0
      %v2137 = vadd.f32 %v1912, %v2136
      %v2138 = vpop.f32.mrb[0].mxu0
      %2139 = vmatprep.mubr.f32.mxu0 %v1218
      %2140 = vmatmul.mubr.f32.gmra.mrb[0].mxu0 %v1217
      %v2141 = vpop.f32.mrb[0].mxu0
      %v2142 = vadd.f32 %v1917, %v2141
      %v2143 = vpop.f32.mrb[0].mxu0
      %2144 = vmatprep.mubr.f32.mxu0 %v1227
      %2145 = vmatmul.mubr.f32.gmra.mrb[0].mxu0 %v1226
      %v2146 = vpop.f32.mrb[0].mxu0
      %v2147 = vadd.f32 %v1922, %v2146
      %v2148 = vpop.f32.mrb[0].mxu0
      %2149 = vmatprep.mubr.f32.mxu0 %v1236
      %2150 = vmatmul.mubr.f32.gmra.mrb[0].mxu0 %v1235
      %v2151 = vpop.f32.mrb[0].mxu0
      %v2152 = vadd.f32 %v1927, %v2151
      %v2153 = vpop.f32.mrb[0].mxu0
      %2154 = vmatprep.mubr.f32.mxu0 %v1245
      %2155 = vmatmul.mubr.f32.gmra.mrb[0].mxu0 %v1244
      %v2156 = vpop.f32.mrb[0].mxu0
      %v2157 = vadd.f32 %v1932, %v2156
      %v2158 = vpop.f32.mrb[0].mxu0
      %2159 = vmatprep.mubr.f32.mxu0 %v1254
      %2160 = vmatmul.mubr.f32.gmra.mrb[0].mxu0 %v1253
      %v2161 = vpop.f32.mrb[0].mxu0
      %v2162 = vadd.f32 %v1937, %v2161
      %v2163 = vpop.f32.mrb[0].mxu0
      %2164 = vmatprep.mubr.f32.mxu0 %v1263
      %2165 = vmatmul.mubr.f32.gmra.mrb[0].mxu0 %v1262
      %v2166 = vpop.f32.mrb[0].mxu0
      %v2167 = vadd.f32 %v1942, %v2166
      %v2168 = vpop.f32.mrb[0].mxu0
      %2169 = vmatprep.mubr.f32.mxu0 %v1272
      %2170 = vmatmul.mubr.f32.gmra.mrb[0].mxu0 %v1271
      %v2171 = vpop.f32.mrb[0].mxu0
      %v2172 = vadd.f32 %v1947, %v2171
      %v2173 = vpop.f32.mrb[0].mxu0
      %2174 = vmatprep.mubr.f32.mxu0 %v1281
      %2175 = vmatmul.mubr.f32.gmra.mrb[0].mxu0 %v1280
      %v2176 = vpop.f32.mrb[0].mxu0
      %v2177 = vadd.f32 %v1952, %v2176
      %v2178 = vpop.f32.mrb[0].mxu0
      %2179 = vmatprep.mubr.f32.mxu0 %v1290
      %2180 = vmatmul.mubr.f32.gmra.mrb[0].mxu0 %v1289
      %v2181 = vpop.f32.mrb[0].mxu0
      %v2182 = vadd.f32 %v1957, %v2181
      %v2183 = vpop.f32.mrb[0].mxu0
      %2184 = vmatprep.mubr.f32.mxu0 %v1299
      %2185 = vmatmul.mubr.f32.gmra.mrb[0].mxu0 %v1298
      %v2186 = vpop.f32.mrb[0].mxu0
      %v2187 = vadd.f32 %v1962, %v2186
      %v2188 = vpop.f32.mrb[0].mxu0
      %2189 = vmatprep.mubr.f32.mxu0 %v1308
      %2190 = vmatmul.mubr.f32.gmra.mrb[0].mxu0 %v1307
      %v2191 = vpop.f32.mrb[0].mxu0
      %v2192 = vadd.f32 %v1967, %v2191
      %v2193 = vpop.f32.mrb[0].mxu0
      %2194 = vmatprep.mubr.f32.mxu0 %v1317
      %2195 = vmatmul.mubr.f32.gmra.mrb[0].mxu0 %v1316
      %v2196 = vpop.f32.mrb[0].mxu0
      %v2197 = vadd.f32 %v1972, %v2196
      %v2198 = vpop.f32.mrb[0].mxu0
      %2199 = vmatprep.mubr.f32.mxu0 %v1326
      %2200 = vmatmul.mubr.f32.gmra.mrb[0].mxu0 %v1325
      %v2201 = vpop.f32.mrb[0].mxu0
      %v2202 = vadd.f32 %v1977, %v2201
      %v2203 = vpop.f32.mrb[0].mxu0
      %2204 = vmatprep.mubr.f32.mxu0 %v1335
      %2205 = vmatmul.mubr.f32.gmra.mrb[0].mxu0 %v1334
      %v2206 = vpop.f32.mrb[0].mxu0
      %v2207 = vadd.f32 %v1982, %v2206
      %v2208 = vpop.f32.mrb[0].mxu0
      %2209 = vmatprep.mubr.f32.mxu0 %v1344
      %2210 = vmatmul.mubr.f32.gmra.mrb[0].mxu0 %v1343
      %v2211 = vpop.f32.mrb[0].mxu0
      %v2212 = vadd.f32 %v1987, %v2211
      %v2213 = vpop.f32.mrb[0].mxu0
      %2214 = vmatprep.mubr.f32.mxu0 %v1353
      %2215 = vmatmul.mubr.f32.gmra.mrb[0].mxu0 %v1352
      %v2216 = vpop.f32.mrb[0].mxu0
      %v2217 = vadd.f32 %v1992, %v2216
      %v2218 = vpop.f32.mrb[0].mxu0
      %2219 = vmatprep.mubr.f32.mxu0 %v1362
      %2220 = vmatmul.mubr.f32.gmra.mrb[0].mxu0 %v1361
      %v2221 = vpop.f32.mrb[0].mxu0
      %v2222 = vadd.f32 %v1997, %v2221
      %v2223 = vpop.f32.mrb[0].mxu0
      %2224 = vmatprep.mubr.f32.mxu0 %v1371
      %2225 = vmatmul.mubr.f32.gmra.mrb[0].mxu0 %v1370
      %v2226 = vpop.f32.mrb[0].mxu0
      %v2227 = vadd.f32 %v2002, %v2226
      %v2228 = vpop.f32.mrb[0].mxu0
      %2229 = vmatprep.mubr.f32.mxu0 %v1380
      %2230 = vmatmul.mubr.f32.gmra.mrb[0].mxu0 %v1379
      %v2231 = vpop.f32.mrb[0].mxu0
      %v2232 = vadd.f32 %v2007, %v2231
      %v2233 = vpop.f32.mrb[0].mxu0
      %2234 = vmatprep.mubr.f32.mxu0 %v1389
      %2235 = vmatmul.mubr.f32.gmra.mrb[0].mxu0 %v1388
      %v2236 = vpop.f32.mrb[0].mxu0
      %v2237 = vadd.f32 %v2012, %v2236
      %v2238 = vpop.f32.mrb[0].mxu0
      %2239 = vmatprep.mubr.f32.mxu0 %v1398
      %2240 = vmatmul.mubr.f32.gmra.mrb[0].mxu0 %v1397
      %v2241 = vpop.f32.mrb[0].mxu0
      %v2242 = vadd.f32 %v2017, %v2241
      %v2243 = vpop.f32.mrb[0].mxu0
      %2244 = vmatprep.mubr.f32.mxu0 %v1407
      %2245 = vmatmul.mubr.f32.gmra.mrb[0].mxu0 %v1406
      %v2246 = vpop.f32.mrb[0].mxu0
      %v2247 = vadd.f32 %v2022, %v2246
      %v2248 = vpop.f32.mrb[0].mxu0
      %2249 = vmatprep.mubr.f32.mxu0 %v1416
      %2250 = vmatmul.mubr.f32.gmra.mrb[0].mxu0 %v1415
      %v2251 = vpop.f32.mrb[0].mxu0
      %v2252 = vadd.f32 %v2027, %v2251
      %v2253 = vpop.f32.mrb[0].mxu0
      %2254 = vmatprep.mubr.f32.mxu0 %v1425
      %2255 = vmatmul.mubr.f32.gmra.mrb[0].mxu0 %v1424
      %v2256 = vpop.f32.mrb[0].mxu0
      %v2257 = vadd.f32 %v2032, %v2256
      %v2258 = vpop.f32.mrb[0].mxu0
      %2259 = vmatprep.mubr.f32.mxu0 %v1434
      %2260 = vmatmul.mubr.f32.gmra.mrb[0].mxu0 %v1433
      %v2261 = vpop.f32.mrb[0].mxu0
      %v2262 = vadd.f32 %v2037, %v2261
      %v2263 = vpop.f32.mrb[0].mxu0
      %2264 = vmatprep.mubr.f32.mxu0 %v1443
      %2265 = vmatmul.mubr.f32.gmra.mrb[0].mxu0 %v1442
      %v2266 = vpop.f32.mrb[0].mxu0
      %v2267 = vadd.f32 %v2042, %v2266
      %v2268 = vpop.f32.mrb[0].mxu0
      %2269 = vmatprep.mubr.f32.mxu0 %v1452
      %2270 = vmatmul.mubr.f32.gmra.mrb[0].mxu0 %v1451
      %v2271 = vpop.f32.mrb[0].mxu0
      %v2272 = vadd.f32 %v2047, %v2271
      %v2273 = vpop.f32.mrb[0].mxu0
      %2274 = vdwg.mxu0
      %2275 = vmatprep.subr.mxu0 0.0
      %2276 = vmatpush1.msra.mxu0 %v1552
      %2277 = vmatprep.subr.mxu0 0.0
      %2278 = vmatpush1.msra.mxu0 %v1553
      %2279 = vmatprep.subr.mxu0 0.0
      %2280 = vmatpush1.msra.mxu0 %v1554
      %2281 = vmatprep.subr.mxu0 0.0
      %2282 = vmatpush1.msra.mxu0 %v1555
      %2283 = vmatprep.subr.mxu0 0.0
      %2284 = vmatpush1.msra.mxu0 %v1556
      %2285 = vmatprep.subr.mxu0 0.0
      %2286 = vmatpush1.msra.mxu0 %v1557
      %2287 = vmatprep.subr.mxu0 0.0
      %2288 = vmatpush1.msra.mxu0 %v1558
      %2289 = vmatprep.subr.mxu0 0.0
      %2290 = vmatpush1.msra.mxu0 %v1559
      %2291 = vmatprep.subr.mxu0 0.0
      %2292 = vmatpush1.msra.mxu0 %v1560
      %2293 = vmatprep.subr.mxu0 0.0
      %2294 = vmatpush1.msra.mxu0 %v1561
      %2295 = vmatprep.subr.mxu0 0.0
      %2296 = vmatpush1.msra.mxu0 %v1562
      %2297 = vmatprep.subr.mxu0 0.0
      %2298 = vmatpush1.msra.mxu0 %v1563
      %2299 = vmatprep.subr.mxu0 0.0
      %2300 = vmatpush1.msra.mxu0 %v1564
      %2301 = vmatprep.subr.mxu0 0.0
      %2302 = vmatpush1.msra.mxu0 %v1565
      %2303 = vmatprep.subr.mxu0 0.0
      %2304 = vmatpush1.msra.mxu0 %v1566
      %2305 = vmatprep.subr.mxu0 0.0
      %2306 = vmatpush1.msra.mxu0 %v1567
      %2307 = vmatprep.subr.mxu0 0.0
      %2308 = vmatpush1.msra.mxu0 %v1568
      %2309 = vmatprep.subr.mxu0 0.0
      %2310 = vmatpush1.msra.mxu0 %v1569
      %2311 = vmatprep.subr.mxu0 0.0
      %2312 = vmatpush1.msra.mxu0 %v1570
      %2313 = vmatprep.subr.mxu0 0.0
      %2314 = vmatpush1.msra.mxu0 %v1571
      %2315 = vmatprep.subr.mxu0 0.0
      %2316 = vmatpush1.msra.mxu0 %v1572
      %2317 = vmatprep.subr.mxu0 0.0
      %2318 = vmatpush1.msra.mxu0 %v1573
      %2319 = vmatprep.subr.mxu0 0.0
      %2320 = vmatpush1.msra.mxu0 %v1574
      %2321 = vmatprep.subr.mxu0 0.0
      %2322 = vmatpush1.msra.mxu0 %v1575
      %2323 = vmatprep.subr.mxu0 0.0
      %2324 = vmatpush1.msra.mxu0 %v1576
      %2325 = vmatprep.subr.mxu0 0.0
      %2326 = vmatpush1.msra.mxu0 %v1577
      %2327 = vmatprep.subr.mxu0 0.0
      %2328 = vmatpush1.msra.mxu0 %v1578
      %2329 = vmatprep.subr.mxu0 0.0
      %2330 = vmatpush1.msra.mxu0 %v1579
      %2331 = vmatprep.subr.mxu0 0.0
      %2332 = vmatpush1.msra.mxu0 %v1580
      %2333 = vmatprep.subr.mxu0 0.0
      %2334 = vmatpush1.msra.mxu0 %v1581
      %2335 = vmatprep.subr.mxu0 0.0
      %2336 = vmatpush1.msra.mxu0 %v1582
      %2337 = vmatprep.subr.mxu0 0.0
      %2338 = vmatpush1.msra.mxu0 %v1583
      %2339 = vmatprep.mubr.f32.mxu0 %v1175
      %2340 = vmatmul.mubr.f32.gmra.mrb[0].mxu0 %v1174
      %v2341 = vpop.f32.mrb[0].mxu0
      %v2342 = vadd.f32 %v2117, %v2341
      %v2343 = vpop.f32.mrb[0].mxu0
      %2344 = vmatprep.mubr.f32.mxu0 %v1184
      %2345 = vmatmul.mubr.f32.gmra.mrb[0].mxu0 %v1183
      %v2346 = vpop.f32.mrb[0].mxu0
      %v2347 = vadd.f32 %v2122, %v2346
      %v2348 = vpop.f32.mrb[0].mxu0
      %2349 = vmatprep.mubr.f32.mxu0 %v1193
      %2350 = vmatmul.mubr.f32.gmra.mrb[0].mxu0 %v1192
      %v2351 = vpop.f32.mrb[0].mxu0
      %v2352 = vadd.f32 %v2127, %v2351
      %v2353 = vpop.f32.mrb[0].mxu0
      %2354 = vmatprep.mubr.f32.mxu0 %v1202
      %2355 = vmatmul.mubr.f32.gmra.mrb[0].mxu0 %v1201
      %v2356 = vpop.f32.mrb[0].mxu0
      %v2357 = vadd.f32 %v2132, %v2356
      %v2358 = vpop.f32.mrb[0].mxu0
      %2359 = vmatprep.mubr.f32.mxu0 %v1211
      %2360 = vmatmul.mubr.f32.gmra.mrb[0].mxu0 %v1210
      %v2361 = vpop.f32.mrb[0].mxu0
      %v2362 = vadd.f32 %v2137, %v2361
      %v2363 = vpop.f32.mrb[0].mxu0
      %2364 = vmatprep.mubr.f32.mxu0 %v1220
      %2365 = vmatmul.mubr.f32.gmra.mrb[0].mxu0 %v1219
      %v2366 = vpop.f32.mrb[0].mxu0
      %v2367 = vadd.f32 %v2142, %v2366
      %v2368 = vpop.f32.mrb[0].mxu0
      %2369 = vmatprep.mubr.f32.mxu0 %v1229
      %2370 = vmatmul.mubr.f32.gmra.mrb[0].mxu0 %v1228
      %v2371 = vpop.f32.mrb[0].mxu0
      %v2372 = vadd.f32 %v2147, %v2371
      %v2373 = vpop.f32.mrb[0].mxu0
      %2374 = vmatprep.mubr.f32.mxu0 %v1238
      %2375 = vmatmul.mubr.f32.gmra.mrb[0].mxu0 %v1237
      %v2376 = vpop.f32.mrb[0].mxu0
      %v2377 = vadd.f32 %v2152, %v2376
      %v2378 = vpop.f32.mrb[0].mxu0
      %2379 = vmatprep.mubr.f32.mxu0 %v1247
      %2380 = vmatmul.mubr.f32.gmra.mrb[0].mxu0 %v1246
      %v2381 = vpop.f32.mrb[0].mxu0
      %v2382 = vadd.f32 %v2157, %v2381
      %v2383 = vpop.f32.mrb[0].mxu0
      %2384 = vmatprep.mubr.f32.mxu0 %v1256
      %2385 = vmatmul.mubr.f32.gmra.mrb[0].mxu0 %v1255
      %v2386 = vpop.f32.mrb[0].mxu0
      %v2387 = vadd.f32 %v2162, %v2386
      %v2388 = vpop.f32.mrb[0].mxu0
      %2389 = vmatprep.mubr.f32.mxu0 %v1265
      %2390 = vmatmul.mubr.f32.gmra.mrb[0].mxu0 %v1264
      %v2391 = vpop.f32.mrb[0].mxu0
      %v2392 = vadd.f32 %v2167, %v2391
      %v2393 = vpop.f32.mrb[0].mxu0
      %2394 = vmatprep.mubr.f32.mxu0 %v1274
      %2395 = vmatmul.mubr.f32.gmra.mrb[0].mxu0 %v1273
      %v2396 = vpop.f32.mrb[0].mxu0
      %v2397 = vadd.f32 %v2172, %v2396
      %v2398 = vpop.f32.mrb[0].mxu0
      %2399 = vmatprep.mubr.f32.mxu0 %v1283
      %2400 = vmatmul.mubr.f32.gmra.mrb[0].mxu0 %v1282
      %v2401 = vpop.f32.mrb[0].mxu0
      %v2402 = vadd.f32 %v2177, %v2401
      %v2403 = vpop.f32.mrb[0].mxu0
      %2404 = vmatprep.mubr.f32.mxu0 %v1292
      %2405 = vmatmul.mubr.f32.gmra.mrb[0].mxu0 %v1291
      %v2406 = vpop.f32.mrb[0].mxu0
      %v2407 = vadd.f32 %v2182, %v2406
      %v2408 = vpop.f32.mrb[0].mxu0
      %2409 = vmatprep.mubr.f32.mxu0 %v1301
      %2410 = vmatmul.mubr.f32.gmra.mrb[0].mxu0 %v1300
      %v2411 = vpop.f32.mrb[0].mxu0
      %v2412 = vadd.f32 %v2187, %v2411
      %v2413 = vpop.f32.mrb[0].mxu0
      %2414 = vmatprep.mubr.f32.mxu0 %v1310
      %2415 = vmatmul.mubr.f32.gmra.mrb[0].mxu0 %v1309
      %v2416 = vpop.f32.mrb[0].mxu0
      %v2417 = vadd.f32 %v2192, %v2416
      %v2418 = vpop.f32.mrb[0].mxu0
      %2419 = vmatprep.mubr.f32.mxu0 %v1319
      %2420 = vmatmul.mubr.f32.gmra.mrb[0].mxu0 %v1318
      %v2421 = vpop.f32.mrb[0].mxu0
      %v2422 = vadd.f32 %v2197, %v2421
      %v2423 = vpop.f32.mrb[0].mxu0
      %2424 = vmatprep.mubr.f32.mxu0 %v1328
      %2425 = vmatmul.mubr.f32.gmra.mrb[0].mxu0 %v1327
      %v2426 = vpop.f32.mrb[0].mxu0
      %v2427 = vadd.f32 %v2202, %v2426
      %v2428 = vpop.f32.mrb[0].mxu0
      %2429 = vmatprep.mubr.f32.mxu0 %v1337
      %2430 = vmatmul.mubr.f32.gmra.mrb[0].mxu0 %v1336
      %v2431 = vpop.f32.mrb[0].mxu0
      %v2432 = vadd.f32 %v2207, %v2431
      %v2433 = vpop.f32.mrb[0].mxu0
      %2434 = vmatprep.mubr.f32.mxu0 %v1346
      %2435 = vmatmul.mubr.f32.gmra.mrb[0].mxu0 %v1345
      %v2436 = vpop.f32.mrb[0].mxu0
      %v2437 = vadd.f32 %v2212, %v2436
      %v2438 = vpop.f32.mrb[0].mxu0
      %2439 = vmatprep.mubr.f32.mxu0 %v1355
      %2440 = vmatmul.mubr.f32.gmra.mrb[0].mxu0 %v1354
      %v2441 = vpop.f32.mrb[0].mxu0
      %v2442 = vadd.f32 %v2217, %v2441
      %v2443 = vpop.f32.mrb[0].mxu0
      %2444 = vmatprep.mubr.f32.mxu0 %v1364
      %2445 = vmatmul.mubr.f32.gmra.mrb[0].mxu0 %v1363
      %v2446 = vpop.f32.mrb[0].mxu0
      %v2447 = vadd.f32 %v2222, %v2446
      %v2448 = vpop.f32.mrb[0].mxu0
      %2449 = vmatprep.mubr.f32.mxu0 %v1373
      %2450 = vmatmul.mubr.f32.gmra.mrb[0].mxu0 %v1372
      %v2451 = vpop.f32.mrb[0].mxu0
      %v2452 = vadd.f32 %v2227, %v2451
      %v2453 = vpop.f32.mrb[0].mxu0
      %2454 = vmatprep.mubr.f32.mxu0 %v1382
      %2455 = vmatmul.mubr.f32.gmra.mrb[0].mxu0 %v1381
      %v2456 = vpop.f32.mrb[0].mxu0
      %v2457 = vadd.f32 %v2232, %v2456
      %v2458 = vpop.f32.mrb[0].mxu0
      %2459 = vmatprep.mubr.f32.mxu0 %v1391
      %2460 = vmatmul.mubr.f32.gmra.mrb[0].mxu0 %v1390
      %v2461 = vpop.f32.mrb[0].mxu0
      %v2462 = vadd.f32 %v2237, %v2461
      %v2463 = vpop.f32.mrb[0].mxu0
      %2464 = vmatprep.mubr.f32.mxu0 %v1400
      %2465 = vmatmul.mubr.f32.gmra.mrb[0].mxu0 %v1399
      %v2466 = vpop.f32.mrb[0].mxu0
      %v2467 = vadd.f32 %v2242, %v2466
      %v2468 = vpop.f32.mrb[0].mxu0
      %2469 = vmatprep.mubr.f32.mxu0 %v1409
      %2470 = vmatmul.mubr.f32.gmra.mrb[0].mxu0 %v1408
      %v2471 = vpop.f32.mrb[0].mxu0
      %v2472 = vadd.f32 %v2247, %v2471
      %v2473 = vpop.f32.mrb[0].mxu0
      %2474 = vmatprep.mubr.f32.mxu0 %v1418
      %2475 = vmatmul.mubr.f32.gmra.mrb[0].mxu0 %v1417
      %v2476 = vpop.f32.mrb[0].mxu0
      %v2477 = vadd.f32 %v2252, %v2476
      %v2478 = vpop.f32.mrb[0].mxu0
      %2479 = vmatprep.mubr.f32.mxu0 %v1427
      %2480 = vmatmul.mubr.f32.gmra.mrb[0].mxu0 %v1426
      %v2481 = vpop.f32.mrb[0].mxu0
      %v2482 = vadd.f32 %v2257, %v2481
      %v2483 = vpop.f32.mrb[0].mxu0
      %2484 = vmatprep.mubr.f32.mxu0 %v1436
      %2485 = vmatmul.mubr.f32.gmra.mrb[0].mxu0 %v1435
      %v2486 = vpop.f32.mrb[0].mxu0
      %v2487 = vadd.f32 %v2262, %v2486
      %v2488 = vpop.f32.mrb[0].mxu0
      %2489 = vmatprep.mubr.f32.mxu0 %v1445
      %2490 = vmatmul.mubr.f32.gmra.mrb[0].mxu0 %v1444
      %v2491 = vpop.f32.mrb[0].mxu0
      %v2492 = vadd.f32 %v2267, %v2491
      %v2493 = vpop.f32.mrb[0].mxu0
      %2494 = vmatprep.mubr.f32.mxu0 %v1454
      %2495 = vmatmul.mubr.f32.gmra.mrb[0].mxu0 %v1453
      %v2496 = vpop.f32.mrb[0].mxu0
      %v2497 = vadd.f32 %v2272, %v2496
      %v2498 = vpop.f32.mrb[0].mxu0
      %2499 = vdwg.mxu0
      %2500 = vmatprep.subr.mxu0 0.0
      %2501 = vmatpush1.msra.mxu0 %v1584
      %2502 = vmatprep.subr.mxu0 0.0
      %2503 = vmatpush1.msra.mxu0 %v1585
      %2504 = vmatprep.subr.mxu0 0.0
      %2505 = vmatpush1.msra.mxu0 %v1586
      %2506 = vmatprep.subr.mxu0 0.0
      %2507 = vmatpush1.msra.mxu0 %v1587
      %2508 = vmatprep.subr.mxu0 0.0
      %2509 = vmatpush1.msra.mxu0 %v1588
      %2510 = vmatprep.subr.mxu0 0.0
      %2511 = vmatpush1.msra.mxu0 %v1589
      %2512 = vmatprep.subr.mxu0 0.0
      %2513 = vmatpush1.msra.mxu0 %v1590
      %2514 = vmatprep.subr.mxu0 0.0
      %2515 = vmatpush1.msra.mxu0 %v1591
      %2516 = vmatprep.subr.mxu0 0.0
      %2517 = vmatpush1.msra.mxu0 %v1592
      %2518 = vmatprep.subr.mxu0 0.0
      %2519 = vmatpush1.msra.mxu0 %v1593
      %2520 = vmatprep.subr.mxu0 0.0
      %2521 = vmatpush1.msra.mxu0 %v1594
      %2522 = vmatprep.subr.mxu0 0.0
      %2523 = vmatpush1.msra.mxu0 %v1595
      %2524 = vmatprep.subr.mxu0 0.0
      %2525 = vmatpush1.msra.mxu0 %v1596
      %2526 = vmatprep.subr.mxu0 0.0
      %2527 = vmatpush1.msra.mxu0 %v1597
      %2528 = vmatprep.subr.mxu0 0.0
      %2529 = vmatpush1.msra.mxu0 %v1598
      %2530 = vmatprep.subr.mxu0 0.0
      %2531 = vmatpush1.msra.mxu0 %v1599
      %2532 = vmatprep.subr.mxu0 0.0
      %2533 = vmatpush1.msra.mxu0 0.0
      %2534 = vmatprep.subr.mxu0 0.0
      %2535 = vmatpush1.msra.mxu0 0.0
      %2536 = vmatprep.subr.mxu0 0.0
      %2537 = vmatpush1.msra.mxu0 0.0
      %2538 = vmatprep.subr.mxu0 0.0
      %2539 = vmatpush1.msra.mxu0 0.0
      %2540 = vmatprep.subr.mxu0 0.0
      %2541 = vmatpush1.msra.mxu0 0.0
      %2542 = vmatprep.subr.mxu0 0.0
      %2543 = vmatpush1.msra.mxu0 0.0
      %2544 = vmatprep.subr.mxu0 0.0
      %2545 = vmatpush1.msra.mxu0 0.0
      %2546 = vmatprep.subr.mxu0 0.0
      %2547 = vmatpush1.msra.mxu0 0.0
      %2548 = vmatprep.subr.mxu0 0.0
      %2549 = vmatpush1.msra.mxu0 0.0
      %2550 = vmatprep.subr.mxu0 0.0
      %2551 = vmatpush1.msra.mxu0 0.0
      %2552 = vmatprep.subr.mxu0 0.0
      %2553 = vmatpush1.msra.mxu0 0.0
      %2554 = vmatprep.subr.mxu0 0.0
      %2555 = vmatpush1.msra.mxu0 0.0
      %2556 = vmatprep.subr.mxu0 0.0
      %2557 = vmatpush1.msra.mxu0 0.0
      %2558 = vmatprep.subr.mxu0 0.0
      %2559 = vmatpush1.msra.mxu0 0.0
      %2560 = vmatprep.subr.mxu0 0.0
      %2561 = vmatpush1.msra.mxu0 0.0
      %2562 = vmatprep.subr.mxu0 0.0
      %2563 = vmatpush1.msra.mxu0 0.0
      %2564 = vmatprep.mubr.f32.mxu0 0.0
      %2565 = vmatmul.mubr.f32.gmra.mrb[0].mxu0 %v1176
      %v2566 = vpop.f32.mrb[0].mxu0
      %v2567 = vadd.f32 %v2342, %v2566
      %v2568 = vpop.f32.mrb[0].mxu0
      %2569 = vmatprep.mubr.f32.mxu0 0.0
      %2570 = vmatmul.mubr.f32.gmra.mrb[0].mxu0 %v1185
      %v2571 = vpop.f32.mrb[0].mxu0
      %v2572 = vadd.f32 %v2347, %v2571
      %v2573 = vpop.f32.mrb[0].mxu0
      %2574 = vmatprep.mubr.f32.mxu0 0.0
      %2575 = vmatmul.mubr.f32.gmra.mrb[0].mxu0 %v1194
      %v2576 = vpop.f32.mrb[0].mxu0
      %v2577 = vadd.f32 %v2352, %v2576
      %v2578 = vpop.f32.mrb[0].mxu0
      %2579 = vmatprep.mubr.f32.mxu0 0.0
      %2580 = vmatmul.mubr.f32.gmra.mrb[0].mxu0 %v1203
      %v2581 = vpop.f32.mrb[0].mxu0
      %v2582 = vadd.f32 %v2357, %v2581
      %v2583 = vpop.f32.mrb[0].mxu0
      %2584 = vmatprep.mubr.f32.mxu0 0.0
      %2585 = vmatmul.mubr.f32.gmra.mrb[0].mxu0 %v1212
      %v2586 = vpop.f32.mrb[0].mxu0
      %v2587 = vadd.f32 %v2362, %v2586
      %v2588 = vpop.f32.mrb[0].mxu0
      %2589 = vmatprep.mubr.f32.mxu0 0.0
      %2590 = vmatmul.mubr.f32.gmra.mrb[0].mxu0 %v1221
      %v2591 = vpop.f32.mrb[0].mxu0
      %v2592 = vadd.f32 %v2367, %v2591
      %v2593 = vpop.f32.mrb[0].mxu0
      %2594 = vmatprep.mubr.f32.mxu0 0.0
      %2595 = vmatmul.mubr.f32.gmra.mrb[0].mxu0 %v1230
      %v2596 = vpop.f32.mrb[0].mxu0
      %v2597 = vadd.f32 %v2372, %v2596
      %v2598 = vpop.f32.mrb[0].mxu0
      %2599 = vmatprep.mubr.f32.mxu0 0.0
      %2600 = vmatmul.mubr.f32.gmra.mrb[0].mxu0 %v1239
      %v2601 = vpop.f32.mrb[0].mxu0
      %v2602 = vadd.f32 %v2377, %v2601
      %v2603 = vpop.f32.mrb[0].mxu0
      %2604 = vmatprep.mubr.f32.mxu0 0.0
      %2605 = vmatmul.mubr.f32.gmra.mrb[0].mxu0 %v1248
      %v2606 = vpop.f32.mrb[0].mxu0
      %v2607 = vadd.f32 %v2382, %v2606
      %v2608 = vpop.f32.mrb[0].mxu0
      %2609 = vmatprep.mubr.f32.mxu0 0.0
      %2610 = vmatmul.mubr.f32.gmra.mrb[0].mxu0 %v1257
      %v2611 = vpop.f32.mrb[0].mxu0
      %v2612 = vadd.f32 %v2387, %v2611
      %v2613 = vpop.f32.mrb[0].mxu0
      %2614 = vmatprep.mubr.f32.mxu0 0.0
      %2615 = vmatmul.mubr.f32.gmra.mrb[0].mxu0 %v1266
      %v2616 = vpop.f32.mrb[0].mxu0
      %v2617 = vadd.f32 %v2392, %v2616
      %v2618 = vpop.f32.mrb[0].mxu0
      %2619 = vmatprep.mubr.f32.mxu0 0.0
      %2620 = vmatmul.mubr.f32.gmra.mrb[0].mxu0 %v1275
      %v2621 = vpop.f32.mrb[0].mxu0
      %v2622 = vadd.f32 %v2397, %v2621
      %v2623 = vpop.f32.mrb[0].mxu0
      %2624 = vmatprep.mubr.f32.mxu0 0.0
      %2625 = vmatmul.mubr.f32.gmra.mrb[0].mxu0 %v1284
      %v2626 = vpop.f32.mrb[0].mxu0
      %v2627 = vadd.f32 %v2402, %v2626
      %v2628 = vpop.f32.mrb[0].mxu0
      %2629 = vmatprep.mubr.f32.mxu0 0.0
      %2630 = vmatmul.mubr.f32.gmra.mrb[0].mxu0 %v1293
      %v2631 = vpop.f32.mrb[0].mxu0
      %v2632 = vadd.f32 %v2407, %v2631
      %v2633 = vpop.f32.mrb[0].mxu0
      %2634 = vmatprep.mubr.f32.mxu0 0.0
      %2635 = vmatmul.mubr.f32.gmra.mrb[0].mxu0 %v1302
      %v2636 = vpop.f32.mrb[0].mxu0
      %v2637 = vadd.f32 %v2412, %v2636
      %v2638 = vpop.f32.mrb[0].mxu0
      %2639 = vmatprep.mubr.f32.mxu0 0.0
      %2640 = vmatmul.mubr.f32.gmra.mrb[0].mxu0 %v1311
      %v2641 = vpop.f32.mrb[0].mxu0
      %v2642 = vadd.f32 %v2417, %v2641
      %v2643 = vpop.f32.mrb[0].mxu0
      %2644 = vmatprep.mubr.f32.mxu0 0.0
      %2645 = vmatmul.mubr.f32.gmra.mrb[0].mxu0 %v1320
      %v2646 = vpop.f32.mrb[0].mxu0
      %v2647 = vadd.f32 %v2422, %v2646
      %v2648 = vpop.f32.mrb[0].mxu0
      %2649 = vmatprep.mubr.f32.mxu0 0.0
      %2650 = vmatmul.mubr.f32.gmra.mrb[0].mxu0 %v1329
      %v2651 = vpop.f32.mrb[0].mxu0
      %v2652 = vadd.f32 %v2427, %v2651
      %v2653 = vpop.f32.mrb[0].mxu0
      %2654 = vmatprep.mubr.f32.mxu0 0.0
      %2655 = vmatmul.mubr.f32.gmra.mrb[0].mxu0 %v1338
      %v2656 = vpop.f32.mrb[0].mxu0
      %v2657 = vadd.f32 %v2432, %v2656
      %v2658 = vpop.f32.mrb[0].mxu0
      %2659 = vmatprep.mubr.f32.mxu0 0.0
      %2660 = vmatmul.mubr.f32.gmra.mrb[0].mxu0 %v1347
      %v2661 = vpop.f32.mrb[0].mxu0
      %v2662 = vadd.f32 %v2437, %v2661
      %v2663 = vpop.f32.mrb[0].mxu0
      %2664 = vmatprep.mubr.f32.mxu0 0.0
      %2665 = vmatmul.mubr.f32.gmra.mrb[0].mxu0 %v1356
      %v2666 = vpop.f32.mrb[0].mxu0
      %v2667 = vadd.f32 %v2442, %v2666
      %v2668 = vpop.f32.mrb[0].mxu0
      %2669 = vmatprep.mubr.f32.mxu0 0.0
      %2670 = vmatmul.mubr.f32.gmra.mrb[0].mxu0 %v1365
      %v2671 = vpop.f32.mrb[0].mxu0
      %v2672 = vadd.f32 %v2447, %v2671
      %v2673 = vpop.f32.mrb[0].mxu0
      %2674 = vmatprep.mubr.f32.mxu0 0.0
      %2675 = vmatmul.mubr.f32.gmra.mrb[0].mxu0 %v1374
      %v2676 = vpop.f32.mrb[0].mxu0
      %v2677 = vadd.f32 %v2452, %v2676
      %v2678 = vpop.f32.mrb[0].mxu0
      %2679 = vmatprep.mubr.f32.mxu0 0.0
      %2680 = vmatmul.mubr.f32.gmra.mrb[0].mxu0 %v1383
      %v2681 = vpop.f32.mrb[0].mxu0
      %v2682 = vadd.f32 %v2457, %v2681
      %v2683 = vpop.f32.mrb[0].mxu0
      %2684 = vmatprep.mubr.f32.mxu0 0.0
      %2685 = vmatmul.mubr.f32.gmra.mrb[0].mxu0 %v1392
      %v2686 = vpop.f32.mrb[0].mxu0
      %v2687 = vadd.f32 %v2462, %v2686
      %v2688 = vpop.f32.mrb[0].mxu0
      %2689 = vmatprep.mubr.f32.mxu0 0.0
      %2690 = vmatmul.mubr.f32.gmra.mrb[0].mxu0 %v1401
      %v2691 = vpop.f32.mrb[0].mxu0
      %v2692 = vadd.f32 %v2467, %v2691
      %v2693 = vpop.f32.mrb[0].mxu0
      %2694 = vmatprep.mubr.f32.mxu0 0.0
      %2695 = vmatmul.mubr.f32.gmra.mrb[0].mxu0 %v1410
      %v2696 = vpop.f32.mrb[0].mxu0
      %v2697 = vadd.f32 %v2472, %v2696
      %v2698 = vpop.f32.mrb[0].mxu0
      %2699 = vmatprep.mubr.f32.mxu0 0.0
      %2700 = vmatmul.mubr.f32.gmra.mrb[0].mxu0 %v1419
      %v2701 = vpop.f32.mrb[0].mxu0
      %v2702 = vadd.f32 %v2477, %v2701
      %v2703 = vpop.f32.mrb[0].mxu0
      %2704 = vmatprep.mubr.f32.mxu0 0.0
      %2705 = vmatmul.mubr.f32.gmra.mrb[0].mxu0 %v1428
      %v2706 = vpop.f32.mrb[0].mxu0
      %v2707 = vadd.f32 %v2482, %v2706
      %v2708 = vpop.f32.mrb[0].mxu0
      %2709 = vmatprep.mubr.f32.mxu0 0.0
      %2710 = vmatmul.mubr.f32.gmra.mrb[0].mxu0 %v1437
      %v2711 = vpop.f32.mrb[0].mxu0
      %v2712 = vadd.f32 %v2487, %v2711
      %v2713 = vpop.f32.mrb[0].mxu0
      %2714 = vmatprep.mubr.f32.mxu0 0.0
      %2715 = vmatmul.mubr.f32.gmra.mrb[0].mxu0 %v1446
      %v2716 = vpop.f32.mrb[0].mxu0
      %v2717 = vadd.f32 %v2492, %v2716
      %v2718 = vpop.f32.mrb[0].mxu0
      %2719 = vmatprep.mubr.f32.mxu0 0.0
      %2720 = vmatmul.mubr.f32.gmra.mrb[0].mxu0 %v1455
      %v2721 = vpop.f32.mrb[0].mxu0
      %v2722 = vadd.f32 %v2497, %v2721
      %v2723 = vpop.f32.mrb[0].mxu0
      %2724 = vdwg.mxu0
      %2725 = vst [vmem:[%s177] sm:$0xff] %v2567
      %2726 = vst [vmem:[%s177 + $0x8] sm:$0xff] %v2572
      %2727 = vst [vmem:[%s177 + $0x10] sm:$0xff] %v2577
      %2728 = vst [vmem:[%s177 + $0x18] sm:$0xff] %v2582
      %2729 = vst [vmem:[%s177 + $0x20] sm:$0xff] %v2587
      %2730 = vst [vmem:[%s177 + $0x28] sm:$0xff] %v2592
      %2731 = vst [vmem:[%s177 + $0x30] sm:$0xff] %v2597
      %2732 = vst [vmem:[%s177 + $0x38] sm:$0xff] %v2602
      %2733 = vst [vmem:[%s177 + $0x40] sm:$0xff] %v2607
      %2734 = vst [vmem:[%s177 + $0x48] sm:$0xff] %v2612
      %2735 = vst [vmem:[%s177 + $0x50] sm:$0xff] %v2617
      %2736 = vst [vmem:[%s177 + $0x58] sm:$0xff] %v2622
      %2737 = vst [vmem:[%s177 + $0x60] sm:$0xff] %v2627
      %2738 = vst [vmem:[%s177 + $0x68] sm:$0xff] %v2632
      %2739 = vst [vmem:[%s177 + $0x70] sm:$0xff] %v2637
      %2740 = vst [vmem:[%s177 + $0x78] sm:$0xff] %v2642
      %2741 = vst [vmem:[%s177 + $0x80] sm:$0xff] %v2647
      %2742 = vst [vmem:[%s177 + $0x88] sm:$0xff] %v2652
      %2743 = vst [vmem:[%s177 + $0x90] sm:$0xff] %v2657
      %2744 = vst [vmem:[%s177 + $0x98] sm:$0xff] %v2662
      %2745 = vst [vmem:[%s177 + $0xa0] sm:$0xff] %v2667
      %2746 = vst [vmem:[%s177 + $0xa8] sm:$0xff] %v2672
      %2747 = vst [vmem:[%s177 + $0xb0] sm:$0xff] %v2677
      %2748 = vst [vmem:[%s177 + $0xb8] sm:$0xff] %v2682
      %2749 = vst [vmem:[%s177 + $0xc0] sm:$0xff] %v2687
      %2750 = vst [vmem:[%s177 + $0xc8] sm:$0xff] %v2692
      %2751 = vst [vmem:[%s177 + $0xd0] sm:$0xff] %v2697
      %2752 = vst [vmem:[%s177 + $0xd8] sm:$0xff] %v2702
      %2753 = vst [vmem:[%s177 + $0xe0] sm:$0xff] %v2707
      %2754 = vst [vmem:[%s177 + $0xe8] sm:$0xff] %v2712
      %2755 = vst [vmem:[%s177 + $0xf0] sm:$0xff] %v2717
      %2756 = vst [vmem:[%s177 + $0xf8] sm:$0xff] %v2722
      %v2757 = vadd.f32 %v2567, %v2572
      %v2758 = vadd.f32 %v2757, %v2577
      %v2759 = vadd.f32 %v2758, %v2582
      %v2760 = vadd.f32 %v2759, %v2587
      %v2761 = vadd.f32 %v2760, %v2592
      %v2762 = vadd.f32 %v2761, %v2597
      %v2763 = vadd.f32 %v2762, %v2602
      %v2764 = vadd.f32 %v2763, %v2607
      %v2765 = vadd.f32 %v2764, %v2612
      %v2766 = vadd.f32 %v2765, %v2617
      %v2767 = vadd.f32 %v2766, %v2622
      %v2768 = vadd.f32 %v2767, %v2627
      %v2769 = vadd.f32 %v2768, %v2632
      %v2770 = vadd.f32 %v2769, %v2637
      %v2771 = vadd.f32 %v2770, %v2642
      %v2772 = vadd.f32 %v2771, %v2647
      %v2773 = vadd.f32 %v2772, %v2652
      %v2774 = vadd.f32 %v2773, %v2657
      %v2775 = vadd.f32 %v2774, %v2662
      %v2776 = vadd.f32 %v2775, %v2667
      %v2777 = vadd.f32 %v2776, %v2672
      %v2778 = vadd.f32 %v2777, %v2677
      %v2779 = vadd.f32 %v2778, %v2682
      %v2780 = vadd.f32 %v2779, %v2687
      %v2781 = vadd.f32 %v2780, %v2692
      %v2782 = vadd.f32 %v2781, %v2697
      %v2783 = vadd.f32 %v2782, %v2702
      %v2784 = vadd.f32 %v2783, %v2707
      %v2785 = vadd.f32 %v2784, %v2712
      %v2786 = vadd.f32 %v2785, %v2717
      %v2787 = vadd.f32 %v2786, %v2722
      %v2788 = vrot.slane %v2787, 4
      %v2789 = vadd.f32 %v2787, %v2788
      %v2790 = vrot.slane %v2789, 2
      %v2791 = vadd.f32 %v2789, %v2790
      %v2792 = vrot.slane %v2791, 1
      %v2793 = vadd.f32 %v2791, %v2792
      %v2794 = vmul.f32 %v2793, 0.00390625
      %v2795 = vsub.f32 %v2567, %v2794
      %v2796 = vsub.f32 %v2572, %v2794
      %v2797 = vsub.f32 %v2577, %v2794
      %v2798 = vsub.f32 %v2582, %v2794
      %v2799 = vsub.f32 %v2587, %v2794
      %v2800 = vsub.f32 %v2592, %v2794
      %v2801 = vsub.f32 %v2597, %v2794
      %v2802 = vsub.f32 %v2602, %v2794
      %v2803 = vsub.f32 %v2607, %v2794
      %v2804 = vsub.f32 %v2612, %v2794
      %v2805 = vsub.f32 %v2617, %v2794
      %v2806 = vsub.f32 %v2622, %v2794
      %v2807 = vsub.f32 %v2627, %v2794
      %v2808 = vsub.f32 %v2632, %v2794
      %v2809 = vsub.f32 %v2637, %v2794
      %v2810 = vsub.f32 %v2642, %v2794
      %v2811 = vsub.f32 %v2647, %v2794
      %v2812 = vsub.f32 %v2652, %v2794
      %v2813 = vsub.f32 %v2657, %v2794
      %v2814 = vsub.f32 %v2662, %v2794
      %v2815 = vsub.f32 %v2667, %v2794
      %v2816 = vsub.f32 %v2672, %v2794
      %v2817 = vsub.f32 %v2677, %v2794
      %v2818 = vsub.f32 %v2682, %v2794
      %v2819 = vsub.f32 %v2687, %v2794
      %v2820 = vsub.f32 %v2692, %v2794
      %v2821 = vsub.f32 %v2697, %v2794
      %v2822 = vsub.f32 %v2702, %v2794
      %v2823 = vsub.f32 %v2707, %v2794
      %v2824 = vsub.f32 %v2712, %v2794
      %v2825 = vsub.f32 %v2717, %v2794
      %v2826 = vsub.f32 %v2722, %v2794
      %v2827 = vmul.f32 %v2795, %v2795
      %v2828 = vmul.f32 %v2796, %v2796
      %v2829 = vmul.f32 %v2797, %v2797
      %v2830 = vmul.f32 %v2798, %v2798
      %v2831 = vmul.f32 %v2799, %v2799
      %v2832 = vmul.f32 %v2800, %v2800
      %v2833 = vmul.f32 %v2801, %v2801
      %v2834 = vmul.f32 %v2802, %v2802
      %v2835 = vmul.f32 %v2803, %v2803
      %v2836 = vmul.f32 %v2804, %v2804
      %v2837 = vmul.f32 %v2805, %v2805
      %v2838 = vmul.f32 %v2806, %v2806
      %v2839 = vmul.f32 %v2807, %v2807
      %v2840 = vmul.f32 %v2808, %v2808
      %v2841 = vmul.f32 %v2809, %v2809
      %v2842 = vmul.f32 %v2810, %v2810
      %v2843 = vmul.f32 %v2811, %v2811
      %v2844 = vmul.f32 %v2812, %v2812
      %v2845 = vmul.f32 %v2813, %v2813
      %v2846 = vmul.f32 %v2814, %v2814
      %v2847 = vmul.f32 %v2815, %v2815
      %v2848 = vmul.f32 %v2816, %v2816
      %v2849 = vmul.f32 %v2817, %v2817
      %v2850 = vmul.f32 %v2818, %v2818
      %v2851 = vmul.f32 %v2819, %v2819
      %v2852 = vmul.f32 %v2820, %v2820
      %v2853 = vmul.f32 %v2821, %v2821
      %v2854 = vmul.f32 %v2822, %v2822
      %v2855 = vmul.f32 %v2823, %v2823
      %v2856 = vmul.f32 %v2824, %v2824
      %v2857 = vmul.f32 %v2825, %v2825
      %v2858 = vmul.f32 %v2826, %v2826
      %v2859 = vadd.f32 %v2827, %v2828
      %v2860 = vadd.f32 %v2859, %v2829
      %v2861 = vadd.f32 %v2860, %v2830
      %v2862 = vadd.f32 %v2861, %v2831
      %v2863 = vadd.f32 %v2862, %v2832
      %v2864 = vadd.f32 %v2863, %v2833
      %v2865 = vadd.f32 %v2864, %v2834
      %v2866 = vadd.f32 %v2865, %v2835
      %v2867 = vadd.f32 %v2866, %v2836
      %v2868 = vadd.f32 %v2867, %v2837
      %v2869 = vadd.f32 %v2868, %v2838
      %v2870 = vadd.f32 %v2869, %v2839
      %v2871 = vadd.f32 %v2870, %v2840
      %v2872 = vadd.f32 %v2871, %v2841
      %v2873 = vadd.f32 %v2872, %v2842
      %v2874 = vadd.f32 %v2873, %v2843
      %v2875 = vadd.f32 %v2874, %v2844
      %v2876 = vadd.f32 %v2875, %v2845
      %v2877 = vadd.f32 %v2876, %v2846
      %v2878 = vadd.f32 %v2877, %v2847
      %v2879 = vadd.f32 %v2878, %v2848
      %v2880 = vadd.f32 %v2879, %v2849
      %v2881 = vadd.f32 %v2880, %v2850
      %v2882 = vadd.f32 %v2881, %v2851
      %v2883 = vadd.f32 %v2882, %v2852
      %v2884 = vadd.f32 %v2883, %v2853
      %v2885 = vadd.f32 %v2884, %v2854
      %v2886 = vadd.f32 %v2885, %v2855
      %v2887 = vadd.f32 %v2886, %v2856
      %v2888 = vadd.f32 %v2887, %v2857
      %v2889 = vadd.f32 %v2888, %v2858
      %v2890 = vrot.slane %v2889, 4
      %v2891 = vadd.f32 %v2889, %v2890
      %v2892 = vrot.slane %v2891, 2
      %v2893 = vadd.f32 %v2891, %v2892
      %v2894 = vrot.slane %v2893, 1
      %v2895 = vadd.f32 %v2893, %v2894
      %v2896 = vlaneseq
      %v2897 = vshrl.u32 %v2896, 7
      %vm2898 = vcmp.eq.s32.totalorder %v2897, 0
      %vm2899 = vcmp.eq.s32.totalorder %v2897, 1
      %v2900 = vsel %vm2899, %v2895, 0.0
      %v2901 = vsel %vm2898, %v2793, %v2900
      %2902 = vst [vmem:[%s181] sm:$0xff] %v2901
      %p2903 = scmp.lt.s32.totalorder %s15, 1
      %s2904 = scalar_select %p2903, %s15, 1
      %s2905 = smul.addr %s2904, 32
      %s2906 = smul.addr %s2905, 8
      %s2907 = scalar_lea.vmem %s2, %s2906
      %p2908 = scmp.lt.s32.totalorder %s15, 1
      %s2909 = scalar_select %p2908, %s15, 1
      %s2910 = smul.addr %s2909, 8
      %s2911 = scalar_lea.vmem %s3, %s2910
      // Predicated region
      $region29: #{residual_block_forward.3} parent=27 // pred_check
        %p2912 = pneg %p80
      $region30: #{residual_block_forward.3} parent=27 // pred_check_branch
        %2914 = sbr.rel (%p2912) target = $region32
      $region31: #{residual_block_forward.3} parent=27 // pred_region
        _
      $region32: #{residual_block_forward.3} parent=27 // pred_fallthru
        _
      // Predicated region
      $region33: #{residual_block_forward.3} parent=27 // pred_check
        %p2915 = pneg %p106
      $region34: #{residual_block_forward.3} parent=27 // pred_check_branch
        %2917 = sbr.rel (%p2915) target = $region36
      $region35: #{residual_block_forward.3} parent=27 // pred_region
        _
      $region36: #{residual_block_forward.3} parent=27 // pred_fallthru
        _
    $region28: #{residual_block_forward.3} parent=5 // pred_fallthru
      _
    %p2918 = scmp.le.s32.totalorder 2, %s10
    // Predicated region
    $region37: #{residual_block_forward.3} parent=5 // pred_check
      %p2919 = pneg %p2918
    $region38: #{residual_block_forward.3} parent=5 // pred_check_branch
      %2921 = sbr.rel (%p2919) target = $region40
    $region39: #{residual_block_forward.3} parent=5 // pred_region
      %s2922 = ssub.s32 %s10, 2
      // Predicated region
      $region41: #{residual_block_forward.3} parent=39 // pred_check
        %p2923 = pneg %p86
      $region42: #{residual_block_forward.3} parent=39 // pred_check_branch
        %2925 = sbr.rel (%p2923) target = $region44
      $region43: #{residual_block_forward.3} parent=39 // pred_region
        %p2926 = scmp.lt.s32.totalorder %s16, 1
        %s2927 = scalar_select %p2926, %s16, 1
        %s2928 = smul.addr %s2927, 32
        %s2929 = smul.addr %s2928, 8
        %s2930 = scalar_lea.vmem %s2, %s2929
      $region44: #{residual_block_forward.3} parent=39 // pred_fallthru
        _
      // Predicated region
      $region45: #{residual_block_forward.3} parent=39 // pred_check
        %p2931 = pneg %p112
      $region46: #{residual_block_forward.3} parent=39 // pred_check_branch
        %2933 = sbr.rel (%p2931) target = $region48
      $region47: #{residual_block_forward.3} parent=39 // pred_region
        %p2934 = scmp.lt.s32.totalorder %s16, 1
        %s2935 = scalar_select %p2934, %s16, 1
        %s2936 = smul.addr %s2935, 8
        %s2937 = scalar_lea.vmem %s3, %s2936
      $region48: #{residual_block_forward.3} parent=39 // pred_fallthru
        _
    $region40: #{residual_block_forward.3} parent=5 // pred_fallthru
      _
  $region6: #{residual_block_forward.3} parent=0 // loop_footer
    %s14 = sadd.s32 1, %s10
  $region7: #{residual_block_forward.3} parent=0 // loop_footer_branch
    %9 = sbr.rel target = $region3
  $region8: #{residual_block_forward.3} parent=0 // loop_exit
    _

// kernel: residual_block_forward.4
$region0: #{residual_block_forward.4}
  #allocation0 [shape = 'u32[]', space=smem, size = 0x4, offset = 0x4, fixed_abs, tag = 'smem constant byte address 0x4 - core index']
  #allocation1 [shape = 'u32[144,128]{1,0:T(1,128)}', space=vmem, size = 0x12000, scoped, tag = 'internal scratch']
  #allocation2 [shape = 'f32[16,16,128]{2,1,0:T(8,128)}', space=vmem, size = 0x20000, scoped, tag = 'scratch operand']
  #allocation3 [shape = 'f32[16,16,1152]{2,1,0:T(8,128)}', space=vmem, size = 0x120000, scoped, tag = 'scratch operand']
  %s0 = inlined_call_operand.vmem [shape: f32[2,16,16,128], index: 0, kind: input, shape index: {}]
  %s1 = inlined_call_operand.vmem [shape: f32[1,128], index: 1, kind: input, shape index: {}]
  %s2 = inlined_call_operand.vmem [shape: f32[1,128], index: 2, kind: input, shape index: {}]
  %s3 = inlined_call_operand.vmem [shape: f32[1152,128], index: 3, kind: input, shape index: {}]
  %s4 = inlined_call_operand.vmem [shape: f32[2,16,16,128], index: 4, kind: output, shape index: {0}]
  %s5 = inlined_call_operand.vmem [shape: f32[2,8,128], index: 5, kind: output, shape index: {1}]
  %6 = xla_tuple %s4, %s5
  %s7 = sld [smem:[#allocation0]]
  $region57: #{residual_block_forward.4} parent=0
    _
  %s9 = ssub.s32 1, %s7
  %s10 = scalar_select 0, %s9, %s7
  loop: start=0, step=1, limit=4
  $region2: #{residual_block_forward.4} parent=0 // loop_pre_header
    _
  $region3: #{residual_block_forward.4} parent=0 // loop_header
    %s12 = sphi 0, %s16
    %p13 = scmp.ge.s32.totalorder %s12, 4
    %s22 = sphi 0, %s24
    %s25 = sphi 0, %s22
    %s26 = sphi 0, %s25
    %s42 = sphi 0, %s26
    %s46 = sphi 0, %s46
    %s48 = sphi 0, %s46
    %s49 = sphi 0, %s48
    %s63 = sphi 0, %s49
    %s67 = sphi 0, %s67
    %s69 = sphi 0, %s67
    %s70 = sphi 0, %s69
    %s84 = sphi 0, %s70
    %s88 = sphi 0, %s88
    %s90 = sphi 0, %s88
    %s91 = sphi 0, %s90
    %s105 = sphi 0, %s91
    %s111 = sphi 0, %s113
    %s114 = sphi 0, %s111
    %s115 = sphi 0, %s114
    %s131 = sphi 0, %s115
    %s137 = sphi 0, %s139
    %s140 = sphi 0, %s137
    %s141 = sphi 0, %s140
    %s157 = sphi 0, %s141
  $region4: #{residual_block_forward.4} parent=0 // loop_header_branch
    %15 = sbr.rel (%p13) target = $region8
  $region5: #{residual_block_forward.4} parent=0 // loop_body
    %s17 = ssub.s32 %s12, 1
    %s18 = ssub.s32 %s12, 2
    %s19 = sadd.s32 %s12, 1
    %s20 = ssub.s32 %s12, %s19
    %p21 = scmp.eq.s32.totalorder %s20, 0
    %s23 = sadd.s32 %s22, 1
    %s24 = scalar_select %p21, %s22, %s23
    %p27 = pneg %p21
    %p28 = scmp.eq.s32.totalorder %s12, 1
    %p29 = por %p27, %p28
    %p30 = scmp.ne.s32.totalorder %s22, %s25
    %p31 = scmp.eq.s32.totalorder %s12, 0
    %p32 = por %p30, %p31
    %p33 = scmp.ne.s32.totalorder %s22, %s25
    %p34 = scmp.eq.s32.totalorder %s17, 1
    %p35 = por %p33, %p34
    %p36 = scmp.ne.s32.totalorder %s25, %s26
    %p37 = scmp.eq.s32.totalorder %s17, 0
    %p38 = por %p36, %p37
    %p39 = scmp.ne.s32.totalorder %s25, %s26
    %p40 = scmp.eq.s32.totalorder %s18, 1
    %p41 = por %p39, %p40
    %p43 = scmp.ne.s32.totalorder %s26, %s42
    %p44 = scmp.eq.s32.totalorder %s18, 0
    %p45 = por %p43, %p44
    %s47 = sadd.s32 %s46, 1
    %p50 = scmp.eq.s32.totalorder %s12, 1
    %p51 = scmp.ne.s32.totalorder %s46, %s48
    %p52 = scmp.eq.s32.totalorder %s12, 0
    %p53 = por %p51, %p52
    %p54 = scmp.ne.s32.totalorder %s46, %s48
    %p55 = scmp.eq.s32.totalorder %s17, 1
    %p56 = por %p54, %p55
    %p57 = scmp.ne.s32.totalorder %s48, %s49
    %p58 = scmp.eq.s32.totalorder %s17, 0
    %p59 = por %p57, %p58
    %p60 = scmp.ne.s32.totalorder %s48, %s49
    %p61 = scmp.eq.s32.totalorder %s18, 1
    %p62 = por %p60, %p61
    %p64 = scmp.ne.s32.totalorder %s49, %s63
    %p65 = scmp.eq.s32.totalorder %s18, 0
    %p66 = por %p64, %p65
    %s68 = sadd.s32 %s67, 1
    %p71 = scmp.eq.s32.totalorder %s12, 1
    %p72 = scmp.ne.s32.totalorder %s67, %s69
    %p73 = scmp.eq.s32.totalorder %s12, 0
    %p74 = por %p72, %p73
    %p75 = scmp.ne.s32.totalorder %s67, %s69
    %p76 = scmp.eq.s32.totalorder %s17, 1
    %p77 = por %p75, %p76
    %p78 = scmp.ne.s32.totalorder %s69, %s70
    %p79 = scmp.eq.s32.totalorder %s17, 0
    %p80 = por %p78, %p79
    %p81 = scmp.ne.s32.totalorder %s69, %s70
    %p82 = scmp.eq.s32.totalorder %s18, 1
    %p83 = por %p81, %p82
    %p85 = scmp.ne.s32.totalorder %s70, %s84
    %p86 = scmp.eq.s32.totalorder %s18, 0
    %p87 = por %p85, %p86
    %s89 = sadd.s32 %s88, 1
    %p92 = scmp.eq.s32.totalorder %s12, 1
    %p93 = scmp.ne.s32.totalorder %s88, %s90
    %p94 = scmp.eq.s32.totalorder %s12, 0
    %p95 = por %p93, %p94
    %p96 = scmp.ne.s32.totalorder %s88, %s90
    %p97 = scmp.eq.s32.totalorder %s17, 1
    %p98 = por %p96, %p97
    %p99 = scmp.ne.s32.totalorder %s90, %s91
    %p100 = scmp.eq.s32.totalorder %s17, 0
    %p101 = por %p99, %p100
    %p102 = scmp.ne.s32.totalorder %s90, %s91
    %p103 = scmp.eq.s32.totalorder %s18, 1
    %p104 = por %p102, %p103
    %p106 = scmp.ne.s32.totalorder %s91, %s105
    %p107 = scmp.eq.s32.totalorder %s18, 0
    %p108 = por %p106, %p107
    %s109 = ssub.s32 %s12, %s19
    %p110 = scmp.eq.s32.totalorder %s109, 0
    %s112 = sadd.s32 %s111, 1
    %s113 = scalar_select %p110, %s111, %s112
    %p116 = pneg %p110
    %p117 = scmp.eq.s32.totalorder %s12, 1
    %p118 = por %p116, %p117
    %p119 = scmp.ne.s32.totalorder %s111, %s114
    %p120 = scmp.eq.s32.totalorder %s12, 0
    %p121 = por %p119, %p120
    %p122 = scmp.ne.s32.totalorder %s111, %s114
    %p123 = scmp.eq.s32.totalorder %s17, 1
    %p124 = por %p122, %p123
    %p125 = scmp.ne.s32.totalorder %s114, %s115
    %p126 = scmp.eq.s32.totalorder %s17, 0
    %p127 = por %p125, %p126
    %p128 = scmp.ne.s32.totalorder %s114, %s115
    %p129 = scmp.eq.s32.totalorder %s18, 1
    %p130 = por %p128, %p129
    %p132 = scmp.ne.s32.totalorder %s115, %s131
    %p133 = scmp.eq.s32.totalorder %s18, 0
    %p134 = por %p132, %p133
    %s135 = ssub.s32 %s12, %s19
    %p136 = scmp.eq.s32.totalorder %s135, 0
    %s138 = sadd.s32 %s137, 1
    %s139 = scalar_select %p136, %s137, %s138
    %p142 = pneg %p136
    %p143 = scmp.eq.s32.totalorder %s12, 1
    %p144 = por %p142, %p143
    %p145 = scmp.ne.s32.totalorder %s137, %s140
    %p146 = scmp.eq.s32.totalorder %s12, 0
    %p147 = por %p145, %p146
    %p148 = scmp.ne.s32.totalorder %s137, %s140
    %p149 = scmp.eq.s32.totalorder %s17, 1
    %p150 = por %p148, %p149
    %p151 = scmp.ne.s32.totalorder %s140, %s141
    %p152 = scmp.eq.s32.totalorder %s17, 0
    %p153 = por %p151, %p152
    %p154 = scmp.ne.s32.totalorder %s140, %s141
    %p155 = scmp.eq.s32.totalorder %s18, 1
    %p156 = por %p154, %p155
    %p158 = scmp.ne.s32.totalorder %s141, %s157
    %p159 = scmp.eq.s32.totalorder %s18, 0
    %p160 = por %p158, %p159
    %p161 = scmp.le.s32.totalorder 1, %s12
    %p162 = scmp.lt.s32.totalorder %s12, 3
    %p163 = pnand %p161, %p162
    %p164 = pneg %p163
    // Predicated region
    $region9: #{residual_block_forward.4} parent=5 // pred_check
      _
    $region10: #{residual_block_forward.4} parent=5 // pred_check_branch
      %166 = sbr.rel (%p163) target = $region12
    $region11: #{residual_block_forward.4} parent=5 // pred_region
      %s167 = ssub.s32 %s12, 1
      // Predicated region
      $region13: #{residual_block_forward.4} parent=11 // pred_check
        %p168 = pneg %p59
      $region14: #{residual_block_forward.4} parent=11 // pred_check_branch
        %170 = sbr.rel (%p168) target = $region16
      $region15: #{residual_block_forward.4} parent=11 // pred_region
        _
      $region16: #{residual_block_forward.4} parent=11 // pred_fallthru
        _
      // Predicated region
      $region17: #{residual_block_forward.4} parent=11 // pred_check
        %p171 = pneg %p80
      $region18: #{residual_block_forward.4} parent=11 // pred_check_branch
        %173 = sbr.rel (%p171) target = $region20
      $region19: #{residual_block_forward.4} parent=11 // pred_region
        _
      $region20: #{residual_block_forward.4} parent=11 // pred_fallthru
        _
      // Predicated region
      $region21: #{residual_block_forward.4} parent=11 // pred_check
        %p174 = pneg %p101
      $region22: #{residual_block_forward.4} parent=11 // pred_check_branch
        %176 = sbr.rel (%p174) target = $region24
      $region23: #{residual_block_forward.4} parent=11 // pred_region
        _
      $region24: #{residual_block_forward.4} parent=11 // pred_fallthru
        _
    $region12: #{residual_block_forward.4} parent=5 // pred_fallthru
      _
    %p177 = scmp.lt.s32.totalorder %s12, 2
    // Predicated region
    $region25: #{residual_block_forward.4} parent=5 // pred_check
      %p178 = pneg %p177
    $region26: #{residual_block_forward.4} parent=5 // pred_check_branch
      %180 = sbr.rel (%p178) target = $region28
    $region27: #{residual_block_forward.4} parent=5 // pred_region
      // Predicated region
      $region29: #{residual_block_forward.4} parent=27 // pred_check
        %p181 = pneg %p32
      $region30: #{residual_block_forward.4} parent=27 // pred_check_branch
        %183 = sbr.rel (%p181) target = $region32
      $region31: #{residual_block_forward.4} parent=27 // pred_region
        %p184 = scmp.lt.s32.totalorder %s12, 1
        %s185 = scalar_select %p184, %s12, 1
        %s186 = smul.addr %s185, 32
        %s187 = smul.addr %s186, 8
        %s188 = scalar_lea.vmem %s0, %s187
      $region32: #{residual_block_forward.4} parent=27 // pred_fallthru
        _
    $region28: #{residual_block_forward.4} parent=5 // pred_fallthru
      _
    %p189 = scmp.le.s32.totalorder 1, %s12
    %p190 = scmp.lt.s32.totalorder %s12, 3
    %p191 = pnand %p189, %p190
    %p192 = pneg %p191
    // Predicated region
    $region33: #{residual_block_forward.4} parent=5 // pred_check
      _
    $region34: #{residual_block_forward.4} parent=5 // pred_check_branch
      %194 = sbr.rel (%p191) target = $region36
    $region35: #{residual_block_forward.4} parent=5 // pred_region
      %s195 = ssub.s32 %s12, 1
      %p196 = scmp.lt.s32.totalorder %s17, 1
      %s197 = scalar_select %p196, %s17, 1
      %s198 = smul.addr %s197, 32
      %s199 = smul.addr %s198, 8
      %s200 = scalar_lea.vmem %s0, %s199
      %p201 = pneg %p38
      %p202 = pneg %p35
      %p203 = pneg %p59
      %p204 = pneg %p56
      %p205 = pneg %p80
      %p206 = pneg %p77
      %p207 = pneg %p101
      %p208 = pneg %p98
      %p209 = pneg %p127
      %p210 = pneg %p124
      %p211 = scmp.lt.s32.totalorder %s17, 1
      %s212 = scalar_select %p211, %s17, 1
      %s213 = smul.addr %s212, 32
      %s214 = smul.addr %s213, 8
      %s215 = scalar_lea.vmem %s4, %s214
      %p216 = pneg %p153
      %p217 = pneg %p150
      %p218 = scmp.lt.s32.totalorder %s17, 1
      %s219 = scalar_select %p218, %s17, 1
      %s220 = smul.addr %s219, 8
      %s221 = scalar_lea.vmem %s5, %s220
      %p222 = scmp.lt.s32.totalorder %s17, 1
      %s223 = scalar_select %p222, %s17, 1
      %s224 = smul.addr %s223, 32
      %s225 = smul.addr %s224, 8
      %s226 = scalar_lea.vmem %s0, %s225
      %p227 = scmp.lt.s32.totalorder %s17, 1
      %s228 = scalar_select %p227, %s17, 1
      %s229 = smul.addr %s228, 32
      %s230 = smul.addr %s229, 8
      %s231 = scalar_lea.vmem %s4, %s230
      %p232 = scmp.lt.s32.totalorder %s17, 1
      %s233 = scalar_select %p232, %s17, 1
      %s234 = smul.addr %s233, 8
      %s235 = scalar_lea.vmem %s5, %s234
      %v236 = vld [vmem:[%s226] sm:$0xff]
      %v237 = vld [vmem:[%s226 + $0x8] sm:$0xff]
      %v238 = vld [vmem:[%s226 + $0x10] sm:$0xff]
      %v239 = vld [vmem:[%s226 + $0x18] sm:$0xff]
      %v240 = vld [vmem:[%s226 + $0x20] sm:$0xff]
      %v241 = vld [vmem:[%s226 + $0x28] sm:$0xff]
      %v242 = vld [vmem:[%s226 + $0x30] sm:$0xff]
      %v243 = vld [vmem:[%s226 + $0x38] sm:$0xff]
      %v244 = vld [vmem:[%s226 + $0x40] sm:$0xff]
      %v245 = vld [vmem:[%s226 + $0x48] sm:$0xff]
      %v246 = vld [vmem:[%s226 + $0x50] sm:$0xff]
      %v247 = vld [vmem:[%s226 + $0x58] sm:$0xff]
      %v248 = vld [vmem:[%s226 + $0x60] sm:$0xff]
      %v249 = vld [vmem:[%s226 + $0x68] sm:$0xff]
      %v250 = vld [vmem:[%s226 + $0x70] sm:$0xff]
      %v251 = vld [vmem:[%s226 + $0x78] sm:$0xff]
      %v252 = vld [vmem:[%s226 + $0x80] sm:$0xff]
      %v253 = vld [vmem:[%s226 + $0x88] sm:$0xff]
      %v254 = vld [vmem:[%s226 + $0x90] sm:$0xff]
      %v255 = vld [vmem:[%s226 + $0x98] sm:$0xff]
      %v256 = vld [vmem:[%s226 + $0xa0] sm:$0xff]
      %v257 = vld [vmem:[%s226 + $0xa8] sm:$0xff]
      %v258 = vld [vmem:[%s226 + $0xb0] sm:$0xff]
      %v259 = vld [vmem:[%s226 + $0xb8] sm:$0xff]
      %v260 = vld [vmem:[%s226 + $0xc0] sm:$0xff]
      %v261 = vld [vmem:[%s226 + $0xc8] sm:$0xff]
      %v262 = vld [vmem:[%s226 + $0xd0] sm:$0xff]
      %v263 = vld [vmem:[%s226 + $0xd8] sm:$0xff]
      %v264 = vld [vmem:[%s226 + $0xe0] sm:$0xff]
      %v265 = vld [vmem:[%s226 + $0xe8] sm:$0xff]
      %v266 = vld [vmem:[%s226 + $0xf0] sm:$0xff]
      %v267 = vld [vmem:[%s226 + $0xf8] sm:$0xff]
      %v268 = vld [vmem:[%s1] sm:$0x1]
      %v270 = vlaneseq
      %v271 = vshrl.u32 %v270, 7
      %v272 = vsub.s32 0, %v271
      %v273 = vrot.slane %v268, %v272
      %v275 = vmul.f32 %v236, %v273
      %v276 = vmul.f32 %v237, %v273
      %v277 = vmul.f32 %v238, %v273
      %v278 = vmul.f32 %v239, %v273
      %v279 = vmul.f32 %v240, %v273
      %v280 = vmul.f32 %v241, %v273
      %v281 = vmul.f32 %v242, %v273
      %v282 = vmul.f32 %v243, %v273
      %v283 = vmul.f32 %v244, %v273
      %v284 = vmul.f32 %v245, %v273
      %v285 = vmul.f32 %v246, %v273
      %v286 = vmul.f32 %v247, %v273
      %v287 = vmul.f32 %v248, %v273
      %v288 = vmul.f32 %v249, %v273
      %v289 = vmul.f32 %v250, %v273
      %v290 = vmul.f32 %v251, %v273
      %v291 = vmul.f32 %v252, %v273
      %v292 = vmul.f32 %v253, %v273
      %v293 = vmul.f32 %v254, %v273
      %v294 = vmul.f32 %v255, %v273
      %v295 = vmul.f32 %v256, %v273
      %v296 = vmul.f32 %v257, %v273
      %v297 = vmul.f32 %v258, %v273
      %v298 = vmul.f32 %v259, %v273
      %v299 = vmul.f32 %v260, %v273
      %v300 = vmul.f32 %v261, %v273
      %v301 = vmul.f32 %v262, %v273
      %v302 = vmul.f32 %v263, %v273
      %v303 = vmul.f32 %v264, %v273
      %v304 = vmul.f32 %v265, %v273
      %v305 = vmul.f32 %v266, %v273
      %v306 = vmul.f32 %v267, %v273
      %v307 = vld [vmem:[%s2] sm:$0x1]
      %v309 = vlaneseq
      %v310 = vshrl.u32 %v309, 7
      %v311 = vsub.s32 0, %v310
      %v312 = vrot.slane %v307, %v311
      %v314 = vadd.f32 %v275, %v312
      %v315 = vadd.f32 %v276, %v312
      %v316 = vadd.f32 %v277, %v312
      %v317 = vadd.f32 %v278, %v312
      %v318 = vadd.f32 %v279, %v312
      %v319 = vadd.f32 %v280, %v312
      %v320 = vadd.f32 %v281, %v312
      %v321 = vadd.f32 %v282, %v312
      %v322 = vadd.f32 %v283, %v312
      %v323 = vadd.f32 %v284, %v312
      %v324 = vadd.f32 %v285, %v312
      %v325 = vadd.f32 %v286, %v312
      %v326 = vadd.f32 %v287, %v312
      %v327 = vadd.f32 %v288, %v312
      %v328 = vadd.f32 %v289, %v312
      %v329 = vadd.f32 %v290, %v312
      %v330 = vadd.f32 %v291, %v312
      %v331 = vadd.f32 %v292, %v312
      %v332 = vadd.f32 %v293, %v312
      %v333 = vadd.f32 %v294, %v312
      %v334 = vadd.f32 %v295, %v312
      %v335 = vadd.f32 %v296, %v312
      %v336 = vadd.f32 %v297, %v312
      %v337 = vadd.f32 %v298, %v312
      %v338 = vadd.f32 %v299, %v312
      %v339 = vadd.f32 %v300, %v312
      %v340 = vadd.f32 %v301, %v312
      %v341 = vadd.f32 %v302, %v312
      %v342 = vadd.f32 %v303, %v312
      %v343 = vadd.f32 %v304, %v312
      %v344 = vadd.f32 %v305, %v312
      %v345 = vadd.f32 %v306, %v312
      %v346 = vmax.f32 %v314, 0.0
      %v347 = vmax.f32 %v315, 0.0
      %v348 = vmax.f32 %v316, 0.0
      %v349 = vmax.f32 %v317, 0.0
      %v350 = vmax.f32 %v318, 0.0
      %v351 = vmax.f32 %v319, 0.0
      %v352 = vmax.f32 %v320, 0.0
      %v353 = vmax.f32 %v321, 0.0
      %v354 = vmax.f32 %v322, 0.0
      %v355 = vmax.f32 %v323, 0.0
      %v356 = vmax.f32 %v324, 0.0
      %v357 = vmax.f32 %v325, 0.0
      %v358 = vmax.f32 %v326, 0.0
      %v359 = vmax.f32 %v327, 0.0
      %v360 = vmax.f32 %v328, 0.0
      %v361 = vmax.f32 %v329, 0.0
      %v362 = vmax.f32 %v330, 0.0
      %v363 = vmax.f32 %v331, 0.0
      %v364 = vmax.f32 %v332, 0.0
      %v365 = vmax.f32 %v333, 0.0
      %v366 = vmax.f32 %v334, 0.0
      %v367 = vmax.f32 %v335, 0.0
      %v368 = vmax.f32 %v336, 0.0
      %v369 = vmax.f32 %v337, 0.0
      %v370 = vmax.f32 %v338, 0.0
      %v371 = vmax.f32 %v339, 0.0
      %v372 = vmax.f32 %v340, 0.0
      %v373 = vmax.f32 %v341, 0.0
      %v374 = vmax.f32 %v342, 0.0
      %v375 = vmax.f32 %v343, 0.0
      %v376 = vmax.f32 %v344, 0.0
      %v377 = vmax.f32 %v345, 0.0
      %378 = vst [vmem:[#allocation2] sm:$0xff] %v346
      %379 = vst [vmem:[#allocation2 + $0x8] sm:$0xff] %v347
      %380 = vst [vmem:[#allocation2 + $0x10] sm:$0xff] %v348
      %381 = vst [vmem:[#allocation2 + $0x18] sm:$0xff] %v349
      %382 = vst [vmem:[#allocation2 + $0x20] sm:$0xff] %v350
      %383 = vst [vmem:[#allocation2 + $0x28] sm:$0xff] %v351
      %384 = vst [vmem:[#allocation2 + $0x30] sm:$0xff] %v352
      %385 = vst [vmem:[#allocation2 + $0x38] sm:$0xff] %v353
      %386 = vst [vmem:[#allocation2 + $0x40] sm:$0xff] %v354
      %387 = vst [vmem:[#allocation2 + $0x48] sm:$0xff] %v355
      %388 = vst [vmem:[#allocation2 + $0x50] sm:$0xff] %v356
      %389 = vst [vmem:[#allocation2 + $0x58] sm:$0xff] %v357
      %390 = vst [vmem:[#allocation2 + $0x60] sm:$0xff] %v358
      %391 = vst [vmem:[#allocation2 + $0x68] sm:$0xff] %v359
      %392 = vst [vmem:[#allocation2 + $0x70] sm:$0xff] %v360
      %393 = vst [vmem:[#allocation2 + $0x78] sm:$0xff] %v361
      %394 = vst [vmem:[#allocation2 + $0x80] sm:$0xff] %v362
      %395 = vst [vmem:[#allocation2 + $0x88] sm:$0xff] %v363
      %396 = vst [vmem:[#allocation2 + $0x90] sm:$0xff] %v364
      %397 = vst [vmem:[#allocation2 + $0x98] sm:$0xff] %v365
      %398 = vst [vmem:[#allocation2 + $0xa0] sm:$0xff] %v366
      %399 = vst [vmem:[#allocation2 + $0xa8] sm:$0xff] %v367
      %400 = vst [vmem:[#allocation2 + $0xb0] sm:$0xff] %v368
      %401 = vst [vmem:[#allocation2 + $0xb8] sm:$0xff] %v369
      %402 = vst [vmem:[#allocation2 + $0xc0] sm:$0xff] %v370
      %403 = vst [vmem:[#allocation2 + $0xc8] sm:$0xff] %v371
      %404 = vst [vmem:[#allocation2 + $0xd0] sm:$0xff] %v372
      %405 = vst [vmem:[#allocation2 + $0xd8] sm:$0xff] %v373
      %406 = vst [vmem:[#allocation2 + $0xe0] sm:$0xff] %v374
      %407 = vst [vmem:[#allocation2 + $0xe8] sm:$0xff] %v375
      %408 = vst [vmem:[#allocation2 + $0xf0] sm:$0xff] %v376
      %409 = vst [vmem:[#allocation2 + $0xf8] sm:$0xff] %v377
      %410 = vst [vmem:[#allocation3] sm:$0xff] 0.0
      %411 = vst [vmem:[#allocation3 + $0x48] sm:$0xff] 0.0
      %412 = vst [vmem:[#allocation3] sm:$0x1] 0.0
      %413 = vst [vmem:[#allocation3 + $0x90] sm:$0x1] 0.0
      %414 = vst [vmem:[#allocation3 + $0x120] sm:$0x1] 0.0
      %415 = vst [vmem:[#allocation3 + $0x1b0] sm:$0x1] 0.0
      %416 = vst [vmem:[#allocation3 + $0x240] sm:$0x1] 0.0
      %417 = vst [vmem:[#allocation3 + $0x2d0] sm:$0x1] 0.0
      %418 = vst [vmem:[#allocation3 + $0x360] sm:$0x1] 0.0
      %419 = vst [vmem:[#allocation3 + $0x3f0] sm:$0x1] 0.0
      %420 = vst [vmem:[#allocation3 + $0x480] sm:$0x1] 0.0
      %421 = vst [vmem:[#allocation3 + $0x510] sm:$0x1] 0.0
      %422 = vst [vmem:[#allocation3 + $0x5a0] sm:$0x1] 0.0
      %423 = vst [vmem:[#allocation3 + $0x630] sm:$0x1] 0.0
      %424 = vst [vmem:[#allocation3 + $0x6c0] sm:$0x1] 0.0
      %425 = vst [vmem:[#allocation3 + $0x750] sm:$0x1] 0.0
      %426 = vst [vmem:[#allocation3 + $0x7e0] sm:$0x1] 0.0
      %427 = vst [vmem:[#allocation3 + $0x870] sm:$0x1] 0.0
      %v428 = vld [vmem:[#allocation2] sm:$0xff]
      %v429 = vld [vmem:[#allocation2 + $0x8] sm:$0x7f]
      %v430 = vld [vmem:[#allocation2 + $0x10] sm:$0xff]
      %v431 = vld [vmem:[#allocation2 + $0x18] sm:$0x7f]
      %v432 = vld [vmem:[#allocation2 + $0x20] sm:$0xff]
      %v433 = vld [vmem:[#allocation2 + $0x28] sm:$0x7f]
      %v434 = vld [vmem:[#allocation2 + $0x30] sm:$0xff]
      %v435 = vld [vmem:[#allocation2 + $0x38] sm:$0x7f]
      %v436 = vld [vmem:[#allocation2 + $0x40] sm:$0xff]
      %v437 = vld [vmem:[#allocation2 + $0x48] sm:$0x7f]
      %v438 = vld [vmem:[#allocation2 + $0x50] sm:$0xff]
      %v439 = vld [vmem:[#allocation2 + $0x58] sm:$0x7f]
      %v440 = vld [vmem:[#allocation2 + $0x60] sm:$0xff]
      %v441 = vld [vmem:[#allocation2 + $0x68] sm:$0x7f]
      %v442 = vld [vmem:[#allocation2 + $0x70] sm:$0xff]
      %v443 = vld [vmem:[#allocation2 + $0x78] sm:$0x7f]
      %v444 = vld [vmem:[#allocation2 + $0x80] sm:$0xff]
      %v445 = vld [vmem:[#allocation2 + $0x88] sm:$0x7f]
      %v446 = vld [vmem:[#allocation2 + $0x90] sm:$0xff]
      %v447 = vld [vmem:[#allocation2 + $0x98] sm:$0x7f]
      %v448 = vld [vmem:[#allocation2 + $0xa0] sm:$0xff]
      %v449 = vld [vmem:[#allocation2 + $0xa8] sm:$0x7f]
      %v450 = vld [vmem:[#allocation2 + $0xb0] sm:$0xff]
      %v451 = vld [vmem:[#allocation2 + $0xb8] sm:$0x7f]
      %v452 = vld [vmem:[#allocation2 + $0xc0] sm:$0xff]
      %v453 = vld [vmem:[#allocation2 + $0xc8] sm:$0x7f]
      %v454 = vld [vmem:[#allocation2 + $0xd0] sm:$0xff]
      %v455 = vld [vmem:[#allocation2 + $0xd8] sm:$0x7f]
      %v456 = vld [vmem:[#allocation2 + $0xe0] sm:$0xff]
      %v457 = vld [vmem:[#allocation2 + $0xe8] sm:$0x7f]
      %vm488 = vcmask 1040384
      %v489 = vrot.slane %v428, 7
      %v490 = vrot.slane %v429, 7
      %v491 = vsel %vm488, %v489, %v490
      %v492 = vrot.slane %v430, 7
      %v493 = vrot.slane %v431, 7
      %v494 = vsel %vm488, %v492, %v493
      %v495 = vrot.slane %v432, 7
      %v496 = vrot.slane %v433, 7
      %v497 = vsel %vm488, %v495, %v496
      %v498 = vrot.slane %v434, 7
      %v499 = vrot.slane %v435, 7
      %v500 = vsel %vm488, %v498, %v499
      %v501 = vrot.slane %v436, 7
      %v502 = vrot.slane %v437, 7
      %v503 = vsel %vm488, %v501, %v502
      %v504 = vrot.slane %v438, 7
      %v505 = vrot.slane %v439, 7
      %v506 = vsel %vm488, %v504, %v505
      %v507 = vrot.slane %v440, 7
      %v508 = vrot.slane %v441, 7
      %v509 = vsel %vm488, %v507, %v508
      %v510 = vrot.slane %v442, 7
      %v511 = vrot.slane %v443, 7
      %v512 = vsel %vm488, %v510, %v511
      %v513 = vrot.slane %v444, 7
      %v514 = vrot.slane %v445, 7
      %v515 = vsel %vm488, %v513, %v514
      %v516 = vrot.slane %v446, 7
      %v517 = vrot.slane %v447, 7
      %v518 = vsel %vm488, %v516, %v517
      %v519 = vrot.slane %v448, 7
      %v520 = vrot.slane %v449, 7
      %v521 = vsel %vm488, %v519, %v520
      %v522 = vrot.slane %v450, 7
      %v523 = vrot.slane %v451, 7
      %v524 = vsel %vm488, %v522, %v523
      %v525 = vrot.slane %v452, 7
      %v526 = vrot.slane %v453, 7
      %v527 = vsel %vm488, %v525, %v526
      %v528 = vrot.slane %v454, 7
      %v529 = vrot.slane %v455, 7
      %v530 = vsel %vm488, %v528, %v529
      %v531 = vrot.slane %v456, 7
      %v532 = vrot.slane %v457, 7
      %v533 = vsel %vm488, %v531, %v532
      %s564 = scalar_lea.vmem [#allocation3], 144
      %565 = vst [vmem:[%s564] sm:$0xfe] %v489
      %566 = vst [vmem:[%s564 + $0x48] sm:$0xff] %v491
      %567 = vst [vmem:[%s564 + $0x90] sm:$0xfe] %v492
      %568 = vst [vmem:[%s564 + $0xd8] sm:$0xff] %v494
      %569 = vst [vmem:[%s564 + $0x120] sm:$0xfe] %v495
      %570 = vst [vmem:[%s564 + $0x168] sm:$0xff] %v497
      %571 = vst [vmem:[%s564 + $0x1b0] sm:$0xfe] %v498
      %572 = vst [vmem:[%s564 + $0x1f8] sm:$0xff] %v500
      %573 = vst [vmem:[%s564 + $0x240] sm:$0xfe] %v501
      %574 = vst [vmem:[%s564 + $0x288] sm:$0xff] %v503
      %575 = vst [vmem:[%s564 + $0x2d0] sm:$0xfe] %v504
      %576 = vst [vmem:[%s564 + $0x318] sm:$0xff] %v506
      %577 = vst [vmem:[%s564 + $0x360] sm:$0xfe] %v507
      %578 = vst [vmem:[%s564 + $0x3a8] sm:$0xff] %v509
      %579 = vst [vmem:[%s564 + $0x3f0] sm:$0xfe] %v510
      %580 = vst [vmem:[%s564 + $0x438] sm:$0xff] %v512
      %581 = vst [vmem:[%s564 + $0x480] sm:$0xfe] %v513
      %582 = vst [vmem:[%s564 + $0x4c8] sm:$0xff] %v515
      %583 = vst [vmem:[%s564 + $0x510] sm:$0xfe] %v516
      %584 = vst [vmem:[%s564 + $0x558] sm:$0xff] %v518
      %585 = vst [vmem:[%s564 + $0x5a0] sm:$0xfe] %v519
      %586 = vst [vmem:[%s564 + $0x5e8] sm:$0xff] %v521
      %587 = vst [vmem:[%s564 + $0x630] sm:$0xfe] %v522
      %588 = vst [vmem:[%s564 + $0x678] sm:$0xff] %v524
      %589 = vst [vmem:[%s564 + $0x6c0] sm:$0xfe] %v525
      %590 = vst [vmem:[%s564 + $0x708] sm:$0xff] %v527
      %591 = vst [vmem:[%s564 + $0x750] sm:$0xfe] %v528
      %592 = vst [vmem:[%s564 + $0x798] sm:$0xff] %v530
      %593 = vst [vmem:[%s564 + $0x7e0] sm:$0xfe] %v531
      %594 = vst [vmem:[%s564 + $0x828] sm:$0xff] %v533
      %595 = vst [vmem:[#allocation3 + $0x8] sm:$0xff] 0.0
      %596 = vst [vmem:[#allocation3 + $0x50] sm:$0xff] 0.0
      %v597 = vld [vmem:[#allocation2] sm:$0xff]
      %v598 = vld [vmem:[#allocation2 + $0x8] sm:$0xff]
      %v599 = vld [vmem:[#allocation2 + $0x10] sm:$0xff]
      %v600 = vld [vmem:[#allocation2 + $0x18] sm:$0xff]
      %v601 = vld [vmem:[#allocation2 + $0x20] sm:$0xff]
      %v602 = vld [vmem:[#allocation2 + $0x28] sm:$0xff]
      %v603 = vld [vmem:[#allocation2 + $0x30] sm:$0xff]
      %v604 = vld [vmem:[#allocation2 + $0x38] sm:$0xff]
      %v605 = vld [vmem:[#allocation2 + $0x40] sm:$0xff]
      %v606 = vld [vmem:[#allocation2 + $0x48] sm:$0xff]
      %v607 = vld [vmem:[#allocation2 + $0x50] sm:$0xff]
      %v608 = vld [vmem:[#allocation2 + $0x58] sm:$0xff]
      %v609 = vld [vmem:[#allocation2 + $0x60] sm:$0xff]
      %v610 = vld [vmem:[#allocation2 + $0x68] sm:$0xff]
      %v611 = vld [vmem:[#allocation2 + $0x70] sm:$0xff]
      %v612 = vld [vmem:[#allocation2 + $0x78] sm:$0xff]
      %v613 = vld [vmem:[#allocation2 + $0x80] sm:$0xff]
      %v614 = vld [vmem:[#allocation2 + $0x88] sm:$0xff]
      %v615 = vld [vmem:[#allocation2 + $0x90] sm:$0xff]
      %v616 = vld [vmem:[#allocation2 + $0x98] sm:$0xff]
      %v617 = vld [vmem:[#allocation2 + $0xa0] sm:$0xff]
      %v618 = vld [vmem:[#allocation2 + $0xa8] sm:$0xff]
      %v619 = vld [vmem:[#allocation2 + $0xb0] sm:$0xff]
      %v620 = vld [vmem:[#allocation2 + $0xb8] sm:$0xff]
      %v621 = vld [vmem:[#allocation2 + $0xc0] sm:$0xff]
      %v622 = vld [vmem:[#allocation2 + $0xc8] sm:$0xff]
      %v623 = vld [vmem:[#allocation2 + $0xd0] sm:$0xff]
      %v624 = vld [vmem:[#allocation2 + $0xd8] sm:$0xff]
      %v625 = vld [vmem:[#allocation2 + $0xe0] sm:$0xff]
      %v626 = vld [vmem:[#allocation2 + $0xe8] sm:$0xff]
      %627 = vst [vmem:[%s564 + $0x8] sm:$0xff] %v597
      %628 = vst [vmem:[%s564 + $0x50] sm:$0xff] %v598
      %629 = vst [vmem:[%s564 + $0x98] sm:$0xff] %v599
      %630 = vst [vmem:[%s564 + $0xe0] sm:$0xff] %v600
      %631 = vst [vmem:[%s564 + $0x128] sm:$0xff] %v601
      %632 = vst [vmem:[%s564 + $0x170] sm:$0xff] %v602
      %633 = vst [vmem:[%s564 + $0x1b8] sm:$0xff] %v603
      %634 = vst [vmem:[%s564 + $0x200] sm:$0xff] %v604
      %635 = vst [vmem:[%s564 + $0x248] sm:$0xff] %v605
      %636 = vst [vmem:[%s564 + $0x290] sm:$0xff] %v606
      %637 = vst [vmem:[%s564 + $0x2d8] sm:$0xff] %v607
      %638 = vst [vmem:[%s564 + $0x320] sm:$0xff] %v608
      %639 = vst [vmem:[%s564 + $0x368] sm:$0xff] %v609
      %640 = vst [vmem:[%s564 + $0x3b0] sm:$0xff] %v610
      %641 = vst [vmem:[%s564 + $0x3f8] sm:$0xff] %v611
      %642 = vst [vmem:[%s564 + $0x440] sm:$0xff] %v612
      %643 = vst [vmem:[%s564 + $0x488] sm:$0xff] %v613
      %644 = vst [vmem:[%s564 + $0x4d0] sm:$0xff] %v614
      %645 = vst [vmem:[%s564 + $0x518] sm:$0xff] %v615
      %646 = vst [vmem:[%s564 + $0x560] sm:$0xff] %v616
      %647 = vst [vmem:[%s564 + $0x5a8] sm:$0xff] %v617
      %648 = vst [vmem:[%s564 + $0x5f0] sm:$0xff] %v618
      %649 = vst [vmem:[%s564 + $0x638] sm:$0xff] %v619
      %650 = vst [vmem:[%s564 + $0x680] sm:$0xff] %v620
      %651 = vst [vmem:[%s564 + $0x6c8] sm:$0xff] %v621
      %652 = vst [vmem:[%s564 + $0x710] sm:$0xff] %v622
      %653 = vst [vmem:[%s564 + $0x758] sm:$0xff] %v623
      %654 = vst [vmem:[%s564 + $0x7a0] sm:$0xff] %v624
      %655 = vst [vmem:[%s564 + $0x7e8] sm:$0xff] %v625
      %656 = vst [vmem:[%s564 + $0x830] sm:$0xff] %v626
      %657 = vst [vmem:[#allocation3 + $0x10] sm:$0xff] 0.0
      %658 = vst [vmem:[#allocation3 + $0x58] sm:$0xff] 0.0
      %659 = vst [vmem:[#allocation3 + $0x5f] sm:$0x1] 0.0
      %660 = vst [vmem:[#allocation3 + $0xef] sm:$0x1] 0.0
      %661 = vst [vmem:[#allocation3 + $0x17f] sm:$0x1] 0.0
      %662 = vst [vmem:[#allocation3 + $0x20f] sm:$0x1] 0.0
      %663 = vst [vmem:[#allocation3 + $0x29f] sm:$0x1] 0.0
      %664 = vst [vmem:[#allocation3 + $0x32f] sm:$0x1] 0.0
      %665 = vst [vmem:[#allocation3 + $0x3bf] sm:$0x1] 0.0
      %666 = vst [vmem:[#allocation3 + $0x44f] sm:$0x1] 0.0
      %667 = vst [vmem:[#allocation3 + $0x4df] sm:$0x1] 0.0
      %668 = vst [vmem:[#allocation3 + $0x56f] sm:$0x1] 0.0
      %669 = vst [vmem:[#allocation3 + $0x5ff] sm:$0x1] 0.0
      %670 = vst [vmem:[#allocation3 + $0x68f] sm:$0x1] 0.0
      %671 = vst [vmem:[#allocation3 + $0x71f] sm:$0x1] 0.0
      %672 = vst [vmem:[#allocation3 + $0x7af] sm:$0x1] 0.0
      %673 = vst [vmem:[#allocation3 + $0x83f] sm:$0x1] 0.0
      %674 = vst [vmem:[#allocation3 + $0x8cf] sm:$0x1] 0.0
      %v675 = vld [vmem:[#allocation2 + $0x1] sm:$0xff]
      %v676 = vld [vmem:[#allocation2 + $0x9] sm:$0x7f]
      %v677 = vld [vmem:[#allocation2 + $0x11] sm:$0xff]
      %v678 = vld [vmem:[#allocation2 + $0x19] sm:$0x7f]
      %v679 = vld [vmem:[#allocation2 + $0x21] sm:$0xff]
      %v680 = vld [vmem:[#allocation2 + $0x29] sm:$0x7f]
      %v681 = vld [vmem:[#allocation2 + $0x31] sm:$0xff]
      %v682 = vld [vmem:[#allocation2 + $0x39] sm:$0x7f]
      %v683 = vld [vmem:[#allocation2 + $0x41] sm:$0xff]
      %v684 = vld [vmem:[#allocation2 + $0x49] sm:$0x7f]
      %v685 = vld [vmem:[#allocation2 + $0x51] sm:$0xff]
      %v686 = vld [vmem:[#allocation2 + $0x59] sm:$0x7f]
      %v687 = vld [vmem:[#allocation2 + $0x61] sm:$0xff]
      %v688 = vld [vmem:[#allocation2 + $0x69] sm:$0x7f]
      %v689 = vld [vmem:[#allocation2 + $0x71] sm:$0xff]
      %v690 = vld [vmem:[#allocation2 + $0x79] sm:$0x7f]
      %v691 = vld [vmem:[#allocation2 + $0x81] sm:$0xff]
      %v692 = vld [vmem:[#allocation2 + $0x89] sm:$0x7f]
      %v693 = vld [vmem:[#allocation2 + $0x91] sm:$0xff]
      %v694 = vld [vmem:[#allocation2 + $0x99] sm:$0x7f]
      %v695 = vld [vmem:[#allocation2 + $0xa1] sm:$0xff]
      %v696 = vld [vmem:[#allocation2 + $0xa9] sm:$0x7f]
      %v697 = vld [vmem:[#allocation2 + $0xb1] sm:$0xff]
      %v698 = vld [vmem:[#allocation2 + $0xb9] sm:$0x7f]
      %v699 = vld [vmem:[#allocation2 + $0xc1] sm:$0xff]
      %v700 = vld [vmem:[#allocation2 + $0xc9] sm:$0x7f]
      %v701 = vld [vmem:[#allocation2 + $0xd1] sm:$0xff]
      %v702 = vld [vmem:[#allocation2 + $0xd9] sm:$0x7f]
      %v703 = vld [vmem:[#allocation2 + $0xe1] sm:$0xff]
      %v704 = vld [vmem:[#allocation2 + $0xe9] sm:$0x7f]
      %705 = vst [vmem:[%s564 + $0x10] sm:$0xff] %v675
      %706 = vst [vmem:[%s564 + $0x58] sm:$0x7f] %v676
      %707 = vst [vmem:[%s564 + $0xa0] sm:$0xff] %v677
      %708 = vst [vmem:[%s564 + $0xe8] sm:$0x7f] %v678
      %709 = vst [vmem:[%s564 + $0x130] sm:$0xff] %v679
      %710 = vst [vmem:[%s564 + $0x178] sm:$0x7f] %v680
      %711 = vst [vmem:[%s564 + $0x1c0] sm:$0xff] %v681
      %712 = vst [vmem:[%s564 + $0x208] sm:$0x7f] %v682
      %713 = vst [vmem:[%s564 + $0x250] sm:$0xff] %v683
      %714 = vst [vmem:[%s564 + $0x298] sm:$0x7f] %v684
      %715 = vst [vmem:[%s564 + $0x2e0] sm:$0xff] %v685
      %716 = vst [vmem:[%s564 + $0x328] sm:$0x7f] %v686
      %717 = vst [vmem:[%s564 + $0x370] sm:$0xff] %v687
      %718 = vst [vmem:[%s564 + $0x3b8] sm:$0x7f] %v688
      %719 = vst [vmem:[%s564 + $0x400] sm:$0xff] %v689
      %720 = vst [vmem:[%s564 + $0x448] sm:$0x7f] %v690
      %721 = vst [vmem:[%s564 + $0x490] sm:$0xff] %v691
      %722 = vst [vmem:[%s564 + $0x4d8] sm:$0x7f] %v692
      %723 = vst [vmem:[%s564 + $0x520] sm:$0xff] %v693
      %724 = vst [vmem:[%s564 + $0x568] sm:$0x7f] %v694
      %725 = vst [vmem:[%s564 + $0x5b0] sm:$0xff] %v695
      %726 = vst [vmem:[%s564 + $0x5f8] sm:$0x7f] %v696
      %727 = vst [vmem:[%s564 + $0x640] sm:$0xff] %v697
      %728 = vst [vmem:[%s564 + $0x688] sm:$0x7f] %v698
      %729 = vst [vmem:[%s564 + $0x6d0] sm:$0xff] %v699
      %730 = vst [vmem:[%s564 + $0x718] sm:$0x7f] %v700
      %731 = vst [vmem:[%s564 + $0x760] sm:$0xff] %v701
      %732 = vst [vmem:[%s564 + $0x7a8] sm:$0x7f] %v702
      %733 = vst [vmem:[%s564 + $0x7f0] sm:$0xff] %v703
      %734 = vst [vmem:[%s564 + $0x838] sm:$0x7f] %v704
      %735 = vst [vmem:[#allocation3 + $0x18] sm:$0x1] 0.0
      %736 = vst [vmem:[#allocation3 + $0xa8] sm:$0x1] 0.0
      %737 = vst [vmem:[#allocation3 + $0x138] sm:$0x1] 0.0
      %738 = vst [vmem:[#allocation3 + $0x1c8] sm:$0x1] 0.0
      %739 = vst [vmem:[#allocation3 + $0x258] sm:$0x1] 0.0
      %740 = vst [vmem:[#allocation3 + $0x2e8] sm:$0x1] 0.0
      %741 = vst [vmem:[#allocation3 + $0x378] sm:$0x1] 0.0
      %742 = vst [vmem:[#allocation3 + $0x408] sm:$0x1] 0.0
      %743 = vst [vmem:[#allocation3 + $0x498] sm:$0x1] 0.0
      %744 = vst [vmem:[#allocation3 + $0x528] sm:$0x1] 0.0
      %745 = vst [vmem:[#allocation3 + $0x5b8] sm:$0x1] 0.0
      %746 = vst [vmem:[#allocation3 + $0x648] sm:$0x1] 0.0
      %747 = vst [vmem:[#allocation3 + $0x6d8] sm:$0x1] 0.0
      %748 = vst [vmem:[#allocation3 + $0x768] sm:$0x1] 0.0
      %749 = vst [vmem:[#allocation3 + $0x7f8] sm:$0x1] 0.0
      %750 = vst [vmem:[#allocation3 + $0x888] sm:$0x1] 0.0
      %v751 = vld [vmem:[#allocation2] sm:$0xff]
      %v752 = vld [vmem:[#allocation2 + $0x8] sm:$0x7f]
      %v753 = vld [vmem:[#allocation2 + $0x10] sm:$0xff]
      %v754 = vld [vmem:[#allocation2 + $0x18] sm:$0x7f]
      %v755 = vld [vmem:[#allocation2 + $0x20] sm:$0xff]
      %v756 = vld [vmem:[#allocation2 + $0x28] sm:$0x7f]
      %v757 = vld [vmem:[#allocation2 + $0x30] sm:$0xff]
      %v758 = vld [vmem:[#allocation2 + $0x38] sm:$0x7f]
      %v759 = vld [vmem:[#allocation2 + $0x40] sm:$0xff]
      %v760 = vld [vmem:[#allocation2 + $0x48] sm:$0x7f]
      %v761 = vld [vmem:[#allocation2 + $0x50] sm:$0xff]
      %v762 = vld [vmem:[#allocation2 + $0x58] sm:$0x7f]
      %v763 = vld [vmem:[#allocation2 + $0x60] sm:$0xff]
      %v764 = vld [vmem:[#allocation2 + $0x68] sm:$0x7f]
      %v765 = vld [vmem:[#allocation2 + $0x70] sm:$0xff]
      %v766 = vld [vmem:[#allocation2 + $0x78] sm:$0x7f]
      %v767 = vld [vmem:[#allocation2 + $0x80] sm:$0xff]
      %v768 = vld [vmem:[#allocation2 + $0x88] sm:$0x7f]
      %v769 = vld [vmem:[#allocation2 + $0x90] sm:$0xff]
      %v770 = vld [vmem:[#allocation2 + $0x98] sm:$0x7f]
      %v771 = vld [vmem:[#allocation2 + $0xa0] sm:$0xff]
      %v772 = vld [vmem:[#allocation2 + $0xa8] sm:$0x7f]
      %v773 = vld [vmem:[#allocation2 + $0xb0] sm:$0xff]
      %v774 = vld [vmem:[#allocation2 + $0xb8] sm:$0x7f]
      %v775 = vld [vmem:[#allocation2 + $0xc0] sm:$0xff]
      %v776 = vld [vmem:[#allocation2 + $0xc8] sm:$0x7f]
      %v777 = vld [vmem:[#allocation2 + $0xd0] sm:$0xff]
      %v778 = vld [vmem:[#allocation2 + $0xd8] sm:$0x7f]
      %v779 = vld [vmem:[#allocation2 + $0xe0] sm:$0xff]
      %v780 = vld [vmem:[#allocation2 + $0xe8] sm:$0x7f]
      %v781 = vld [vmem:[#allocation2 + $0xf0] sm:$0xff]
      %v782 = vld [vmem:[#allocation2 + $0xf8] sm:$0x7f]
      %v815 = vrot.slane %v751, 7
      %v816 = vrot.slane %v752, 7
      %v817 = vsel %vm488, %v815, %v816
      %v818 = vrot.slane %v753, 7
      %v819 = vrot.slane %v754, 7
      %v820 = vsel %vm488, %v818, %v819
      %v821 = vrot.slane %v755, 7
      %v822 = vrot.slane %v756, 7
      %v823 = vsel %vm488, %v821, %v822
      %v824 = vrot.slane %v757, 7
      %v825 = vrot.slane %v758, 7
      %v826 = vsel %vm488, %v824, %v825
      %v827 = vrot.slane %v759, 7
      %v828 = vrot.slane %v760, 7
      %v829 = vsel %vm488, %v827, %v828
      %v830 = vrot.slane %v761, 7
      %v831 = vrot.slane %v762, 7
      %v832 = vsel %vm488, %v830, %v831
      %v833 = vrot.slane %v763, 7
      %v834 = vrot.slane %v764, 7
      %v835 = vsel %vm488, %v833, %v834
      %v836 = vrot.slane %v765, 7
      %v837 = vrot.slane %v766, 7
      %v838 = vsel %vm488, %v836, %v837
      %v839 = vrot.slane %v767, 7
      %v840 = vrot.slane %v768, 7
      %v841 = vsel %vm488, %v839, %v840
      %v842 = vrot.slane %v769, 7
      %v843 = vrot.slane %v770, 7
      %v844 = vsel %vm488, %v842, %v843
      %v845 = vrot.slane %v771, 7
      %v846 = vrot.slane %v772, 7
      %v847 = vsel %vm488, %v845, %v846
      %v848 = vrot.slane %v773, 7
      %v849 = vrot.slane %v774, 7
      %v850 = vsel %vm488, %v848, %v849
      %v851 = vrot.slane %v775, 7
      %v852 = vrot.slane %v776, 7
      %v853 = vsel %vm488, %v851, %v852
      %v854 = vrot.slane %v777, 7
      %v855 = vrot.slane %v778, 7
      %v856 = vsel %vm488, %v854, %v855
      %v857 = vrot.slane %v779, 7
      %v858 = vrot.slane %v780, 7
      %v859 = vsel %vm488, %v857, %v858
      %v860 = vrot.slane %v781, 7
      %v861 = vrot.slane %v782, 7
      %v862 = vsel %vm488, %v860, %v861
      %895 = vst [vmem:[#allocation3 + $0x18] sm:$0xfe] %v815
      %896 = vst [vmem:[#allocation3 + $0x60] sm:$0xff] %v817
      %897 = vst [vmem:[#allocation3 + $0xa8] sm:$0xfe] %v818
      %898 = vst [vmem:[#allocation3 + $0xf0] sm:$0xff] %v820
      %899 = vst [vmem:[#allocation3 + $0x138] sm:$0xfe] %v821
      %900 = vst [vmem:[#allocation3 + $0x180] sm:$0xff] %v823
      %901 = vst [vmem:[#allocation3 + $0x1c8] sm:$0xfe] %v824
      %902 = vst [vmem:[#allocation3 + $0x210] sm:$0xff] %v826
      %903 = vst [vmem:[#allocation3 + $0x258] sm:$0xfe] %v827
      %904 = vst [vmem:[#allocation3 + $0x2a0] sm:$0xff] %v829
      %905 = vst [vmem:[#allocation3 + $0x2e8] sm:$0xfe] %v830
      %906 = vst [vmem:[#allocation3 + $0x330] sm:$0xff] %v832
      %907 = vst [vmem:[#allocation3 + $0x378] sm:$0xfe] %v833
      %908 = vst [vmem:[#allocation3 + $0x3c0] sm:$0xff] %v835
      %909 = vst [vmem:[#allocation3 + $0x408] sm:$0xfe] %v836
      %910 = vst [vmem:[#allocation3 + $0x450] sm:$0xff] %v838
      %911 = vst [vmem:[#allocation3 + $0x498] sm:$0xfe] %v839
      %912 = vst [vmem:[#allocation3 + $0x4e0] sm:$0xff] %v841
      %913 = vst [vmem:[#allocation3 + $0x528] sm:$0xfe] %v842
      %914 = vst [vmem:[#allocation3 + $0x570] sm:$0xff] %v844
      %915 = vst [vmem:[#allocation3 + $0x5b8] sm:$0xfe] %v845
      %916 = vst [vmem:[#allocation3 + $0x600] sm:$0xff] %v847
      %917 = vst [vmem:[#allocation3 + $0x648] sm:$0xfe] %v848
      %918 = vst [vmem:[#allocation3 + $0x690] sm:$0xff] %v850
      %919 = vst [vmem:[#allocation3 + $0x6d8] sm:$0xfe] %v851
      %920 = vst [vmem:[#allocation3 + $0x720] sm:$0xff] %v853
      %921 = vst [vmem:[#allocation3 + $0x768] sm:$0xfe] %v854
      %922 = vst [vmem:[#allocation3 + $0x7b0] sm:$0xff] %v856
      %923 = vst [vmem:[#allocation3 + $0x7f8] sm:$0xfe] %v857
      %924 = vst [vmem:[#allocation3 + $0x840] sm:$0xff] %v859
      %925 = vst [vmem:[#allocation3 + $0x888] sm:$0xfe] %v860
      %926 = vst [vmem:[#allocation3 + $0x8d0] sm:$0xff] %v862
      %v927 = vld [vmem:[#allocation2] sm:$0xff]
      %v928 = vld [vmem:[#allocation2 + $0x8] sm:$0xff]
      %v929 = vld [vmem:[#allocation2 + $0x10] sm:$0xff]
      %v930 = vld [vmem:[#allocation2 + $0x18] sm:$0xff]
      %v931 = vld [vmem:[#allocation2 + $0x20] sm:$0xff]
      %v932 = vld [vmem:[#allocation2 + $0x28] sm:$0xff]
      %v933 = vld [vmem:[#allocation2 + $0x30] sm:$0xff]
      %v934 = vld [vmem:[#allocation2 + $0x38] sm:$0xff]
      %v935 = vld [vmem:[#allocation2 + $0x40] sm:$0xff]
      %v936 = vld [vmem:[#allocation2 + $0x48] sm:$0xff]
      %v937 = vld [vmem:[#allocation2 + $0x50] sm:$0xff]
      %v938 = vld [vmem:[#allocation2 + $0x58] sm:$0xff]
      %v939 = vld [vmem:[#allocation2 + $0x60] sm:$0xff]
      %v940 = vld [vmem:[#allocation2 + $0x68] sm:$0xff]
      %v941 = vld [vmem:[#allocation2 + $0x70] sm:$0xff]
      %v942 = vld [vmem:[#allocation2 + $0x78] sm:$0xff]
      %v943 = vld [vmem:[#allocation2 + $0x80] sm:$0xff]
      %v944 = vld [vmem:[#allocation2 + $0x88] sm:$0xff]
      %v945 = vld [vmem:[#allocation2 + $0x90] sm:$0xff]
      %v946 = vld [vmem:[#allocation2 + $0x98] sm:$0xff]
      %v947 = vld [vmem:[#allocation2 + $0xa0] sm:$0xff]
      %v948 = vld [vmem:[#allocation2 + $0xa8] sm:$0xff]
      %v949 = vld [vmem:[#allocation2 + $0xb0] sm:$0xff]
      %v950 = vld [vmem:[#allocation2 + $0xb8] sm:$0xff]
      %v951 = vld [vmem:[#allocation2 + $0xc0] sm:$0xff]
      %v952 = vld [vmem:[#allocation2 + $0xc8] sm:$0xff]
      %v953 = vld [vmem:[#allocation2 + $0xd0] sm:$0xff]
      %v954 = vld [vmem:[#allocation2 + $0xd8] sm:$0xff]
      %v955 = vld [vmem:[#allocation2 + $0xe0] sm:$0xff]
      %v956 = vld [vmem:[#allocation2 + $0xe8] sm:$0xff]
      %v957 = vld [vmem:[#allocation2 + $0xf0] sm:$0xff]
      %v958 = vld [vmem:[#allocation2 + $0xf8] sm:$0xff]
      %959 = vst [vmem:[#allocation3 + $0x20] sm:$0xff] %v927
      %960 = vst [vmem:[#allocation3 + $0x68] sm:$0xff] %v928
      %961 = vst [vmem:[#allocation3 + $0xb0] sm:$0xff] %v929
      %962 = vst [vmem:[#allocation3 + $0xf8] sm:$0xff] %v930
      %963 = vst [vmem:[#allocation3 + $0x140] sm:$0xff] %v931
      %964 = vst [vmem:[#allocation3 + $0x188] sm:$0xff] %v932
      %965 = vst [vmem:[#allocation3 + $0x1d0] sm:$0xff] %v933
      %966 = vst [vmem:[#allocation3 + $0x218] sm:$0xff] %v934
      %967 = vst [vmem:[#allocation3 + $0x260] sm:$0xff] %v935
      %968 = vst [vmem:[#allocation3 + $0x2a8] sm:$0xff] %v936
      %969 = vst [vmem:[#allocation3 + $0x2f0] sm:$0xff] %v937
      %970 = vst [vmem:[#allocation3 + $0x338] sm:$0xff] %v938
      %971 = vst [vmem:[#allocation3 + $0x380] sm:$0xff] %v939
      %972 = vst [vmem:[#allocation3 + $0x3c8] sm:$0xff] %v940
      %973 = vst [vmem:[#allocation3 + $0x410] sm:$0xff] %v941
      %974 = vst [vmem:[#allocation3 + $0x458] sm:$0xff] %v942
      %975 = vst [vmem:[#allocation3 + $0x4a0] sm:$0xff] %v943
      %976 = vst [vmem:[#allocation3 + $0x4e8] sm:$0xff] %v944
      %977 = vst [vmem:[#allocation3 + $0x530] sm:$0xff] %v945
      %978 = vst [vmem:[#allocation3 + $0x578] sm:$0xff] %v946
      %979 = vst [vmem:[#allocation3 + $0x5c0] sm:$0xff] %v947
      %980 = vst [vmem:[#allocation3 + $0x608] sm:$0xff] %v948
      %981 = vst [vmem:[#allocation3 + $0x650] sm:$0xff] %v949
      %982 = vst [vmem:[#allocation3 + $0x698] sm:$0xff] %v950
      %983 = vst [vmem:[#allocation3 + $0x6e0] sm:$0xff] %v951
      %984 = vst [vmem:[#allocation3 + $0x728] sm:$0xff] %v952
      %985 = vst [vmem:[#allocation3 + $0x770] sm:$0xff] %v953
      %986 = vst [vmem:[#allocation3 + $0x7b8] sm:$0xff] %v954
      %987 = vst [vmem:[#allocation3 + $0x800] sm:$0xff] %v955
      %988 = vst [vmem:[#allocation3 + $0x848] sm:$0xff] %v956
      %989 = vst [vmem:[#allocation3 + $0x890] sm:$0xff] %v957
      %990 = vst [vmem:[#allocation3 + $0x8d8] sm:$0xff] %v958
      %991 = vst [vmem:[#allocation3 + $0x77] sm:$0x1] 0.0
      %992 = vst [vmem:[#allocation3 + $0x107] sm:$0x1] 0.0
      %993 = vst [vmem:[#allocation3 + $0x197] sm:$0x1] 0.0
      %994 = vst [vmem:[#allocation3 + $0x227] sm:$0x1] 0.0
      %995 = vst [vmem:[#allocation3 + $0x2b7] sm:$0x1] 0.0
      %996 = vst [vmem:[#allocation3 + $0x347] sm:$0x1] 0.0
      %997 = vst [vmem:[#allocation3 + $0x3d7] sm:$0x1] 0.0
      %998 = vst [vmem:[#allocation3 + $0x467] sm:$0x1] 0.0
      %999 = vst [vmem:[#allocation3 + $0x4f7] sm:$0x1] 0.0
      %1000 = vst [vmem:[#allocation3 + $0x587] sm:$0x1] 0.0
      %1001 = vst [vmem:[#allocation3 + $0x617] sm:$0x1] 0.0
      %1002 = vst [vmem:[#allocation3 + $0x6a7] sm:$0x1] 0.0
      %1003 = vst [vmem:[#allocation3 + $0x737] sm:$0x1] 0.0
      %1004 = vst [vmem:[#allocation3 + $0x7c7] sm:$0x1] 0.0
      %1005 = vst [vmem:[#allocation3 + $0x857] sm:$0x1] 0.0
      %1006 = vst [vmem:[#allocation3 + $0x8e7] sm:$0x1] 0.0
      %v1007 = vld [vmem:[#allocation2 + $0x1] sm:$0xff]
      %v1008 = vld [vmem:[#allocation2 + $0x9] sm:$0x7f]
      %v1009 = vld [vmem:[#allocation2 + $0x11] sm:$0xff]
      %v1010 = vld [vmem:[#allocation2 + $0x19] sm:$0x7f]
      %v1011 = vld [vmem:[#allocation2 + $0x21] sm:$0xff]
      %v1012 = vld [vmem:[#allocation2 + $0x29] sm:$0x7f]
      %v1013 = vld [vmem:[#allocation2 + $0x31] sm:$0xff]
      %v1014 = vld [vmem:[#allocation2 + $0x39] sm:$0x7f]
      %v1015 = vld [vmem:[#allocation2 + $0x41] sm:$0xff]
      %v1016 = vld [vmem:[#allocation2 + $0x49] sm:$0x7f]
      %v1017 = vld [vmem:[#allocation2 + $0x51] sm:$0xff]
      %v1018 = vld [vmem:[#allocation2 + $0x59] sm:$0x7f]
      %v1019 = vld [vmem:[#allocation2 + $0x61] sm:$0xff]
      %v1020 = vld [vmem:[#allocation2 + $0x69] sm:$0x7f]
      %v1021 = vld [vmem:[#allocation2 + $0x71] sm:$0xff]
      %v1022 = vld [vmem:[#allocation2 + $0x79] sm:$0x7f]
      %v1023 = vld [vmem:[#allocation2 + $0x81] sm:$0xff]
      %v1024 = vld [vmem:[#allocation2 + $0x89] sm:$0x7f]
      %v1025 = vld [vmem:[#allocation2 + $0x91] sm:$0xff]
      %v1026 = vld [vmem:[#allocation2 + $0x99] sm:$0x7f]
      %v1027 = vld [vmem:[#allocation2 + $0xa1] sm:$0xff]
      %v1028 = vld [vmem:[#allocation2 + $0xa9] sm:$0x7f]
      %v1029 = vld [vmem:[#allocation2 + $0xb1] sm:$0xff]
      %v1030 = vld [vmem:[#allocation2 + $0xb9] sm:$0x7f]
      %v1031 = vld [vmem:[#allocation2 + $0xc1] sm:$0xff]
      %v1032 = vld [vmem:[#allocation2 + $0xc9] sm:$0x7f]
      %v1033 = vld [vmem:[#allocation2 + $0xd1] sm:$0xff]
      %v1034 = vld [vmem:[#allocation2 + $0xd9] sm:$0x7f]
      %v1035 = vld [vmem:[#allocation2 + $0xe1] sm:$0xff]
      %v1036 = vld [vmem:[#allocation2 + $0xe9] sm:$0x7f]
      %v1037 = vld [vmem:[#allocation2 + $0xf1] sm:$0xff]
      %v1038 = vld [vmem:[#allocation2 + $0xf9] sm:$0x7f]
      %1039 = vst [vmem:[#allocation3 + $0x28] sm:$0xff] %v1007
      %1040 = vst [vmem:[#allocation3 + $0x70] sm:$0x7f] %v1008
      %1041 = vst [vmem:[#allocation3 + $0xb8] sm:$0xff] %v1009
      %1042 = vst [vmem:[#allocation3 + $0x100] sm:$0x7f] %v1010
      %1043 = vst [vmem:[#allocation3 + $0x148] sm:$0xff] %v1011
      %1044 = vst [vmem:[#allocation3 + $0x190] sm:$0x7f] %v1012
      %1045 = vst [vmem:[#allocation3 + $0x1d8] sm:$0xff] %v1013
      %1046 = vst [vmem:[#allocation3 + $0x220] sm:$0x7f] %v1014
      %1047 = vst [vmem:[#allocation3 + $0x268] sm:$0xff] %v1015
      %1048 = vst [vmem:[#allocation3 + $0x2b0] sm:$0x7f] %v1016
      %1049 = vst [vmem:[#allocation3 + $0x2f8] sm:$0xff] %v1017
      %1050 = vst [vmem:[#allocation3 + $0x340] sm:$0x7f] %v1018
      %1051 = vst [vmem:[#allocation3 + $0x388] sm:$0xff] %v1019
      %1052 = vst [vmem:[#allocation3 + $0x3d0] sm:$0x7f] %v1020
      %1053 = vst [vmem:[#allocation3 + $0x418] sm:$0xff] %v1021
      %1054 = vst [vmem:[#allocation3 + $0x460] sm:$0x7f] %v1022
      %1055 = vst [vmem:[#allocation3 + $0x4a8] sm:$0xff] %v1023
      %1056 = vst [vmem:[#allocation3 + $0x4f0] sm:$0x7f] %v1024
      %1057 = vst [vmem:[#allocation3 + $0x538] sm:$0xff] %v1025
      %1058 = vst [vmem:[#allocation3 + $0x580] sm:$0x7f] %v1026
      %1059 = vst [vmem:[#allocation3 + $0x5c8] sm:$0xff] %v1027
      %1060 = vst [vmem:[#allocation3 + $0x610] sm:$0x7f] %v1028
      %1061 = vst [vmem:[#allocation3 + $0x658] sm:$0xff] %v1029
      %1062 = vst [vmem:[#allocation3 + $0x6a0] sm:$0x7f] %v1030
      %1063 = vst [vmem:[#allocation3 + $0x6e8] sm:$0xff] %v1031
      %1064 = vst [vmem:[#allocation3 + $0x730] sm:$0x7f] %v1032
      %1065 = vst [vmem:[#allocation3 + $0x778] sm:$0xff] %v1033
      %1066 = vst [vmem:[#allocation3 + $0x7c0] sm:$0x7f] %v1034
      %1067 = vst [vmem:[#allocation3 + $0x808] sm:$0xff] %v1035
      %1068 = vst [vmem:[#allocation3 + $0x850] sm:$0x7f] %v1036
      %1069 = vst [vmem:[#allocation3 + $0x898] sm:$0xff] %v1037
      %1070 = vst [vmem:[#allocation3 + $0x8e0] sm:$0x7f] %v1038
      %s1071 = scalar_lea.vmem [#allocation3], 2160
      %1072 = vst [vmem:[%s1071 + $0x30] sm:$0xff] 0.0
      %1073 = vst [vmem:[%s1071 + $0x78] sm:$0xff] 0.0
      %1074 = vst [vmem:[#allocation3 + $0x30] sm:$0x1] 0.0
      %1075 = vst [vmem:[#allocation3 + $0xc0] sm:$0x1] 0.0
      %1076 = vst [vmem:[#allocation3 + $0x150] sm:$0x1] 0.0
      %1077 = vst [vmem:[#allocation3 + $0x1e0] sm:$0x1] 0.0
      %1078 = vst [vmem:[#allocation3 + $0x270] sm:$0x1] 0.0
      %1079 = vst [vmem:[#allocation3 + $0x300] sm:$0x1] 0.0
      %1080 = vst [vmem:[#allocation3 + $0x390] sm:$0x1] 0.0
      %1081 = vst [vmem:[#allocation3 + $0x420] sm:$0x1] 0.0
      %1082 = vst [vmem:[#allocation3 + $0x4b0] sm:$0x1] 0.0
      %1083 = vst [vmem:[#allocation3 + $0x540] sm:$0x1] 0.0
      %1084 = vst [vmem:[#allocation3 + $0x5d0] sm:$0x1] 0.0
      %1085 = vst [vmem:[#allocation3 + $0x660] sm:$0x1] 0.0
      %1086 = vst [vmem:[#allocation3 + $0x6f0] sm:$0x1] 0.0
      %1087 = vst [vmem:[#allocation3 + $0x780] sm:$0x1] 0.0
      %1088 = vst [vmem:[#allocation3 + $0x810] sm:$0x1] 0.0
      %1089 = vst [vmem:[#allocation3 + $0x8a0] sm:$0x1] 0.0
      %s1090 = scalar_lea.vmem [#allocation2], 16
      %v1091 = vld [vmem:[%s1090] sm:$0xff]
      %v1092 = vld [vmem:[%s1090 + $0x8] sm:$0x7f]
      %v1093 = vld [vmem:[%s1090 + $0x10] sm:$0xff]
      %v1094 = vld [vmem:[%s1090 + $0x18] sm:$0x7f]
      %v1095 = vld [vmem:[%s1090 + $0x20] sm:$0xff]
      %v1096 = vld [vmem:[%s1090 + $0x28] sm:$0x7f]
      %v1097 = vld [vmem:[%s1090 + $0x30] sm:$0xff]
      %v1098 = vld [vmem:[%s1090 + $0x38] sm:$0x7f]
      %v1099 = vld [vmem:[%s1090 + $0x40] sm:$0xff]
      %v1100 = vld [vmem:[%s1090 + $0x48] sm:$0x7f]
      %v1101 = vld [vmem:[%s1090 + $0x50] sm:$0xff]
      %v1102 = vld [vmem:[%s1090 + $0x58] sm:$0x7f]
      %v1103 = vld [vmem:[%s1090 + $0x60] sm:$0xff]
      %v1104 = vld [vmem:[%s1090 + $0x68] sm:$0x7f]
      %v1105 = vld [vmem:[%s1090 + $0x70] sm:$0xff]
      %v1106 = vld [vmem:[%s1090 + $0x78] sm:$0x7f]
      %v1107 = vld [vmem:[%s1090 + $0x80] sm:$0xff]
      %v1108 = vld [vmem:[%s1090 + $0x88] sm:$0x7f]
      %v1109 = vld [vmem:[%s1090 + $0x90] sm:$0xff]
      %v1110 = vld [vmem:[%s1090 + $0x98] sm:$0x7f]
      %v1111 = vld [vmem:[%s1090 + $0xa0] sm:$0xff]
      %v1112 = vld [vmem:[%s1090 + $0xa8] sm:$0x7f]
      %v1113 = vld [vmem:[%s1090 + $0xb0] sm:$0xff]
      %v1114 = vld [vmem:[%s1090 + $0xb8] sm:$0x7f]
      %v1115 = vld [vmem:[%s1090 + $0xc0] sm:$0xff]
      %v1116 = vld [vmem:[%s1090 + $0xc8] sm:$0x7f]
      %v1117 = vld [vmem:[%s1090 + $0xd0] sm:$0xff]
      %v1118 = vld [vmem:[%s1090 + $0xd8] sm:$0x7f]
      %v1119 = vld [vmem:[%s1090 + $0xe0] sm:$0xff]
      %v1120 = vld [vmem:[%s1090 + $0xe8] sm:$0x7f]
      %v1151 = vrot.slane %v1091, 7
      %v1152 = vrot.slane %v1092, 7
      %v1153 = vsel %vm488, %v1151, %v1152
      %v1154 = vrot.slane %v1093, 7
      %v1155 = vrot.slane %v1094, 7
      %v1156 = vsel %vm488, %v1154, %v1155
      %v1157 = vrot.slane %v1095, 7
      %v1158 = vrot.slane %v1096, 7
      %v1159 = vsel %vm488, %v1157, %v1158
      %v1160 = vrot.slane %v1097, 7
      %v1161 = vrot.slane %v1098, 7
      %v1162 = vsel %vm488, %v1160, %v1161
      %v1163 = vrot.slane %v1099, 7
      %v1164 = vrot.slane %v1100, 7
      %v1165 = vsel %vm488, %v1163, %v1164
      %v1166 = vrot.slane %v1101, 7
      %v1167 = vrot.slane %v1102, 7
      %v1168 = vsel %vm488, %v1166, %v1167
      %v1169 = vrot.slane %v1103, 7
      %v1170 = vrot.slane %v1104, 7
      %v1171 = vsel %vm488, %v1169, %v1170
      %v1172 = vrot.slane %v1105, 7
      %v1173 = vrot.slane %v1106, 7
      %v1174 = vsel %vm488, %v1172, %v1173
      %v1175 = vrot.slane %v1107, 7
      %v1176 = vrot.slane %v1108, 7
      %v1177 = vsel %vm488, %v1175, %v1176
      %v1178 = vrot.slane %v1109, 7
      %v1179 = vrot.slane %v1110, 7
      %v1180 = vsel %vm488, %v1178, %v1179
      %v1181 = vrot.slane %v1111, 7
      %v1182 = vrot.slane %v1112, 7
      %v1183 = vsel %vm488, %v1181, %v1182
      %v1184 = vrot.slane %v1113, 7
      %v1185 = vrot.slane %v1114, 7
      %v1186 = vsel %vm488, %v1184, %v1185
      %v1187 = vrot.slane %v1115, 7
      %v1188 = vrot.slane %v1116, 7
      %v1189 = vsel %vm488, %v1187, %v1188
      %v1190 = vrot.slane %v1117, 7
      %v1191 = vrot.slane %v1118, 7
      %v1192 = vsel %vm488, %v1190, %v1191
      %v1193 = vrot.slane %v1119, 7
      %v1194 = vrot.slane %v1120, 7
      %v1195 = vsel %vm488, %v1193, %v1194
      %1226 = vst [vmem:[#allocation3 + $0x30] sm:$0xfe] %v1151
      %1227 = vst [vmem:[#allocation3 + $0x78] sm:$0xff] %v1153
      %1228 = vst [vmem:[#allocation3 + $0xc0] sm:$0xfe] %v1154
      %1229 = vst [vmem:[#allocation3 + $0x108] sm:$0xff] %v1156
      %1230 = vst [vmem:[#allocation3 + $0x150] sm:$0xfe] %v1157
      %1231 = vst [vmem:[#allocation3 + $0x198] sm:$0xff] %v1159
      %1232 = vst [vmem:[#allocation3 + $0x1e0] sm:$0xfe] %v1160
      %1233 = vst [vmem:[#allocation3 + $0x228] sm:$0xff] %v1162
      %1234 = vst [vmem:[#allocation3 + $0x270] sm:$0xfe] %v1163
      %1235 = vst [vmem:[#allocation3 + $0x2b8] sm:$0xff] %v1165
      %1236 = vst [vmem:[#allocation3 + $0x300] sm:$0xfe] %v1166
      %1237 = vst [vmem:[#allocation3 + $0x348] sm:$0xff] %v1168
      %1238 = vst [vmem:[#allocation3 + $0x390] sm:$0xfe] %v1169
      %1239 = vst [vmem:[#allocation3 + $0x3d8] sm:$0xff] %v1171
      %1240 = vst [vmem:[#allocation3 + $0x420] sm:$0xfe] %v1172
      %1241 = vst [vmem:[#allocation3 + $0x468] sm:$0xff] %v1174
      %1242 = vst [vmem:[#allocation3 + $0x4b0] sm:$0xfe] %v1175
      %1243 = vst [vmem:[#allocation3 + $0x4f8] sm:$0xff] %v1177
      %1244 = vst [vmem:[#allocation3 + $0x540] sm:$0xfe] %v1178
      %1245 = vst [vmem:[#allocation3 + $0x588] sm:$0xff] %v1180
      %1246 = vst [vmem:[#allocation3 + $0x5d0] sm:$0xfe] %v1181
      %1247 = vst [vmem:[#allocation3 + $0x618] sm:$0xff] %v1183
      %1248 = vst [vmem:[#allocation3 + $0x660] sm:$0xfe] %v1184
      %1249 = vst [vmem:[#allocation3 + $0x6a8] sm:$0xff] %v1186
      %1250 = vst [vmem:[#allocation3 + $0x6f0] sm:$0xfe] %v1187
      %1251 = vst [vmem:[#allocation3 + $0x738] sm:$0xff] %v1189
      %1252 = vst [vmem:[#allocation3 + $0x780] sm:$0xfe] %v1190
      %1253 = vst [vmem:[#allocation3 + $0x7c8] sm:$0xff] %v1192
      %1254 = vst [vmem:[#allocation3 + $0x810] sm:$0xfe] %v1193
      %1255 = vst [vmem:[#allocation3 + $0x858] sm:$0xff] %v1195
      %1256 = vst [vmem:[%s1071 + $0x38] sm:$0xff] 0.0
      %1257 = vst [vmem:[%s1071 + $0x80] sm:$0xff] 0.0
      %v1258 = vld [vmem:[%s1090] sm:$0xff]
      %v1259 = vld [vmem:[%s1090 + $0x8] sm:$0xff]
      %v1260 = vld [vmem:[%s1090 + $0x10] sm:$0xff]
      %v1261 = vld [vmem:[%s1090 + $0x18] sm:$0xff]
      %v1262 = vld [vmem:[%s1090 + $0x20] sm:$0xff]
      %v1263 = vld [vmem:[%s1090 + $0x28] sm:$0xff]
      %v1264 = vld [vmem:[%s1090 + $0x30] sm:$0xff]
      %v1265 = vld [vmem:[%s1090 + $0x38] sm:$0xff]
      %v1266 = vld [vmem:[%s1090 + $0x40] sm:$0xff]
      %v1267 = vld [vmem:[%s1090 + $0x48] sm:$0xff]
      %v1268 = vld [vmem:[%s1090 + $0x50] sm:$0xff]
      %v1269 = vld [vmem:[%s1090 + $0x58] sm:$0xff]
      %v1270 = vld [vmem:[%s1090 + $0x60] sm:$0xff]
      %v1271 = vld [vmem:[%s1090 + $0x68] sm:$0xff]
      %v1272 = vld [vmem:[%s1090 + $0x70] sm:$0xff]
      %v1273 = vld [vmem:[%s1090 + $0x78] sm:$0xff]
      %v1274 = vld [vmem:[%s1090 + $0x80] sm:$0xff]
      %v1275 = vld [vmem:[%s1090 + $0x88] sm:$0xff]
      %v1276 = vld [vmem:[%s1090 + $0x90] sm:$0xff]
      %v1277 = vld [vmem:[%s1090 + $0x98] sm:$0xff]
      %v1278 = vld [vmem:[%s1090 + $0xa0] sm:$0xff]
      %v1279 = vld [vmem:[%s1090 + $0xa8] sm:$0xff]
      %v1280 = vld [vmem:[%s1090 + $0xb0] sm:$0xff]
      %v1281 = vld [vmem:[%s1090 + $0xb8] sm:$0xff]
      %v1282 = vld [vmem:[%s1090 + $0xc0] sm:$0xff]
      %v1283 = vld [vmem:[%s1090 + $0xc8] sm:$0xff]
      %v1284 = vld [vmem:[%s1090 + $0xd0] sm:$0xff]
      %v1285 = vld [vmem:[%s1090 + $0xd8] sm:$0xff]
      %v1286 = vld [vmem:[%s1090 + $0xe0] sm:$0xff]
      %v1287 = vld [vmem:[%s1090 + $0xe8] sm:$0xff]
      %1288 = vst [vmem:[#allocation3 + $0x38] sm:$0xff] %v1258
      %1289 = vst [vmem:[#allocation3 + $0x80] sm:$0xff] %v1259
      %1290 = vst [vmem:[#allocation3 + $0xc8] sm:$0xff] %v1260
      %1291 = vst [vmem:[#allocation3 + $0x110] sm:$0xff] %v1261
      %1292 = vst [vmem:[#allocation3 + $0x158] sm:$0xff] %v1262
      %1293 = vst [vmem:[#allocation3 + $0x1a0] sm:$0xff] %v1263
      %1294 = vst [vmem:[#allocation3 + $0x1e8] sm:$0xff] %v1264
      %1295 = vst [vmem:[#allocation3 + $0x230] sm:$0xff] %v1265
      %1296 = vst [vmem:[#allocation3 + $0x278] sm:$0xff] %v1266
      %1297 = vst [vmem:[#allocation3 + $0x2c0] sm:$0xff] %v1267
      %1298 = vst [vmem:[#allocation3 + $0x308] sm:$0xff] %v1268
      %1299 = vst [vmem:[#allocation3 + $0x350] sm:$0xff] %v1269
      %1300 = vst [vmem:[#allocation3 + $0x398] sm:$0xff] %v1270
      %1301 = vst [vmem:[#allocation3 + $0x3e0] sm:$0xff] %v1271
      %1302 = vst [vmem:[#allocation3 + $0x428] sm:$0xff] %v1272
      %1303 = vst [vmem:[#allocation3 + $0x470] sm:$0xff] %v1273
      %1304 = vst [vmem:[#allocation3 + $0x4b8] sm:$0xff] %v1274
      %1305 = vst [vmem:[#allocation3 + $0x500] sm:$0xff] %v1275
      %1306 = vst [vmem:[#allocation3 + $0x548] sm:$0xff] %v1276
      %1307 = vst [vmem:[#allocation3 + $0x590] sm:$0xff] %v1277
      %1308 = vst [vmem:[#allocation3 + $0x5d8] sm:$0xff] %v1278
      %1309 = vst [vmem:[#allocation3 + $0x620] sm:$0xff] %v1279
      %1310 = vst [vmem:[#allocation3 + $0x668] sm:$0xff] %v1280
      %1311 = vst [vmem:[#allocation3 + $0x6b0] sm:$0xff] %v1281
      %1312 = vst [vmem:[#allocation3 + $0x6f8] sm:$0xff] %v1282
      %1313 = vst [vmem:[#allocation3 + $0x740] sm:$0xff] %v1283
      %1314 = vst [vmem:[#allocation3 + $0x788] sm:$0xff] %v1284
      %1315 = vst [vmem:[#allocation3 + $0x7d0] sm:$0xff] %v1285
      %1316 = vst [vmem:[#allocation3 + $0x818] sm:$0xff] %v1286
      %1317 = vst [vmem:[#allocation3 + $0x860] sm:$0xff] %v1287
      %1318 = vst [vmem:[%s1071 + $0x40] sm:$0xff] 0.0
      %1319 = vst [vmem:[%s1071 + $0x88] sm:$0xff] 0.0
      %1320 = vst [vmem:[#allocation3 + $0x8f] sm:$0x1] 0.0
      %1321 = vst [vmem:[#allocation3 + $0x11f] sm:$0x1] 0.0
      %1322 = vst [vmem:[#allocation3 + $0x1af] sm:$0x1] 0.0
      %1323 = vst [vmem:[#allocation3 + $0x23f] sm:$0x1] 0.0
      %1324 = vst [vmem:[#allocation3 + $0x2cf] sm:$0x1] 0.0
      %1325 = vst [vmem:[#allocation3 + $0x35f] sm:$0x1] 0.0
      %1326 = vst [vmem:[#allocation3 + $0x3ef] sm:$0x1] 0.0
      %1327 = vst [vmem:[#allocation3 + $0x47f] sm:$0x1] 0.0
      %1328 = vst [vmem:[#allocation3 + $0x50f] sm:$0x1] 0.0
      %1329 = vst [vmem:[#allocation3 + $0x59f] sm:$0x1] 0.0
      %1330 = vst [vmem:[#allocation3 + $0x62f] sm:$0x1] 0.0
      %1331 = vst [vmem:[#allocation3 + $0x6bf] sm:$0x1] 0.0
      %1332 = vst [vmem:[#allocation3 + $0x74f] sm:$0x1] 0.0
      %1333 = vst [vmem:[#allocation3 + $0x7df] sm:$0x1] 0.0
      %1334 = vst [vmem:[#allocation3 + $0x86f] sm:$0x1] 0.0
      %1335 = vst [vmem:[#allocation3 + $0x8ff] sm:$0x1] 0.0
      %v1336 = vld [vmem:[%s1090 + $0x1] sm:$0xff]
      %v1337 = vld [vmem:[%s1090 + $0x9] sm:$0x7f]
      %v1338 = vld [vmem:[%s1090 + $0x11] sm:$0xff]
      %v1339 = vld [vmem:[%s1090 + $0x19] sm:$0x7f]
      %v1340 = vld [vmem:[%s1090 + $0x21] sm:$0xff]
      %v1341 = vld [vmem:[%s1090 + $0x29] sm:$0x7f]
      %v1342 = vld [vmem:[%s1090 + $0x31] sm:$0xff]
      %v1343 = vld [vmem:[%s1090 + $0x39] sm:$0x7f]
      %v1344 = vld [vmem:[%s1090 + $0x41] sm:$0xff]
      %v1345 = vld [vmem:[%s1090 + $0x49] sm:$0x7f]
      %v1346 = vld [vmem:[%s1090 + $0x51] sm:$0xff]
      %v1347 = vld [vmem:[%s1090 + $0x59] sm:$0x7f]
      %v1348 = vld [vmem:[%s1090 + $0x61] sm:$0xff]
      %v1349 = vld [vmem:[%s1090 + $0x69] sm:$0x7f]
      %v1350 = vld [vmem:[%s1090 + $0x71] sm:$0xff]
      %v1351 = vld [vmem:[%s1090 + $0x79] sm:$0x7f]
      %v1352 = vld [vmem:[%s1090 + $0x81] sm:$0xff]
      %v1353 = vld [vmem:[%s1090 + $0x89] sm:$0x7f]
      %v1354 = vld [vmem:[%s1090 + $0x91] sm:$0xff]
      %v1355 = vld [vmem:[%s1090 + $0x99] sm:$0x7f]
      %v1356 = vld [vmem:[%s1090 + $0xa1] sm:$0xff]
      %v1357 = vld [vmem:[%s1090 + $0xa9] sm:$0x7f]
      %v1358 = vld [vmem:[%s1090 + $0xb1] sm:$0xff]
      %v1359 = vld [vmem:[%s1090 + $0xb9] sm:$0x7f]
      %v1360 = vld [vmem:[%s1090 + $0xc1] sm:$0xff]
      %v1361 = vld [vmem:[%s1090 + $0xc9] sm:$0x7f]
      %v1362 = vld [vmem:[%s1090 + $0xd1] sm:$0xff]
      %v1363 = vld [vmem:[%s1090 + $0xd9] sm:$0x7f]
      %v1364 = vld [vmem:[%s1090 + $0xe1] sm:$0xff]
      %v1365 = vld [vmem:[%s1090 + $0xe9] sm:$0x7f]
      %1366 = vst [vmem:[#allocation3 + $0x40] sm:$0xff] %v1336
      %1367 = vst [vmem:[#allocation3 + $0x88] sm:$0x7f] %v1337
      %1368 = vst [vmem:[#allocation3 + $0xd0] sm:$0xff] %v1338
      %1369 = vst [vmem:[#allocation3 + $0x118] sm:$0x7f] %v1339
      %1370 = vst [vmem:[#allocation3 + $0x160] sm:$0xff] %v1340
      %1371 = vst [vmem:[#allocation3 + $0x1a8] sm:$0x7f] %v1341
      %1372 = vst [vmem:[#allocation3 + $0x1f0] sm:$0xff] %v1342
      %1373 = vst [vmem:[#allocation3 + $0x238] sm:$0x7f] %v1343
      %1374 = vst [vmem:[#allocation3 + $0x280] sm:$0xff] %v1344
      %1375 = vst [vmem:[#allocation3 + $0x2c8] sm:$0x7f] %v1345
      %1376 = vst [vmem:[#allocation3 + $0x310] sm:$0xff] %v1346
      %1377 = vst [vmem:[#allocation3 + $0x358] sm:$0x7f] %v1347
      %1378 = vst [vmem:[#allocation3 + $0x3a0] sm:$0xff] %v1348
      %1379 = vst [vmem:[#allocation3 + $0x3e8] sm:$0x7f] %v1349
      %1380 = vst [vmem:[#allocation3 + $0x430] sm:$0xff] %v1350
      %1381 = vst [vmem:[#allocation3 + $0x478] sm:$0x7f] %v1351
      %1382 = vst [vmem:[#allocation3 + $0x4c0] sm:$0xff] %v1352
      %1383 = vst [vmem:[#allocation3 + $0x508] sm:$0x7f] %v1353
      %1384 = vst [vmem:[#allocation3 + $0x550] sm:$0xff] %v1354
      %1385 = vst [vmem:[#allocation3 + $0x598] sm:$0x7f] %v1355
      %1386 = vst [vmem:[#allocation3 + $0x5e0] sm:$0xff] %v1356
      %1387 = vst [vmem:[#allocation3 + $0x628] sm:$0x7f] %v1357
      %1388 = vst [vmem:[#allocation3 + $0x670] sm:$0xff] %v1358
      %1389 = vst [vmem:[#allocation3 + $0x6b8] sm:$0x7f] %v1359
      %1390 = vst [vmem:[#allocation3 + $0x700] sm:$0xff] %v1360
      %1391 = vst [vmem:[#allocation3 + $0x748] sm:$0x7f] %v1361
      %1392 = vst [vmem:[#allocation3 + $0x790] sm:$0xff] %v1362
      %1393 = vst [vmem:[#allocation3 + $0x7d8] sm:$0x7f] %v1363
      %1394 = vst [vmem:[#allocation3 + $0x820] sm:$0xff] %v1364
      %1395 = vst [vmem:[#allocation3 + $0x868] sm:$0x7f] %v1365
      %v1396 = vld [vmem:[#allocation3] sm:$0xff]
      %v1397 = vld [vmem:[#allocation3 + $0x8] sm:$0xff]
      %v1398 = vld [vmem:[#allocation3 + $0x10] sm:$0xff]
      %v1399 = vld [vmem:[#allocation3 + $0x18] sm:$0xff]
      %v1400 = vld [vmem:[#allocation3 + $0x20] sm:$0xff]
      %v1401 = vld [vmem:[#allocation3 + $0x28] sm:$0xff]
      %v1402 = vld [vmem:[#allocation3 + $0x30] sm:$0xff]
      %v1403 = vld [vmem:[#allocation3 + $0x38] sm:$0xff]
      %v1404 = vld [vmem:[#allocation3 + $0x40] sm:$0xff]
      %v1405 = vld [vmem:[#allocation3 + $0x48] sm:$0xff]
      %v1406 = vld [vmem:[#allocation3 + $0x50] sm:$0xff]
      %v1407 = vld [vmem:[#allocation3 + $0x58] sm:$0xff]
      %v1408 = vld [vmem:[#allocation3 + $0x60] sm:$0xff]
      %v1409 = vld [vmem:[#allocation3 + $0x68] sm:$0xff]
      %v1410 = vld [vmem:[#allocation3 + $0x70] sm:$0xff]
      %v1411 = vld [vmem:[#allocation3 + $0x78] sm:$0xff]
      %v1412 = vld [vmem:[#allocation3 + $0x80] sm:$0xff]
      %v1413 = vld [vmem:[#allocation3 + $0x88] sm:$0xff]
      %v1414 = vld [vmem:[#allocation3 + $0x90] sm:$0xff]
      %v1415 = vld [vmem:[#allocation3 + $0x98] sm:$0xff]
      %v1416 = vld [vmem:[#allocation3 + $0xa0] sm:$0xff]
      %v1417 = vld [vmem:[#allocation3 + $0xa8] sm:$0xff]
      %v1418 = vld [vmem:[#allocation3 + $0xb0] sm:$0xff]
      %v1419 = vld [vmem:[#allocation3 + $0xb8] sm:$0xff]
      %v1420 = vld [vmem:[#allocation3 + $0xc0] sm:$0xff]
      %v1421 = vld [vmem:[#allocation3 + $0xc8] sm:$0xff]
      %v1422 = vld [vmem:[#allocation3 + $0xd0] sm:$0xff]
      %v1423 = vld [vmem:[#allocation3 + $0xd8] sm:$0xff]
      %v1424 = vld [vmem:[#allocation3 + $0xe0] sm:$0xff]
      %v1425 = vld [vmem:[#allocation3 + $0xe8] sm:$0xff]
      %v1426 = vld [vmem:[#allocation3 + $0xf0] sm:$0xff]
      %v1427 = vld [vmem:[#allocation3 + $0xf8] sm:$0xff]
      %v1428 = vld [vmem:[#allocation3 + $0x100] sm:$0xff]
      %v1429 = vld [vmem:[#allocation3 + $0x108] sm:$0xff]
      %v1430 = vld [vmem:[#allocation3 + $0x110] sm:$0xff]
      %v1431 = vld [vmem:[#allocation3 + $0x118] sm:$0xff]
      %v1432 = vld [vmem:[#allocation3 + $0x120] sm:$0xff]
      %v1433 = vld [vmem:[#allocation3 + $0x128] sm:$0xff]
      %v1434 = vld [vmem:[#allocation3 + $0x130] sm:$0xff]
      %v1435 = vld [vmem:[#allocation3 + $0x138] sm:$0xff]
      %v1436 = vld [vmem:[#allocation3 + $0x140] sm:$0xff]
      %v1437 = vld [vmem:[#allocation3 + $0x148] sm:$0xff]
      %v1438 = vld [vmem:[#allocation3 + $0x150] sm:$0xff]
      %v1439 = vld [vmem:[#allocation3 + $0x158] sm:$0xff]
      %v1440 = vld [vmem:[#allocation3 + $0x160] sm:$0xff]
      %v1441 = vld [vmem:[#allocation3 + $0x168] sm:$0xff]
      %v1442 = vld [vmem:[#allocation3 + $0x170] sm:$0xff]
      %v1443 = vld [vmem:[#allocation3 + $0x178] sm:$0xff]
      %v1444 = vld [vmem:[#allocation3 + $0x180] sm:$0xff]
      %v1445 = vld [vmem:[#allocation3 + $0x188] sm:$0xff]
      %v1446 = vld [vmem:[#allocation3 + $0x190] sm:$0xff]
      %v1447 = vld [vmem:[#allocation3 + $0x198] sm:$0xff]
      %v1448 = vld [vmem:[#allocation3 + $0x1a0] sm:$0xff]
      %v1449 = vld [vmem:[#allocation3 + $0x1a8] sm:$0xff]
      %v1450 = vld [vmem:[#allocation3 + $0x1b0] sm:$0xff]
      %v1451 = vld [vmem:[#allocation3 + $0x1b8] sm:$0xff]
      %v1452 = vld [vmem:[#allocation3 + $0x1c0] sm:$0xff]
      %v1453 = vld [vmem:[#allocation3 + $0x1c8] sm:$0xff]
      %v1454 = vld [vmem:[#allocation3 + $0x1d0] sm:$0xff]
      %v1455 = vld [vmem:[#allocation3 + $0x1d8] sm:$0xff]
      %v1456 = vld [vmem:[#allocation3 + $0x1e0] sm:$0xff]
      %v1457 = vld [vmem:[#allocation3 + $0x1e8] sm:$0xff]
      %v1458 = vld [vmem:[#allocation3 + $0x1f0] sm:$0xff]
      %v1459 = vld [vmem:[#allocation3 + $0x1f8] sm:$0xff]
      %v1460 = vld [vmem:[#allocation3 + $0x200] sm:$0xff]
      %v1461 = vld [vmem:[#allocation3 + $0x208] sm:$0xff]
      %v1462 = vld [vmem:[#allocation3 + $0x210] sm:$0xff]
      %v1463 = vld [vmem:[#allocation3 + $0x218] sm:$0xff]
      %v1464 = vld [vmem:[#allocation3 + $0x220] sm:$0xff]
      %v1465 = vld [vmem:[#allocation3 + $0x228] sm:$0xff]
      %v1466 = vld [vmem:[#allocation3 + $0x230] sm:$0xff]
      %v1467 = vld [vmem:[#allocation3 + $0x238] sm:$0xff]
      %v1468 = vld [vmem:[#allocation3 + $0x240] sm:$0xff]
      %v1469 = vld [vmem:[#allocation3 + $0x248] sm:$0xff]
      %v1470 = vld [vmem:[#allocation3 + $0x250] sm:$0xff]
      %v1471 = vld [vmem:[#allocation3 + $0x258] sm:$0xff]
      %v1472 = vld [vmem:[#allocation3 + $0x260] sm:$0xff]
      %v1473 = vld [vmem:[#allocation3 + $0x268] sm:$0xff]
      %v1474 = vld [vmem:[#allocation3 + $0x270] sm:$0xff]
      %v1475 = vld [vmem:[#allocation3 + $0x278] sm:$0xff]
      %v1476 = vld [vmem:[#allocation3 + $0x280] sm:$0xff]
      %v1477 = vld [vmem:[#allocation3 + $0x288] sm:$0xff]
      %v1478 = vld [vmem:[#allocation3 + $0x290] sm:$0xff]
      %v1479 = vld [vmem:[#allocation3 + $0x298] sm:$0xff]
      %v1480 = vld [vmem:[#allocation3 + $0x2a0] sm:$0xff]
      %v1481 = vld [vmem:[#allocation3 + $0x2a8] sm:$0xff]
      %v1482 = vld [vmem:[#allocation3 + $0x2b0] sm:$0xff]
      %v1483 = vld [vmem:[#allocation3 + $0x2b8] sm:$0xff]
      %v1484 = vld [vmem:[#allocation3 + $0x2c0] sm:$0xff]
      %v1485 = vld [vmem:[#allocation3 + $0x2c8] sm:$0xff]
      %v1486 = vld [vmem:[#allocation3 + $0x2d0] sm:$0xff]
      %v1487 = vld [vmem:[#allocation3 + $0x2d8] sm:$0xff]
      %v1488 = vld [vmem:[#allocation3 + $0x2e0] sm:$0xff]
      %v1489 = vld [vmem:[#allocation3 + $0x2e8] sm:$0xff]
      %v1490 = vld [vmem:[#allocation3 + $0x2f0] sm:$0xff]
      %v1491 = vld [vmem:[#allocation3 + $0x2f8] sm:$0xff]
      %v1492 = vld [vmem:[#allocation3 + $0x300] sm:$0xff]
      %v1493 = vld [vmem:[#allocation3 + $0x308] sm:$0xff]
      %v1494 = vld [vmem:[#allocation3 + $0x310] sm:$0xff]
      %v1495 = vld [vmem:[#allocation3 + $0x318] sm:$0xff]
      %v1496 = vld [vmem:[#allocation3 + $0x320] sm:$0xff]
      %v1497 = vld [vmem:[#allocation3 + $0x328] sm:$0xff]
      %v1498 = vld [vmem:[#allocation3 + $0x330] sm:$0xff]
      %v1499 = vld [vmem:[#allocation3 + $0x338] sm:$0xff]
      %v1500 = vld [vmem:[#allocation3 + $0x340] sm:$0xff]
      %v1501 = vld [vmem:[#allocation3 + $0x348] sm:$0xff]
      %v1502 = vld [vmem:[#allocation3 + $0x350] sm:$0xff]
      %v1503 = vld [vmem:[#allocation3 + $0x358] sm:$0xff]
      %v1504 = vld [vmem:[#allocation3 + $0x360] sm:$0xff]
      %v1505 = vld [vmem:[#allocation3 + $0x368] sm:$0xff]
      %v1506 = vld [vmem:[#allocation3 + $0x370] sm:$0xff]
      %v1507 = vld [vmem:[#allocation3 + $0x378] sm:$0xff]
      %v1508 = vld [vmem:[#allocation3 + $0x380] sm:$0xff]
      %v1509 = vld [vmem:[#allocation3 + $0x388] sm:$0xff]
      %v1510 = vld [vmem:[#allocation3 + $0x390] sm:$0xff]
      %v1511 = vld [vmem:[#allocation3 + $0x398] sm:$0xff]
      %v1512 = vld [vmem:[#allocation3 + $0x3a0] sm:$0xff]
      %v1513 = vld [vmem:[#allocation3 + $0x3a8] sm:$0xff]
      %v1514 = vld [vmem:[#allocation3 + $0x3b0] sm:$0xff]
      %v1515 = vld [vmem:[#allocation3 + $0x3b8] sm:$0xff]
      %v1516 = vld [vmem:[#allocation3 + $0x3c0] sm:$0xff]
      %v1517 = vld [vmem:[#allocation3 + $0x3c8] sm:$0xff]
      %v1518 = vld [vmem:[#allocation3 + $0x3d0] sm:$0xff]
      %v1519 = vld [vmem:[#allocation3 + $0x3d8] sm:$0xff]
      %v1520 = vld [vmem:[#allocation3 + $0x3e0] sm:$0xff]
      %v1521 = vld [vmem:[#allocation3 + $0x3e8] sm:$0xff]
      %v1522 = vld [vmem:[#allocation3 + $0x3f0] sm:$0xff]
      %v1523 = vld [vmem:[#allocation3 + $0x3f8] sm:$0xff]
      %v1524 = vld [vmem:[#allocation3 + $0x400] sm:$0xff]
      %v1525 = vld [vmem:[#allocation3 + $0x408] sm:$0xff]
      %v1526 = vld [vmem:[#allocation3 + $0x410] sm:$0xff]
      %v1527 = vld [vmem:[#allocation3 + $0x418] sm:$0xff]
      %v1528 = vld [vmem:[#allocation3 + $0x420] sm:$0xff]
      %v1529 = vld [vmem:[#allocation3 + $0x428] sm:$0xff]
      %v1530 = vld [vmem:[#allocation3 + $0x430] sm:$0xff]
      %v1531 = vld [vmem:[#allocation3 + $0x438] sm:$0xff]
      %v1532 = vld [vmem:[#allocation3 + $0x440] sm:$0xff]
      %v1533 = vld [vmem:[#allocation3 + $0x448] sm:$0xff]
      %v1534 = vld [vmem:[#allocation3 + $0x450] sm:$0xff]
      %v1535 = vld [vmem:[#allocation3 + $0x458] sm:$0xff]
      %v1536 = vld [vmem:[#allocation3 + $0x460] sm:$0xff]
      %v1537 = vld [vmem:[#allocation3 + $0x468] sm:$0xff]
      %v1538 = vld [vmem:[#allocation3 + $0x470] sm:$0xff]
      %v1539 = vld [vmem:[#allocation3 + $0x478] sm:$0xff]
      %v1540 = vld [vmem:[#allocation3 + $0x480] sm:$0xff]
      %v1541 = vld [vmem:[#allocation3 + $0x488] sm:$0xff]
      %v1542 = vld [vmem:[#allocation3 + $0x490] sm:$0xff]
      %v1543 = vld [vmem:[#allocation3 + $0x498] sm:$0xff]
      %v1544 = vld [vmem:[#allocation3 + $0x4a0] sm:$0xff]
      %v1545 = vld [vmem:[#allocation3 + $0x4a8] sm:$0xff]
      %v1546 = vld [vmem:[#allocation3 + $0x4b0] sm:$0xff]
      %v1547 = vld [vmem:[#allocation3 + $0x4b8] sm:$0xff]
      %v1548 = vld [vmem:[#allocation3 + $0x4c0] sm:$0xff]
      %v1549 = vld [vmem:[#allocation3 + $0x4c8] sm:$0xff]
      %v1550 = vld [vmem:[#allocation3 + $0x4d0] sm:$0xff]
      %v1551 = vld [vmem:[#allocation3 + $0x4d8] sm:$0xff]
      %v1552 = vld [vmem:[#allocation3 + $0x4e0] sm:$0xff]
      %v1553 = vld [vmem:[#allocation3 + $0x4e8] sm:$0xff]
      %v1554 = vld [vmem:[#allocation3 + $0x4f0] sm:$0xff]
      %v1555 = vld [vmem:[#allocation3 + $0x4f8] sm:$0xff]
      %v1556 = vld [vmem:[#allocation3 + $0x500] sm:$0xff]
      %v1557 = vld [vmem:[#allocation3 + $0x508] sm:$0xff]
      %v1558 = vld [vmem:[#allocation3 + $0x510] sm:$0xff]
      %v1559 = vld [vmem:[#allocation3 + $0x518] sm:$0xff]
      %v1560 = vld [vmem:[#allocation3 + $0x520] sm:$0xff]
      %v1561 = vld [vmem:[#allocation3 + $0x528] sm:$0xff]
      %v1562 = vld [vmem:[#allocation3 + $0x530] sm:$0xff]
      %v1563 = vld [vmem:[#allocation3 + $0x538] sm:$0xff]
      %v1564 = vld [vmem:[#allocation3 + $0x540] sm:$0xff]
      %v1565 = vld [vmem:[#allocation3 + $0x548] sm:$0xff]
      %v1566 = vld [vmem:[#allocation3 + $0x550] sm:$0xff]
      %v1567 = vld [vmem:[#allocation3 + $0x558] sm:$0xff]
      %v1568 = vld [vmem:[#allocation3 + $0x560] sm:$0xff]
      %v1569 = vld [vmem:[#allocation3 + $0x568] sm:$0xff]
      %v1570 = vld [vmem:[#allocation3 + $0x570] sm:$0xff]
      %v1571 = vld [vmem:[#allocation3 + $0x578] sm:$0xff]
      %v1572 = vld [vmem:[#allocation3 + $0x580] sm:$0xff]
      %v1573 = vld [vmem:[#allocation3 + $0x588] sm:$0xff]
      %v1574 = vld [vmem:[#allocation3 + $0x590] sm:$0xff]
      %v1575 = vld [vmem:[#allocation3 + $0x598] sm:$0xff]
      %v1576 = vld [vmem:[#allocation3 + $0x5a0] sm:$0xff]
      %v1577 = vld [vmem:[#allocation3 + $0x5a8] sm:$0xff]
      %v1578 = vld [vmem:[#allocation3 + $0x5b0] sm:$0xff]
      %v1579 = vld [vmem:[#allocation3 + $0x5b8] sm:$0xff]
      %v1580 = vld [vmem:[#allocation3 + $0x5c0] sm:$0xff]
      %v1581 = vld [vmem:[#allocation3 + $0x5c8] sm:$0xff]
      %v1582 = vld [vmem:[#allocation3 + $0x5d0] sm:$0xff]
      %v1583 = vld [vmem:[#allocation3 + $0x5d8] sm:$0xff]
      %v1584 = vld [vmem:[#allocation3 + $0x5e0] sm:$0xff]
      %v1585 = vld [vmem:[#allocation3 + $0x5e8] sm:$0xff]
      %v1586 = vld [vmem:[#allocation3 + $0x5f0] sm:$0xff]
      %v1587 = vld [vmem:[#allocation3 + $0x5f8] sm:$0xff]
      %v1588 = vld [vmem:[#allocation3 + $0x600] sm:$0xff]
      %v1589 = vld [vmem:[#allocation3 + $0x608] sm:$0xff]
      %v1590 = vld [vmem:[#allocation3 + $0x610] sm:$0xff]
      %v1591 = vld [vmem:[#allocation3 + $0x618] sm:$0xff]
      %v1592 = vld [vmem:[#allocation3 + $0x620] sm:$0xff]
      %v1593 = vld [vmem:[#allocation3 + $0x628] sm:$0xff]
      %v1594 = vld [vmem:[#allocation3 + $0x630] sm:$0xff]
      %v1595 = vld [vmem:[#allocation3 + $0x638] sm:$0xff]
      %v1596 = vld [vmem:[#allocation3 + $0x640] sm:$0xff]
      %v1597 = vld [vmem:[#allocation3 + $0x648] sm:$0xff]
      %v1598 = vld [vmem:[#allocation3 + $0x650] sm:$0xff]
      %v1599 = vld [vmem:[#allocation3 + $0x658] sm:$0xff]
      %v1600 = vld [vmem:[#allocation3 + $0x660] sm:$0xff]
      %v1601 = vld [vmem:[#allocation3 + $0x668] sm:$0xff]
      %v1602 = vld [vmem:[#allocation3 + $0x670] sm:$0xff]
      %v1603 = vld [vmem:[#allocation3 + $0x678] sm:$0xff]
      %v1604 = vld [vmem:[#allocation3 + $0x680] sm:$0xff]
      %v1605 = vld [vmem:[#allocation3 + $0x688] sm:$0xff]
      %v1606 = vld [vmem:[#allocation3 + $0x690] sm:$0xff]
      %v1607 = vld [vmem:[#allocation3 + $0x698] sm:$0xff]
      %v1608 = vld [vmem:[#allocation3 + $0x6a0] sm:$0xff]
      %v1609 = vld [vmem:[#allocation3 + $0x6a8] sm:$0xff]
      %v1610 = vld [vmem:[#allocation3 + $0x6b0] sm:$0xff]
      %v1611 = vld [vmem:[#allocation3 + $0x6b8] sm:$0xff]
      %v1612 = vld [vmem:[#allocation3 + $0x6c0] sm:$0xff]
      %v1613 = vld [vmem:[#allocation3 + $0x6c8] sm:$0xff]
      %v1614 = vld [vmem:[#allocation3 + $0x6d0] sm:$0xff]
      %v1615 = vld [vmem:[#allocation3 + $0x6d8] sm:$0xff]
      %v1616 = vld [vmem:[#allocation3 + $0x6e0] sm:$0xff]
      %v1617 = vld [vmem:[#allocation3 + $0x6e8] sm:$0xff]
      %v1618 = vld [vmem:[#allocation3 + $0x6f0] sm:$0xff]
      %v1619 = vld [vmem:[#allocation3 + $0x6f8] sm:$0xff]
      %v1620 = vld [vmem:[#allocation3 + $0x700] sm:$0xff]
      %v1621 = vld [vmem:[#allocation3 + $0x708] sm:$0xff]
      %v1622 = vld [vmem:[#allocation3 + $0x710] sm:$0xff]
      %v1623 = vld [vmem:[#allocation3 + $0x718] sm:$0xff]
      %v1624 = vld [vmem:[#allocation3 + $0x720] sm:$0xff]
      %v1625 = vld [vmem:[#allocation3 + $0x728] sm:$0xff]
      %v1626 = vld [vmem:[#allocation3 + $0x730] sm:$0xff]
      %v1627 = vld [vmem:[#allocation3 + $0x738] sm:$0xff]
      %v1628 = vld [vmem:[#allocation3 + $0x740] sm:$0xff]
      %v1629 = vld [vmem:[#allocation3 + $0x748] sm:$0xff]
      %v1630 = vld [vmem:[#allocation3 + $0x750] sm:$0xff]
      %v1631 = vld [vmem:[#allocation3 + $0x758] sm:$0xff]
      %v1632 = vld [vmem:[#allocation3 + $0x760] sm:$0xff]
      %v1633 = vld [vmem:[#allocation3 + $0x768] sm:$0xff]
      %v1634 = vld [vmem:[#allocation3 + $0x770] sm:$0xff]
      %v1635 = vld [vmem:[#allocation3 + $0x778] sm:$0xff]
      %v1636 = vld [vmem:[#allocation3 + $0x780] sm:$0xff]
      %v1637 = vld [vmem:[#allocation3 + $0x788] sm:$0xff]
      %v1638 = vld [vmem:[#allocation3 + $0x790] sm:$0xff]
      %v1639 = vld [vmem:[#allocation3 + $0x798] sm:$0xff]
      %v1640 = vld [vmem:[#allocation3 + $0x7a0] sm:$0xff]
      %v1641 = vld [vmem:[#allocation3 + $0x7a8] sm:$0xff]
      %v1642 = vld [vmem:[#allocation3 + $0x7b0] sm:$0xff]
      %v1643 = vld [vmem:[#allocation3 + $0x7b8] sm:$0xff]
      %v1644 = vld [vmem:[#allocation3 + $0x7c0] sm:$0xff]
      %v1645 = vld [vmem:[#allocation3 + $0x7c8] sm:$0xff]
      %v1646 = vld [vmem:[#allocation3 + $0x7d0] sm:$0xff]
      %v1647 = vld [vmem:[#allocation3 + $0x7d8] sm:$0xff]
      %v1648 = vld [vmem:[#allocation3 + $0x7e0] sm:$0xff]
      %v1649 = vld [vmem:[#allocation3 + $0x7e8] sm:$0xff]
      %v1650 = vld [vmem:[#allocation3 + $0x7f0] sm:$0xff]
      %v1651 = vld [vmem:[#allocation3 + $0x7f8] sm:$0xff]
      %v1652 = vld [vmem:[#allocation3 + $0x800] sm:$0xff]
      %v1653 = vld [vmem:[#allocation3 + $0x808] sm:$0xff]
      %v1654 = vld [vmem:[#allocation3 + $0x810] sm:$0xff]
      %v1655 = vld [vmem:[#allocation3 + $0x818] sm:$0xff]
      %v1656 = vld [vmem:[#allocation3 + $0x820] sm:$0xff]
      %v1657 = vld [vmem:[#allocation3 + $0x828] sm:$0xff]
      %v1658 = vld [vmem:[#allocation3 + $0x830] sm:$0xff]
      %v1659 = vld [vmem:[#allocation3 + $0x838] sm:$0xff]
      %v1660 = vld [vmem:[#allocation3 + $0x840] sm:$0xff]
      %v1661 = vld [vmem:[#allocation3 + $0x848] sm:$0xff]
      %v1662 = vld [vmem:[#allocation3 + $0x850] sm:$0xff]
      %v1663 = vld [vmem:[#allocation3 + $0x858] sm:$0xff]
      %v1664 = vld [vmem:[#allocation3 + $0x860] sm:$0xff]
      %v1665 = vld [vmem:[#allocation3 + $0x868] sm:$0xff]
      %v1666 = vld [vmem:[#allocation3 + $0x870] sm:$0xff]
      %v1667 = vld [vmem:[#allocation3 + $0x878] sm:$0xff]
      %v1668 = vld [vmem:[#allocation3 + $0x880] sm:$0xff]
      %v1669 = vld [vmem:[#allocation3 + $0x888] sm:$0xff]
      %v1670 = vld [vmem:[#allocation3 + $0x890] sm:$0xff]
      %v1671 = vld [vmem:[#allocation3 + $0x898] sm:$0xff]
      %v1672 = vld [vmem:[#allocation3 + $0x8a0] sm:$0xff]
      %v1673 = vld [vmem:[#allocation3 + $0x8a8] sm:$0xff]
      %v1674 = vld [vmem:[#allocation3 + $0x8b0] sm:$0xff]
      %v1675 = vld [vmem:[#allocation3 + $0x8b8] sm:$0xff]
      %v1676 = vld [vmem:[#allocation3 + $0x8c0] sm:$0xff]
      %v1677 = vld [vmem:[#allocation3 + $0x8c8] sm:$0xff]
      %v1678 = vld [vmem:[#allocation3 + $0x8d0] sm:$0xff]
      %v1679 = vld [vmem:[#allocation3 + $0x8d8] sm:$0xff]
      %v1680 = vld [vmem:[#allocation3 + $0x8e0] sm:$0xff]
      %v1681 = vld [vmem:[#allocation3 + $0x8e8] sm:$0xff]
      %v1682 = vld [vmem:[#allocation3 + $0x8f0] sm:$0xff]
      %v1683 = vld [vmem:[#allocation3 + $0x8f8] sm:$0xff]
      %v1684 = vld [vmem:[%s3] sm:$0xff]
      %v1685 = vld [vmem:[%s3 + $0x8] sm:$0xff]
      %v1686 = vld [vmem:[%s3 + $0x10] sm:$0xff]
      %v1687 = vld [vmem:[%s3 + $0x18] sm:$0xff]
      %v1688 = vld [vmem:[%s3 + $0x20] sm:$0xff]
      %v1689 = vld [vmem:[%s3 + $0x28] sm:$0xff]
      %v1690 = vld [vmem:[%s3 + $0x30] sm:$0xff]
      %v1691 = vld [vmem:[%s3 + $0x38] sm:$0xff]
      %v1692 = vld [vmem:[%s3 + $0x40] sm:$0xff]
      %v1693 = vld [vmem:[%s3 + $0x48] sm:$0xff]
      %v1694 = vld [vmem:[%s3 + $0x50] sm:$0xff]
      %v1695 = vld [vmem:[%s3 + $0x58] sm:$0xff]
      %v1696 = vld [vmem:[%s3 + $0x60] sm:$0xff]
      %v1697 = vld [vmem:[%s3 + $0x68] sm:$0xff]
      %v1698 = vld [vmem:[%s3 + $0x70] sm:$0xff]
      %v1699 = vld [vmem:[%s3 + $0x78] sm:$0xff]
      %v1700 = vld [vmem:[%s3 + $0x80] sm:$0xff]
      %v1701 = vld [vmem:[%s3 + $0x88] sm:$0xff]
      %v1702 = vld [vmem:[%s3 + $0x90] sm:$0xff]
      %v1703 = vld [vmem:[%s3 + $0x98] sm:$0xff]
      %v1704 = vld [vmem:[%s3 + $0xa0] sm:$0xff]
      %v1705 = vld [vmem:[%s3 + $0xa8] sm:$0xff]
      %v1706 = vld [vmem:[%s3 + $0xb0] sm:$0xff]
      %v1707 = vld [vmem:[%s3 + $0xb8] sm:$0xff]
      %v1708 = vld [vmem:[%s3 + $0xc0] sm:$0xff]
      %v1709 = vld [vmem:[%s3 + $0xc8] sm:$0xff]
      %v1710 = vld [vmem:[%s3 + $0xd0] sm:$0xff]
      %v1711 = vld [vmem:[%s3 + $0xd8] sm:$0xff]
      %v1712 = vld [vmem:[%s3 + $0xe0] sm:$0xff]
      %v1713 = vld [vmem:[%s3 + $0xe8] sm:$0xff]
      %v1714 = vld [vmem:[%s3 + $0xf0] sm:$0xff]
      %v1715 = vld [vmem:[%s3 + $0xf8] sm:$0xff]
      %v1716 = vld [vmem:[%s3 + $0x100] sm:$0xff]
      %v1717 = vld [vmem:[%s3 + $0x108] sm:$0xff]
      %v1718 = vld [vmem:[%s3 + $0x110] sm:$0xff]
      %v1719 = vld [vmem:[%s3 + $0x118] sm:$0xff]
      %v1720 = vld [vmem:[%s3 + $0x120] sm:$0xff]
      %v1721 = vld [vmem:[%s3 + $0x128] sm:$0xff]
      %v1722 = vld [vmem:[%s3 + $0x130] sm:$0xff]
      %v1723 = vld [vmem:[%s3 + $0x138] sm:$0xff]
      %v1724 = vld [vmem:[%s3 + $0x140] sm:$0xff]
      %v1725 = vld [vmem:[%s3 + $0x148] sm:$0xff]
      %v1726 = vld [vmem:[%s3 + $0x150] sm:$0xff]
      %v1727 = vld [vmem:[%s3 + $0x158] sm:$0xff]
      %v1728 = vld [vmem:[%s3 + $0x160] sm:$0xff]
      %v1729 = vld [vmem:[%s3 + $0x168] sm:$0xff]
      %v1730 = vld [vmem:[%s3 + $0x170] sm:$0xff]
      %v1731 = vld [vmem:[%s3 + $0x178] sm:$0xff]
      %v1732 = vld [vmem:[%s3 + $0x180] sm:$0xff]
      %v1733 = vld [vmem:[%s3 + $0x188] sm:$0xff]
      %v1734 = vld [vmem:[%s3 + $0x190] sm:$0xff]
      %v1735 = vld [vmem:[%s3 + $0x198] sm:$0xff]
      %v1736 = vld [vmem:[%s3 + $0x1a0] sm:$0xff]
      %v1737 = vld [vmem:[%s3 + $0x1a8] sm:$0xff]
      %v1738 = vld [vmem:[%s3 + $0x1b0] sm:$0xff]
      %v1739 = vld [vmem:[%s3 + $0x1b8] sm:$0xff]
      %v1740 = vld [vmem:[%s3 + $0x1c0] sm:$0xff]
      %v1741 = vld [vmem:[%s3 + $0x1c8] sm:$0xff]
      %v1742 = vld [vmem:[%s3 + $0x1d0] sm:$0xff]
      %v1743 = vld [vmem:[%s3 + $0x1d8] sm:$0xff]
      %v1744 = vld [vmem:[%s3 + $0x1e0] sm:$0xff]
      %v1745 = vld [vmem:[%s3 + $0x1e8] sm:$0xff]
      %v1746 = vld [vmem:[%s3 + $0x1f0] sm:$0xff]
      %v1747 = vld [vmem:[%s3 + $0x1f8] sm:$0xff]
      %v1748 = vld [vmem:[%s3 + $0x200] sm:$0xff]
      %v1749 = vld [vmem:[%s3 + $0x208] sm:$0xff]
      %v1750 = vld [vmem:[%s3 + $0x210] sm:$0xff]
      %v1751 = vld [vmem:[%s3 + $0x218] sm:$0xff]
      %v1752 = vld [vmem:[%s3 + $0x220] sm:$0xff]
      %v1753 = vld [vmem:[%s3 + $0x228] sm:$0xff]
      %v1754 = vld [vmem:[%s3 + $0x230] sm:$0xff]
      %v1755 = vld [vmem:[%s3 + $0x238] sm:$0xff]
      %v1756 = vld [vmem:[%s3 + $0x240] sm:$0xff]
      %v1757 = vld [vmem:[%s3 + $0x248] sm:$0xff]
      %v1758 = vld [vmem:[%s3 + $0x250] sm:$0xff]
      %v1759 = vld [vmem:[%s3 + $0x258] sm:$0xff]
      %v1760 = vld [vmem:[%s3 + $0x260] sm:$0xff]
      %v1761 = vld [vmem:[%s3 + $0x268] sm:$0xff]
      %v1762 = vld [vmem:[%s3 + $0x270] sm:$0xff]
      %v1763 = vld [vmem:[%s3 + $0x278] sm:$0xff]
      %v1764 = vld [vmem:[%s3 + $0x280] sm:$0xff]
      %v1765 = vld [vmem:[%s3 + $0x288] sm:$0xff]
      %v1766 = vld [vmem:[%s3 + $0x290] sm:$0xff]
      %v1767 = vld [vmem:[%s3 + $0x298] sm:$0xff]
      %v1768 = vld [vmem:[%s3 + $0x2a0] sm:$0xff]
      %v1769 = vld [vmem:[%s3 + $0x2a8] sm:$0xff]
      %v1770 = vld [vmem:[%s3 + $0x2b0] sm:$0xff]
      %v1771 = vld [vmem:[%s3 + $0x2b8] sm:$0xff]
      %v1772 = vld [vmem:[%s3 + $0x2c0] sm:$0xff]
      %v1773 = vld [vmem:[%s3 + $0x2c8] sm:$0xff]
      %v1774 = vld [vmem:[%s3 + $0x2d0] sm:$0xff]
      %v1775 = vld [vmem:[%s3 + $0x2d8] sm:$0xff]
      %v1776 = vld [vmem:[%s3 + $0x2e0] sm:$0xff]
      %v1777 = vld [vmem:[%s3 + $0x2e8] sm:$0xff]
      %v1778 = vld [vmem:[%s3 + $0x2f0] sm:$0xff]
      %v1779 = vld [vmem:[%s3 + $0x2f8] sm:$0xff]
      %v1780 = vld [vmem:[%s3 + $0x300] sm:$0xff]
      %v1781 = vld [vmem:[%s3 + $0x308] sm:$0xff]
      %v1782 = vld [vmem:[%s3 + $0x310] sm:$0xff]
      %v1783 = vld [vmem:[%s3 + $0x318] sm:$0xff]
      %v1784 = vld [vmem:[%s3 + $0x320] sm:$0xff]
      %v1785 = vld [vmem:[%s3 + $0x328] sm:$0xff]
      %v1786 = vld [vmem:[%s3 + $0x330] sm:$0xff]
      %v1787 = vld [vmem:[%s3 + $0x338] sm:$0xff]
      %v1788 = vld [vmem:[%s3 + $0x340] sm:$0xff]
      %v1789 = vld [vmem:[%s3 + $0x348] sm:$0xff]
      %v1790 = vld [vmem:[%s3 + $0x350] sm:$0xff]
      %v1791 = vld [vmem:[%s3 + $0x358] sm:$0xff]
      %v1792 = vld [vmem:[%s3 + $0x360] sm:$0xff]
      %v1793 = vld [vmem:[%s3 + $0x368] sm:$0xff]
      %v1794 = vld [vmem:[%s3 + $0x370] sm:$0xff]
      %v1795 = vld [vmem:[%s3 + $0x378] sm:$0xff]
      %v1796 = vld [vmem:[%s3 + $0x380] sm:$0xff]
      %v1797 = vld [vmem:[%s3 + $0x388] sm:$0xff]
      %v1798 = vld [vmem:[%s3 + $0x390] sm:$0xff]
      %v1799 = vld [vmem:[%s3 + $0x398] sm:$0xff]
      %v1800 = vld [vmem:[%s3 + $0x3a0] sm:$0xff]
      %v1801 = vld [vmem:[%s3 + $0x3a8] sm:$0xff]
      %v1802 = vld [vmem:[%s3 + $0x3b0] sm:$0xff]
      %v1803 = vld [vmem:[%s3 + $0x3b8] sm:$0xff]
      %v1804 = vld [vmem:[%s3 + $0x3c0] sm:$0xff]
      %v1805 = vld [vmem:[%s3 + $0x3c8] sm:$0xff]
      %v1806 = vld [vmem:[%s3 + $0x3d0] sm:$0xff]
      %v1807 = vld [vmem:[%s3 + $0x3d8] sm:$0xff]
      %v1808 = vld [vmem:[%s3 + $0x3e0] sm:$0xff]
      %v1809 = vld [vmem:[%s3 + $0x3e8] sm:$0xff]
      %v1810 = vld [vmem:[%s3 + $0x3f0] sm:$0xff]
      %v1811 = vld [vmem:[%s3 + $0x3f8] sm:$0xff]
      %v1812 = vld [vmem:[%s3 + $0x400] sm:$0xff]
      %v1813 = vld [vmem:[%s3 + $0x408] sm:$0xff]
      %v1814 = vld [vmem:[%s3 + $0x410] sm:$0xff]
      %v1815 = vld [vmem:[%s3 + $0x418] sm:$0xff]
      %v1816 = vld [vmem:[%s3 + $0x420] sm:$0xff]
      %v1817 = vld [vmem:[%s3 + $0x428] sm:$0xff]
      %v1818 = vld [vmem:[%s3 + $0x430] sm:$0xff]
      %v1819 = vld [vmem:[%s3 + $0x438] sm:$0xff]
      %v1820 = vld [vmem:[%s3 + $0x440] sm:$0xff]
      %v1821 = vld [vmem:[%s3 + $0x448] sm:$0xff]
      %v1822 = vld [vmem:[%s3 + $0x450] sm:$0xff]
      %v1823 = vld [vmem:[%s3 + $0x458] sm:$0xff]
      %v1824 = vld [vmem:[%s3 + $0x460] sm:$0xff]
      %v1825 = vld [vmem:[%s3 + $0x468] sm:$0xff]
      %v1826 = vld [vmem:[%s3 + $0x470] sm:$0xff]
      %v1827 = vld [vmem:[%s3 + $0x478] sm:$0xff]
      %1828 = vmatprep.subr.mxu0 0.0
      %1829 = vmatpush1.msra.mxu0 %v1684
      %1830 = vmatprep.subr.mxu0 0.0
      %1831 = vmatpush1.msra.mxu0 %v1685
      %1832 = vmatprep.subr.mxu0 0.0
      %1833 = vmatpush1.msra.mxu0 %v1686
      %1834 = vmatprep.subr.mxu0 0.0
      %1835 = vmatpush1.msra.mxu0 %v1687
      %1836 = vmatprep.subr.mxu0 0.0
      %1837 = vmatpush1.msra.mxu0 %v1688
      %1838 = vmatprep.subr.mxu0 0.0
      %1839 = vmatpush1.msra.mxu0 %v1689
      %1840 = vmatprep.subr.mxu0 0.0
      %1841 = vmatpush1.msra.mxu0 %v1690
      %1842 = vmatprep.subr.mxu0 0.0
      %1843 = vmatpush1.msra.mxu0 %v1691
      %1844 = vmatprep.subr.mxu0 0.0
      %1845 = vmatpush1.msra.mxu0 %v1692
      %1846 = vmatprep.subr.mxu0 0.0
      %1847 = vmatpush1.msra.mxu0 %v1693
      %1848 = vmatprep.subr.mxu0 0.0
      %1849 = vmatpush1.msra.mxu0 %v1694
      %1850 = vmatprep.subr.mxu0 0.0
      %1851 = vmatpush1.msra.mxu0 %v1695
      %1852 = vmatprep.subr.mxu0 0.0
      %1853 = vmatpush1.msra.mxu0 %v1696
      %1854 = vmatprep.subr.mxu0 0.0
      %1855 = vmatpush1.msra.mxu0 %v1697
      %1856 = vmatprep.subr.mxu0 0.0
      %1857 = vmatpush1.msra.mxu0 %v1698
      %1858 = vmatprep.subr.mxu0 0.0
      %1859 = vmatpush1.msra.mxu0 %v1699
      %1860 = vmatprep.subr.mxu0 0.0
      %1861 = vmatpush1.msra.mxu0 %v1700
      %1862 = vmatprep.subr.mxu0 0.0
      %1863 = vmatpush1.msra.mxu0 %v1701
      %1864 = vmatprep.subr.mxu0 0.0
      %1865 = vmatpush1.msra.mxu0 %v1702
      %1866 = vmatprep.subr.mxu0 0.0
      %1867 = vmatpush1.msra.mxu0 %v1703
      %1868 = vmatprep.subr.mxu0 0.0
      %1869 = vmatpush1.msra.mxu0 %v1704
      %1870 = vmatprep.subr.mxu0 0.0
      %1871 = vmatpush1.msra.mxu0 %v1705
      %1872 = vmatprep.subr.mxu0 0.0
      %1873 = vmatpush1.msra.mxu0 %v1706
      %1874 = vmatprep.subr.mxu0 0.0
      %1875 = vmatpush1.msra.mxu0 %v1707
      %1876 = vmatprep.subr.mxu0 0.0
      %1877 = vmatpush1.msra.mxu0 %v1708
      %1878 = vmatprep.subr.mxu0 0.0
      %1879 = vmatpush1.msra.mxu0 %v1709
      %1880 = vmatprep.subr.mxu0 0.0
      %1881 = vmatpush1.msra.mxu0 %v1710
      %1882 = vmatprep.subr.mxu0 0.0
      %1883 = vmatpush1.msra.mxu0 %v1711
      %1884 = vmatprep.subr.mxu0 0.0
      %1885 = vmatpush1.msra.mxu0 %v1712
      %1886 = vmatprep.subr.mxu0 0.0
      %1887 = vmatpush1.msra.mxu0 %v1713
      %1888 = vmatprep.subr.mxu0 0.0
      %1889 = vmatpush1.msra.mxu0 %v1714
      %1890 = vmatprep.subr.mxu0 0.0
      %1891 = vmatpush1.msra.mxu0 %v1715
      %1892 = vmatprep.mubr.f32.mxu0 %v1397
      %1893 = vmatmul.mubr.f32.gmra.mrb[0].mxu0 %v1396
      %v1894 = vpop.f32.mrb[0].mxu0
      %v1895 = vadd.f32 0.0, %v1894
      %v1896 = vpop.f32.mrb[0].mxu0
      %1897 = vmatprep.mubr.f32.mxu0 %v1406
      %1898 = vmatmul.mubr.f32.gmra.mrb[0].mxu0 %v1405
      %v1899 = vpop.f32.mrb[0].mxu0
      %v1900 = vadd.f32 0.0, %v1899
      %v1901 = vpop.f32.mrb[0].mxu0
      %1902 = vmatprep.mubr.f32.mxu0 %v1415
      %1903 = vmatmul.mubr.f32.gmra.mrb[0].mxu0 %v1414
      %v1904 = vpop.f32.mrb[0].mxu0
      %v1905 = vadd.f32 0.0, %v1904
      %v1906 = vpop.f32.mrb[0].mxu0
      %1907 = vmatprep.mubr.f32.mxu0 %v1424
      %1908 = vmatmul.mubr.f32.gmra.mrb[0].mxu0 %v1423
      %v1909 = vpop.f32.mrb[0].mxu0
      %v1910 = vadd.f32 0.0, %v1909
      %v1911 = vpop.f32.mrb[0].mxu0
      %1912 = vmatprep.mubr.f32.mxu0 %v1433
      %1913 = vmatmul.mubr.f32.gmra.mrb[0].mxu0 %v1432
      %v1914 = vpop.f32.mrb[0].mxu0
      %v1915 = vadd.f32 0.0, %v1914
      %v1916 = vpop.f32.mrb[0].mxu0
      %1917 = vmatprep.mubr.f32.mxu0 %v1442
      %1918 = vmatmul.mubr.f32.gmra.mrb[0].mxu0 %v1441
      %v1919 = vpop.f32.mrb[0].mxu0
      %v1920 = vadd.f32 0.0, %v1919
      %v1921 = vpop.f32.mrb[0].mxu0
      %1922 = vmatprep.mubr.f32.mxu0 %v1451
      %1923 = vmatmul.mubr.f32.gmra.mrb[0].mxu0 %v1450
      %v1924 = vpop.f32.mrb[0].mxu0
      %v1925 = vadd.f32 0.0, %v1924
      %v1926 = vpop.f32.mrb[0].mxu0
      %1927 = vmatprep.mubr.f32.mxu0 %v1460
      %1928 = vmatmul.mubr.f32.gmra.mrb[0].mxu0 %v1459
      %v1929 = vpop.f32.mrb[0].mxu0
      %v1930 = vadd.f32 0.0, %v1929
      %v1931 = vpop.f32.mrb[0].mxu0
      %1932 = vmatprep.mubr.f32.mxu0 %v1469
      %1933 = vmatmul.mubr.f32.gmra.mrb[0].mxu0 %v1468
      %v1934 = vpop.f32.mrb[0].mxu0
      %v1935 = vadd.f32 0.0, %v1934
      %v1936 = vpop.f32.mrb[0].mxu0
      %1937 = vmatprep.mubr.f32.mxu0 %v1478
      %1938 = vmatmul.mubr.f32.gmra.mrb[0].mxu0 %v1477
      %v1939 = vpop.f32.mrb[0].mxu0
      %v1940 = vadd.f32 0.0, %v1939
      %v1941 = vpop.f32.mrb[0].mxu0
      %1942 = vmatprep.mubr.f32.mxu0 %v1487
      %1943 = vmatmul.mubr.f32.gmra.mrb[0].mxu0 %v1486
      %v1944 = vpop.f32.mrb[0].mxu0
      %v1945 = vadd.f32 0.0, %v1944
      %v1946 = vpop.f32.mrb[0].mxu0
      %1947 = vmatprep.mubr.f32.mxu0 %v1496
      %1948 = vmatmul.mubr.f32.gmra.mrb[0].mxu0 %v1495
      %v1949 = vpop.f32.mrb[0].mxu0
      %v1950 = vadd.f32 0.0, %v1949
      %v1951 = vpop.f32.mrb[0].mxu0
      %1952 = vmatprep.mubr.f32.mxu0 %v1505
      %1953 = vmatmul.mubr.f32.gmra.mrb[0].mxu0 %v1504
      %v1954 = vpop.f32.mrb[0].mxu0
      %v1955 = vadd.f32 0.0, %v1954
      %v1956 = vpop.f32.mrb[0].mxu0
      %1957 = vmatprep.mubr.f32.mxu0 %v1514
      %1958 = vmatmul.mubr.f32.gmra.mrb[0].mxu0 %v1513
      %v1959 = vpop.f32.mrb[0].mxu0
      %v1960 = vadd.f32 0.0, %v1959
      %v1961 = vpop.f32.mrb[0].mxu0
      %1962 = vmatprep.mubr.f32.mxu0 %v1523
      %1963 = vmatmul.mubr.f32.gmra.mrb[0].mxu0 %v1522
      %v1964 = vpop.f32.mrb[0].mxu0
      %v1965 = vadd.f32 0.0, %v1964
      %v1966 = vpop.f32.mrb[0].mxu0
      %1967 = vmatprep.mubr.f32.mxu0 %v1532
      %1968 = vmatmul.mubr.f32.gmra.mrb[0].mxu0 %v1531
      %v1969 = vpop.f32.mrb[0].mxu0
      %v1970 = vadd.f32 0.0, %v1969
      %v1971 = vpop.f32.mrb[0].mxu0
      %1972 = vmatprep.mubr.f32.mxu0 %v1541
      %1973 = vmatmul.mubr.f32.gmra.mrb[0].mxu0 %v1540
      %v1974 = vpop.f32.mrb[0].mxu0
      %v1975 = vadd.f32 0.0, %v1974
      %v1976 = vpop.f32.mrb[0].mxu0
      %1977 = vmatprep.mubr.f32.mxu0 %v1550
      %1978 = vmatmul.mubr.f32.gmra.mrb[0].mxu0 %v1549
      %v1979 = vpop.f32.mrb[0].mxu0
      %v1980 = vadd.f32 0.0, %v1979
      %v1981 = vpop.f32.mrb[0].mxu0
      %1982 = vmatprep.mubr.f32.mxu0 %v1559
      %1983 = vmatmul.mubr.f32.gmra.mrb[0].mxu0 %v1558
      %v1984 = vpop.f32.mrb[0].mxu0
      %v1985 = vadd.f32 0.0, %v1984
      %v1986 = vpop.f32.mrb[0].mxu0
      %1987 = vmatprep.mubr.f32.mxu0 %v1568
      %1988 = vmatmul.mubr.f32.gmra.mrb[0].mxu0 %v1567
      %v1989 = vpop.f32.mrb[0].mxu0
      %v1990 = vadd.f32 0.0, %v1989
      %v1991 = vpop.f32.mrb[0].mxu0
      %1992 = vmatprep.mubr.f32.mxu0 %v1577
      %1993 = vmatmul.mubr.f32.gmra.mrb[0].mxu0 %v1576
      %v1994 = vpop.f32.mrb[0].mxu0
      %v1995 = vadd.f32 0.0, %v1994
      %v1996 = vpop.f32.mrb[0].mxu0
      %1997 = vmatprep.mubr.f32.mxu0 %v1586
      %1998 = vmatmul.mubr.f32.gmra.mrb[0].mxu0 %v1585
      %v1999 = vpop.f32.mrb[0].mxu0
      %v2000 = vadd.f32 0.0, %v1999
      %v2001 = vpop.f32.mrb[0].mxu0
      %2002 = vmatprep.mubr.f32.mxu0 %v1595
      %2003 = vmatmul.mubr.f32.gmra.mrb[0].mxu0 %v1594
      %v2004 = vpop.f32.mrb[0].mxu0
      %v2005 = vadd.f32 0.0, %v2004
      %v2006 = vpop.f32.mrb[0].mxu0
      %2007 = vmatprep.mubr.f32.mxu0 %v1604
      %2008 = vmatmul.mubr.f32.gmra.mrb[0].mxu0 %v1603
      %v2009 = vpop.f32.mrb[0].mxu0
      %v2010 = vadd.f32 0.0, %v2009
      %v2011 = vpop.f32.mrb[0].mxu0
      %2012 = vmatprep.mubr.f32.mxu0 %v1613
      %2013 = vmatmul.mubr.f32.gmra.mrb[0].mxu0 %v1612
      %v2014 = vpop.f32.mrb[0].mxu0
      %v2015 = vadd.f32 0.0, %v2014
      %v2016 = vpop.f32.mrb[0].mxu0
      %2017 = vmatprep.mubr.f32.mxu0 %v1622
      %2018 = vmatmul.mubr.f32.gmra.mrb[0].mxu0 %v1621
      %v2019 = vpop.f32.mrb[0].mxu0
      %v2020 = vadd.f32 0.0, %v2019
      %v2021 = vpop.f32.mrb[0].mxu0
      %2022 = vmatprep.mubr.f32.mxu0 %v1631
      %2023 = vmatmul.mubr.f32.gmra.mrb[0].mxu0 %v1630
      %v2024 = vpop.f32.mrb[0].mxu0
      %v2025 = vadd.f32 0.0, %v2024
      %v2026 = vpop.f32.mrb[0].mxu0
      %2027 = vmatprep.mubr.f32.mxu0 %v1640
      %2028 = vmatmul.mubr.f32.gmra.mrb[0].mxu0 %v1639
      %v2029 = vpop.f32.mrb[0].mxu0
      %v2030 = vadd.f32 0.0, %v2029
      %v2031 = vpop.f32.mrb[0].mxu0
      %2032 = vmatprep.mubr.f32.mxu0 %v1649
      %2033 = vmatmul.mubr.f32.gmra.mrb[0].mxu0 %v1648
      %v2034 = vpop.f32.mrb[0].mxu0
      %v2035 = vadd.f32 0.0, %v2034
      %v2036 = vpop.f32.mrb[0].mxu0
      %2037 = vmatprep.mubr.f32.mxu0 %v1658
      %2038 = vmatmul.mubr.f32.gmra.mrb[0].mxu0 %v1657
      %v2039 = vpop.f32.mrb[0].mxu0
      %v2040 = vadd.f32 0.0, %v2039
      %v2041 = vpop.f32.mrb[0].mxu0
      %2042 = vmatprep.mubr.f32.mxu0 %v1667
      %2043 = vmatmul.mubr.f32.gmra.mrb[0].mxu0 %v1666
      %v2044 = vpop.f32.mrb[0].mxu0
      %v2045 = vadd.f32 0.0, %v2044
      %v2046 = vpop.f32.mrb[0].mxu0
      %2047 = vmatprep.mubr.f32.mxu0 %v1676
      %2048 = vmatmul.mubr.f32.gmra.mrb[0].mxu0 %v1675
      %v2049 = vpop.f32.mrb[0].mxu0
      %v2050 = vadd.f32 0.0, %v2049
      %v2051 = vpop.f32.mrb[0].mxu0
      %2052 = vdwg.mxu0
      %2053 = vmatprep.subr.mxu0 0.0
      %2054 = vmatpush1.msra.mxu0 %v1716
      %2055 = vmatprep.subr.mxu0 0.0
      %2056 = vmatpush1.msra.mxu0 %v1717
      %2057 = vmatprep.subr.mxu0 0.0
      %2058 = vmatpush1.msra.mxu0 %v1718
      %2059 = vmatprep.subr.mxu0 0.0
      %2060 = vmatpush1.msra.mxu0 %v1719
      %2061 = vmatprep.subr.mxu0 0.0
      %2062 = vmatpush1.msra.mxu0 %v1720
      %2063 = vmatprep.subr.mxu0 0.0
      %2064 = vmatpush1.msra.mxu0 %v1721
      %2065 = vmatprep.subr.mxu0 0.0
      %2066 = vmatpush1.msra.mxu0 %v1722
      %2067 = vmatprep.subr.mxu0 0.0
      %2068 = vmatpush1.msra.mxu0 %v1723
      %2069 = vmatprep.subr.mxu0 0.0
      %2070 = vmatpush1.msra.mxu0 %v1724
      %2071 = vmatprep.subr.mxu0 0.0
      %2072 = vmatpush1.msra.mxu0 %v1725
      %2073 = vmatprep.subr.mxu0 0.0
      %2074 = vmatpush1.msra.mxu0 %v1726
      %2075 = vmatprep.subr.mxu0 0.0
      %2076 = vmatpush1.msra.mxu0 %v1727
      %2077 = vmatprep.subr.mxu0 0.0
      %2078 = vmatpush1.msra.mxu0 %v1728
      %2079 = vmatprep.subr.mxu0 0.0
      %2080 = vmatpush1.msra.mxu0 %v1729
      %2081 = vmatprep.subr.mxu0 0.0
      %2082 = vmatpush1.msra.mxu0 %v1730
      %2083 = vmatprep.subr.mxu0 0.0
      %2084 = vmatpush1.msra.mxu0 %v1731
      %2085 = vmatprep.subr.mxu0 0.0
      %2086 = vmatpush1.msra.mxu0 %v1732
      %2087 = vmatprep.subr.mxu0 0.0
      %2088 = vmatpush1.msra.mxu0 %v1733
      %2089 = vmatprep.subr.mxu0 0.0
      %2090 = vmatpush1.msra.mxu0 %v1734
      %2091 = vmatprep.subr.mxu0 0.0
      %2092 = vmatpush1.msra.mxu0 %v1735
      %2093 = vmatprep.subr.mxu0 0.0
      %2094 = vmatpush1.msra.mxu0 %v1736
      %2095 = vmatprep.subr.mxu0 0.0
      %2096 = vmatpush1.msra.mxu0 %v1737
      %2097 = vmatprep.subr.mxu0 0.0
      %2098 = vmatpush1.msra.mxu0 %v1738
      %2099 = vmatprep.subr.mxu0 0.0
      %2100 = vmatpush1.msra.mxu0 %v1739
      %2101 = vmatprep.subr.mxu0 0.0
      %2102 = vmatpush1.msra.mxu0 %v1740
      %2103 = vmatprep.subr.mxu0 0.0
      %2104 = vmatpush1.msra.mxu0 %v1741
      %2105 = vmatprep.subr.mxu0 0.0
      %2106 = vmatpush1.msra.mxu0 %v1742
      %2107 = vmatprep.subr.mxu0 0.0
      %2108 = vmatpush1.msra.mxu0 %v1743
      %2109 = vmatprep.subr.mxu0 0.0
      %2110 = vmatpush1.msra.mxu0 %v1744
      %2111 = vmatprep.subr.mxu0 0.0
      %2112 = vmatpush1.msra.mxu0 %v1745
      %2113 = vmatprep.subr.mxu0 0.0
      %2114 = vmatpush1.msra.mxu0 %v1746
      %2115 = vmatprep.subr.mxu0 0.0
      %2116 = vmatpush1.msra.mxu0 %v1747
      %2117 = vmatprep.mubr.f32.mxu0 %v1399
      %2118 = vmatmul.mubr.f32.gmra.mrb[0].mxu0 %v1398
      %v2119 = vpop.f32.mrb[0].mxu0
      %v2120 = vadd.f32 %v1895, %v2119
      %v2121 = vpop.f32.mrb[0].mxu0
      %2122 = vmatprep.mubr.f32.mxu0 %v1408
      %2123 = vmatmul.mubr.f32.gmra.mrb[0].mxu0 %v1407
      %v2124 = vpop.f32.mrb[0].mxu0
      %v2125 = vadd.f32 %v1900, %v2124
      %v2126 = vpop.f32.mrb[0].mxu0
      %2127 = vmatprep.mubr.f32.mxu0 %v1417
      %2128 = vmatmul.mubr.f32.gmra.mrb[0].mxu0 %v1416
      %v2129 = vpop.f32.mrb[0].mxu0
      %v2130 = vadd.f32 %v1905, %v2129
      %v2131 = vpop.f32.mrb[0].mxu0
      %2132 = vmatprep.mubr.f32.mxu0 %v1426
      %2133 = vmatmul.mubr.f32.gmra.mrb[0].mxu0 %v1425
      %v2134 = vpop.f32.mrb[0].mxu0
      %v2135 = vadd.f32 %v1910, %v2134
      %v2136 = vpop.f32.mrb[0].mxu0
      %2137 = vmatprep.mubr.f32.mxu0 %v1435
      %2138 = vmatmul.mubr.f32.gmra.mrb[0].mxu0 %v1434
      %v2139 = vpop.f32.mrb[0].mxu0
      %v2140 = vadd.f32 %v1915, %v2139
      %v2141 = vpop.f32.mrb[0].mxu0
      %2142 = vmatprep.mubr.f32.mxu0 %v1444
      %2143 = vmatmul.mubr.f32.gmra.mrb[0].mxu0 %v1443
      %v2144 = vpop.f32.mrb[0].mxu0
      %v2145 = vadd.f32 %v1920, %v2144
      %v2146 = vpop.f32.mrb[0].mxu0
      %2147 = vmatprep.mubr.f32.mxu0 %v1453
      %2148 = vmatmul.mubr.f32.gmra.mrb[0].mxu0 %v1452
      %v2149 = vpop.f32.mrb[0].mxu0
      %v2150 = vadd.f32 %v1925, %v2149
      %v2151 = vpop.f32.mrb[0].mxu0
      %2152 = vmatprep.mubr.f32.mxu0 %v1462
      %2153 = vmatmul.mubr.f32.gmra.mrb[0].mxu0 %v1461
      %v2154 = vpop.f32.mrb[0].mxu0
      %v2155 = vadd.f32 %v1930, %v2154
      %v2156 = vpop.f32.mrb[0].mxu0
      %2157 = vmatprep.mubr.f32.mxu0 %v1471
      %2158 = vmatmul.mubr.f32.gmra.mrb[0].mxu0 %v1470
      %v2159 = vpop.f32.mrb[0].mxu0
      %v2160 = vadd.f32 %v1935, %v2159
      %v2161 = vpop.f32.mrb[0].mxu0
      %2162 = vmatprep.mubr.f32.mxu0 %v1480
      %2163 = vmatmul.mubr.f32.gmra.mrb[0].mxu0 %v1479
      %v2164 = vpop.f32.mrb[0].mxu0
      %v2165 = vadd.f32 %v1940, %v2164
      %v2166 = vpop.f32.mrb[0].mxu0
      %2167 = vmatprep.mubr.f32.mxu0 %v1489
      %2168 = vmatmul.mubr.f32.gmra.mrb[0].mxu0 %v1488
      %v2169 = vpop.f32.mrb[0].mxu0
      %v2170 = vadd.f32 %v1945, %v2169
      %v2171 = vpop.f32.mrb[0].mxu0
      %2172 = vmatprep.mubr.f32.mxu0 %v1498
      %2173 = vmatmul.mubr.f32.gmra.mrb[0].mxu0 %v1497
      %v2174 = vpop.f32.mrb[0].mxu0
      %v2175 = vadd.f32 %v1950, %v2174
      %v2176 = vpop.f32.mrb[0].mxu0
      %2177 = vmatprep.mubr.f32.mxu0 %v1507
      %2178 = vmatmul.mubr.f32.gmra.mrb[0].mxu0 %v1506
      %v2179 = vpop.f32.mrb[0].mxu0
      %v2180 = vadd.f32 %v1955, %v2179
      %v2181 = vpop.f32.mrb[0].mxu0
      %2182 = vmatprep.mubr.f32.mxu0 %v1516
      %2183 = vmatmul.mubr.f32.gmra.mrb[0].mxu0 %v1515
      %v2184 = vpop.f32.mrb[0].mxu0
      %v2185 = vadd.f32 %v1960, %v2184
      %v2186 = vpop.f32.mrb[0].mxu0
      %2187 = vmatprep.mubr.f32.mxu0 %v1525
      %2188 = vmatmul.mubr.f32.gmra.mrb[0].mxu0 %v1524
      %v2189 = vpop.f32.mrb[0].mxu0
      %v2190 = vadd.f32 %v1965, %v2189
      %v2191 = vpop.f32.mrb[0].mxu0
      %2192 = vmatprep.mubr.f32.mxu0 %v1534
      %2193 = vmatmul.mubr.f32.gmra.mrb[0].mxu0 %v1533
      %v2194 = vpop.f32.mrb[0].mxu0
      %v2195 = vadd.f32 %v1970, %v2194
      %v2196 = vpop.f32.mrb[0].mxu0
      %2197 = vmatprep.mubr.f32.mxu0 %v1543
      %2198 = vmatmul.mubr.f32.gmra.mrb[0].mxu0 %v1542
      %v2199 = vpop.f32.mrb[0].mxu0
      %v2200 = vadd.f32 %v1975, %v2199
      %v2201 = vpop.f32.mrb[0].mxu0
      %2202 = vmatprep.mubr.f32.mxu0 %v1552
      %2203 = vmatmul.mubr.f32.gmra.mrb[0].mxu0 %v1551
      %v2204 = vpop.f32.mrb[0].mxu0
      %v2205 = vadd.f32 %v1980, %v2204
      %v2206 = vpop.f32.mrb[0].mxu0
      %2207 = vmatprep.mubr.f32.mxu0 %v1561
      %2208 = vmatmul.mubr.f32.gmra.mrb[0].mxu0 %v1560
      %v2209 = vpop.f32.mrb[0].mxu0
      %v2210 = vadd.f32 %v1985, %v2209
      %v2211 = vpop.f32.mrb[0].mxu0
      %2212 = vmatprep.mubr.f32.mxu0 %v1570
      %2213 = vmatmul.mubr.f32.gmra.mrb[0].mxu0 %v1569
      %v2214 = vpop.f32.mrb[0].mxu0
      %v2215 = vadd.f32 %v1990, %v2214
      %v2216 = vpop.f32.mrb[0].mxu0
      %2217 = vmatprep.mubr.f32.mxu0 %v1579
      %2218 = vmatmul.mubr.f32.gmra.mrb[0].mxu0 %v1578
      %v2219 = vpop.f32.mrb[0].mxu0
      %v2220 = vadd.f32 %v1995, %v2219
      %v2221 = vpop.f32.mrb[0].mxu0
      %2222 = vmatprep.mubr.f32.mxu0 %v1588
      %2223 = vmatmul.mubr.f32.gmra.mrb[0].mxu0 %v1587
      %v2224 = vpop.f32.mrb[0].mxu0
      %v2225 = vadd.f32 %v2000, %v2224
      %v2226 = vpop.f32.mrb[0].mxu0
      %2227 = vmatprep.mubr.f32.mxu0 %v1597
      %2228 = vmatmul.mubr.f32.gmra.mrb[0].mxu0 %v1596
      %v2229 = vpop.f32.mrb[0].mxu0
      %v2230 = vadd.f32 %v2005, %v2229
      %v2231 = vpop.f32.mrb[0].mxu0
      %2232 = vmatprep.mubr.f32.mxu0 %v1606
      %2233 = vmatmul.mubr.f32.gmra.mrb[0].mxu0 %v1605
      %v2234 = vpop.f32.mrb[0].mxu0
      %v2235 = vadd.f32 %v2010, %v2234
      %v2236 = vpop.f32.mrb[0].mxu0
      %2237 = vmatprep.mubr.f32.mxu0 %v1615
      %2238 = vmatmul.mubr.f32.gmra.mrb[0].mxu0 %v1614
      %v2239 = vpop.f32.mrb[0].mxu0
      %v2240 = vadd.f32 %v2015, %v2239
      %v2241 = vpop.f32.mrb[0].mxu0
      %2242 = vmatprep.mubr.f32.mxu0 %v1624
      %2243 = vmatmul.mubr.f32.gmra.mrb[0].mxu0 %v1623
      %v2244 = vpop.f32.mrb[0].mxu0
      %v2245 = vadd.f32 %v2020, %v2244
      %v2246 = vpop.f32.mrb[0].mxu0
      %2247 = vmatprep.mubr.f32.mxu0 %v1633
      %2248 = vmatmul.mubr.f32.gmra.mrb[0].mxu0 %v1632
      %v2249 = vpop.f32.mrb[0].mxu0
      %v2250 = vadd.f32 %v2025, %v2249
      %v2251 = vpop.f32.mrb[0].mxu0
      %2252 = vmatprep.mubr.f32.mxu0 %v1642
      %2253 = vmatmul.mubr.f32.gmra.mrb[0].mxu0 %v1641
      %v2254 = vpop.f32.mrb[0].mxu0
      %v2255 = vadd.f32 %v2030, %v2254
      %v2256 = vpop.f32.mrb[0].mxu0
      %2257 = vmatprep.mubr.f32.mxu0 %v1651
      %2258 = vmatmul.mubr.f32.gmra.mrb[0].mxu0 %v1650
      %v2259 = vpop.f32.mrb[0].mxu0
      %v2260 = vadd.f32 %v2035, %v2259
      %v2261 = vpop.f32.mrb[0].mxu0
      %2262 = vmatprep.mubr.f32.mxu0 %v1660
      %2263 = vmatmul.mubr.f32.gmra.mrb[0].mxu0 %v1659
      %v2264 = vpop.f32.mrb[0].mxu0
      %v2265 = vadd.f32 %v2040, %v2264
      %v2266 = vpop.f32.mrb[0].mxu0
      %2267 = vmatprep.mubr.f32.mxu0 %v1669
      %2268 = vmatmul.mubr.f32.gmra.mrb[0].mxu0 %v1668
      %v2269 = vpop.f32.mrb[0].mxu0
      %v2270 = vadd.f32 %v2045, %v2269
      %v2271 = vpop.f32.mrb[0].mxu0
      %2272 = vmatprep.mubr.f32.mxu0 %v1678
      %2273 = vmatmul.mubr.f32.gmra.mrb[0].mxu0 %v1677
      %v2274 = vpop.f32.mrb[0].mxu0
      %v2275 = vadd.f32 %v2050, %v2274
      %v2276 = vpop.f32.mrb[0].mxu0
      %2277 = vdwg.mxu0
      %2278 = vmatprep.subr.mxu0 0.0
      %2279 = vmatpush1.msra.mxu0 %v1748
      %2280 = vmatprep.subr.mxu0 0.0
      %2281 = vmatpush1.msra.mxu0 %v1749
      %2282 = vmatprep.subr.mxu0 0.0
      %2283 = vmatpush1.msra.mxu0 %v1750
      %2284 = vmatprep.subr.mxu0 0.0
      %2285 = vmatpush1.msra.mxu0 %v1751
      %2286 = vmatprep.subr.mxu0 0.0
      %2287 = vmatpush1.msra.mxu0 %v1752
      %2288 = vmatprep.subr.mxu0 0.0
      %2289 = vmatpush1.msra.mxu0 %v1753
      %2290 = vmatprep.subr.mxu0 0.0
      %2291 = vmatpush1.msra.mxu0 %v1754
      %2292 = vmatprep.subr.mxu0 0.0
      %2293 = vmatpush1.msra.mxu0 %v1755
      %2294 = vmatprep.subr.mxu0 0.0
      %2295 = vmatpush1.msra.mxu0 %v1756
      %2296 = vmatprep.subr.mxu0 0.0
      %2297 = vmatpush1.msra.mxu0 %v1757
      %2298 = vmatprep.subr.mxu0 0.0
      %2299 = vmatpush1.msra.mxu0 %v1758
      %2300 = vmatprep.subr.mxu0 0.0
      %2301 = vmatpush1.msra.mxu0 %v1759
      %2302 = vmatprep.subr.mxu0 0.0
      %2303 = vmatpush1.msra.mxu0 %v1760
      %2304 = vmatprep.subr.mxu0 0.0
      %2305 = vmatpush1.msra.mxu0 %v1761
      %2306 = vmatprep.subr.mxu0 0.0
      %2307 = vmatpush1.msra.mxu0 %v1762
      %2308 = vmatprep.subr.mxu0 0.0
      %2309 = vmatpush1.msra.mxu0 %v1763
      %2310 = vmatprep.subr.mxu0 0.0
      %2311 = vmatpush1.msra.mxu0 %v1764
      %2312 = vmatprep.subr.mxu0 0.0
      %2313 = vmatpush1.msra.mxu0 %v1765
      %2314 = vmatprep.subr.mxu0 0.0
      %2315 = vmatpush1.msra.mxu0 %v1766
      %2316 = vmatprep.subr.mxu0 0.0
      %2317 = vmatpush1.msra.mxu0 %v1767
      %2318 = vmatprep.subr.mxu0 0.0
      %2319 = vmatpush1.msra.mxu0 %v1768
      %2320 = vmatprep.subr.mxu0 0.0
      %2321 = vmatpush1.msra.mxu0 %v1769
      %2322 = vmatprep.subr.mxu0 0.0
      %2323 = vmatpush1.msra.mxu0 %v1770
      %2324 = vmatprep.subr.mxu0 0.0
      %2325 = vmatpush1.msra.mxu0 %v1771
      %2326 = vmatprep.subr.mxu0 0.0
      %2327 = vmatpush1.msra.mxu0 %v1772
      %2328 = vmatprep.subr.mxu0 0.0
      %2329 = vmatpush1.msra.mxu0 %v1773
      %2330 = vmatprep.subr.mxu0 0.0
      %2331 = vmatpush1.msra.mxu0 %v1774
      %2332 = vmatprep.subr.mxu0 0.0
      %2333 = vmatpush1.msra.mxu0 %v1775
      %2334 = vmatprep.subr.mxu0 0.0
      %2335 = vmatpush1.msra.mxu0 %v1776
      %2336 = vmatprep.subr.mxu0 0.0
      %2337 = vmatpush1.msra.mxu0 %v1777
      %2338 = vmatprep.subr.mxu0 0.0
      %2339 = vmatpush1.msra.mxu0 %v1778
      %2340 = vmatprep.subr.mxu0 0.0
      %2341 = vmatpush1.msra.mxu0 %v1779
      %2342 = vmatprep.mubr.f32.mxu0 %v1401
      %2343 = vmatmul.mubr.f32.gmra.mrb[0].mxu0 %v1400
      %v2344 = vpop.f32.mrb[0].mxu0
      %v2345 = vadd.f32 %v2120, %v2344
      %v2346 = vpop.f32.mrb[0].mxu0
      %2347 = vmatprep.mubr.f32.mxu0 %v1410
      %2348 = vmatmul.mubr.f32.gmra.mrb[0].mxu0 %v1409
      %v2349 = vpop.f32.mrb[0].mxu0
      %v2350 = vadd.f32 %v2125, %v2349
      %v2351 = vpop.f32.mrb[0].mxu0
      %2352 = vmatprep.mubr.f32.mxu0 %v1419
      %2353 = vmatmul.mubr.f32.gmra.mrb[0].mxu0 %v1418
      %v2354 = vpop.f32.mrb[0].mxu0
      %v2355 = vadd.f32 %v2130, %v2354
      %v2356 = vpop.f32.mrb[0].mxu0
      %2357 = vmatprep.mubr.f32.mxu0 %v1428
      %2358 = vmatmul.mubr.f32.gmra.mrb[0].mxu0 %v1427
      %v2359 = vpop.f32.mrb[0].mxu0
      %v2360 = vadd.f32 %v2135, %v2359
      %v2361 = vpop.f32.mrb[0].mxu0
      %2362 = vmatprep.mubr.f32.mxu0 %v1437
      %2363 = vmatmul.mubr.f32.gmra.mrb[0].mxu0 %v1436
      %v2364 = vpop.f32.mrb[0].mxu0
      %v2365 = vadd.f32 %v2140, %v2364
      %v2366 = vpop.f32.mrb[0].mxu0
      %2367 = vmatprep.mubr.f32.mxu0 %v1446
      %2368 = vmatmul.mubr.f32.gmra.mrb[0].mxu0 %v1445
      %v2369 = vpop.f32.mrb[0].mxu0
      %v2370 = vadd.f32 %v2145, %v2369
      %v2371 = vpop.f32.mrb[0].mxu0
      %2372 = vmatprep.mubr.f32.mxu0 %v1455
      %2373 = vmatmul.mubr.f32.gmra.mrb[0].mxu0 %v1454
      %v2374 = vpop.f32.mrb[0].mxu0
      %v2375 = vadd.f32 %v2150, %v2374
      %v2376 = vpop.f32.mrb[0].mxu0
      %2377 = vmatprep.mubr.f32.mxu0 %v1464
      %2378 = vmatmul.mubr.f32.gmra.mrb[0].mxu0 %v1463
      %v2379 = vpop.f32.mrb[0].mxu0
      %v2380 = vadd.f32 %v2155, %v2379
      %v2381 = vpop.f32.mrb[0].mxu0
      %2382 = vmatprep.mubr.f32.mxu0 %v1473
      %2383 = vmatmul.mubr.f32.gmra.mrb[0].mxu0 %v1472
      %v2384 = vpop.f32.mrb[0].mxu0
      %v2385 = vadd.f32 %v2160, %v2384
      %v2386 = vpop.f32.mrb[0].mxu0
      %2387 = vmatprep.mubr.f32.mxu0 %v1482
      %2388 = vmatmul.mubr.f32.gmra.mrb[0].mxu0 %v1481
      %v2389 = vpop.f32.mrb[0].mxu0
      %v2390 = vadd.f32 %v2165, %v2389
      %v2391 = vpop.f32.mrb[0].mxu0
      %2392 = vmatprep.mubr.f32.mxu0 %v1491
      %2393 = vmatmul.mubr.f32.gmra.mrb[0].mxu0 %v1490
      %v2394 = vpop.f32.mrb[0].mxu0
      %v2395 = vadd.f32 %v2170, %v2394
      %v2396 = vpop.f32.mrb[0].mxu0
      %2397 = vmatprep.mubr.f32.mxu0 %v1500
      %2398 = vmatmul.mubr.f32.gmra.mrb[0].mxu0 %v1499
      %v2399 = vpop.f32.mrb[0].mxu0
      %v2400 = vadd.f32 %v2175, %v2399
      %v2401 = vpop.f32.mrb[0].mxu0
      %2402 = vmatprep.mubr.f32.mxu0 %v1509
      %2403 = vmatmul.mubr.f32.gmra.mrb[0].mxu0 %v1508
      %v2404 = vpop.f32.mrb[0].mxu0
      %v2405 = vadd.f32 %v2180, %v2404
      %v2406 = vpop.f32.mrb[0].mxu0
      %2407 = vmatprep.mubr.f32.mxu0 %v1518
      %2408 = vmatmul.mubr.f32.gmra.mrb[0].mxu0 %v1517
      %v2409 = vpop.f32.mrb[0].mxu0
      %v2410 = vadd.f32 %v2185, %v2409
      %v2411 = vpop.f32.mrb[0].mxu0
      %2412 = vmatprep.mubr.f32.mxu0 %v1527
      %2413 = vmatmul.mubr.f32.gmra.mrb[0].mxu0 %v1526
      %v2414 = vpop.f32.mrb[0].mxu0
      %v2415 = vadd.f32 %v2190, %v2414
      %v2416 = vpop.f32.mrb[0].mxu0
      %2417 = vmatprep.mubr.f32.mxu0 %v1536
      %2418 = vmatmul.mubr.f32.gmra.mrb[0].mxu0 %v1535
      %v2419 = vpop.f32.mrb[0].mxu0
      %v2420 = vadd.f32 %v2195, %v2419
      %v2421 = vpop.f32.mrb[0].mxu0
      %2422 = vmatprep.mubr.f32.mxu0 %v1545
      %2423 = vmatmul.mubr.f32.gmra.mrb[0].mxu0 %v1544
      %v2424 = vpop.f32.mrb[0].mxu0
      %v2425 = vadd.f32 %v2200, %v2424
      %v2426 = vpop.f32.mrb[0].mxu0
      %2427 = vmatprep.mubr.f32.mxu0 %v1554
      %2428 = vmatmul.mubr.f32.gmra.mrb[0].mxu0 %v1553
      %v2429 = vpop.f32.mrb[0].mxu0
      %v2430 = vadd.f32 %v2205, %v2429
      %v2431 = vpop.f32.mrb[0].mxu0
      %2432 = vmatprep.mubr.f32.mxu0 %v1563
      %2433 = vmatmul.mubr.f32.gmra.mrb[0].mxu0 %v1562
      %v2434 = vpop.f32.mrb[0].mxu0
      %v2435 = vadd.f32 %v2210, %v2434
      %v2436 = vpop.f32.mrb[0].mxu0
      %2437 = vmatprep.mubr.f32.mxu0 %v1572
      %2438 = vmatmul.mubr.f32.gmra.mrb[0].mxu0 %v1571
      %v2439 = vpop.f32.mrb[0].mxu0
      %v2440 = vadd.f32 %v2215, %v2439
      %v2441 = vpop.f32.mrb[0].mxu0
      %2442 = vmatprep.mubr.f32.mxu0 %v1581
      %2443 = vmatmul.mubr.f32.gmra.mrb[0].mxu0 %v1580
      %v2444 = vpop.f32.mrb[0].mxu0
      %v2445 = vadd.f32 %v2220, %v2444
      %v2446 = vpop.f32.mrb[0].mxu0
      %2447 = vmatprep.mubr.f32.mxu0 %v1590
      %2448 = vmatmul.mubr.f32.gmra.mrb[0].mxu0 %v1589
      %v2449 = vpop.f32.mrb[0].mxu0
      %v2450 = vadd.f32 %v2225, %v2449
      %v2451 = vpop.f32.mrb[0].mxu0
      %2452 = vmatprep.mubr.f32.mxu0 %v1599
      %2453 = vmatmul.mubr.f32.gmra.mrb[0].mxu0 %v1598
      %v2454 = vpop.f32.mrb[0].mxu0
      %v2455 = vadd.f32 %v2230, %v2454
      %v2456 = vpop.f32.mrb[0].mxu0
      %2457 = vmatprep.mubr.f32.mxu0 %v1608
      %2458 = vmatmul.mubr.f32.gmra.mrb[0].mxu0 %v1607
      %v2459 = vpop.f32.mrb[0].mxu0
      %v2460 = vadd.f32 %v2235, %v2459
      %v2461 = vpop.f32.mrb[0].mxu0
      %2462 = vmatprep.mubr.f32.mxu0 %v1617
      %2463 = vmatmul.mubr.f32.gmra.mrb[0].mxu0 %v1616
      %v2464 = vpop.f32.mrb[0].mxu0
      %v2465 = vadd.f32 %v2240, %v2464
      %v2466 = vpop.f32.mrb[0].mxu0
      %2467 = vmatprep.mubr.f32.mxu0 %v1626
      %2468 = vmatmul.mubr.f32.gmra.mrb[0].mxu0 %v1625
      %v2469 = vpop.f32.mrb[0].mxu0
      %v2470 = vadd.f32 %v2245, %v2469
      %v2471 = vpop.f32.mrb[0].mxu0
      %2472 = vmatprep.mubr.f32.mxu0 %v1635
      %2473 = vmatmul.mubr.f32.gmra.mrb[0].mxu0 %v1634
      %v2474 = vpop.f32.mrb[0].mxu0
      %v2475 = vadd.f32 %v2250, %v2474
      %v2476 = vpop.f32.mrb[0].mxu0
      %2477 = vmatprep.mubr.f32.mxu0 %v1644
      %2478 = vmatmul.mubr.f32.gmra.mrb[0].mxu0 %v1643
      %v2479 = vpop.f32.mrb[0].mxu0
      %v2480 = vadd.f32 %v2255, %v2479
      %v2481 = vpop.f32.mrb[0].mxu0
      %2482 = vmatprep.mubr.f32.mxu0 %v1653
      %2483 = vmatmul.mubr.f32.gmra.mrb[0].mxu0 %v1652
      %v2484 = vpop.f32.mrb[0].mxu0
      %v2485 = vadd.f32 %v2260, %v2484
      %v2486 = vpop.f32.mrb[0].mxu0
      %2487 = vmatprep.mubr.f32.mxu0 %v1662
      %2488 = vmatmul.mubr.f32.gmra.mrb[0].mxu0 %v1661
      %v2489 = vpop.f32.mrb[0].mxu0
      %v2490 = vadd.f32 %v2265, %v2489
      %v2491 = vpop.f32.mrb[0].mxu0
      %2492 = vmatprep.mubr.f32.mxu0 %v1671
      %2493 = vmatmul.mubr.f32.gmra.mrb[0].mxu0 %v1670
      %v2494 = vpop.f32.mrb[0].mxu0
      %v2495 = vadd.f32 %v2270, %v2494
      %v2496 = vpop.f32.mrb[0].mxu0
      %2497 = vmatprep.mubr.f32.mxu0 %v1680
      %2498 = vmatmul.mubr.f32.gmra.mrb[0].mxu0 %v1679
      %v2499 = vpop.f32.mrb[0].mxu0
      %v2500 = vadd.f32 %v2275, %v2499
      %v2501 = vpop.f32.mrb[0].mxu0
      %2502 = vdwg.mxu0
      %2503 = vmatprep.subr.mxu0 0.0
      %2504 = vmatpush1.msra.mxu0 %v1780
      %2505 = vmatprep.subr.mxu0 0.0
      %2506 = vmatpush1.msra.mxu0 %v1781
      %2507 = vmatprep.subr.mxu0 0.0
      %2508 = vmatpush1.msra.mxu0 %v1782
      %2509 = vmatprep.subr.mxu0 0.0
      %2510 = vmatpush1.msra.mxu0 %v1783
      %2511 = vmatprep.subr.mxu0 0.0
      %2512 = vmatpush1.msra.mxu0 %v1784
      %2513 = vmatprep.subr.mxu0 0.0
      %2514 = vmatpush1.msra.mxu0 %v1785
      %2515 = vmatprep.subr.mxu0 0.0
      %2516 = vmatpush1.msra.mxu0 %v1786
      %2517 = vmatprep.subr.mxu0 0.0
      %2518 = vmatpush1.msra.mxu0 %v1787
      %2519 = vmatprep.subr.mxu0 0.0
      %2520 = vmatpush1.msra.mxu0 %v1788
      %2521 = vmatprep.subr.mxu0 0.0
      %2522 = vmatpush1.msra.mxu0 %v1789
      %2523 = vmatprep.subr.mxu0 0.0
      %2524 = vmatpush1.msra.mxu0 %v1790
      %2525 = vmatprep.subr.mxu0 0.0
      %2526 = vmatpush1.msra.mxu0 %v1791
      %2527 = vmatprep.subr.mxu0 0.0
      %2528 = vmatpush1.msra.mxu0 %v1792
      %2529 = vmatprep.subr.mxu0 0.0
      %2530 = vmatpush1.msra.mxu0 %v1793
      %2531 = vmatprep.subr.mxu0 0.0
      %2532 = vmatpush1.msra.mxu0 %v1794
      %2533 = vmatprep.subr.mxu0 0.0
      %2534 = vmatpush1.msra.mxu0 %v1795
      %2535 = vmatprep.subr.mxu0 0.0
      %2536 = vmatpush1.msra.mxu0 %v1796
      %2537 = vmatprep.subr.mxu0 0.0
      %2538 = vmatpush1.msra.mxu0 %v1797
      %2539 = vmatprep.subr.mxu0 0.0
      %2540 = vmatpush1.msra.mxu0 %v1798
      %2541 = vmatprep.subr.mxu0 0.0
      %2542 = vmatpush1.msra.mxu0 %v1799
      %2543 = vmatprep.subr.mxu0 0.0
      %2544 = vmatpush1.msra.mxu0 %v1800
      %2545 = vmatprep.subr.mxu0 0.0
      %2546 = vmatpush1.msra.mxu0 %v1801
      %2547 = vmatprep.subr.mxu0 0.0
      %2548 = vmatpush1.msra.mxu0 %v1802
      %2549 = vmatprep.subr.mxu0 0.0
      %2550 = vmatpush1.msra.mxu0 %v1803
      %2551 = vmatprep.subr.mxu0 0.0
      %2552 = vmatpush1.msra.mxu0 %v1804
      %2553 = vmatprep.subr.mxu0 0.0
      %2554 = vmatpush1.msra.mxu0 %v1805
      %2555 = vmatprep.subr.mxu0 0.0
      %2556 = vmatpush1.msra.mxu0 %v1806
      %2557 = vmatprep.subr.mxu0 0.0
      %2558 = vmatpush1.msra.mxu0 %v1807
      %2559 = vmatprep.subr.mxu0 0.0
      %2560 = vmatpush1.msra.mxu0 %v1808
      %2561 = vmatprep.subr.mxu0 0.0
      %2562 = vmatpush1.msra.mxu0 %v1809
      %2563 = vmatprep.subr.mxu0 0.0
      %2564 = vmatpush1.msra.mxu0 %v1810
      %2565 = vmatprep.subr.mxu0 0.0
      %2566 = vmatpush1.msra.mxu0 %v1811
      %2567 = vmatprep.mubr.f32.mxu0 %v1403
      %2568 = vmatmul.mubr.f32.gmra.mrb[0].mxu0 %v1402
      %v2569 = vpop.f32.mrb[0].mxu0
      %v2570 = vadd.f32 %v2345, %v2569
      %v2571 = vpop.f32.mrb[0].mxu0
      %2572 = vmatprep.mubr.f32.mxu0 %v1412
      %2573 = vmatmul.mubr.f32.gmra.mrb[0].mxu0 %v1411
      %v2574 = vpop.f32.mrb[0].mxu0
      %v2575 = vadd.f32 %v2350, %v2574
      %v2576 = vpop.f32.mrb[0].mxu0
      %2577 = vmatprep.mubr.f32.mxu0 %v1421
      %2578 = vmatmul.mubr.f32.gmra.mrb[0].mxu0 %v1420
      %v2579 = vpop.f32.mrb[0].mxu0
      %v2580 = vadd.f32 %v2355, %v2579
      %v2581 = vpop.f32.mrb[0].mxu0
      %2582 = vmatprep.mubr.f32.mxu0 %v1430
      %2583 = vmatmul.mubr.f32.gmra.mrb[0].mxu0 %v1429
      %v2584 = vpop.f32.mrb[0].mxu0
      %v2585 = vadd.f32 %v2360, %v2584
      %v2586 = vpop.f32.mrb[0].mxu0
      %2587 = vmatprep.mubr.f32.mxu0 %v1439
      %2588 = vmatmul.mubr.f32.gmra.mrb[0].mxu0 %v1438
      %v2589 = vpop.f32.mrb[0].mxu0
      %v2590 = vadd.f32 %v2365, %v2589
      %v2591 = vpop.f32.mrb[0].mxu0
      %2592 = vmatprep.mubr.f32.mxu0 %v1448
      %2593 = vmatmul.mubr.f32.gmra.mrb[0].mxu0 %v1447
      %v2594 = vpop.f32.mrb[0].mxu0
      %v2595 = vadd.f32 %v2370, %v2594
      %v2596 = vpop.f32.mrb[0].mxu0
      %2597 = vmatprep.mubr.f32.mxu0 %v1457
      %2598 = vmatmul.mubr.f32.gmra.mrb[0].mxu0 %v1456
      %v2599 = vpop.f32.mrb[0].mxu0
      %v2600 = vadd.f32 %v2375, %v2599
      %v2601 = vpop.f32.mrb[0].mxu0
      %2602 = vmatprep.mubr.f32.mxu0 %v1466
      %2603 = vmatmul.mubr.f32.gmra.mrb[0].mxu0 %v1465
      %v2604 = vpop.f32.mrb[0].mxu0
      %v2605 = vadd.f32 %v2380, %v2604
      %v2606 = vpop.f32.mrb[0].mxu0
      %2607 = vmatprep.mubr.f32.mxu0 %v1475
      %2608 = vmatmul.mubr.f32.gmra.mrb[0].mxu0 %v1474
      %v2609 = vpop.f32.mrb[0].mxu0
      %v2610 = vadd.f32 %v2385, %v2609
      %v2611 = vpop.f32.mrb[0].mxu0
      %2612 = vmatprep.mubr.f32.mxu0 %v1484
      %2613 = vmatmul.mubr.f32.gmra.mrb[0].mxu0 %v1483
      %v2614 = vpop.f32.mrb[0].mxu0
      %v2615 = vadd.f32 %v2390, %v2614
      %v2616 = vpop.f32.mrb[0].mxu0
      %2617 = vmatprep.mubr.f32.mxu0 %v1493
      %2618 = vmatmul.mubr.f32.gmra.mrb[0].mxu0 %v1492
      %v2619 = vpop.f32.mrb[0].mxu0
      %v2620 = vadd.f32 %v2395, %v2619
      %v2621 = vpop.f32.mrb[0].mxu0
      %2622 = vmatprep.mubr.f32.mxu0 %v1502
      %2623 = vmatmul.mubr.f32.gmra.mrb[0].mxu0 %v1501
      %v2624 = vpop.f32.mrb[0].mxu0
      %v2625 = vadd.f32 %v2400, %v2624
      %v2626 = vpop.f32.mrb[0].mxu0
      %2627 = vmatprep.mubr.f32.mxu0 %v1511
      %2628 = vmatmul.mubr.f32.gmra.mrb[0].mxu0 %v1510
      %v2629 = vpop.f32.mrb[0].mxu0
      %v2630 = vadd.f32 %v2405, %v2629
      %v2631 = vpop.f32.mrb[0].mxu0
      %2632 = vmatprep.mubr.f32.mxu0 %v1520
      %2633 = vmatmul.mubr.f32.gmra.mrb[0].mxu0 %v1519
      %v2634 = vpop.f32.mrb[0].mxu0
      %v2635 = vadd.f32 %v2410, %v2634
      %v2636 = vpop.f32.mrb[0].mxu0
      %2637 = vmatprep.mubr.f32.mxu0 %v1529
      %2638 = vmatmul.mubr.f32.gmra.mrb[0].mxu0 %v1528
      %v2639 = vpop.f32.mrb[0].mxu0
      %v2640 = vadd.f32 %v2415, %v2639
      %v2641 = vpop.f32.mrb[0].mxu0
      %2642 = vmatprep.mubr.f32.mxu0 %v1538
      %2643 = vmatmul.mubr.f32.gmra.mrb[0].mxu0 %v1537
      %v2644 = vpop.f32.mrb[0].mxu0
      %v2645 = vadd.f32 %v2420, %v2644
      %v2646 = vpop.f32.mrb[0].mxu0
      %2647 = vmatprep.mubr.f32.mxu0 %v1547
      %2648 = vmatmul.mubr.f32.gmra.mrb[0].mxu0 %v1546
      %v2649 = vpop.f32.mrb[0].mxu0
      %v2650 = vadd.f32 %v2425, %v2649
      %v2651 = vpop.f32.mrb[0].mxu0
      %2652 = vmatprep.mubr.f32.mxu0 %v1556
      %2653 = vmatmul.mubr.f32.gmra.mrb[0].mxu0 %v1555
      %v2654 = vpop.f32.mrb[0].mxu0
      %v2655 = vadd.f32 %v2430, %v2654
      %v2656 = vpop.f32.mrb[0].mxu0
      %2657 = vmatprep.mubr.f32.mxu0 %v1565
      %2658 = vmatmul.mubr.f32.gmra.mrb[0].mxu0 %v1564
      %v2659 = vpop.f32.mrb[0].mxu0
      %v2660 = vadd.f32 %v2435, %v2659
      %v2661 = vpop.f32.mrb[0].mxu0
      %2662 = vmatprep.mubr.f32.mxu0 %v1574
      %2663 = vmatmul.mubr.f32.gmra.mrb[0].mxu0 %v1573
      %v2664 = vpop.f32.mrb[0].mxu0
      %v2665 = vadd.f32 %v2440, %v2664
      %v2666 = vpop.f32.mrb[0].mxu0
      %2667 = vmatprep.mubr.f32.mxu0 %v1583
      %2668 = vmatmul.mubr.f32.gmra.mrb[0].mxu0 %v1582
      %v2669 = vpop.f32.mrb[0].mxu0
      %v2670 = vadd.f32 %v2445, %v2669
      %v2671 = vpop.f32.mrb[0].mxu0
      %2672 = vmatprep.mubr.f32.mxu0 %v1592
      %2673 = vmatmul.mubr.f32.gmra.mrb[0].mxu0 %v1591
      %v2674 = vpop.f32.mrb[0].mxu0
      %v2675 = vadd.f32 %v2450, %v2674
      %v2676 = vpop.f32.mrb[0].mxu0
      %2677 = vmatprep.mubr.f32.mxu0 %v1601
      %2678 = vmatmul.mubr.f32.gmra.mrb[0].mxu0 %v1600
      %v2679 = vpop.f32.mrb[0].mxu0
      %v2680 = vadd.f32 %v2455, %v2679
      %v2681 = vpop.f32.mrb[0].mxu0
      %2682 = vmatprep.mubr.f32.mxu0 %v1610
      %2683 = vmatmul.mubr.f32.gmra.mrb[0].mxu0 %v1609
      %v2684 = vpop.f32.mrb[0].mxu0
      %v2685 = vadd.f32 %v2460, %v2684
      %v2686 = vpop.f32.mrb[0].mxu0
      %2687 = vmatprep.mubr.f32.mxu0 %v1619
      %2688 = vmatmul.mubr.f32.gmra.mrb[0].mxu0 %v1618
      %v2689 = vpop.f32.mrb[0].mxu0
      %v2690 = vadd.f32 %v2465, %v2689
      %v2691 = vpop.f32.mrb[0].mxu0
      %2692 = vmatprep.mubr.f32.mxu0 %v1628
      %2693 = vmatmul.mubr.f32.gmra.mrb[0].mxu0 %v1627
      %v2694 = vpop.f32.mrb[0].mxu0
      %v2695 = vadd.f32 %v2470, %v2694
      %v2696 = vpop.f32.mrb[0].mxu0
      %2697 = vmatprep.mubr.f32.mxu0 %v1637
      %2698 = vmatmul.mubr.f32.gmra.mrb[0].mxu0 %v1636
      %v2699 = vpop.f32.mrb[0].mxu0
      %v2700 = vadd.f32 %v2475, %v2699
      %v2701 = vpop.f32.mrb[0].mxu0
      %2702 = vmatprep.mubr.f32.mxu0 %v1646
      %2703 = vmatmul.mubr.f32.gmra.mrb[0].mxu0 %v1645
      %v2704 = vpop.f32.mrb[0].mxu0
      %v2705 = vadd.f32 %v2480, %v2704
      %v2706 = vpop.f32.mrb[0].mxu0
      %2707 = vmatprep.mubr.f32.mxu0 %v1655
      %2708 = vmatmul.mubr.f32.gmra.mrb[0].mxu0 %v1654
      %v2709 = vpop.f32.mrb[0].mxu0
      %v2710 = vadd.f32 %v2485, %v2709
      %v2711 = vpop.f32.mrb[0].mxu0
      %2712 = vmatprep.mubr.f32.mxu0 %v1664
      %2713 = vmatmul.mubr.f32.gmra.mrb[0].mxu0 %v1663
      %v2714 = vpop.f32.mrb[0].mxu0
      %v2715 = vadd.f32 %v2490, %v2714
      %v2716 = vpop.f32.mrb[0].mxu0
      %2717 = vmatprep.mubr.f32.mxu0 %v1673
      %2718 = vmatmul.mubr.f32.gmra.mrb[0].mxu0 %v1672
      %v2719 = vpop.f32.mrb[0].mxu0
      %v2720 = vadd.f32 %v2495, %v2719
      %v2721 = vpop.f32.mrb[0].mxu0
      %2722 = vmatprep.mubr.f32.mxu0 %v1682
      %2723 = vmatmul.mubr.f32.gmra.mrb[0].mxu0 %v1681
      %v2724 = vpop.f32.mrb[0].mxu0
      %v2725 = vadd.f32 %v2500, %v2724
      %v2726 = vpop.f32.mrb[0].mxu0
      %2727 = vdwg.mxu0
      %2728 = vmatprep.subr.mxu0 0.0
      %2729 = vmatpush1.msra.mxu0 %v1812
      %2730 = vmatprep.subr.mxu0 0.0
      %2731 = vmatpush1.msra.mxu0 %v1813
      %2732 = vmatprep.subr.mxu0 0.0
      %2733 = vmatpush1.msra.mxu0 %v1814
      %2734 = vmatprep.subr.mxu0 0.0
      %2735 = vmatpush1.msra.mxu0 %v1815
      %2736 = vmatprep.subr.mxu0 0.0
      %2737 = vmatpush1.msra.mxu0 %v1816
      %2738 = vmatprep.subr.mxu0 0.0
      %2739 = vmatpush1.msra.mxu0 %v1817
      %2740 = vmatprep.subr.mxu0 0.0
      %2741 = vmatpush1.msra.mxu0 %v1818
      %2742 = vmatprep.subr.mxu0 0.0
      %2743 = vmatpush1.msra.mxu0 %v1819
      %2744 = vmatprep.subr.mxu0 0.0
      %2745 = vmatpush1.msra.mxu0 %v1820
      %2746 = vmatprep.subr.mxu0 0.0
      %2747 = vmatpush1.msra.mxu0 %v1821
      %2748 = vmatprep.subr.mxu0 0.0
      %2749 = vmatpush1.msra.mxu0 %v1822
      %2750 = vmatprep.subr.mxu0 0.0
      %2751 = vmatpush1.msra.mxu0 %v1823
      %2752 = vmatprep.subr.mxu0 0.0
      %2753 = vmatpush1.msra.mxu0 %v1824
      %2754 = vmatprep.subr.mxu0 0.0
      %2755 = vmatpush1.msra.mxu0 %v1825
      %2756 = vmatprep.subr.mxu0 0.0
      %2757 = vmatpush1.msra.mxu0 %v1826
      %2758 = vmatprep.subr.mxu0 0.0
      %2759 = vmatpush1.msra.mxu0 %v1827
      %2760 = vmatprep.subr.mxu0 0.0
      %2761 = vmatpush1.msra.mxu0 0.0
      %2762 = vmatprep.subr.mxu0 0.0
      %2763 = vmatpush1.msra.mxu0 0.0
      %2764 = vmatprep.subr.mxu0 0.0
      %2765 = vmatpush1.msra.mxu0 0.0
      %2766 = vmatprep.subr.mxu0 0.0
      %2767 = vmatpush1.msra.mxu0 0.0
      %2768 = vmatprep.subr.mxu0 0.0
      %2769 = vmatpush1.msra.mxu0 0.0
      %2770 = vmatprep.subr.mxu0 0.0
      %2771 = vmatpush1.msra.mxu0 0.0
      %2772 = vmatprep.subr.mxu0 0.0
      %2773 = vmatpush1.msra.mxu0 0.0
      %2774 = vmatprep.subr.mxu0 0.0
      %2775 = vmatpush1.msra.mxu0 0.0
      %2776 = vmatprep.subr.mxu0 0.0
      %2777 = vmatpush1.msra.mxu0 0.0
      %2778 = vmatprep.subr.mxu0 0.0
      %2779 = vmatpush1.msra.mxu0 0.0
      %2780 = vmatprep.subr.mxu0 0.0
      %2781 = vmatpush1.msra.mxu0 0.0
      %2782 = vmatprep.subr.mxu0 0.0
      %2783 = vmatpush1.msra.mxu0 0.0
      %2784 = vmatprep.subr.mxu0 0.0
      %2785 = vmatpush1.msra.mxu0 0.0
      %2786 = vmatprep.subr.mxu0 0.0
      %2787 = vmatpush1.msra.mxu0 0.0
      %2788 = vmatprep.subr.mxu0 0.0
      %2789 = vmatpush1.msra.mxu0 0.0
      %2790 = vmatprep.subr.mxu0 0.0
      %2791 = vmatpush1.msra.mxu0 0.0
      %2792 = vmatprep.mubr.f32.mxu0 0.0
      %2793 = vmatmul.mubr.f32.gmra.mrb[0].mxu0 %v1404
      %v2794 = vpop.f32.mrb[0].mxu0
      %v2795 = vadd.f32 %v2570, %v2794
      %v2796 = vpop.f32.mrb[0].mxu0
      %2797 = vmatprep.mubr.f32.mxu0 0.0
      %2798 = vmatmul.mubr.f32.gmra.mrb[0].mxu0 %v1413
      %v2799 = vpop.f32.mrb[0].mxu0
      %v2800 = vadd.f32 %v2575, %v2799
      %v2801 = vpop.f32.mrb[0].mxu0
      %2802 = vmatprep.mubr.f32.mxu0 0.0
      %2803 = vmatmul.mubr.f32.gmra.mrb[0].mxu0 %v1422
      %v2804 = vpop.f32.mrb[0].mxu0
      %v2805 = vadd.f32 %v2580, %v2804
      %v2806 = vpop.f32.mrb[0].mxu0
      %2807 = vmatprep.mubr.f32.mxu0 0.0
      %2808 = vmatmul.mubr.f32.gmra.mrb[0].mxu0 %v1431
      %v2809 = vpop.f32.mrb[0].mxu0
      %v2810 = vadd.f32 %v2585, %v2809
      %v2811 = vpop.f32.mrb[0].mxu0
      %2812 = vmatprep.mubr.f32.mxu0 0.0
      %2813 = vmatmul.mubr.f32.gmra.mrb[0].mxu0 %v1440
      %v2814 = vpop.f32.mrb[0].mxu0
      %v2815 = vadd.f32 %v2590, %v2814
      %v2816 = vpop.f32.mrb[0].mxu0
      %2817 = vmatprep.mubr.f32.mxu0 0.0
      %2818 = vmatmul.mubr.f32.gmra.mrb[0].mxu0 %v1449
      %v2819 = vpop.f32.mrb[0].mxu0
      %v2820 = vadd.f32 %v2595, %v2819
      %v2821 = vpop.f32.mrb[0].mxu0
      %2822 = vmatprep.mubr.f32.mxu0 0.0
      %2823 = vmatmul.mubr.f32.gmra.mrb[0].mxu0 %v1458
      %v2824 = vpop.f32.mrb[0].mxu0
      %v2825 = vadd.f32 %v2600, %v2824
      %v2826 = vpop.f32.mrb[0].mxu0
      %2827 = vmatprep.mubr.f32.mxu0 0.0
      %2828 = vmatmul.mubr.f32.gmra.mrb[0].mxu0 %v1467
      %v2829 = vpop.f32.mrb[0].mxu0
      %v2830 = vadd.f32 %v2605, %v2829
      %v2831 = vpop.f32.mrb[0].mxu0
      %2832 = vmatprep.mubr.f32.mxu0 0.0
      %2833 = vmatmul.mubr.f32.gmra.mrb[0].mxu0 %v1476
      %v2834 = vpop.f32.mrb[0].mxu0
      %v2835 = vadd.f32 %v2610, %v2834
      %v2836 = vpop.f32.mrb[0].mxu0
      %2837 = vmatprep.mubr.f32.mxu0 0.0
      %2838 = vmatmul.mubr.f32.gmra.mrb[0].mxu0 %v1485
      %v2839 = vpop.f32.mrb[0].mxu0
      %v2840 = vadd.f32 %v2615, %v2839
      %v2841 = vpop.f32.mrb[0].mxu0
      %2842 = vmatprep.mubr.f32.mxu0 0.0
      %2843 = vmatmul.mubr.f32.gmra.mrb[0].mxu0 %v1494
      %v2844 = vpop.f32.mrb[0].mxu0
      %v2845 = vadd.f32 %v2620, %v2844
      %v2846 = vpop.f32.mrb[0].mxu0
      %2847 = vmatprep.mubr.f32.mxu0 0.0
      %2848 = vmatmul.mubr.f32.gmra.mrb[0].mxu0 %v1503
      %v2849 = vpop.f32.mrb[0].mxu0
      %v2850 = vadd.f32 %v2625, %v2849
      %v2851 = vpop.f32.mrb[0].mxu0
      %2852 = vmatprep.mubr.f32.mxu0 0.0
      %2853 = vmatmul.mubr.f32.gmra.mrb[0].mxu0 %v1512
      %v2854 = vpop.f32.mrb[0].mxu0
      %v2855 = vadd.f32 %v2630, %v2854
      %v2856 = vpop.f32.mrb[0].mxu0
      %2857 = vmatprep.mubr.f32.mxu0 0.0
      %2858 = vmatmul.mubr.f32.gmra.mrb[0].mxu0 %v1521
      %v2859 = vpop.f32.mrb[0].mxu0
      %v2860 = vadd.f32 %v2635, %v2859
      %v2861 = vpop.f32.mrb[0].mxu0
      %2862 = vmatprep.mubr.f32.mxu0 0.0
      %2863 = vmatmul.mubr.f32.gmra.mrb[0].mxu0 %v1530
      %v2864 = vpop.f32.mrb[0].mxu0
      %v2865 = vadd.f32 %v2640, %v2864
      %v2866 = vpop.f32.mrb[0].mxu0
      %2867 = vmatprep.mubr.f32.mxu0 0.0
      %2868 = vmatmul.mubr.f32.gmra.mrb[0].mxu0 %v1539
      %v2869 = vpop.f32.mrb[0].mxu0
      %v2870 = vadd.f32 %v2645, %v2869
      %v2871 = vpop.f32.mrb[0].mxu0
      %2872 = vmatprep.mubr.f32.mxu0 0.0
      %2873 = vmatmul.mubr.f32.gmra.mrb[0].mxu0 %v1548
      %v2874 = vpop.f32.mrb[0].mxu0
      %v2875 = vadd.f32 %v2650, %v2874
      %v2876 = vpop.f32.mrb[0].mxu0
      %2877 = vmatprep.mubr.f32.mxu0 0.0
      %2878 = vmatmul.mubr.f32.gmra.mrb[0].mxu0 %v1557
      %v2879 = vpop.f32.mrb[0].mxu0
      %v2880 = vadd.f32 %v2655, %v2879
      %v2881 = vpop.f32.mrb[0].mxu0
      %2882 = vmatprep.mubr.f32.mxu0 0.0
      %2883 = vmatmul.mubr.f32.gmra.mrb[0].mxu0 %v1566
      %v2884 = vpop.f32.mrb[0].mxu0
      %v2885 = vadd.f32 %v2660, %v2884
      %v2886 = vpop.f32.mrb[0].mxu0
      %2887 = vmatprep.mubr.f32.mxu0 0.0
      %2888 = vmatmul.mubr.f32.gmra.mrb[0].mxu0 %v1575
      %v2889 = vpop.f32.mrb[0].mxu0
      %v2890 = vadd.f32 %v2665, %v2889
      %v2891 = vpop.f32.mrb[0].mxu0
      %2892 = vmatprep.mubr.f32.mxu0 0.0
      %2893 = vmatmul.mubr.f32.gmra.mrb[0].mxu0 %v1584
      %v2894 = vpop.f32.mrb[0].mxu0
      %v2895 = vadd.f32 %v2670, %v2894
      %v2896 = vpop.f32.mrb[0].mxu0
      %2897 = vmatprep.mubr.f32.mxu0 0.0
      %2898 = vmatmul.mubr.f32.gmra.mrb[0].mxu0 %v1593
      %v2899 = vpop.f32.mrb[0].mxu0
      %v2900 = vadd.f32 %v2675, %v2899
      %v2901 = vpop.f32.mrb[0].mxu0
      %2902 = vmatprep.mubr.f32.mxu0 0.0
      %2903 = vmatmul.mubr.f32.gmra.mrb[0].mxu0 %v1602
      %v2904 = vpop.f32.mrb[0].mxu0
      %v2905 = vadd.f32 %v2680, %v2904
      %v2906 = vpop.f32.mrb[0].mxu0
      %2907 = vmatprep.mubr.f32.mxu0 0.0
      %2908 = vmatmul.mubr.f32.gmra.mrb[0].mxu0 %v1611
      %v2909 = vpop.f32.mrb[0].mxu0
      %v2910 = vadd.f32 %v2685, %v2909
      %v2911 = vpop.f32.mrb[0].mxu0
      %2912 = vmatprep.mubr.f32.mxu0 0.0
      %2913 = vmatmul.mubr.f32.gmra.mrb[0].mxu0 %v1620
      %v2914 = vpop.f32.mrb[0].mxu0
      %v2915 = vadd.f32 %v2690, %v2914
      %v2916 = vpop.f32.mrb[0].mxu0
      %2917 = vmatprep.mubr.f32.mxu0 0.0
      %2918 = vmatmul.mubr.f32.gmra.mrb[0].mxu0 %v1629
      %v2919 = vpop.f32.mrb[0].mxu0
      %v2920 = vadd.f32 %v2695, %v2919
      %v2921 = vpop.f32.mrb[0].mxu0
      %2922 = vmatprep.mubr.f32.mxu0 0.0
      %2923 = vmatmul.mubr.f32.gmra.mrb[0].mxu0 %v1638
      %v2924 = vpop.f32.mrb[0].mxu0
      %v2925 = vadd.f32 %v2700, %v2924
      %v2926 = vpop.f32.mrb[0].mxu0
      %2927 = vmatprep.mubr.f32.mxu0 0.0
      %2928 = vmatmul.mubr.f32.gmra.mrb[0].mxu0 %v1647
      %v2929 = vpop.f32.mrb[0].mxu0
      %v2930 = vadd.f32 %v2705, %v2929
      %v2931 = vpop.f32.mrb[0].mxu0
      %2932 = vmatprep.mubr.f32.mxu0 0.0
      %2933 = vmatmul.mubr.f32.gmra.mrb[0].mxu0 %v1656
      %v2934 = vpop.f32.mrb[0].mxu0
      %v2935 = vadd.f32 %v2710, %v2934
      %v2936 = vpop.f32.mrb[0].mxu0
      %2937 = vmatprep.mubr.f32.mxu0 0.0
      %2938 = vmatmul.mubr.f32.gmra.mrb[0].mxu0 %v1665
      %v2939 = vpop.f32.mrb[0].mxu0
      %v2940 = vadd.f32 %v2715, %v2939
      %v2941 = vpop.f32.mrb[0].mxu0
      %2942 = vmatprep.mubr.f32.mxu0 0.0
      %2943 = vmatmul.mubr.f32.gmra.mrb[0].mxu0 %v1674
      %v2944 = vpop.f32.mrb[0].mxu0
      %v2945 = vadd.f32 %v2720, %v2944
      %v2946 = vpop.f32.mrb[0].mxu0
      %2947 = vmatprep.mubr.f32.mxu0 0.0
      %2948 = vmatmul.mubr.f32.gmra.mrb[0].mxu0 %v1683
      %v2949 = vpop.f32.mrb[0].mxu0
      %v2950 = vadd.f32 %v2725, %v2949
      %v2951 = vpop.f32.mrb[0].mxu0
      %2952 = vdwg.mxu0
      %2953 = vst [vmem:[%s231] sm:$0xff] %v2795
      %2954 = vst [vmem:[%s231 + $0x8] sm:$0xff] %v2800
      %2955 = vst [vmem:[%s231 + $0x10] sm:$0xff] %v2805
      %2956 = vst [vmem:[%s231 + $0x18] sm:$0xff] %v2810
      %2957 = vst [vmem:[%s231 + $0x20] sm:$0xff] %v2815
      %2958 = vst [vmem:[%s231 + $0x28] sm:$0xff] %v2820
      %2959 = vst [vmem:[%s231 + $0x30] sm:$0xff] %v2825
      %2960 = vst [vmem:[%s231 + $0x38] sm:$0xff] %v2830
      %2961 = vst [vmem:[%s231 + $0x40] sm:$0xff] %v2835
      %2962 = vst [vmem:[%s231 + $0x48] sm:$0xff] %v2840
      %2963 = vst [vmem:[%s231 + $0x50] sm:$0xff] %v2845
      %2964 = vst [vmem:[%s231 + $0x58] sm:$0xff] %v2850
      %2965 = vst [vmem:[%s231 + $0x60] sm:$0xff] %v2855
      %2966 = vst [vmem:[%s231 + $0x68] sm:$0xff] %v2860
      %2967 = vst [vmem:[%s231 + $0x70] sm:$0xff] %v2865
      %2968 = vst [vmem:[%s231 + $0x78] sm:$0xff] %v2870
      %2969 = vst [vmem:[%s231 + $0x80] sm:$0xff] %v2875
      %2970 = vst [vmem:[%s231 + $0x88] sm:$0xff] %v2880
      %2971 = vst [vmem:[%s231 + $0x90] sm:$0xff] %v2885
      %2972 = vst [vmem:[%s231 + $0x98] sm:$0xff] %v2890
      %2973 = vst [vmem:[%s231 + $0xa0] sm:$0xff] %v2895
      %2974 = vst [vmem:[%s231 + $0xa8] sm:$0xff] %v2900
      %2975 = vst [vmem:[%s231 + $0xb0] sm:$0xff] %v2905
      %2976 = vst [vmem:[%s231 + $0xb8] sm:$0xff] %v2910
      %2977 = vst [vmem:[%s231 + $0xc0] sm:$0xff] %v2915
      %2978 = vst [vmem:[%s231 + $0xc8] sm:$0xff] %v2920
      %2979 = vst [vmem:[%s231 + $0xd0] sm:$0xff] %v2925
      %2980 = vst [vmem:[%s231 + $0xd8] sm:$0xff] %v2930
      %2981 = vst [vmem:[%s231 + $0xe0] sm:$0xff] %v2935
      %2982 = vst [vmem:[%s231 + $0xe8] sm:$0xff] %v2940
      %2983 = vst [vmem:[%s231 + $0xf0] sm:$0xff] %v2945
      %2984 = vst [vmem:[%s231 + $0xf8] sm:$0xff] %v2950
      %v2985 = vadd.f32 %v2795, %v2800
      %v2986 = vadd.f32 %v2985, %v2805
      %v2987 = vadd.f32 %v2986, %v2810
      %v2988 = vadd.f32 %v2987, %v2815
      %v2989 = vadd.f32 %v2988, %v2820
      %v2990 = vadd.f32 %v2989, %v2825
      %v2991 = vadd.f32 %v2990, %v2830
      %v2992 = vadd.f32 %v2991, %v2835
      %v2993 = vadd.f32 %v2992, %v2840
      %v2994 = vadd.f32 %v2993, %v2845
      %v2995 = vadd.f32 %v2994, %v2850
      %v2996 = vadd.f32 %v2995, %v2855
      %v2997 = vadd.f32 %v2996, %v2860
      %v2998 = vadd.f32 %v2997, %v2865
      %v2999 = vadd.f32 %v2998, %v2870
      %v3000 = vadd.f32 %v2999, %v2875
      %v3001 = vadd.f32 %v3000, %v2880
      %v3002 = vadd.f32 %v3001, %v2885
      %v3003 = vadd.f32 %v3002, %v2890
      %v3004 = vadd.f32 %v3003, %v2895
      %v3005 = vadd.f32 %v3004, %v2900
      %v3006 = vadd.f32 %v3005, %v2905
      %v3007 = vadd.f32 %v3006, %v2910
      %v3008 = vadd.f32 %v3007, %v2915
      %v3009 = vadd.f32 %v3008, %v2920
      %v3010 = vadd.f32 %v3009, %v2925
      %v3011 = vadd.f32 %v3010, %v2930
      %v3012 = vadd.f32 %v3011, %v2935
      %v3013 = vadd.f32 %v3012, %v2940
      %v3014 = vadd.f32 %v3013, %v2945
      %v3015 = vadd.f32 %v3014, %v2950
      %v3016 = vrot.slane %v3015, 4
      %v3017 = vadd.f32 %v3015, %v3016
      %v3018 = vrot.slane %v3017, 2
      %v3019 = vadd.f32 %v3017, %v3018
      %v3020 = vrot.slane %v3019, 1
      %v3021 = vadd.f32 %v3019, %v3020
      %v3022 = vmul.f32 %v3021, 0.00390625
      %v3023 = vsub.f32 %v2795, %v3022
      %v3024 = vsub.f32 %v2800, %v3022
      %v3025 = vsub.f32 %v2805, %v3022
      %v3026 = vsub.f32 %v2810, %v3022
      %v3027 = vsub.f32 %v2815, %v3022
      %v3028 = vsub.f32 %v2820, %v3022
      %v3029 = vsub.f32 %v2825, %v3022
      %v3030 = vsub.f32 %v2830, %v3022
      %v3031 = vsub.f32 %v2835, %v3022
      %v3032 = vsub.f32 %v2840, %v3022
      %v3033 = vsub.f32 %v2845, %v3022
      %v3034 = vsub.f32 %v2850, %v3022
      %v3035 = vsub.f32 %v2855, %v3022
      %v3036 = vsub.f32 %v2860, %v3022
      %v3037 = vsub.f32 %v2865, %v3022
      %v3038 = vsub.f32 %v2870, %v3022
      %v3039 = vsub.f32 %v2875, %v3022
      %v3040 = vsub.f32 %v2880, %v3022
      %v3041 = vsub.f32 %v2885, %v3022
      %v3042 = vsub.f32 %v2890, %v3022
      %v3043 = vsub.f32 %v2895, %v3022
      %v3044 = vsub.f32 %v2900, %v3022
      %v3045 = vsub.f32 %v2905, %v3022
      %v3046 = vsub.f32 %v2910, %v3022
      %v3047 = vsub.f32 %v2915, %v3022
      %v3048 = vsub.f32 %v2920, %v3022
      %v3049 = vsub.f32 %v2925, %v3022
      %v3050 = vsub.f32 %v2930, %v3022
      %v3051 = vsub.f32 %v2935, %v3022
      %v3052 = vsub.f32 %v2940, %v3022
      %v3053 = vsub.f32 %v2945, %v3022
      %v3054 = vsub.f32 %v2950, %v3022
      %v3055 = vmul.f32 %v3023, %v3023
      %v3056 = vmul.f32 %v3024, %v3024
      %v3057 = vmul.f32 %v3025, %v3025
      %v3058 = vmul.f32 %v3026, %v3026
      %v3059 = vmul.f32 %v3027, %v3027
      %v3060 = vmul.f32 %v3028, %v3028
      %v3061 = vmul.f32 %v3029, %v3029
      %v3062 = vmul.f32 %v3030, %v3030
      %v3063 = vmul.f32 %v3031, %v3031
      %v3064 = vmul.f32 %v3032, %v3032
      %v3065 = vmul.f32 %v3033, %v3033
      %v3066 = vmul.f32 %v3034, %v3034
      %v3067 = vmul.f32 %v3035, %v3035
      %v3068 = vmul.f32 %v3036, %v3036
      %v3069 = vmul.f32 %v3037, %v3037
      %v3070 = vmul.f32 %v3038, %v3038
      %v3071 = vmul.f32 %v3039, %v3039
      %v3072 = vmul.f32 %v3040, %v3040
      %v3073 = vmul.f32 %v3041, %v3041
      %v3074 = vmul.f32 %v3042, %v3042
      %v3075 = vmul.f32 %v3043, %v3043
      %v3076 = vmul.f32 %v3044, %v3044
      %v3077 = vmul.f32 %v3045, %v3045
      %v3078 = vmul.f32 %v3046, %v3046
      %v3079 = vmul.f32 %v3047, %v3047
      %v3080 = vmul.f32 %v3048, %v3048
      %v3081 = vmul.f32 %v3049, %v3049
      %v3082 = vmul.f32 %v3050, %v3050
      %v3083 = vmul.f32 %v3051, %v3051
      %v3084 = vmul.f32 %v3052, %v3052
      %v3085 = vmul.f32 %v3053, %v3053
      %v3086 = vmul.f32 %v3054, %v3054
      %v3087 = vadd.f32 %v3055, %v3056
      %v3088 = vadd.f32 %v3087, %v3057
      %v3089 = vadd.f32 %v3088, %v3058
      %v3090 = vadd.f32 %v3089, %v3059
      %v3091 = vadd.f32 %v3090, %v3060
      %v3092 = vadd.f32 %v3091, %v3061
      %v3093 = vadd.f32 %v3092, %v3062
      %v3094 = vadd.f32 %v3093, %v3063
      %v3095 = vadd.f32 %v3094, %v3064
      %v3096 = vadd.f32 %v3095, %v3065
      %v3097 = vadd.f32 %v3096, %v3066
      %v3098 = vadd.f32 %v3097, %v3067
      %v3099 = vadd.f32 %v3098, %v3068
      %v3100 = vadd.f32 %v3099, %v3069
      %v3101 = vadd.f32 %v3100, %v3070
      %v3102 = vadd.f32 %v3101, %v3071
      %v3103 = vadd.f32 %v3102, %v3072
      %v3104 = vadd.f32 %v3103, %v3073
      %v3105 = vadd.f32 %v3104, %v3074
      %v3106 = vadd.f32 %v3105, %v3075
      %v3107 = vadd.f32 %v3106, %v3076
      %v3108 = vadd.f32 %v3107, %v3077
      %v3109 = vadd.f32 %v3108, %v3078
      %v3110 = vadd.f32 %v3109, %v3079
      %v3111 = vadd.f32 %v3110, %v3080
      %v3112 = vadd.f32 %v3111, %v3081
      %v3113 = vadd.f32 %v3112, %v3082
      %v3114 = vadd.f32 %v3113, %v3083
      %v3115 = vadd.f32 %v3114, %v3084
      %v3116 = vadd.f32 %v3115, %v3085
      %v3117 = vadd.f32 %v3116, %v3086
      %v3118 = vrot.slane %v3117, 4
      %v3119 = vadd.f32 %v3117, %v3118
      %v3120 = vrot.slane %v3119, 2
      %v3121 = vadd.f32 %v3119, %v3120
      %v3122 = vrot.slane %v3121, 1
      %v3123 = vadd.f32 %v3121, %v3122
      %v3124 = vlaneseq
      %v3125 = vshrl.u32 %v3124, 7
      %vm3126 = vcmp.eq.s32.totalorder %v3125, 0
      %vm3127 = vcmp.eq.s32.totalorder %v3125, 1
      %v3128 = vsel %vm3127, %v3123, 0.0
      %v3129 = vsel %vm3126, %v3021, %v3128
      %3130 = vst [vmem:[%s235] sm:$0xff] %v3129
      %p3131 = scmp.lt.s32.totalorder %s17, 1
      %s3132 = scalar_select %p3131, %s17, 1
      %s3133 = smul.addr %s3132, 32
      %s3134 = smul.addr %s3133, 8
      %s3135 = scalar_lea.vmem %s4, %s3134
      %p3136 = scmp.lt.s32.totalorder %s17, 1
      %s3137 = scalar_select %p3136, %s17, 1
      %s3138 = smul.addr %s3137, 8
      %s3139 = scalar_lea.vmem %s5, %s3138
      // Predicated region
      $region37: #{residual_block_forward.4} parent=35 // pred_check
        %p3140 = pneg %p124
      $region38: #{residual_block_forward.4} parent=35 // pred_check_branch
        %3142 = sbr.rel (%p3140) target = $region40
      $region39: #{residual_block_forward.4} parent=35 // pred_region
        _
      $region40: #{residual_block_forward.4} parent=35 // pred_fallthru
        _
      // Predicated region
      $region41: #{residual_block_forward.4} parent=35 // pred_check
        %p3143 = pneg %p150
      $region42: #{residual_block_forward.4} parent=35 // pred_check_branch
        %3145 = sbr.rel (%p3143) target = $region44
      $region43: #{residual_block_forward.4} parent=35 // pred_region
        _
      $region44: #{residual_block_forward.4} parent=35 // pred_fallthru
        _
    $region36: #{residual_block_forward.4} parent=5 // pred_fallthru
      _
    %p3146 = scmp.le.s32.totalorder 2, %s12
    // Predicated region
    $region45: #{residual_block_forward.4} parent=5 // pred_check
      %p3147 = pneg %p3146
    $region46: #{residual_block_forward.4} parent=5 // pred_check_branch
      %3149 = sbr.rel (%p3147) target = $region48
    $region47: #{residual_block_forward.4} parent=5 // pred_region
      %s3150 = ssub.s32 %s12, 2
      // Predicated region
      $region49: #{residual_block_forward.4} parent=47 // pred_check
        %p3151 = pneg %p130
      $region50: #{residual_block_forward.4} parent=47 // pred_check_branch
        %3153 = sbr.rel (%p3151) target = $region52
      $region51: #{residual_block_forward.4} parent=47 // pred_region
        %p3154 = scmp.lt.s32.totalorder %s18, 1
        %s3155 = scalar_select %p3154, %s18, 1
        %s3156 = smul.addr %s3155, 32
        %s3157 = smul.addr %s3156, 8
        %s3158 = scalar_lea.vmem %s4, %s3157
      $region52: #{residual_block_forward.4} parent=47 // pred_fallthru
        _
      // Predicated region
      $region53: #{residual_block_forward.4} parent=47 // pred_check
        %p3159 = pneg %p156
      $region54: #{residual_block_forward.4} parent=47 // pred_check_branch
        %3161 = sbr.rel (%p3159) target = $region56
      $region55: #{residual_block_forward.4} parent=47 // pred_region
        %p3162 = scmp.lt.s32.totalorder %s18, 1
        %s3163 = scalar_select %p3162, %s18, 1
        %s3164 = smul.addr %s3163, 8
        %s3165 = scalar_lea.vmem %s5, %s3164
      $region56: #{residual_block_forward.4} parent=47 // pred_fallthru
        _
    $region48: #{residual_block_forward.4} parent=5 // pred_fallthru
      _
  $region6: #{residual_block_forward.4} parent=0 // loop_footer
    %s16 = sadd.s32 1, %s12
  $region7: #{residual_block_forward.4} parent=0 // loop_footer_branch
    %11 = sbr.rel target = $region3
  $region8: #{residual_block_forward.4} parent=0 // loop_exit
    _

</llo_original>
